<compile_context>
chip_gen: v7x
topology: tpu7x:2x2x1
jax: 0.10.0
libtpu: 0.0.40
codegen_flags: <defaults>
</compile_context>

<pallas_src>
import functools

import numpy as np
import jax
import jax.numpy as jnp
from jax.experimental import pallas as pl
from jax.experimental.pallas import tpu as pltpu

BN_EPS = 1e-5
VMEM = pltpu.MemorySpace.VMEM


# ---------------------------------------------------------------------------
# In-kernel helpers (straight-line ops only: 2D dots, aligned row slices,
# elementwise, axis-0 reductions, 2D iota).
# ---------------------------------------------------------------------------

def _batchnorm(y, g, b):
    # Training-mode batch statistics, one pass (E[y^2] - E[y]^2), per column.
    mean = jnp.mean(y, axis=0, keepdims=True)
    var = jnp.maximum(jnp.mean(y * y, axis=0, keepdims=True) - mean * mean, 0.0)
    return (y - mean) * (g * jax.lax.rsqrt(var + BN_EPS)) + b


def _gather(sel_ref, act_f32):
    # 0/1 selection matmul == exact gather of (bf16) activations for all taps.
    return jnp.dot(sel_ref[...], act_f32.astype(jnp.bfloat16),
                   preferred_element_type=jnp.float32).astype(jnp.bfloat16)


def _conv_taps(sel_bf16, w_ref):
    # sel_bf16: (taps*rows, cin), rows ordered (tap, n, oy, ox).
    # w_ref:    (taps, cin, cout) stacked per-tap weights.
    taps = w_ref.shape[0]
    rows = sel_bf16.shape[0] // taps
    acc = None
    for t in range(taps):                      # static unroll (taps == 9)
        part = jnp.dot(sel_bf16[t * rows:(t + 1) * rows, :], w_ref[t],
                       preferred_element_type=jnp.float32)
        acc = part if acc is None else acc + part
    return acc


def _split_cols(y, c):
    # Split (rows, 2c) -> cols [0:c], [c:2c] via 0/1 matmuls (avoids unaligned
    # lane-offset slices inside the kernel; cost is negligible at these sizes).
    two_c = y.shape[1]
    row = jax.lax.broadcasted_iota(jnp.int32, (two_c, c), 0)
    col = jax.lax.broadcasted_iota(jnp.int32, (two_c, c), 1)
    lo = jnp.dot(y, (row == col).astype(y.dtype),
                 preferred_element_type=jnp.float32)
    hi = jnp.dot(y, (row == col + c).astype(y.dtype),
                 preferred_element_type=jnp.float32)
    return lo, hi


# ---------------------------------------------------------------------------
# The single fused kernel.
# ---------------------------------------------------------------------------

def _fused_resnet_kernel(
        p1_ref, w1_ref, g1_ref, b1_ref,
        s1a_ref, wm1_ref, gm1_ref, bm1_ref,
        s1b_ref, w1b_ref, g1b_ref, b1b_ref,
        s2a_ref, wm2_ref, gm2_ref, bm2_ref,
        s2b_ref, w2b_ref, g2b_ref, b2b_ref,
        pool_ref, lw_ref, lb_ref,
        logits_ref, feats_ref):
    # conv1 (5x5, valid) + BN + ReLU.  Conv bias omitted: batch-stat BN cancels it.
    y = jnp.dot(p1_ref[...], w1_ref[...], preferred_element_type=jnp.float32)
    y = jnp.maximum(_batchnorm(y, g1_ref[...], b1_ref[...]), 0.0)        # (N*256, 6)

    # ---- layer1: SpectralBasicBlock(6 -> 16, stride 2) ---------------------
    # conv3x3(s=2) merged with the 1x1 shortcut (extra cols of centre tap).
    h = _conv_taps(_gather(s1a_ref, y), wm1_ref)                         # (N*64, 32)
    h = _batchnorm(h, gm1_ref[...], bm1_ref[...])
    main, sc = _split_cols(h, wm1_ref.shape[2] // 2)
    main = jnp.maximum(main, 0.0)
    # conv3x3(s=1) + BN + residual add + ReLU.
    y = _conv_taps(_gather(s1b_ref, main), w1b_ref)                      # (N*64, 16)
    y = jnp.maximum(_batchnorm(y, g1b_ref[...], b1b_ref[...]) + sc, 0.0)

    # ---- layer2: SpectralBasicBlock(16 -> 32, stride 2) --------------------
    h = _conv_taps(_gather(s2a_ref, y), wm2_ref)                         # (N*16, 64)
    h = _batchnorm(h, gm2_ref[...], bm2_ref[...])
    main, sc = _split_cols(h, wm2_ref.shape[2] // 2)
    main = jnp.maximum(main, 0.0)
    y = _conv_taps(_gather(s2b_ref, main), w2b_ref)                      # (N*16, 32)
    y = jnp.maximum(_batchnorm(y, g2b_ref[...], b2b_ref[...]) + sc, 0.0)

    # ---- avg_pool2d(4) + linear head (fused; features emitted directly) ----
    feats = jnp.dot(pool_ref[...], y, preferred_element_type=jnp.float32)  # (N, 32)
    feats_ref[...] = feats
    logits_ref[...] = (jnp.dot(feats, lw_ref[...],
                               preferred_element_type=jnp.float32) + lb_ref[...])


# ---------------------------------------------------------------------------
# One-time weight / constant preprocessing (hoisted out of the forward path).
# ---------------------------------------------------------------------------

def _make_tap_selection(n, h, w, k, stride, pad):
    """0/1 gather matrix for a kxk conv.  Rows ordered (tap, batch, oy, ox);
    columns ordered (batch, iy, ix).  Out-of-bounds taps -> all-zero rows."""
    oh = (h + 2 * pad - k) // stride + 1
    ow = (w + 2 * pad - k) // stride + 1
    sel = np.zeros((k * k * n * oh * ow, n * h * w), np.float32)
    r = 0
    for di in range(k):
        for dj in range(k):
            for b in range(n):
                for oy in range(oh):
                    for ox in range(ow):
                        iy = oy * stride + di - pad
                        ix = ox * stride + dj - pad
                        if 0 <= iy < h and 0 <= ix < w:
                            sel[r, (b * h + iy) * w + ix] = 1.0
                        r += 1
    return sel, oh, ow


def _tap_stack(w):
    # (Cout, Cin, 3, 3) -> (9, Cin, Cout), taps row-major over (kh, kw).
    return jnp.transpose(w, (2, 3, 1, 0)).reshape(9, w.shape[1], w.shape[0])


def _merged_tap_stack(w3, wsc):
    # Widen each tap with the 1x1 shortcut weight (centre tap only) -> (9, Cin, 2*Cout).
    cout, cin = w3.shape[0], w3.shape[1]
    extra = jnp.zeros((9, cin, cout), jnp.float32)
    extra = extra.at[4].set(jnp.transpose(wsc[:, :, 0, 0]))
    return jnp.concatenate([_tap_stack(w3), extra], axis=2)


def _conv1_w_mat(w):
    # (6, 3, 5, 5) -> (75, 6); columns ordered (kh, kw, cin) to match im2col.
    return jnp.transpose(w, (2, 3, 1, 0)).reshape(-1, w.shape[0])


def _spectral_normalize(w, u0, n_power_iterations, norm_bound):
    # TODO(synk): exact spectral_norm_conv internals of SpectralBasicBlock are
    # not given; standard power iteration on the reshaped kernel is used as
    # deterministic weight preprocessing (sigma clamped to norm_bound).
    cout = w.shape[0]
    wm = w.reshape(cout, -1)
    u = u0 / (jnp.linalg.norm(u0) + 1e-12)
    v = wm.T @ u
    for _ in range(max(1, n_power_iterations)):
        v = wm.T @ u
        v = v / (jnp.linalg.norm(v) + 1e-12)
        u = wm @ v
        u = u / (jnp.linalg.norm(u) + 1e-12)
    sigma = u @ (wm @ v)
    return w / jnp.maximum(1.0, sigma / norm_bound)


def _conv_init(key, cout, cin, k):
    fan_in = cin * k * k
    return jax.random.normal(key, (cout, cin, k, k), jnp.float32) / jnp.sqrt(
        jnp.float32(fan_in))


def init_params(key, norm_bound, n_power_iterations):
    ks = jax.random.split(key, 5)
    p = {
        # conv1 bias omitted: exactly cancelled by the training-mode BatchNorm
        # that immediately follows.
        "conv1_w": _conv_init(ks[0], 6, 3, 5),
        "bn1_g": jnp.ones((1, 6), jnp.float32),
        "bn1_b": jnp.zeros((1, 6), jnp.float32),
    }

    def block(k0, cin, cout):
        kk = jax.random.split(k0, 6)
        w1 = _spectral_normalize(_conv_init(kk[0], cout, cin, 3),
                                 jax.random.normal(kk[3], (cout,), jnp.float32),
                                 n_power_iterations, norm_bound)
        w2 = _spectral_normalize(_conv_init(kk[1], cout, cout, 3),
                                 jax.random.normal(kk[4], (cout,), jnp.float32),
                                 n_power_iterations, norm_bound)
        ws = _spectral_normalize(_conv_init(kk[2], cout, cin, 1),
                                 jax.random.normal(kk[5], (cout,), jnp.float32),
                                 n_power_iterations, norm_bound)
        ones = jnp.ones((1, cout), jnp.float32)
        zeros = jnp.zeros((1, cout), jnp.float32)
        return {"conv1_w": w1, "bn1_g": ones, "bn1_b": zeros,
                "conv2_w": w2, "bn2_g": ones, "bn2_b": zeros,
                "sc_w": ws, "sc_bn_g": ones, "sc_bn_b": zeros}

    p["layer1"] = block(ks[1], 6, 16)      # 6 -> 16, stride 2
    p["layer2"] = block(ks[2], 16, 32)     # 16 -> 32, stride 2
    p["lin_w"] = jax.random.normal(ks[3], (10, 32), jnp.float32) / jnp.sqrt(32.0)
    p["lin_b"] = jnp.zeros((1, 10), jnp.float32)
    return p


def prepare_operands(params, batch, in_hw=20):
    """Kernel-ready operands for a fixed batch size: bf16 weight/tap stacks,
    merged BN params, tap-selection + pooling matrices.  Computed once."""
    bf16 = jnp.bfloat16
    l1, l2 = params["layer1"], params["layer2"]

    h1 = in_hw - 4                                              # conv1: 20 -> 16
    s1a, h2, _ = _make_tap_selection(batch, h1, h1, 3, 2, 1)    # 16 -> 8
    s1b, _, _ = _make_tap_selection(batch, h2, h2, 3, 1, 1)     # 8  -> 8
    s2a, h3, _ = _make_tap_selection(batch, h2, h2, 3, 2, 1)    # 8  -> 4
    s2b, _, _ = _make_tap_selection(batch, h3, h3, 3, 1, 1)     # 4  -> 4

    pool = np.zeros((batch, batch * h3 * h3), np.float32)       # avg_pool2d(4)
    for b in range(batch):
        pool[b, b * h3 * h3:(b + 1) * h3 * h3] = 1.0 / (h3 * h3)

    return (
        _conv1_w_mat(params["conv1_w"]).astype(bf16),
        params["bn1_g"], params["bn1_b"],
        jnp.asarray(s1a, bf16),
        _merged_tap_stack(l1["conv1_w"], l1["sc_w"]).astype(bf16),
        jnp.concatenate([l1["bn1_g"], l1["sc_bn_g"]], axis=1),
        jnp.concatenate([l1["bn1_b"], l1["sc_bn_b"]], axis=1),
        jnp.asarray(s1b, bf16),
        _tap_stack(l1["conv2_w"]).astype(bf16),
        l1["bn2_g"], l1["bn2_b"],
        jnp.asarray(s2a, bf16),
        _merged_tap_stack(l2["conv1_w"], l2["sc_w"]).astype(bf16),
        jnp.concatenate([l2["bn1_g"], l2["sc_bn_g"]], axis=1),
        jnp.concatenate([l2["bn1_b"], l2["sc_bn_b"]], axis=1),
        jnp.asarray(s2b, bf16),
        _tap_stack(l2["conv2_w"]).astype(bf16),
        l2["bn2_g"], l2["bn2_b"],
        jnp.asarray(pool, jnp.float32),
        jnp.transpose(params["lin_w"]),                         # (32, 10)
        params["lin_b"],
    )


# ---------------------------------------------------------------------------
# Forward pass.
# ---------------------------------------------------------------------------

def _conv1_im2col(x_nhwc, k=5):
    # im2col for the network *input* only (all later patch gathers happen
    # inside the kernel from VMEM-resident activations).
    n, h, w, c = x_nhwc.shape
    oh, ow = h - k + 1, w - k + 1
    cols = [x_nhwc[:, i:i + oh, j:j + ow, :] for i in range(k) for j in range(k)]
    patches = jnp.stack(cols, axis=3)                 # (N, OH, OW, k*k, C)
    return patches.reshape(n * oh * ow, k * k * c)


@functools.partial(jax.jit, static_argnames=("return_features",))
def spectral_resnet6_forward(operands, x_nchw, return_features=False):
    n = x_nchw.shape[0]
    x = jnp.transpose(x_nchw, (0, 2, 3, 1)).astype(jnp.float32)   # NCHW -> NHWC
    p1 = _conv1_im2col(x).astype(jnp.bfloat16)

    # TODO(synk): single-VMEM-block design targets small batch; add a row/batch
    # grid (marked "parallel") before scaling N, especially for v7x's 64 MiB VMEM.
    logits, feats = pl.pallas_call(
        _fused_resnet_kernel,
        out_shape=(jax.ShapeDtypeStruct((n, 10), jnp.float32),
                   jax.ShapeDtypeStruct((n, 32), jnp.float32)),
        in_specs=[pl.BlockSpec(memory_space=VMEM)] * 23,
        out_specs=(pl.BlockSpec(memory_space=VMEM),
                   pl.BlockSpec(memory_space=VMEM)),
    )(p1, *operands)

    if return_features:
        return logits, feats
    return logits


if __name__ == "__main__":
    key = jax.random.PRNGKey(0)
    kx, kp = jax.random.split(key)

    # Module hyperparameters.
    params = init_params(kp, norm_bound=0.9, n_power_iterations=1)

    # 20x20 input: conv1(5x5 valid) -> 16x16 -> block1(s2) 8x8 -> block2(s2) 4x4
    # -> avg_pool(4) -> 32 features -> linear(32, 10).
    batch = 2
    x = jax.random.normal(kx, (batch, 3, 20, 20), jnp.float32)

    operands = prepare_operands(params, batch, in_hw=20)

    logits, feats = spectral_resnet6_forward(operands, x, return_features=True)
    logits = jax.block_until_ready(logits)
    feats = jax.block_until_ready(feats)

    assert logits.shape == (batch, 10), logits.shape
    assert feats.shape == (batch, 32), feats.shape
    assert bool(jnp.all(jnp.isfinite(logits)))
    assert bool(jnp.all(jnp.isfinite(feats)))
    print("KERNEL_OK")
</pallas_src>

<mosaic_0001>
module attributes {stable_mosaic.version = 11 : i64} {
  func.func @_fused_resnet_kernel(%arg0: memref<512x75xbf16, #tpu.memory_space<vmem>>, %arg1: memref<75x6xbf16, #tpu.memory_space<vmem>>, %arg2: memref<1x6xf32, #tpu.memory_space<vmem>>, %arg3: memref<1x6xf32, #tpu.memory_space<vmem>>, %arg4: memref<1152x512xbf16, #tpu.memory_space<vmem>>, %arg5: memref<9x6x32xbf16, #tpu.memory_space<vmem>>, %arg6: memref<1x32xf32, #tpu.memory_space<vmem>>, %arg7: memref<1x32xf32, #tpu.memory_space<vmem>>, %arg8: memref<1152x128xbf16, #tpu.memory_space<vmem>>, %arg9: memref<9x16x16xbf16, #tpu.memory_space<vmem>>, %arg10: memref<1x16xf32, #tpu.memory_space<vmem>>, %arg11: memref<1x16xf32, #tpu.memory_space<vmem>>, %arg12: memref<288x128xbf16, #tpu.memory_space<vmem>>, %arg13: memref<9x16x64xbf16, #tpu.memory_space<vmem>>, %arg14: memref<1x64xf32, #tpu.memory_space<vmem>>, %arg15: memref<1x64xf32, #tpu.memory_space<vmem>>, %arg16: memref<288x32xbf16, #tpu.memory_space<vmem>>, %arg17: memref<9x32x32xbf16, #tpu.memory_space<vmem>>, %arg18: memref<1x32xf32, #tpu.memory_space<vmem>>, %arg19: memref<1x32xf32, #tpu.memory_space<vmem>>, %arg20: memref<2x32xf32, #tpu.memory_space<vmem>>, %arg21: memref<32x10xf32, #tpu.memory_space<vmem>>, %arg22: memref<1x10xf32, #tpu.memory_space<vmem>>, %arg23: memref<2x10xf32, #tpu.memory_space<vmem>>, %arg24: memref<2x32xf32, #tpu.memory_space<vmem>>) attributes {dimension_semantics = [], scalar_prefetch = 0 : i64, scratch_operands = 0 : i64, tpu.core_type = #tpu.core_type<tc>} {
    %c0 = arith.constant 0 : index
    %c0_0 = arith.constant 0 : index
    %0 = vector.load %arg0[%c0, %c0_0] : memref<512x75xbf16, #tpu.memory_space<vmem>>, vector<512x75xbf16>
    %c0_1 = arith.constant 0 : index
    %c0_2 = arith.constant 0 : index
    %1 = vector.load %arg1[%c0_1, %c0_2] : memref<75x6xbf16, #tpu.memory_space<vmem>>, vector<75x6xbf16>
    %cst = arith.constant dense<0.000000e+00> : vector<512x6xf32>
    %2 = tpu.matmul %0, %1, %cst {dimension_numbers = #tpu.dot_dimension_numbers<[1], [0], [0], [1], [0, 0, 1, 1], [], []>} : vector<512x75xbf16>, vector<75x6xbf16>, vector<512x6xf32> -> vector<512x6xf32>
    %c0_3 = arith.constant 0 : index
    %c0_4 = arith.constant 0 : index
    %3 = vector.load %arg2[%c0_3, %c0_4] : memref<1x6xf32, #tpu.memory_space<vmem>>, vector<1x6xf32>
    %c0_5 = arith.constant 0 : index
    %c0_6 = arith.constant 0 : index
    %4 = vector.load %arg3[%c0_5, %c0_6] : memref<1x6xf32, #tpu.memory_space<vmem>>, vector<1x6xf32>
    %cst_7 = arith.constant dense<0.000000e+00> : vector<6xf32>
    %5 = vector.multi_reduction <add>, %2, %cst_7 [0] : vector<512x6xf32> to vector<6xf32>
    %6 = vector.shape_cast %5 : vector<6xf32> to vector<1x6xf32>
    %cst_8 = arith.constant 5.120000e+02 : f32
    %7 = vector.broadcast %cst_8 : f32 to vector<1x6xf32>
    %8 = arith.divf %6, %7 : vector<1x6xf32>
    %9 = arith.mulf %2, %2 : vector<512x6xf32>
    %cst_9 = arith.constant dense<0.000000e+00> : vector<6xf32>
    %10 = vector.multi_reduction <add>, %9, %cst_9 [0] : vector<512x6xf32> to vector<6xf32>
    %11 = vector.shape_cast %10 : vector<6xf32> to vector<1x6xf32>
    %cst_10 = arith.constant 5.120000e+02 : f32
    %12 = vector.broadcast %cst_10 : f32 to vector<1x6xf32>
    %13 = arith.divf %11, %12 : vector<1x6xf32>
    %14 = arith.mulf %8, %8 : vector<1x6xf32>
    %15 = arith.subf %13, %14 : vector<1x6xf32>
    %cst_11 = arith.constant 0.000000e+00 : f32
    %16 = vector.broadcast %cst_11 : f32 to vector<1x6xf32>
    %17 = arith.maximumf %15, %16 : vector<1x6xf32>
    %18 = vector.broadcast %8 : vector<1x6xf32> to vector<512x6xf32>
    %19 = arith.subf %2, %18 : vector<512x6xf32>
    %cst_12 = arith.constant 9.99999974E-6 : f32
    %20 = vector.broadcast %cst_12 : f32 to vector<1x6xf32>
    %21 = arith.addf %17, %20 : vector<1x6xf32>
    %22 = math.rsqrt %21 : vector<1x6xf32>
    %23 = arith.mulf %3, %22 : vector<1x6xf32>
    %24 = vector.broadcast %23 : vector<1x6xf32> to vector<512x6xf32>
    %25 = arith.mulf %19, %24 : vector<512x6xf32>
    %26 = vector.broadcast %4 : vector<1x6xf32> to vector<512x6xf32>
    %27 = arith.addf %25, %26 : vector<512x6xf32>
    %cst_13 = arith.constant 0.000000e+00 : f32
    %28 = vector.broadcast %cst_13 : f32 to vector<512x6xf32>
    %29 = arith.maximumf %27, %28 : vector<512x6xf32>
    %c0_14 = arith.constant 0 : index
    %c0_15 = arith.constant 0 : index
    %30 = vector.load %arg4[%c0_14, %c0_15] : memref<1152x512xbf16, #tpu.memory_space<vmem>>, vector<1152x512xbf16>
    %31 = arith.truncf %29 : vector<512x6xf32> to vector<512x6xbf16>
    %cst_16 = arith.constant dense<0.000000e+00> : vector<1152x6xf32>
    %32 = tpu.matmul %30, %31, %cst_16 {dimension_numbers = #tpu.dot_dimension_numbers<[1], [0], [0], [1], [0, 0, 1, 1], [], []>} : vector<1152x512xbf16>, vector<512x6xbf16>, vector<1152x6xf32> -> vector<1152x6xf32>
    %33 = arith.truncf %32 : vector<1152x6xf32> to vector<1152x6xbf16>
    %34 = vector.extract_strided_slice %33 {offsets = [0, 0], sizes = [128, 6], strides = [1, 1]} : vector<1152x6xbf16> to vector<128x6xbf16>
    %c0_17 = arith.constant 0 : index
    %c0_18 = arith.constant 0 : index
    %c0_19 = arith.constant 0 : index
    %35 = vector.load %arg5[%c0_17, %c0_18, %c0_19] : memref<9x6x32xbf16, #tpu.memory_space<vmem>>, vector<1x6x32xbf16>
    %36 = vector.shape_cast %35 : vector<1x6x32xbf16> to vector<6x32xbf16>
    %cst_20 = arith.constant dense<0.000000e+00> : vector<128x32xf32>
    %37 = tpu.matmul %34, %36, %cst_20 {dimension_numbers = #tpu.dot_dimension_numbers<[1], [0], [0], [1], [0, 0, 1, 1], [], []>} : vector<128x6xbf16>, vector<6x32xbf16>, vector<128x32xf32> -> vector<128x32xf32>
    %38 = vector.extract_strided_slice %33 {offsets = [128, 0], sizes = [128, 6], strides = [1, 1]} : vector<1152x6xbf16> to vector<128x6xbf16>
    %c1 = arith.constant 1 : index
    %c0_21 = arith.constant 0 : index
    %c0_22 = arith.constant 0 : index
    %39 = vector.load %arg5[%c1, %c0_21, %c0_22] : memref<9x6x32xbf16, #tpu.memory_space<vmem>>, vector<1x6x32xbf16>
    %40 = vector.shape_cast %39 : vector<1x6x32xbf16> to vector<6x32xbf16>
    %cst_23 = arith.constant dense<0.000000e+00> : vector<128x32xf32>
    %41 = tpu.matmul %38, %40, %cst_23 {dimension_numbers = #tpu.dot_dimension_numbers<[1], [0], [0], [1], [0, 0, 1, 1], [], []>} : vector<128x6xbf16>, vector<6x32xbf16>, vector<128x32xf32> -> vector<128x32xf32>
    %42 = arith.addf %37, %41 : vector<128x32xf32>
    %43 = vector.extract_strided_slice %33 {offsets = [256, 0], sizes = [128, 6], strides = [1, 1]} : vector<1152x6xbf16> to vector<128x6xbf16>
    %c2 = arith.constant 2 : index
    %c0_24 = arith.constant 0 : index
    %c0_25 = arith.constant 0 : index
    %44 = vector.load %arg5[%c2, %c0_24, %c0_25] : memref<9x6x32xbf16, #tpu.memory_space<vmem>>, vector<1x6x32xbf16>
    %45 = vector.shape_cast %44 : vector<1x6x32xbf16> to vector<6x32xbf16>
    %cst_26 = arith.constant dense<0.000000e+00> : vector<128x32xf32>
    %46 = tpu.matmul %43, %45, %cst_26 {dimension_numbers = #tpu.dot_dimension_numbers<[1], [0], [0], [1], [0, 0, 1, 1], [], []>} : vector<128x6xbf16>, vector<6x32xbf16>, vector<128x32xf32> -> vector<128x32xf32>
    %47 = arith.addf %42, %46 : vector<128x32xf32>
    %48 = vector.extract_strided_slice %33 {offsets = [384, 0], sizes = [128, 6], strides = [1, 1]} : vector<1152x6xbf16> to vector<128x6xbf16>
    %c3 = arith.constant 3 : index
    %c0_27 = arith.constant 0 : index
    %c0_28 = arith.constant 0 : index
    %49 = vector.load %arg5[%c3, %c0_27, %c0_28] : memref<9x6x32xbf16, #tpu.memory_space<vmem>>, vector<1x6x32xbf16>
    %50 = vector.shape_cast %49 : vector<1x6x32xbf16> to vector<6x32xbf16>
    %cst_29 = arith.constant dense<0.000000e+00> : vector<128x32xf32>
    %51 = tpu.matmul %48, %50, %cst_29 {dimension_numbers = #tpu.dot_dimension_numbers<[1], [0], [0], [1], [0, 0, 1, 1], [], []>} : vector<128x6xbf16>, vector<6x32xbf16>, vector<128x32xf32> -> vector<128x32xf32>
    %52 = arith.addf %47, %51 : vector<128x32xf32>
    %53 = vector.extract_strided_slice %33 {offsets = [512, 0], sizes = [128, 6], strides = [1, 1]} : vector<1152x6xbf16> to vector<128x6xbf16>
    %c4 = arith.constant 4 : index
    %c0_30 = arith.constant 0 : index
    %c0_31 = arith.constant 0 : index
    %54 = vector.load %arg5[%c4, %c0_30, %c0_31] : memref<9x6x32xbf16, #tpu.memory_space<vmem>>, vector<1x6x32xbf16>
    %55 = vector.shape_cast %54 : vector<1x6x32xbf16> to vector<6x32xbf16>
    %cst_32 = arith.constant dense<0.000000e+00> : vector<128x32xf32>
    %56 = tpu.matmul %53, %55, %cst_32 {dimension_numbers = #tpu.dot_dimension_numbers<[1], [0], [0], [1], [0, 0, 1, 1], [], []>} : vector<128x6xbf16>, vector<6x32xbf16>, vector<128x32xf32> -> vector<128x32xf32>
    %57 = arith.addf %52, %56 : vector<128x32xf32>
    %58 = vector.extract_strided_slice %33 {offsets = [640, 0], sizes = [128, 6], strides = [1, 1]} : vector<1152x6xbf16> to vector<128x6xbf16>
    %c5 = arith.constant 5 : index
    %c0_33 = arith.constant 0 : index
    %c0_34 = arith.constant 0 : index
    %59 = vector.load %arg5[%c5, %c0_33, %c0_34] : memref<9x6x32xbf16, #tpu.memory_space<vmem>>, vector<1x6x32xbf16>
    %60 = vector.shape_cast %59 : vector<1x6x32xbf16> to vector<6x32xbf16>
    %cst_35 = arith.constant dense<0.000000e+00> : vector<128x32xf32>
    %61 = tpu.matmul %58, %60, %cst_35 {dimension_numbers = #tpu.dot_dimension_numbers<[1], [0], [0], [1], [0, 0, 1, 1], [], []>} : vector<128x6xbf16>, vector<6x32xbf16>, vector<128x32xf32> -> vector<128x32xf32>
    %62 = arith.addf %57, %61 : vector<128x32xf32>
    %63 = vector.extract_strided_slice %33 {offsets = [768, 0], sizes = [128, 6], strides = [1, 1]} : vector<1152x6xbf16> to vector<128x6xbf16>
    %c6 = arith.constant 6 : index
    %c0_36 = arith.constant 0 : index
    %c0_37 = arith.constant 0 : index
    %64 = vector.load %arg5[%c6, %c0_36, %c0_37] : memref<9x6x32xbf16, #tpu.memory_space<vmem>>, vector<1x6x32xbf16>
    %65 = vector.shape_cast %64 : vector<1x6x32xbf16> to vector<6x32xbf16>
    %cst_38 = arith.constant dense<0.000000e+00> : vector<128x32xf32>
    %66 = tpu.matmul %63, %65, %cst_38 {dimension_numbers = #tpu.dot_dimension_numbers<[1], [0], [0], [1], [0, 0, 1, 1], [], []>} : vector<128x6xbf16>, vector<6x32xbf16>, vector<128x32xf32> -> vector<128x32xf32>
    %67 = arith.addf %62, %66 : vector<128x32xf32>
    %68 = vector.extract_strided_slice %33 {offsets = [896, 0], sizes = [128, 6], strides = [1, 1]} : vector<1152x6xbf16> to vector<128x6xbf16>
    %c7 = arith.constant 7 : index
    %c0_39 = arith.constant 0 : index
    %c0_40 = arith.constant 0 : index
    %69 = vector.load %arg5[%c7, %c0_39, %c0_40] : memref<9x6x32xbf16, #tpu.memory_space<vmem>>, vector<1x6x32xbf16>
    %70 = vector.shape_cast %69 : vector<1x6x32xbf16> to vector<6x32xbf16>
    %cst_41 = arith.constant dense<0.000000e+00> : vector<128x32xf32>
    %71 = tpu.matmul %68, %70, %cst_41 {dimension_numbers = #tpu.dot_dimension_numbers<[1], [0], [0], [1], [0, 0, 1, 1], [], []>} : vector<128x6xbf16>, vector<6x32xbf16>, vector<128x32xf32> -> vector<128x32xf32>
    %72 = arith.addf %67, %71 : vector<128x32xf32>
    %73 = vector.extract_strided_slice %33 {offsets = [1024, 0], sizes = [128, 6], strides = [1, 1]} : vector<1152x6xbf16> to vector<128x6xbf16>
    %c8 = arith.constant 8 : index
    %c0_42 = arith.constant 0 : index
    %c0_43 = arith.constant 0 : index
    %74 = vector.load %arg5[%c8, %c0_42, %c0_43] : memref<9x6x32xbf16, #tpu.memory_space<vmem>>, vector<1x6x32xbf16>
    %75 = vector.shape_cast %74 : vector<1x6x32xbf16> to vector<6x32xbf16>
    %cst_44 = arith.constant dense<0.000000e+00> : vector<128x32xf32>
    %76 = tpu.matmul %73, %75, %cst_44 {dimension_numbers = #tpu.dot_dimension_numbers<[1], [0], [0], [1], [0, 0, 1, 1], [], []>} : vector<128x6xbf16>, vector<6x32xbf16>, vector<128x32xf32> -> vector<128x32xf32>
    %77 = arith.addf %72, %76 : vector<128x32xf32>
    %c0_45 = arith.constant 0 : index
    %c0_46 = arith.constant 0 : index
    %78 = vector.load %arg6[%c0_45, %c0_46] : memref<1x32xf32, #tpu.memory_space<vmem>>, vector<1x32xf32>
    %c0_47 = arith.constant 0 : index
    %c0_48 = arith.constant 0 : index
    %79 = vector.load %arg7[%c0_47, %c0_48] : memref<1x32xf32, #tpu.memory_space<vmem>>, vector<1x32xf32>
    %cst_49 = arith.constant dense<0.000000e+00> : vector<32xf32>
    %80 = vector.multi_reduction <add>, %77, %cst_49 [0] : vector<128x32xf32> to vector<32xf32>
    %81 = vector.shape_cast %80 : vector<32xf32> to vector<1x32xf32>
    %cst_50 = arith.constant 1.280000e+02 : f32
    %82 = vector.broadcast %cst_50 : f32 to vector<1x32xf32>
    %83 = arith.divf %81, %82 : vector<1x32xf32>
    %84 = arith.mulf %77, %77 : vector<128x32xf32>
    %cst_51 = arith.constant dense<0.000000e+00> : vector<32xf32>
    %85 = vector.multi_reduction <add>, %84, %cst_51 [0] : vector<128x32xf32> to vector<32xf32>
    %86 = vector.shape_cast %85 : vector<32xf32> to vector<1x32xf32>
    %cst_52 = arith.constant 1.280000e+02 : f32
    %87 = vector.broadcast %cst_52 : f32 to vector<1x32xf32>
    %88 = arith.divf %86, %87 : vector<1x32xf32>
    %89 = arith.mulf %83, %83 : vector<1x32xf32>
    %90 = arith.subf %88, %89 : vector<1x32xf32>
    %cst_53 = arith.constant 0.000000e+00 : f32
    %91 = vector.broadcast %cst_53 : f32 to vector<1x32xf32>
    %92 = arith.maximumf %90, %91 : vector<1x32xf32>
    %93 = vector.broadcast %83 : vector<1x32xf32> to vector<128x32xf32>
    %94 = arith.subf %77, %93 : vector<128x32xf32>
    %cst_54 = arith.constant 9.99999974E-6 : f32
    %95 = vector.broadcast %cst_54 : f32 to vector<1x32xf32>
    %96 = arith.addf %92, %95 : vector<1x32xf32>
    %97 = math.rsqrt %96 : vector<1x32xf32>
    %98 = arith.mulf %78, %97 : vector<1x32xf32>
    %99 = vector.broadcast %98 : vector<1x32xf32> to vector<128x32xf32>
    %100 = arith.mulf %94, %99 : vector<128x32xf32>
    %101 = vector.broadcast %79 : vector<1x32xf32> to vector<128x32xf32>
    %102 = arith.addf %100, %101 : vector<128x32xf32>
    %103 = tpu.iota {dimensions = array<i32: 0>} : vector<32x16xi32>
    %104 = tpu.iota {dimensions = array<i32: 1>} : vector<32x16xi32>
    %105 = arith.cmpi eq, %103, %104 : vector<32x16xi32>
    %106 = arith.extui %105 : vector<32x16xi1> to vector<32x16xi32>
    %107 = arith.sitofp %106 : vector<32x16xi32> to vector<32x16xf32>
    %cst_55 = arith.constant dense<0.000000e+00> : vector<128x16xf32>
    %108 = tpu.matmul %102, %107, %cst_55 {dimension_numbers = #tpu.dot_dimension_numbers<[1], [0], [0], [1], [0, 0, 1, 1], [], []>} : vector<128x32xf32>, vector<32x16xf32>, vector<128x16xf32> -> vector<128x16xf32>
    %c16_i32 = arith.constant 16 : i32
    %109 = vector.broadcast %c16_i32 : i32 to vector<32x16xi32>
    %110 = arith.addi %104, %109 : vector<32x16xi32>
    %111 = arith.cmpi eq, %103, %110 : vector<32x16xi32>
    %112 = arith.extui %111 : vector<32x16xi1> to vector<32x16xi32>
    %113 = arith.sitofp %112 : vector<32x16xi32> to vector<32x16xf32>
    %cst_56 = arith.constant dense<0.000000e+00> : vector<128x16xf32>
    %114 = tpu.matmul %102, %113, %cst_56 {dimension_numbers = #tpu.dot_dimension_numbers<[1], [0], [0], [1], [0, 0, 1, 1], [], []>} : vector<128x32xf32>, vector<32x16xf32>, vector<128x16xf32> -> vector<128x16xf32>
    %cst_57 = arith.constant 0.000000e+00 : f32
    %115 = vector.broadcast %cst_57 : f32 to vector<128x16xf32>
    %116 = arith.maximumf %108, %115 : vector<128x16xf32>
    %c0_58 = arith.constant 0 : index
    %c0_59 = arith.constant 0 : index
    %117 = vector.load %arg8[%c0_58, %c0_59] : memref<1152x128xbf16, #tpu.memory_space<vmem>>, vector<1152x128xbf16>
    %118 = arith.truncf %116 : vector<128x16xf32> to vector<128x16xbf16>
    %cst_60 = arith.constant dense<0.000000e+00> : vector<1152x16xf32>
    %119 = tpu.matmul %117, %118, %cst_60 {dimension_numbers = #tpu.dot_dimension_numbers<[1], [0], [0], [1], [0, 0, 1, 1], [], []>} : vector<1152x128xbf16>, vector<128x16xbf16>, vector<1152x16xf32> -> vector<1152x16xf32>
    %120 = arith.truncf %119 : vector<1152x16xf32> to vector<1152x16xbf16>
    %121 = vector.extract_strided_slice %120 {offsets = [0, 0], sizes = [128, 16], strides = [1, 1]} : vector<1152x16xbf16> to vector<128x16xbf16>
    %c0_61 = arith.constant 0 : index
    %c0_62 = arith.constant 0 : index
    %c0_63 = arith.constant 0 : index
    %122 = vector.load %arg9[%c0_61, %c0_62, %c0_63] : memref<9x16x16xbf16, #tpu.memory_space<vmem>>, vector<1x16x16xbf16>
    %123 = vector.shape_cast %122 : vector<1x16x16xbf16> to vector<16x16xbf16>
    %cst_64 = arith.constant dense<0.000000e+00> : vector<128x16xf32>
    %124 = tpu.matmul %121, %123, %cst_64 {dimension_numbers = #tpu.dot_dimension_numbers<[1], [0], [0], [1], [0, 0, 1, 1], [], []>} : vector<128x16xbf16>, vector<16x16xbf16>, vector<128x16xf32> -> vector<128x16xf32>
    %125 = vector.extract_strided_slice %120 {offsets = [128, 0], sizes = [128, 16], strides = [1, 1]} : vector<1152x16xbf16> to vector<128x16xbf16>
    %c1_65 = arith.constant 1 : index
    %c0_66 = arith.constant 0 : index
    %c0_67 = arith.constant 0 : index
    %126 = vector.load %arg9[%c1_65, %c0_66, %c0_67] : memref<9x16x16xbf16, #tpu.memory_space<vmem>>, vector<1x16x16xbf16>
    %127 = vector.shape_cast %126 : vector<1x16x16xbf16> to vector<16x16xbf16>
    %cst_68 = arith.constant dense<0.000000e+00> : vector<128x16xf32>
    %128 = tpu.matmul %125, %127, %cst_68 {dimension_numbers = #tpu.dot_dimension_numbers<[1], [0], [0], [1], [0, 0, 1, 1], [], []>} : vector<128x16xbf16>, vector<16x16xbf16>, vector<128x16xf32> -> vector<128x16xf32>
    %129 = arith.addf %124, %128 : vector<128x16xf32>
    %130 = vector.extract_strided_slice %120 {offsets = [256, 0], sizes = [128, 16], strides = [1, 1]} : vector<1152x16xbf16> to vector<128x16xbf16>
    %c2_69 = arith.constant 2 : index
    %c0_70 = arith.constant 0 : index
    %c0_71 = arith.constant 0 : index
    %131 = vector.load %arg9[%c2_69, %c0_70, %c0_71] : memref<9x16x16xbf16, #tpu.memory_space<vmem>>, vector<1x16x16xbf16>
    %132 = vector.shape_cast %131 : vector<1x16x16xbf16> to vector<16x16xbf16>
    %cst_72 = arith.constant dense<0.000000e+00> : vector<128x16xf32>
    %133 = tpu.matmul %130, %132, %cst_72 {dimension_numbers = #tpu.dot_dimension_numbers<[1], [0], [0], [1], [0, 0, 1, 1], [], []>} : vector<128x16xbf16>, vector<16x16xbf16>, vector<128x16xf32> -> vector<128x16xf32>
    %134 = arith.addf %129, %133 : vector<128x16xf32>
    %135 = vector.extract_strided_slice %120 {offsets = [384, 0], sizes = [128, 16], strides = [1, 1]} : vector<1152x16xbf16> to vector<128x16xbf16>
    %c3_73 = arith.constant 3 : index
    %c0_74 = arith.constant 0 : index
    %c0_75 = arith.constant 0 : index
    %136 = vector.load %arg9[%c3_73, %c0_74, %c0_75] : memref<9x16x16xbf16, #tpu.memory_space<vmem>>, vector<1x16x16xbf16>
    %137 = vector.shape_cast %136 : vector<1x16x16xbf16> to vector<16x16xbf16>
    %cst_76 = arith.constant dense<0.000000e+00> : vector<128x16xf32>
    %138 = tpu.matmul %135, %137, %cst_76 {dimension_numbers = #tpu.dot_dimension_numbers<[1], [0], [0], [1], [0, 0, 1, 1], [], []>} : vector<128x16xbf16>, vector<16x16xbf16>, vector<128x16xf32> -> vector<128x16xf32>
    %139 = arith.addf %134, %138 : vector<128x16xf32>
    %140 = vector.extract_strided_slice %120 {offsets = [512, 0], sizes = [128, 16], strides = [1, 1]} : vector<1152x16xbf16> to vector<128x16xbf16>
    %c4_77 = arith.constant 4 : index
    %c0_78 = arith.constant 0 : index
    %c0_79 = arith.constant 0 : index
    %141 = vector.load %arg9[%c4_77, %c0_78, %c0_79] : memref<9x16x16xbf16, #tpu.memory_space<vmem>>, vector<1x16x16xbf16>
    %142 = vector.shape_cast %141 : vector<1x16x16xbf16> to vector<16x16xbf16>
    %cst_80 = arith.constant dense<0.000000e+00> : vector<128x16xf32>
    %143 = tpu.matmul %140, %142, %cst_80 {dimension_numbers = #tpu.dot_dimension_numbers<[1], [0], [0], [1], [0, 0, 1, 1], [], []>} : vector<128x16xbf16>, vector<16x16xbf16>, vector<128x16xf32> -> vector<128x16xf32>
    %144 = arith.addf %139, %143 : vector<128x16xf32>
    %145 = vector.extract_strided_slice %120 {offsets = [640, 0], sizes = [128, 16], strides = [1, 1]} : vector<1152x16xbf16> to vector<128x16xbf16>
    %c5_81 = arith.constant 5 : index
    %c0_82 = arith.constant 0 : index
    %c0_83 = arith.constant 0 : index
    %146 = vector.load %arg9[%c5_81, %c0_82, %c0_83] : memref<9x16x16xbf16, #tpu.memory_space<vmem>>, vector<1x16x16xbf16>
    %147 = vector.shape_cast %146 : vector<1x16x16xbf16> to vector<16x16xbf16>
    %cst_84 = arith.constant dense<0.000000e+00> : vector<128x16xf32>
    %148 = tpu.matmul %145, %147, %cst_84 {dimension_numbers = #tpu.dot_dimension_numbers<[1], [0], [0], [1], [0, 0, 1, 1], [], []>} : vector<128x16xbf16>, vector<16x16xbf16>, vector<128x16xf32> -> vector<128x16xf32>
    %149 = arith.addf %144, %148 : vector<128x16xf32>
    %150 = vector.extract_strided_slice %120 {offsets = [768, 0], sizes = [128, 16], strides = [1, 1]} : vector<1152x16xbf16> to vector<128x16xbf16>
    %c6_85 = arith.constant 6 : index
    %c0_86 = arith.constant 0 : index
    %c0_87 = arith.constant 0 : index
    %151 = vector.load %arg9[%c6_85, %c0_86, %c0_87] : memref<9x16x16xbf16, #tpu.memory_space<vmem>>, vector<1x16x16xbf16>
    %152 = vector.shape_cast %151 : vector<1x16x16xbf16> to vector<16x16xbf16>
    %cst_88 = arith.constant dense<0.000000e+00> : vector<128x16xf32>
    %153 = tpu.matmul %150, %152, %cst_88 {dimension_numbers = #tpu.dot_dimension_numbers<[1], [0], [0], [1], [0, 0, 1, 1], [], []>} : vector<128x16xbf16>, vector<16x16xbf16>, vector<128x16xf32> -> vector<128x16xf32>
    %154 = arith.addf %149, %153 : vector<128x16xf32>
    %155 = vector.extract_strided_slice %120 {offsets = [896, 0], sizes = [128, 16], strides = [1, 1]} : vector<1152x16xbf16> to vector<128x16xbf16>
    %c7_89 = arith.constant 7 : index
    %c0_90 = arith.constant 0 : index
    %c0_91 = arith.constant 0 : index
    %156 = vector.load %arg9[%c7_89, %c0_90, %c0_91] : memref<9x16x16xbf16, #tpu.memory_space<vmem>>, vector<1x16x16xbf16>
    %157 = vector.shape_cast %156 : vector<1x16x16xbf16> to vector<16x16xbf16>
    %cst_92 = arith.constant dense<0.000000e+00> : vector<128x16xf32>
    %158 = tpu.matmul %155, %157, %cst_92 {dimension_numbers = #tpu.dot_dimension_numbers<[1], [0], [0], [1], [0, 0, 1, 1], [], []>} : vector<128x16xbf16>, vector<16x16xbf16>, vector<128x16xf32> -> vector<128x16xf32>
    %159 = arith.addf %154, %158 : vector<128x16xf32>
    %160 = vector.extract_strided_slice %120 {offsets = [1024, 0], sizes = [128, 16], strides = [1, 1]} : vector<1152x16xbf16> to vector<128x16xbf16>
    %c8_93 = arith.constant 8 : index
    %c0_94 = arith.constant 0 : index
    %c0_95 = arith.constant 0 : index
    %161 = vector.load %arg9[%c8_93, %c0_94, %c0_95] : memref<9x16x16xbf16, #tpu.memory_space<vmem>>, vector<1x16x16xbf16>
    %162 = vector.shape_cast %161 : vector<1x16x16xbf16> to vector<16x16xbf16>
    %cst_96 = arith.constant dense<0.000000e+00> : vector<128x16xf32>
    %163 = tpu.matmul %160, %162, %cst_96 {dimension_numbers = #tpu.dot_dimension_numbers<[1], [0], [0], [1], [0, 0, 1, 1], [], []>} : vector<128x16xbf16>, vector<16x16xbf16>, vector<128x16xf32> -> vector<128x16xf32>
    %164 = arith.addf %159, %163 : vector<128x16xf32>
    %c0_97 = arith.constant 0 : index
    %c0_98 = arith.constant 0 : index
    %165 = vector.load %arg10[%c0_97, %c0_98] : memref<1x16xf32, #tpu.memory_space<vmem>>, vector<1x16xf32>
    %c0_99 = arith.constant 0 : index
    %c0_100 = arith.constant 0 : index
    %166 = vector.load %arg11[%c0_99, %c0_100] : memref<1x16xf32, #tpu.memory_space<vmem>>, vector<1x16xf32>
    %cst_101 = arith.constant dense<0.000000e+00> : vector<16xf32>
    %167 = vector.multi_reduction <add>, %164, %cst_101 [0] : vector<128x16xf32> to vector<16xf32>
    %168 = vector.shape_cast %167 : vector<16xf32> to vector<1x16xf32>
    %cst_102 = arith.constant 1.280000e+02 : f32
    %169 = vector.broadcast %cst_102 : f32 to vector<1x16xf32>
    %170 = arith.divf %168, %169 : vector<1x16xf32>
    %171 = arith.mulf %164, %164 : vector<128x16xf32>
    %cst_103 = arith.constant dense<0.000000e+00> : vector<16xf32>
    %172 = vector.multi_reduction <add>, %171, %cst_103 [0] : vector<128x16xf32> to vector<16xf32>
    %173 = vector.shape_cast %172 : vector<16xf32> to vector<1x16xf32>
    %cst_104 = arith.constant 1.280000e+02 : f32
    %174 = vector.broadcast %cst_104 : f32 to vector<1x16xf32>
    %175 = arith.divf %173, %174 : vector<1x16xf32>
    %176 = arith.mulf %170, %170 : vector<1x16xf32>
    %177 = arith.subf %175, %176 : vector<1x16xf32>
    %cst_105 = arith.constant 0.000000e+00 : f32
    %178 = vector.broadcast %cst_105 : f32 to vector<1x16xf32>
    %179 = arith.maximumf %177, %178 : vector<1x16xf32>
    %180 = vector.broadcast %170 : vector<1x16xf32> to vector<128x16xf32>
    %181 = arith.subf %164, %180 : vector<128x16xf32>
    %cst_106 = arith.constant 9.99999974E-6 : f32
    %182 = vector.broadcast %cst_106 : f32 to vector<1x16xf32>
    %183 = arith.addf %179, %182 : vector<1x16xf32>
    %184 = math.rsqrt %183 : vector<1x16xf32>
    %185 = arith.mulf %165, %184 : vector<1x16xf32>
    %186 = vector.broadcast %185 : vector<1x16xf32> to vector<128x16xf32>
    %187 = arith.mulf %181, %186 : vector<128x16xf32>
    %188 = vector.broadcast %166 : vector<1x16xf32> to vector<128x16xf32>
    %189 = arith.addf %187, %188 : vector<128x16xf32>
    %190 = arith.addf %189, %114 : vector<128x16xf32>
    %cst_107 = arith.constant 0.000000e+00 : f32
    %191 = vector.broadcast %cst_107 : f32 to vector<128x16xf32>
    %192 = arith.maximumf %190, %191 : vector<128x16xf32>
    %c0_108 = arith.constant 0 : index
    %c0_109 = arith.constant 0 : index
    %193 = vector.load %arg12[%c0_108, %c0_109] : memref<288x128xbf16, #tpu.memory_space<vmem>>, vector<288x128xbf16>
    %194 = arith.truncf %192 : vector<128x16xf32> to vector<128x16xbf16>
    %cst_110 = arith.constant dense<0.000000e+00> : vector<288x16xf32>
    %195 = tpu.matmul %193, %194, %cst_110 {dimension_numbers = #tpu.dot_dimension_numbers<[1], [0], [0], [1], [0, 0, 1, 1], [], []>} : vector<288x128xbf16>, vector<128x16xbf16>, vector<288x16xf32> -> vector<288x16xf32>
    %196 = arith.truncf %195 : vector<288x16xf32> to vector<288x16xbf16>
    %197 = vector.extract_strided_slice %196 {offsets = [0, 0], sizes = [32, 16], strides = [1, 1]} : vector<288x16xbf16> to vector<32x16xbf16>
    %c0_111 = arith.constant 0 : index
    %c0_112 = arith.constant 0 : index
    %c0_113 = arith.constant 0 : index
    %198 = vector.load %arg13[%c0_111, %c0_112, %c0_113] : memref<9x16x64xbf16, #tpu.memory_space<vmem>>, vector<1x16x64xbf16>
    %199 = vector.shape_cast %198 : vector<1x16x64xbf16> to vector<16x64xbf16>
    %cst_114 = arith.constant dense<0.000000e+00> : vector<32x64xf32>
    %200 = tpu.matmul %197, %199, %cst_114 {dimension_numbers = #tpu.dot_dimension_numbers<[1], [0], [0], [1], [0, 0, 1, 1], [], []>} : vector<32x16xbf16>, vector<16x64xbf16>, vector<32x64xf32> -> vector<32x64xf32>
    %201 = vector.extract_strided_slice %196 {offsets = [32, 0], sizes = [32, 16], strides = [1, 1]} : vector<288x16xbf16> to vector<32x16xbf16>
    %c1_115 = arith.constant 1 : index
    %c0_116 = arith.constant 0 : index
    %c0_117 = arith.constant 0 : index
    %202 = vector.load %arg13[%c1_115, %c0_116, %c0_117] : memref<9x16x64xbf16, #tpu.memory_space<vmem>>, vector<1x16x64xbf16>
    %203 = vector.shape_cast %202 : vector<1x16x64xbf16> to vector<16x64xbf16>
    %cst_118 = arith.constant dense<0.000000e+00> : vector<32x64xf32>
    %204 = tpu.matmul %201, %203, %cst_118 {dimension_numbers = #tpu.dot_dimension_numbers<[1], [0], [0], [1], [0, 0, 1, 1], [], []>} : vector<32x16xbf16>, vector<16x64xbf16>, vector<32x64xf32> -> vector<32x64xf32>
    %205 = arith.addf %200, %204 : vector<32x64xf32>
    %206 = vector.extract_strided_slice %196 {offsets = [64, 0], sizes = [32, 16], strides = [1, 1]} : vector<288x16xbf16> to vector<32x16xbf16>
    %c2_119 = arith.constant 2 : index
    %c0_120 = arith.constant 0 : index
    %c0_121 = arith.constant 0 : index
    %207 = vector.load %arg13[%c2_119, %c0_120, %c0_121] : memref<9x16x64xbf16, #tpu.memory_space<vmem>>, vector<1x16x64xbf16>
    %208 = vector.shape_cast %207 : vector<1x16x64xbf16> to vector<16x64xbf16>
    %cst_122 = arith.constant dense<0.000000e+00> : vector<32x64xf32>
    %209 = tpu.matmul %206, %208, %cst_122 {dimension_numbers = #tpu.dot_dimension_numbers<[1], [0], [0], [1], [0, 0, 1, 1], [], []>} : vector<32x16xbf16>, vector<16x64xbf16>, vector<32x64xf32> -> vector<32x64xf32>
    %210 = arith.addf %205, %209 : vector<32x64xf32>
    %211 = vector.extract_strided_slice %196 {offsets = [96, 0], sizes = [32, 16], strides = [1, 1]} : vector<288x16xbf16> to vector<32x16xbf16>
    %c3_123 = arith.constant 3 : index
    %c0_124 = arith.constant 0 : index
    %c0_125 = arith.constant 0 : index
    %212 = vector.load %arg13[%c3_123, %c0_124, %c0_125] : memref<9x16x64xbf16, #tpu.memory_space<vmem>>, vector<1x16x64xbf16>
    %213 = vector.shape_cast %212 : vector<1x16x64xbf16> to vector<16x64xbf16>
    %cst_126 = arith.constant dense<0.000000e+00> : vector<32x64xf32>
    %214 = tpu.matmul %211, %213, %cst_126 {dimension_numbers = #tpu.dot_dimension_numbers<[1], [0], [0], [1], [0, 0, 1, 1], [], []>} : vector<32x16xbf16>, vector<16x64xbf16>, vector<32x64xf32> -> vector<32x64xf32>
    %215 = arith.addf %210, %214 : vector<32x64xf32>
    %216 = vector.extract_strided_slice %196 {offsets = [128, 0], sizes = [32, 16], strides = [1, 1]} : vector<288x16xbf16> to vector<32x16xbf16>
    %c4_127 = arith.constant 4 : index
    %c0_128 = arith.constant 0 : index
    %c0_129 = arith.constant 0 : index
    %217 = vector.load %arg13[%c4_127, %c0_128, %c0_129] : memref<9x16x64xbf16, #tpu.memory_space<vmem>>, vector<1x16x64xbf16>
    %218 = vector.shape_cast %217 : vector<1x16x64xbf16> to vector<16x64xbf16>
    %cst_130 = arith.constant dense<0.000000e+00> : vector<32x64xf32>
    %219 = tpu.matmul %216, %218, %cst_130 {dimension_numbers = #tpu.dot_dimension_numbers<[1], [0], [0], [1], [0, 0, 1, 1], [], []>} : vector<32x16xbf16>, vector<16x64xbf16>, vector<32x64xf32> -> vector<32x64xf32>
    %220 = arith.addf %215, %219 : vector<32x64xf32>
    %221 = vector.extract_strided_slice %196 {offsets = [160, 0], sizes = [32, 16], strides = [1, 1]} : vector<288x16xbf16> to vector<32x16xbf16>
    %c5_131 = arith.constant 5 : index
    %c0_132 = arith.constant 0 : index
    %c0_133 = arith.constant 0 : index
    %222 = vector.load %arg13[%c5_131, %c0_132, %c0_133] : memref<9x16x64xbf16, #tpu.memory_space<vmem>>, vector<1x16x64xbf16>
    %223 = vector.shape_cast %222 : vector<1x16x64xbf16> to vector<16x64xbf16>
    %cst_134 = arith.constant dense<0.000000e+00> : vector<32x64xf32>
    %224 = tpu.matmul %221, %223, %cst_134 {dimension_numbers = #tpu.dot_dimension_numbers<[1], [0], [0], [1], [0, 0, 1, 1], [], []>} : vector<32x16xbf16>, vector<16x64xbf16>, vector<32x64xf32> -> vector<32x64xf32>
    %225 = arith.addf %220, %224 : vector<32x64xf32>
    %226 = vector.extract_strided_slice %196 {offsets = [192, 0], sizes = [32, 16], strides = [1, 1]} : vector<288x16xbf16> to vector<32x16xbf16>
    %c6_135 = arith.constant 6 : index
    %c0_136 = arith.constant 0 : index
    %c0_137 = arith.constant 0 : index
    %227 = vector.load %arg13[%c6_135, %c0_136, %c0_137] : memref<9x16x64xbf16, #tpu.memory_space<vmem>>, vector<1x16x64xbf16>
    %228 = vector.shape_cast %227 : vector<1x16x64xbf16> to vector<16x64xbf16>
    %cst_138 = arith.constant dense<0.000000e+00> : vector<32x64xf32>
    %229 = tpu.matmul %226, %228, %cst_138 {dimension_numbers = #tpu.dot_dimension_numbers<[1], [0], [0], [1], [0, 0, 1, 1], [], []>} : vector<32x16xbf16>, vector<16x64xbf16>, vector<32x64xf32> -> vector<32x64xf32>
    %230 = arith.addf %225, %229 : vector<32x64xf32>
    %231 = vector.extract_strided_slice %196 {offsets = [224, 0], sizes = [32, 16], strides = [1, 1]} : vector<288x16xbf16> to vector<32x16xbf16>
    %c7_139 = arith.constant 7 : index
    %c0_140 = arith.constant 0 : index
    %c0_141 = arith.constant 0 : index
    %232 = vector.load %arg13[%c7_139, %c0_140, %c0_141] : memref<9x16x64xbf16, #tpu.memory_space<vmem>>, vector<1x16x64xbf16>
    %233 = vector.shape_cast %232 : vector<1x16x64xbf16> to vector<16x64xbf16>
    %cst_142 = arith.constant dense<0.000000e+00> : vector<32x64xf32>
    %234 = tpu.matmul %231, %233, %cst_142 {dimension_numbers = #tpu.dot_dimension_numbers<[1], [0], [0], [1], [0, 0, 1, 1], [], []>} : vector<32x16xbf16>, vector<16x64xbf16>, vector<32x64xf32> -> vector<32x64xf32>
    %235 = arith.addf %230, %234 : vector<32x64xf32>
    %236 = vector.extract_strided_slice %196 {offsets = [256, 0], sizes = [32, 16], strides = [1, 1]} : vector<288x16xbf16> to vector<32x16xbf16>
    %c8_143 = arith.constant 8 : index
    %c0_144 = arith.constant 0 : index
    %c0_145 = arith.constant 0 : index
    %237 = vector.load %arg13[%c8_143, %c0_144, %c0_145] : memref<9x16x64xbf16, #tpu.memory_space<vmem>>, vector<1x16x64xbf16>
    %238 = vector.shape_cast %237 : vector<1x16x64xbf16> to vector<16x64xbf16>
    %cst_146 = arith.constant dense<0.000000e+00> : vector<32x64xf32>
    %239 = tpu.matmul %236, %238, %cst_146 {dimension_numbers = #tpu.dot_dimension_numbers<[1], [0], [0], [1], [0, 0, 1, 1], [], []>} : vector<32x16xbf16>, vector<16x64xbf16>, vector<32x64xf32> -> vector<32x64xf32>
    %240 = arith.addf %235, %239 : vector<32x64xf32>
    %c0_147 = arith.constant 0 : index
    %c0_148 = arith.constant 0 : index
    %241 = vector.load %arg14[%c0_147, %c0_148] : memref<1x64xf32, #tpu.memory_space<vmem>>, vector<1x64xf32>
    %c0_149 = arith.constant 0 : index
    %c0_150 = arith.constant 0 : index
    %242 = vector.load %arg15[%c0_149, %c0_150] : memref<1x64xf32, #tpu.memory_space<vmem>>, vector<1x64xf32>
    %cst_151 = arith.constant dense<0.000000e+00> : vector<64xf32>
    %243 = vector.multi_reduction <add>, %240, %cst_151 [0] : vector<32x64xf32> to vector<64xf32>
    %244 = vector.shape_cast %243 : vector<64xf32> to vector<1x64xf32>
    %cst_152 = arith.constant 3.200000e+01 : f32
    %245 = vector.broadcast %cst_152 : f32 to vector<1x64xf32>
    %246 = arith.divf %244, %245 : vector<1x64xf32>
    %247 = arith.mulf %240, %240 : vector<32x64xf32>
    %cst_153 = arith.constant dense<0.000000e+00> : vector<64xf32>
    %248 = vector.multi_reduction <add>, %247, %cst_153 [0] : vector<32x64xf32> to vector<64xf32>
    %249 = vector.shape_cast %248 : vector<64xf32> to vector<1x64xf32>
    %cst_154 = arith.constant 3.200000e+01 : f32
    %250 = vector.broadcast %cst_154 : f32 to vector<1x64xf32>
    %251 = arith.divf %249, %250 : vector<1x64xf32>
    %252 = arith.mulf %246, %246 : vector<1x64xf32>
    %253 = arith.subf %251, %252 : vector<1x64xf32>
    %cst_155 = arith.constant 0.000000e+00 : f32
    %254 = vector.broadcast %cst_155 : f32 to vector<1x64xf32>
    %255 = arith.maximumf %253, %254 : vector<1x64xf32>
    %256 = vector.broadcast %246 : vector<1x64xf32> to vector<32x64xf32>
    %257 = arith.subf %240, %256 : vector<32x64xf32>
    %cst_156 = arith.constant 9.99999974E-6 : f32
    %258 = vector.broadcast %cst_156 : f32 to vector<1x64xf32>
    %259 = arith.addf %255, %258 : vector<1x64xf32>
    %260 = math.rsqrt %259 : vector<1x64xf32>
    %261 = arith.mulf %241, %260 : vector<1x64xf32>
    %262 = vector.broadcast %261 : vector<1x64xf32> to vector<32x64xf32>
    %263 = arith.mulf %257, %262 : vector<32x64xf32>
    %264 = vector.broadcast %242 : vector<1x64xf32> to vector<32x64xf32>
    %265 = arith.addf %263, %264 : vector<32x64xf32>
    %266 = tpu.iota {dimensions = array<i32: 0>} : vector<64x32xi32>
    %267 = tpu.iota {dimensions = array<i32: 1>} : vector<64x32xi32>
    %268 = arith.cmpi eq, %266, %267 : vector<64x32xi32>
    %269 = arith.extui %268 : vector<64x32xi1> to vector<64x32xi32>
    %270 = arith.sitofp %269 : vector<64x32xi32> to vector<64x32xf32>
    %cst_157 = arith.constant dense<0.000000e+00> : vector<32x32xf32>
    %271 = tpu.matmul %265, %270, %cst_157 {dimension_numbers = #tpu.dot_dimension_numbers<[1], [0], [0], [1], [0, 0, 1, 1], [], []>} : vector<32x64xf32>, vector<64x32xf32>, vector<32x32xf32> -> vector<32x32xf32>
    %c32_i32 = arith.constant 32 : i32
    %272 = vector.broadcast %c32_i32 : i32 to vector<64x32xi32>
    %273 = arith.addi %267, %272 : vector<64x32xi32>
    %274 = arith.cmpi eq, %266, %273 : vector<64x32xi32>
    %275 = arith.extui %274 : vector<64x32xi1> to vector<64x32xi32>
    %276 = arith.sitofp %275 : vector<64x32xi32> to vector<64x32xf32>
    %cst_158 = arith.constant dense<0.000000e+00> : vector<32x32xf32>
    %277 = tpu.matmul %265, %276, %cst_158 {dimension_numbers = #tpu.dot_dimension_numbers<[1], [0], [0], [1], [0, 0, 1, 1], [], []>} : vector<32x64xf32>, vector<64x32xf32>, vector<32x32xf32> -> vector<32x32xf32>
    %cst_159 = arith.constant 0.000000e+00 : f32
    %278 = vector.broadcast %cst_159 : f32 to vector<32x32xf32>
    %279 = arith.maximumf %271, %278 : vector<32x32xf32>
    %c0_160 = arith.constant 0 : index
    %c0_161 = arith.constant 0 : index
    %280 = vector.load %arg16[%c0_160, %c0_161] : memref<288x32xbf16, #tpu.memory_space<vmem>>, vector<288x32xbf16>
    %281 = arith.truncf %279 : vector<32x32xf32> to vector<32x32xbf16>
    %cst_162 = arith.constant dense<0.000000e+00> : vector<288x32xf32>
    %282 = tpu.matmul %280, %281, %cst_162 {dimension_numbers = #tpu.dot_dimension_numbers<[1], [0], [0], [1], [0, 0, 1, 1], [], []>} : vector<288x32xbf16>, vector<32x32xbf16>, vector<288x32xf32> -> vector<288x32xf32>
    %283 = arith.truncf %282 : vector<288x32xf32> to vector<288x32xbf16>
    %284 = vector.extract_strided_slice %283 {offsets = [0, 0], sizes = [32, 32], strides = [1, 1]} : vector<288x32xbf16> to vector<32x32xbf16>
    %c0_163 = arith.constant 0 : index
    %c0_164 = arith.constant 0 : index
    %c0_165 = arith.constant 0 : index
    %285 = vector.load %arg17[%c0_163, %c0_164, %c0_165] : memref<9x32x32xbf16, #tpu.memory_space<vmem>>, vector<1x32x32xbf16>
    %286 = vector.shape_cast %285 : vector<1x32x32xbf16> to vector<32x32xbf16>
    %cst_166 = arith.constant dense<0.000000e+00> : vector<32x32xf32>
    %287 = tpu.matmul %284, %286, %cst_166 {dimension_numbers = #tpu.dot_dimension_numbers<[1], [0], [0], [1], [0, 0, 1, 1], [], []>} : vector<32x32xbf16>, vector<32x32xbf16>, vector<32x32xf32> -> vector<32x32xf32>
    %288 = vector.extract_strided_slice %283 {offsets = [32, 0], sizes = [32, 32], strides = [1, 1]} : vector<288x32xbf16> to vector<32x32xbf16>
    %c1_167 = arith.constant 1 : index
    %c0_168 = arith.constant 0 : index
    %c0_169 = arith.constant 0 : index
    %289 = vector.load %arg17[%c1_167, %c0_168, %c0_169] : memref<9x32x32xbf16, #tpu.memory_space<vmem>>, vector<1x32x32xbf16>
    %290 = vector.shape_cast %289 : vector<1x32x32xbf16> to vector<32x32xbf16>
    %cst_170 = arith.constant dense<0.000000e+00> : vector<32x32xf32>
    %291 = tpu.matmul %288, %290, %cst_170 {dimension_numbers = #tpu.dot_dimension_numbers<[1], [0], [0], [1], [0, 0, 1, 1], [], []>} : vector<32x32xbf16>, vector<32x32xbf16>, vector<32x32xf32> -> vector<32x32xf32>
    %292 = arith.addf %287, %291 : vector<32x32xf32>
    %293 = vector.extract_strided_slice %283 {offsets = [64, 0], sizes = [32, 32], strides = [1, 1]} : vector<288x32xbf16> to vector<32x32xbf16>
    %c2_171 = arith.constant 2 : index
    %c0_172 = arith.constant 0 : index
    %c0_173 = arith.constant 0 : index
    %294 = vector.load %arg17[%c2_171, %c0_172, %c0_173] : memref<9x32x32xbf16, #tpu.memory_space<vmem>>, vector<1x32x32xbf16>
    %295 = vector.shape_cast %294 : vector<1x32x32xbf16> to vector<32x32xbf16>
    %cst_174 = arith.constant dense<0.000000e+00> : vector<32x32xf32>
    %296 = tpu.matmul %293, %295, %cst_174 {dimension_numbers = #tpu.dot_dimension_numbers<[1], [0], [0], [1], [0, 0, 1, 1], [], []>} : vector<32x32xbf16>, vector<32x32xbf16>, vector<32x32xf32> -> vector<32x32xf32>
    %297 = arith.addf %292, %296 : vector<32x32xf32>
    %298 = vector.extract_strided_slice %283 {offsets = [96, 0], sizes = [32, 32], strides = [1, 1]} : vector<288x32xbf16> to vector<32x32xbf16>
    %c3_175 = arith.constant 3 : index
    %c0_176 = arith.constant 0 : index
    %c0_177 = arith.constant 0 : index
    %299 = vector.load %arg17[%c3_175, %c0_176, %c0_177] : memref<9x32x32xbf16, #tpu.memory_space<vmem>>, vector<1x32x32xbf16>
    %300 = vector.shape_cast %299 : vector<1x32x32xbf16> to vector<32x32xbf16>
    %cst_178 = arith.constant dense<0.000000e+00> : vector<32x32xf32>
    %301 = tpu.matmul %298, %300, %cst_178 {dimension_numbers = #tpu.dot_dimension_numbers<[1], [0], [0], [1], [0, 0, 1, 1], [], []>} : vector<32x32xbf16>, vector<32x32xbf16>, vector<32x32xf32> -> vector<32x32xf32>
    %302 = arith.addf %297, %301 : vector<32x32xf32>
    %303 = vector.extract_strided_slice %283 {offsets = [128, 0], sizes = [32, 32], strides = [1, 1]} : vector<288x32xbf16> to vector<32x32xbf16>
    %c4_179 = arith.constant 4 : index
    %c0_180 = arith.constant 0 : index
    %c0_181 = arith.constant 0 : index
    %304 = vector.load %arg17[%c4_179, %c0_180, %c0_181] : memref<9x32x32xbf16, #tpu.memory_space<vmem>>, vector<1x32x32xbf16>
    %305 = vector.shape_cast %304 : vector<1x32x32xbf16> to vector<32x32xbf16>
    %cst_182 = arith.constant dense<0.000000e+00> : vector<32x32xf32>
    %306 = tpu.matmul %303, %305, %cst_182 {dimension_numbers = #tpu.dot_dimension_numbers<[1], [0], [0], [1], [0, 0, 1, 1], [], []>} : vector<32x32xbf16>, vector<32x32xbf16>, vector<32x32xf32> -> vector<32x32xf32>
    %307 = arith.addf %302, %306 : vector<32x32xf32>
    %308 = vector.extract_strided_slice %283 {offsets = [160, 0], sizes = [32, 32], strides = [1, 1]} : vector<288x32xbf16> to vector<32x32xbf16>
    %c5_183 = arith.constant 5 : index
    %c0_184 = arith.constant 0 : index
    %c0_185 = arith.constant 0 : index
    %309 = vector.load %arg17[%c5_183, %c0_184, %c0_185] : memref<9x32x32xbf16, #tpu.memory_space<vmem>>, vector<1x32x32xbf16>
    %310 = vector.shape_cast %309 : vector<1x32x32xbf16> to vector<32x32xbf16>
    %cst_186 = arith.constant dense<0.000000e+00> : vector<32x32xf32>
    %311 = tpu.matmul %308, %310, %cst_186 {dimension_numbers = #tpu.dot_dimension_numbers<[1], [0], [0], [1], [0, 0, 1, 1], [], []>} : vector<32x32xbf16>, vector<32x32xbf16>, vector<32x32xf32> -> vector<32x32xf32>
    %312 = arith.addf %307, %311 : vector<32x32xf32>
    %313 = vector.extract_strided_slice %283 {offsets = [192, 0], sizes = [32, 32], strides = [1, 1]} : vector<288x32xbf16> to vector<32x32xbf16>
    %c6_187 = arith.constant 6 : index
    %c0_188 = arith.constant 0 : index
    %c0_189 = arith.constant 0 : index
    %314 = vector.load %arg17[%c6_187, %c0_188, %c0_189] : memref<9x32x32xbf16, #tpu.memory_space<vmem>>, vector<1x32x32xbf16>
    %315 = vector.shape_cast %314 : vector<1x32x32xbf16> to vector<32x32xbf16>
    %cst_190 = arith.constant dense<0.000000e+00> : vector<32x32xf32>
    %316 = tpu.matmul %313, %315, %cst_190 {dimension_numbers = #tpu.dot_dimension_numbers<[1], [0], [0], [1], [0, 0, 1, 1], [], []>} : vector<32x32xbf16>, vector<32x32xbf16>, vector<32x32xf32> -> vector<32x32xf32>
    %317 = arith.addf %312, %316 : vector<32x32xf32>
    %318 = vector.extract_strided_slice %283 {offsets = [224, 0], sizes = [32, 32], strides = [1, 1]} : vector<288x32xbf16> to vector<32x32xbf16>
    %c7_191 = arith.constant 7 : index
    %c0_192 = arith.constant 0 : index
    %c0_193 = arith.constant 0 : index
    %319 = vector.load %arg17[%c7_191, %c0_192, %c0_193] : memref<9x32x32xbf16, #tpu.memory_space<vmem>>, vector<1x32x32xbf16>
    %320 = vector.shape_cast %319 : vector<1x32x32xbf16> to vector<32x32xbf16>
    %cst_194 = arith.constant dense<0.000000e+00> : vector<32x32xf32>
    %321 = tpu.matmul %318, %320, %cst_194 {dimension_numbers = #tpu.dot_dimension_numbers<[1], [0], [0], [1], [0, 0, 1, 1], [], []>} : vector<32x32xbf16>, vector<32x32xbf16>, vector<32x32xf32> -> vector<32x32xf32>
    %322 = arith.addf %317, %321 : vector<32x32xf32>
    %323 = vector.extract_strided_slice %283 {offsets = [256, 0], sizes = [32, 32], strides = [1, 1]} : vector<288x32xbf16> to vector<32x32xbf16>
    %c8_195 = arith.constant 8 : index
    %c0_196 = arith.constant 0 : index
    %c0_197 = arith.constant 0 : index
    %324 = vector.load %arg17[%c8_195, %c0_196, %c0_197] : memref<9x32x32xbf16, #tpu.memory_space<vmem>>, vector<1x32x32xbf16>
    %325 = vector.shape_cast %324 : vector<1x32x32xbf16> to vector<32x32xbf16>
    %cst_198 = arith.constant dense<0.000000e+00> : vector<32x32xf32>
    %326 = tpu.matmul %323, %325, %cst_198 {dimension_numbers = #tpu.dot_dimension_numbers<[1], [0], [0], [1], [0, 0, 1, 1], [], []>} : vector<32x32xbf16>, vector<32x32xbf16>, vector<32x32xf32> -> vector<32x32xf32>
    %327 = arith.addf %322, %326 : vector<32x32xf32>
    %c0_199 = arith.constant 0 : index
    %c0_200 = arith.constant 0 : index
    %328 = vector.load %arg18[%c0_199, %c0_200] : memref<1x32xf32, #tpu.memory_space<vmem>>, vector<1x32xf32>
    %c0_201 = arith.constant 0 : index
    %c0_202 = arith.constant 0 : index
    %329 = vector.load %arg19[%c0_201, %c0_202] : memref<1x32xf32, #tpu.memory_space<vmem>>, vector<1x32xf32>
    %cst_203 = arith.constant dense<0.000000e+00> : vector<32xf32>
    %330 = vector.multi_reduction <add>, %327, %cst_203 [0] : vector<32x32xf32> to vector<32xf32>
    %331 = vector.shape_cast %330 : vector<32xf32> to vector<1x32xf32>
    %cst_204 = arith.constant 3.200000e+01 : f32
    %332 = vector.broadcast %cst_204 : f32 to vector<1x32xf32>
    %333 = arith.divf %331, %332 : vector<1x32xf32>
    %334 = arith.mulf %327, %327 : vector<32x32xf32>
    %cst_205 = arith.constant dense<0.000000e+00> : vector<32xf32>
    %335 = vector.multi_reduction <add>, %334, %cst_205 [0] : vector<32x32xf32> to vector<32xf32>
    %336 = vector.shape_cast %335 : vector<32xf32> to vector<1x32xf32>
    %cst_206 = arith.constant 3.200000e+01 : f32
    %337 = vector.broadcast %cst_206 : f32 to vector<1x32xf32>
    %338 = arith.divf %336, %337 : vector<1x32xf32>
    %339 = arith.mulf %333, %333 : vector<1x32xf32>
    %340 = arith.subf %338, %339 : vector<1x32xf32>
    %cst_207 = arith.constant 0.000000e+00 : f32
    %341 = vector.broadcast %cst_207 : f32 to vector<1x32xf32>
    %342 = arith.maximumf %340, %341 : vector<1x32xf32>
    %343 = vector.broadcast %333 : vector<1x32xf32> to vector<32x32xf32>
    %344 = arith.subf %327, %343 : vector<32x32xf32>
    %cst_208 = arith.constant 9.99999974E-6 : f32
    %345 = vector.broadcast %cst_208 : f32 to vector<1x32xf32>
    %346 = arith.addf %342, %345 : vector<1x32xf32>
    %347 = math.rsqrt %346 : vector<1x32xf32>
    %348 = arith.mulf %328, %347 : vector<1x32xf32>
    %349 = vector.broadcast %348 : vector<1x32xf32> to vector<32x32xf32>
    %350 = arith.mulf %344, %349 : vector<32x32xf32>
    %351 = vector.broadcast %329 : vector<1x32xf32> to vector<32x32xf32>
    %352 = arith.addf %350, %351 : vector<32x32xf32>
    %353 = arith.addf %352, %277 : vector<32x32xf32>
    %cst_209 = arith.constant 0.000000e+00 : f32
    %354 = vector.broadcast %cst_209 : f32 to vector<32x32xf32>
    %355 = arith.maximumf %353, %354 : vector<32x32xf32>
    %c0_210 = arith.constant 0 : index
    %c0_211 = arith.constant 0 : index
    %356 = vector.load %arg20[%c0_210, %c0_211] : memref<2x32xf32, #tpu.memory_space<vmem>>, vector<2x32xf32>
    %cst_212 = arith.constant dense<0.000000e+00> : vector<2x32xf32>
    %357 = tpu.matmul %356, %355, %cst_212 {dimension_numbers = #tpu.dot_dimension_numbers<[1], [0], [0], [1], [0, 0, 1, 1], [], []>} : vector<2x32xf32>, vector<32x32xf32>, vector<2x32xf32> -> vector<2x32xf32>
    %c0_213 = arith.constant 0 : index
    %c0_214 = arith.constant 0 : index
    %358 = vector.load %arg24[%c0_213, %c0_214] : memref<2x32xf32, #tpu.memory_space<vmem>>, vector<2x32xf32>
    tpu.vector_store %arg24[%c0_213, %c0_214], %357 {strides = array<i32>} : memref<2x32xf32, #tpu.memory_space<vmem>>, vector<2x32xf32>,
    %c0_215 = arith.constant 0 : index
    %c0_216 = arith.constant 0 : index
    %359 = vector.load %arg21[%c0_215, %c0_216] : memref<32x10xf32, #tpu.memory_space<vmem>>, vector<32x10xf32>
    %cst_217 = arith.constant dense<0.000000e+00> : vector<2x10xf32>
    %360 = tpu.matmul %357, %359, %cst_217 {dimension_numbers = #tpu.dot_dimension_numbers<[1], [0], [0], [1], [0, 0, 1, 1], [], []>} : vector<2x32xf32>, vector<32x10xf32>, vector<2x10xf32> -> vector<2x10xf32>
    %c0_218 = arith.constant 0 : index
    %c0_219 = arith.constant 0 : index
    %361 = vector.load %arg22[%c0_218, %c0_219] : memref<1x10xf32, #tpu.memory_space<vmem>>, vector<1x10xf32>
    %362 = vector.broadcast %361 : vector<1x10xf32> to vector<2x10xf32>
    %363 = arith.addf %360, %362 : vector<2x10xf32>
    %c0_220 = arith.constant 0 : index
    %c0_221 = arith.constant 0 : index
    %364 = vector.load %arg23[%c0_220, %c0_221] : memref<2x10xf32, #tpu.memory_space<vmem>>, vector<2x10xf32>
    tpu.vector_store %arg23[%c0_220, %c0_221], %363 {strides = array<i32>} : memref<2x10xf32, #tpu.memory_space<vmem>>, vector<2x10xf32>,
    return
  }
}

</mosaic_0001>

<llo_original>
// kernel: spectral_resnet6_forward.1
$region0: #{spectral_resnet6_forward.1}
  #allocation0 [shape = 'u32[]', space=smem, size = 0x4, offset = 0x4, fixed_abs, tag = 'smem constant byte address 0x4 - core index']
  #allocation1 [shape = 'u32[144,128]{1,0:T(1,128)}', space=vmem, size = 0x12000, scoped, tag = 'internal scratch']
  %s0 = inlined_call_operand.vmem [shape: bf16[512,75], index: 0, kind: input, shape index: {}]
  %s1 = inlined_call_operand.vmem [shape: bf16[75,6], index: 1, kind: input, shape index: {}]
  %s2 = inlined_call_operand.vmem [shape: f32[1,6], index: 2, kind: input, shape index: {}]
  %s3 = inlined_call_operand.vmem [shape: f32[1,6], index: 3, kind: input, shape index: {}]
  %s4 = inlined_call_operand.vmem [shape: bf16[1152,512], index: 4, kind: input, shape index: {}]
  %s5 = inlined_call_operand.vmem [shape: bf16[9,6,32], index: 5, kind: input, shape index: {}]
  %s6 = inlined_call_operand.vmem [shape: f32[1,32], index: 6, kind: input, shape index: {}]
  %s7 = inlined_call_operand.vmem [shape: f32[1,32], index: 7, kind: input, shape index: {}]
  %s8 = inlined_call_operand.vmem [shape: bf16[1152,128], index: 8, kind: input, shape index: {}]
  %s9 = inlined_call_operand.vmem [shape: bf16[9,16,16], index: 9, kind: input, shape index: {}]
  %s10 = inlined_call_operand.vmem [shape: f32[1,16], index: 10, kind: input, shape index: {}]
  %s11 = inlined_call_operand.vmem [shape: f32[1,16], index: 11, kind: input, shape index: {}]
  %s12 = inlined_call_operand.vmem [shape: bf16[288,128], index: 12, kind: input, shape index: {}]
  %s13 = inlined_call_operand.vmem [shape: bf16[9,16,64], index: 13, kind: input, shape index: {}]
  %s14 = inlined_call_operand.vmem [shape: f32[1,64], index: 14, kind: input, shape index: {}]
  %s15 = inlined_call_operand.vmem [shape: f32[1,64], index: 15, kind: input, shape index: {}]
  %s16 = inlined_call_operand.vmem [shape: bf16[288,32], index: 16, kind: input, shape index: {}]
  %s17 = inlined_call_operand.vmem [shape: bf16[9,32,32], index: 17, kind: input, shape index: {}]
  %s18 = inlined_call_operand.vmem [shape: f32[1,32], index: 18, kind: input, shape index: {}]
  %s19 = inlined_call_operand.vmem [shape: f32[1,32], index: 19, kind: input, shape index: {}]
  %s20 = inlined_call_operand.vmem [shape: f32[2,32], index: 20, kind: input, shape index: {}]
  %s21 = inlined_call_operand.vmem [shape: f32[32,10], index: 21, kind: input, shape index: {}]
  %s22 = inlined_call_operand.vmem [shape: f32[1,10], index: 22, kind: input, shape index: {}]
  %s23 = inlined_call_operand.hbm [shape: f32[2,10], index: 23, kind: output, shape index: {0}]
  %s24 = inlined_call_operand.hbm [shape: f32[2,32], index: 24, kind: output, shape index: {1}]
  %25 = xla_tuple %s23, %s24
  %s26 = sld [smem:[#allocation0]]
  $region110: #{spectral_resnet6_forward.1} parent=0
    _
  %s28 = ssub.s32 1, %s26
  %s29 = scalar_select 0, %s28, %s26
  $region1: #{spectral_resnet6_forward.1} parent=0
    #allocation2 [shape = 'u8[1024]{0}', space=vmem, size = 0x400, scoped, tag = 'output window, operand 0, single buffered']
    #allocation3 [shape = 's32[1]{0}', space=sflag, size = 0x4, scoped, tag = 'scoped memory for spectral_resnet6_forward.1']
    #allocation4 [shape = 'u8[1024]{0}', space=vmem, size = 0x400, scoped, tag = 'output window, operand 1, single buffered']
    #allocation5 [shape = 's32[1]{0}', space=sflag, size = 0x4, scoped, tag = 'scoped memory for spectral_resnet6_forward.1']
    %30 = vsyncpa [#allocation3], 0
    %31 = vsyncpa [#allocation5], 0
    // Predicated region
    $region2: #{spectral_resnet6_forward.1} parent=1 // pred_check
      _
    $region3: #{spectral_resnet6_forward.1} parent=1 // pred_check_branch
      %33 = sbr.rel (0) target = $region5
    $region4: #{spectral_resnet6_forward.1} parent=1 // pred_region
      _
    $region5: #{spectral_resnet6_forward.1} parent=1 // pred_fallthru
      _
    // Predicated region
    $region6: #{spectral_resnet6_forward.1} parent=1 // pred_check
      _
    $region7: #{spectral_resnet6_forward.1} parent=1 // pred_check_branch
      %35 = sbr.rel (0) target = $region9
    $region8: #{spectral_resnet6_forward.1} parent=1 // pred_region
      _
    $region9: #{spectral_resnet6_forward.1} parent=1 // pred_fallthru
      _
    // Predicated region
    $region10: #{spectral_resnet6_forward.1} parent=1 // pred_check
      _
    $region11: #{spectral_resnet6_forward.1} parent=1 // pred_check_branch
      %37 = sbr.rel (0) target = $region13
    $region12: #{spectral_resnet6_forward.1} parent=1 // pred_region
      _
    $region13: #{spectral_resnet6_forward.1} parent=1 // pred_fallthru
      _
    // Predicated region
    $region14: #{spectral_resnet6_forward.1} parent=1 // pred_check
      _
    $region15: #{spectral_resnet6_forward.1} parent=1 // pred_check_branch
      %39 = sbr.rel (0) target = $region17
    $region16: #{spectral_resnet6_forward.1} parent=1 // pred_region
      _
    $region17: #{spectral_resnet6_forward.1} parent=1 // pred_fallthru
      _
    // Predicated region
    $region18: #{spectral_resnet6_forward.1} parent=1 // pred_check
      _
    $region19: #{spectral_resnet6_forward.1} parent=1 // pred_check_branch
      %41 = sbr.rel (0) target = $region21
    $region20: #{spectral_resnet6_forward.1} parent=1 // pred_region
      _
    $region21: #{spectral_resnet6_forward.1} parent=1 // pred_fallthru
      _
    // Predicated region
    $region22: #{spectral_resnet6_forward.1} parent=1 // pred_check
      _
    $region23: #{spectral_resnet6_forward.1} parent=1 // pred_check_branch
      %43 = sbr.rel (0) target = $region25
    $region24: #{spectral_resnet6_forward.1} parent=1 // pred_region
      _
    $region25: #{spectral_resnet6_forward.1} parent=1 // pred_fallthru
      _
    // Predicated region
    $region26: #{spectral_resnet6_forward.1} parent=1 // pred_check
      _
    $region27: #{spectral_resnet6_forward.1} parent=1 // pred_check_branch
      %45 = sbr.rel (0) target = $region29
    $region28: #{spectral_resnet6_forward.1} parent=1 // pred_region
      _
    $region29: #{spectral_resnet6_forward.1} parent=1 // pred_fallthru
      _
    // Predicated region
    $region30: #{spectral_resnet6_forward.1} parent=1 // pred_check
      _
    $region31: #{spectral_resnet6_forward.1} parent=1 // pred_check_branch
      %47 = sbr.rel (0) target = $region33
    $region32: #{spectral_resnet6_forward.1} parent=1 // pred_region
      _
    $region33: #{spectral_resnet6_forward.1} parent=1 // pred_fallthru
      _
    // Predicated region
    $region34: #{spectral_resnet6_forward.1} parent=1 // pred_check
      _
    $region35: #{spectral_resnet6_forward.1} parent=1 // pred_check_branch
      %49 = sbr.rel (0) target = $region37
    $region36: #{spectral_resnet6_forward.1} parent=1 // pred_region
      _
    $region37: #{spectral_resnet6_forward.1} parent=1 // pred_fallthru
      _
    // Predicated region
    $region38: #{spectral_resnet6_forward.1} parent=1 // pred_check
      _
    $region39: #{spectral_resnet6_forward.1} parent=1 // pred_check_branch
      %51 = sbr.rel (0) target = $region41
    $region40: #{spectral_resnet6_forward.1} parent=1 // pred_region
      _
    $region41: #{spectral_resnet6_forward.1} parent=1 // pred_fallthru
      _
    // Predicated region
    $region42: #{spectral_resnet6_forward.1} parent=1 // pred_check
      _
    $region43: #{spectral_resnet6_forward.1} parent=1 // pred_check_branch
      %53 = sbr.rel (0) target = $region45
    $region44: #{spectral_resnet6_forward.1} parent=1 // pred_region
      _
    $region45: #{spectral_resnet6_forward.1} parent=1 // pred_fallthru
      _
    // Predicated region
    $region46: #{spectral_resnet6_forward.1} parent=1 // pred_check
      _
    $region47: #{spectral_resnet6_forward.1} parent=1 // pred_check_branch
      %55 = sbr.rel (0) target = $region49
    $region48: #{spectral_resnet6_forward.1} parent=1 // pred_region
      _
    $region49: #{spectral_resnet6_forward.1} parent=1 // pred_fallthru
      _
    // Predicated region
    $region50: #{spectral_resnet6_forward.1} parent=1 // pred_check
      _
    $region51: #{spectral_resnet6_forward.1} parent=1 // pred_check_branch
      %57 = sbr.rel (0) target = $region53
    $region52: #{spectral_resnet6_forward.1} parent=1 // pred_region
      _
    $region53: #{spectral_resnet6_forward.1} parent=1 // pred_fallthru
      _
    // Predicated region
    $region54: #{spectral_resnet6_forward.1} parent=1 // pred_check
      _
    $region55: #{spectral_resnet6_forward.1} parent=1 // pred_check_branch
      %59 = sbr.rel (0) target = $region57
    $region56: #{spectral_resnet6_forward.1} parent=1 // pred_region
      _
    $region57: #{spectral_resnet6_forward.1} parent=1 // pred_fallthru
      _
    // Predicated region
    $region58: #{spectral_resnet6_forward.1} parent=1 // pred_check
      _
    $region59: #{spectral_resnet6_forward.1} parent=1 // pred_check_branch
      %61 = sbr.rel (0) target = $region61
    $region60: #{spectral_resnet6_forward.1} parent=1 // pred_region
      _
    $region61: #{spectral_resnet6_forward.1} parent=1 // pred_fallthru
      _
    // Predicated region
    $region62: #{spectral_resnet6_forward.1} parent=1 // pred_check
      _
    $region63: #{spectral_resnet6_forward.1} parent=1 // pred_check_branch
      %63 = sbr.rel (0) target = $region65
    $region64: #{spectral_resnet6_forward.1} parent=1 // pred_region
      _
    $region65: #{spectral_resnet6_forward.1} parent=1 // pred_fallthru
      _
    // Predicated region
    $region66: #{spectral_resnet6_forward.1} parent=1 // pred_check
      _
    $region67: #{spectral_resnet6_forward.1} parent=1 // pred_check_branch
      %65 = sbr.rel (0) target = $region69
    $region68: #{spectral_resnet6_forward.1} parent=1 // pred_region
      _
    $region69: #{spectral_resnet6_forward.1} parent=1 // pred_fallthru
      _
    // Predicated region
    $region70: #{spectral_resnet6_forward.1} parent=1 // pred_check
      _
    $region71: #{spectral_resnet6_forward.1} parent=1 // pred_check_branch
      %67 = sbr.rel (0) target = $region73
    $region72: #{spectral_resnet6_forward.1} parent=1 // pred_region
      _
    $region73: #{spectral_resnet6_forward.1} parent=1 // pred_fallthru
      _
    // Predicated region
    $region74: #{spectral_resnet6_forward.1} parent=1 // pred_check
      _
    $region75: #{spectral_resnet6_forward.1} parent=1 // pred_check_branch
      %69 = sbr.rel (0) target = $region77
    $region76: #{spectral_resnet6_forward.1} parent=1 // pred_region
      _
    $region77: #{spectral_resnet6_forward.1} parent=1 // pred_fallthru
      _
    // Predicated region
    $region78: #{spectral_resnet6_forward.1} parent=1 // pred_check
      _
    $region79: #{spectral_resnet6_forward.1} parent=1 // pred_check_branch
      %71 = sbr.rel (0) target = $region81
    $region80: #{spectral_resnet6_forward.1} parent=1 // pred_region
      _
    $region81: #{spectral_resnet6_forward.1} parent=1 // pred_fallthru
      _
    // Predicated region
    $region82: #{spectral_resnet6_forward.1} parent=1 // pred_check
      _
    $region83: #{spectral_resnet6_forward.1} parent=1 // pred_check_branch
      %73 = sbr.rel (0) target = $region85
    $region84: #{spectral_resnet6_forward.1} parent=1 // pred_region
      _
    $region85: #{spectral_resnet6_forward.1} parent=1 // pred_fallthru
      _
    // Predicated region
    $region86: #{spectral_resnet6_forward.1} parent=1 // pred_check
      _
    $region87: #{spectral_resnet6_forward.1} parent=1 // pred_check_branch
      %75 = sbr.rel (0) target = $region89
    $region88: #{spectral_resnet6_forward.1} parent=1 // pred_region
      _
    $region89: #{spectral_resnet6_forward.1} parent=1 // pred_fallthru
      _
    // Predicated region
    $region90: #{spectral_resnet6_forward.1} parent=1 // pred_check
      _
    $region91: #{spectral_resnet6_forward.1} parent=1 // pred_check_branch
      %77 = sbr.rel (0) target = $region93
    $region92: #{spectral_resnet6_forward.1} parent=1 // pred_region
      _
    $region93: #{spectral_resnet6_forward.1} parent=1 // pred_fallthru
      _
    %v79 = vld [vmem:[%s0] sm:$0xf]
    %v80 = vld [vmem:[%s0 + $0x4] sm:$0xf]
    %v81 = vld [vmem:[%s0 + $0x8] sm:$0xf]
    %v82 = vld [vmem:[%s0 + $0xc] sm:$0xf]
    %v83 = vld [vmem:[%s0 + $0x10] sm:$0xf]
    %v84 = vld [vmem:[%s0 + $0x14] sm:$0xf]
    %v85 = vld [vmem:[%s0 + $0x18] sm:$0xf]
    %v86 = vld [vmem:[%s0 + $0x1c] sm:$0xf]
    %v87 = vld [vmem:[%s0 + $0x20] sm:$0xf]
    %v88 = vld [vmem:[%s0 + $0x24] sm:$0xf]
    %v89 = vld [vmem:[%s0 + $0x28] sm:$0xf]
    %v90 = vld [vmem:[%s0 + $0x2c] sm:$0xf]
    %v91 = vld [vmem:[%s0 + $0x30] sm:$0xf]
    %v92 = vld [vmem:[%s0 + $0x34] sm:$0xf]
    %v93 = vld [vmem:[%s0 + $0x38] sm:$0xf]
    %v94 = vld [vmem:[%s0 + $0x3c] sm:$0xf]
    %v95 = vld [vmem:[%s0 + $0x40] sm:$0xf]
    %v96 = vld [vmem:[%s0 + $0x44] sm:$0xf]
    %v97 = vld [vmem:[%s0 + $0x48] sm:$0xf]
    %v98 = vld [vmem:[%s0 + $0x4c] sm:$0xf]
    %v99 = vld [vmem:[%s0 + $0x50] sm:$0xf]
    %v100 = vld [vmem:[%s0 + $0x54] sm:$0xf]
    %v101 = vld [vmem:[%s0 + $0x58] sm:$0xf]
    %v102 = vld [vmem:[%s0 + $0x5c] sm:$0xf]
    %v103 = vld [vmem:[%s0 + $0x60] sm:$0xf]
    %v104 = vld [vmem:[%s0 + $0x64] sm:$0xf]
    %v105 = vld [vmem:[%s0 + $0x68] sm:$0xf]
    %v106 = vld [vmem:[%s0 + $0x6c] sm:$0xf]
    %v107 = vld [vmem:[%s0 + $0x70] sm:$0xf]
    %v108 = vld [vmem:[%s0 + $0x74] sm:$0xf]
    %v109 = vld [vmem:[%s0 + $0x78] sm:$0xf]
    %v110 = vld [vmem:[%s0 + $0x7c] sm:$0xf]
    %v111 = vld [vmem:[%s0 + $0x80] sm:$0xf]
    %v112 = vld [vmem:[%s0 + $0x84] sm:$0xf]
    %v113 = vld [vmem:[%s0 + $0x88] sm:$0xf]
    %v114 = vld [vmem:[%s0 + $0x8c] sm:$0xf]
    %v115 = vld [vmem:[%s0 + $0x90] sm:$0xf]
    %v116 = vld [vmem:[%s0 + $0x94] sm:$0xf]
    %v117 = vld [vmem:[%s0 + $0x98] sm:$0xf]
    %v118 = vld [vmem:[%s0 + $0x9c] sm:$0xf]
    %v119 = vld [vmem:[%s0 + $0xa0] sm:$0xf]
    %v120 = vld [vmem:[%s0 + $0xa4] sm:$0xf]
    %v121 = vld [vmem:[%s0 + $0xa8] sm:$0xf]
    %v122 = vld [vmem:[%s0 + $0xac] sm:$0xf]
    %v123 = vld [vmem:[%s0 + $0xb0] sm:$0xf]
    %v124 = vld [vmem:[%s0 + $0xb4] sm:$0xf]
    %v125 = vld [vmem:[%s0 + $0xb8] sm:$0xf]
    %v126 = vld [vmem:[%s0 + $0xbc] sm:$0xf]
    %v127 = vld [vmem:[%s0 + $0xc0] sm:$0xf]
    %v128 = vld [vmem:[%s0 + $0xc4] sm:$0xf]
    %v129 = vld [vmem:[%s0 + $0xc8] sm:$0xf]
    %v130 = vld [vmem:[%s0 + $0xcc] sm:$0xf]
    %v131 = vld [vmem:[%s0 + $0xd0] sm:$0xf]
    %v132 = vld [vmem:[%s0 + $0xd4] sm:$0xf]
    %v133 = vld [vmem:[%s0 + $0xd8] sm:$0xf]
    %v134 = vld [vmem:[%s0 + $0xdc] sm:$0xf]
    %v135 = vld [vmem:[%s0 + $0xe0] sm:$0xf]
    %v136 = vld [vmem:[%s0 + $0xe4] sm:$0xf]
    %v137 = vld [vmem:[%s0 + $0xe8] sm:$0xf]
    %v138 = vld [vmem:[%s0 + $0xec] sm:$0xf]
    %v139 = vld [vmem:[%s0 + $0xf0] sm:$0xf]
    %v140 = vld [vmem:[%s0 + $0xf4] sm:$0xf]
    %v141 = vld [vmem:[%s0 + $0xf8] sm:$0xf]
    %v142 = vld [vmem:[%s0 + $0xfc] sm:$0xf]
    %v143 = vld [vmem:[%s1] sm:$0xf]
    %v144 = vld [vmem:[%s1 + $0x4] sm:$0xf]
    %v145 = vld [vmem:[%s1 + $0x8] sm:$0xf]
    %v146 = vld [vmem:[%s1 + $0xc] sm:$0xf]
    %v147 = vld [vmem:[%s1 + $0x10] sm:$0xf]
    %v148 = vld [vmem:[%s1 + $0x14] sm:$0xf]
    %v149 = vld [vmem:[%s1 + $0x18] sm:$0xf]
    %v150 = vld [vmem:[%s1 + $0x1c] sm:$0xf]
    %v151 = vld [vmem:[%s1 + $0x20] sm:$0xf]
    %v152 = vld [vmem:[%s1 + $0x24] sm:$0x3]
    %v217 = vunpack.c.l.b16 %v79
    %v218 = vunpack.c.l.b16 %v80
    %v219 = vunpack.c.l.b16 %v81
    %v220 = vunpack.c.l.b16 %v82
    %v221 = vunpack.c.l.b16 %v83
    %v222 = vunpack.c.l.b16 %v84
    %v223 = vunpack.c.l.b16 %v85
    %v224 = vunpack.c.l.b16 %v86
    %v225 = vunpack.c.l.b16 %v87
    %v226 = vunpack.c.l.b16 %v88
    %v227 = vunpack.c.l.b16 %v89
    %v228 = vunpack.c.l.b16 %v90
    %v229 = vunpack.c.l.b16 %v91
    %v230 = vunpack.c.l.b16 %v92
    %v231 = vunpack.c.l.b16 %v93
    %v232 = vunpack.c.l.b16 %v94
    %v233 = vunpack.c.l.b16 %v95
    %v234 = vunpack.c.l.b16 %v96
    %v235 = vunpack.c.l.b16 %v97
    %v236 = vunpack.c.l.b16 %v98
    %v237 = vunpack.c.l.b16 %v99
    %v238 = vunpack.c.l.b16 %v100
    %v239 = vunpack.c.l.b16 %v101
    %v240 = vunpack.c.l.b16 %v102
    %v241 = vunpack.c.l.b16 %v103
    %v242 = vunpack.c.l.b16 %v104
    %v243 = vunpack.c.l.b16 %v105
    %v244 = vunpack.c.l.b16 %v106
    %v245 = vunpack.c.l.b16 %v107
    %v246 = vunpack.c.l.b16 %v108
    %v247 = vunpack.c.l.b16 %v109
    %v248 = vunpack.c.l.b16 %v110
    %v249 = vunpack.c.l.b16 %v111
    %v250 = vunpack.c.l.b16 %v112
    %v251 = vunpack.c.l.b16 %v113
    %v252 = vunpack.c.l.b16 %v114
    %v253 = vunpack.c.l.b16 %v115
    %v254 = vunpack.c.l.b16 %v116
    %v255 = vunpack.c.l.b16 %v117
    %v256 = vunpack.c.l.b16 %v118
    %v257 = vunpack.c.l.b16 %v119
    %v258 = vunpack.c.l.b16 %v120
    %v259 = vunpack.c.l.b16 %v121
    %v260 = vunpack.c.l.b16 %v122
    %v261 = vunpack.c.l.b16 %v123
    %v262 = vunpack.c.l.b16 %v124
    %v263 = vunpack.c.l.b16 %v125
    %v264 = vunpack.c.l.b16 %v126
    %v265 = vunpack.c.l.b16 %v127
    %v266 = vunpack.c.l.b16 %v128
    %v267 = vunpack.c.l.b16 %v129
    %v268 = vunpack.c.l.b16 %v130
    %v269 = vunpack.c.l.b16 %v131
    %v270 = vunpack.c.l.b16 %v132
    %v271 = vunpack.c.l.b16 %v133
    %v272 = vunpack.c.l.b16 %v134
    %v273 = vunpack.c.l.b16 %v135
    %v274 = vunpack.c.l.b16 %v136
    %v275 = vunpack.c.l.b16 %v137
    %v276 = vunpack.c.l.b16 %v138
    %v277 = vunpack.c.l.b16 %v139
    %v278 = vunpack.c.l.b16 %v140
    %v279 = vunpack.c.l.b16 %v141
    %v280 = vunpack.c.l.b16 %v142
    %v281 = vpack.c.b16 %v218, %v217
    %v282 = vpack.c.b16 %v220, %v219
    %v283 = vpack.c.b16 %v222, %v221
    %v284 = vpack.c.b16 %v224, %v223
    %v285 = vpack.c.b16 %v226, %v225
    %v286 = vpack.c.b16 %v228, %v227
    %v287 = vpack.c.b16 %v230, %v229
    %v288 = vpack.c.b16 %v232, %v231
    %v289 = vpack.c.b16 %v234, %v233
    %v290 = vpack.c.b16 %v236, %v235
    %v291 = vpack.c.b16 %v238, %v237
    %v292 = vpack.c.b16 %v240, %v239
    %v293 = vpack.c.b16 %v242, %v241
    %v294 = vpack.c.b16 %v244, %v243
    %v295 = vpack.c.b16 %v246, %v245
    %v296 = vpack.c.b16 %v248, %v247
    %v297 = vpack.c.b16 %v250, %v249
    %v298 = vpack.c.b16 %v252, %v251
    %v299 = vpack.c.b16 %v254, %v253
    %v300 = vpack.c.b16 %v256, %v255
    %v301 = vpack.c.b16 %v258, %v257
    %v302 = vpack.c.b16 %v260, %v259
    %v303 = vpack.c.b16 %v262, %v261
    %v304 = vpack.c.b16 %v264, %v263
    %v305 = vpack.c.b16 %v266, %v265
    %v306 = vpack.c.b16 %v268, %v267
    %v307 = vpack.c.b16 %v270, %v269
    %v308 = vpack.c.b16 %v272, %v271
    %v309 = vpack.c.b16 %v274, %v273
    %v310 = vpack.c.b16 %v276, %v275
    %v311 = vpack.c.b16 %v278, %v277
    %v312 = vpack.c.b16 %v280, %v279
    %v323 = vunpack.c.l.b16 %v143
    %v324 = vunpack.c.l.b16 %v144
    %v325 = vunpack.c.l.b16 %v145
    %v326 = vunpack.c.l.b16 %v146
    %v327 = vunpack.c.l.b16 %v147
    %v328 = vunpack.c.l.b16 %v148
    %v329 = vunpack.c.l.b16 %v149
    %v330 = vunpack.c.l.b16 %v150
    %v331 = vunpack.c.l.b16 %v151
    %v332 = vunpack.c.l.b16 %v152
    %v333 = vpack.c.b16 %v324, %v323
    %v334 = vpack.c.b16 %v326, %v325
    %v335 = vpack.c.b16 %v328, %v327
    %v336 = vpack.c.b16 %v330, %v329
    %v337 = vpack.c.b16 %v332, %v331
    %vm342 = vcmask 613376
    %v344 = vsel %vm342, %v281, 0
    %v347 = vsel %vm342, %v282, 0
    %v350 = vsel %vm342, %v283, 0
    %v353 = vsel %vm342, %v284, 0
    %v356 = vsel %vm342, %v285, 0
    %v359 = vsel %vm342, %v286, 0
    %v362 = vsel %vm342, %v287, 0
    %v365 = vsel %vm342, %v288, 0
    %v368 = vsel %vm342, %v289, 0
    %v371 = vsel %vm342, %v290, 0
    %v374 = vsel %vm342, %v291, 0
    %v377 = vsel %vm342, %v292, 0
    %v380 = vsel %vm342, %v293, 0
    %v383 = vsel %vm342, %v294, 0
    %v386 = vsel %vm342, %v295, 0
    %v389 = vsel %vm342, %v296, 0
    %v392 = vsel %vm342, %v297, 0
    %v395 = vsel %vm342, %v298, 0
    %v398 = vsel %vm342, %v299, 0
    %v401 = vsel %vm342, %v300, 0
    %v404 = vsel %vm342, %v301, 0
    %v407 = vsel %vm342, %v302, 0
    %v410 = vsel %vm342, %v303, 0
    %v413 = vsel %vm342, %v304, 0
    %v416 = vsel %vm342, %v305, 0
    %v419 = vsel %vm342, %v306, 0
    %v422 = vsel %vm342, %v307, 0
    %v425 = vsel %vm342, %v308, 0
    %v428 = vsel %vm342, %v309, 0
    %v431 = vsel %vm342, %v310, 0
    %v434 = vsel %vm342, %v311, 0
    %v437 = vsel %vm342, %v312, 0
    %vm439 = vcmask 1044480
    %vm440 = vcmask 1045504
    %v441 = vsel %vm439, 4294967295, 65535
    %v442 = vsel %vm440, %v441, 0
    %v444 = vand.u32 %v337, %v442
    %446 = vmatprep.subr.bf16.mxu0 0
    %447 = vmatpush1.bf16.msra.mxu0 %v333
    %448 = vmatprep.subr.bf16.mxu0 0
    %449 = vmatpush1.bf16.msra.mxu0 %v334
    %450 = vmatprep.subr.bf16.mxu0 0
    %451 = vmatpush1.bf16.msra.mxu0 %v335
    %452 = vmatprep.subr.bf16.mxu0 0
    %453 = vmatpush1.bf16.msra.mxu0 %v336
    %454 = vmatprep.subr.bf16.mxu0 0
    %455 = vmatpush1.bf16.msra.mxu0 %v444
    %456 = vmatprep.subr.bf16.mxu0 0
    %457 = vmatpush1.bf16.msra.mxu0 0
    %458 = vmatprep.subr.bf16.mxu0 0
    %459 = vmatpush1.bf16.msra.mxu0 0
    %460 = vmatprep.subr.bf16.mxu0 0
    %461 = vmatpush1.bf16.msra.mxu0 0
    %462 = vmatprep.subr.bf16.mxu0 0
    %463 = vmatpush1.bf16.msra.mxu0 0
    %464 = vmatprep.subr.bf16.mxu0 0
    %465 = vmatpush1.bf16.msra.mxu0 0
    %466 = vmatprep.subr.bf16.mxu0 0
    %467 = vmatpush1.bf16.msra.mxu0 0
    %468 = vmatprep.subr.bf16.mxu0 0
    %469 = vmatpush1.bf16.msra.mxu0 0
    %470 = vmatprep.subr.bf16.mxu0 0
    %471 = vmatpush1.bf16.msra.mxu0 0
    %472 = vmatprep.subr.bf16.mxu0 0
    %473 = vmatpush1.bf16.msra.mxu0 0
    %474 = vmatprep.subr.bf16.mxu0 0
    %475 = vmatpush1.bf16.msra.mxu0 0
    %476 = vmatprep.subr.bf16.mxu0 0
    %477 = vmatpush1.bf16.msra.mxu0 0
    %478 = vmatprep.mubr.bf16.mxu0 0
    %479 = vmatmul.mubr.bf16.gmra.mrb[0].mxu0 %v344
    %v480 = vpop.f32.mrb[0].mxu0
    %v481 = vadd.f32 0.0, %v480
    %v482 = vpop.f32.mrb[0].mxu0
    %v483 = vpop.f32.mrb[0].mxu0
    %v484 = vadd.f32 0.0, %v483
    %v485 = vpop.f32.mrb[0].mxu0
    %486 = vmatprep.mubr.bf16.mxu0 0
    %487 = vmatmul.mubr.bf16.gmra.mrb[0].mxu0 %v347
    %v488 = vpop.f32.mrb[0].mxu0
    %v489 = vadd.f32 0.0, %v488
    %v490 = vpop.f32.mrb[0].mxu0
    %v491 = vpop.f32.mrb[0].mxu0
    %v492 = vadd.f32 0.0, %v491
    %v493 = vpop.f32.mrb[0].mxu0
    %494 = vmatprep.mubr.bf16.mxu0 0
    %495 = vmatmul.mubr.bf16.gmra.mrb[0].mxu0 %v350
    %v496 = vpop.f32.mrb[0].mxu0
    %v497 = vadd.f32 0.0, %v496
    %v498 = vpop.f32.mrb[0].mxu0
    %v499 = vpop.f32.mrb[0].mxu0
    %v500 = vadd.f32 0.0, %v499
    %v501 = vpop.f32.mrb[0].mxu0
    %502 = vmatprep.mubr.bf16.mxu0 0
    %503 = vmatmul.mubr.bf16.gmra.mrb[0].mxu0 %v353
    %v504 = vpop.f32.mrb[0].mxu0
    %v505 = vadd.f32 0.0, %v504
    %v506 = vpop.f32.mrb[0].mxu0
    %v507 = vpop.f32.mrb[0].mxu0
    %v508 = vadd.f32 0.0, %v507
    %v509 = vpop.f32.mrb[0].mxu0
    %510 = vmatprep.mubr.bf16.mxu0 0
    %511 = vmatmul.mubr.bf16.gmra.mrb[0].mxu0 %v356
    %v512 = vpop.f32.mrb[0].mxu0
    %v513 = vadd.f32 0.0, %v512
    %v514 = vpop.f32.mrb[0].mxu0
    %v515 = vpop.f32.mrb[0].mxu0
    %v516 = vadd.f32 0.0, %v515
    %v517 = vpop.f32.mrb[0].mxu0
    %518 = vmatprep.mubr.bf16.mxu0 0
    %519 = vmatmul.mubr.bf16.gmra.mrb[0].mxu0 %v359
    %v520 = vpop.f32.mrb[0].mxu0
    %v521 = vadd.f32 0.0, %v520
    %v522 = vpop.f32.mrb[0].mxu0
    %v523 = vpop.f32.mrb[0].mxu0
    %v524 = vadd.f32 0.0, %v523
    %v525 = vpop.f32.mrb[0].mxu0
    %526 = vmatprep.mubr.bf16.mxu0 0
    %527 = vmatmul.mubr.bf16.gmra.mrb[0].mxu0 %v362
    %v528 = vpop.f32.mrb[0].mxu0
    %v529 = vadd.f32 0.0, %v528
    %v530 = vpop.f32.mrb[0].mxu0
    %v531 = vpop.f32.mrb[0].mxu0
    %v532 = vadd.f32 0.0, %v531
    %v533 = vpop.f32.mrb[0].mxu0
    %534 = vmatprep.mubr.bf16.mxu0 0
    %535 = vmatmul.mubr.bf16.gmra.mrb[0].mxu0 %v365
    %v536 = vpop.f32.mrb[0].mxu0
    %v537 = vadd.f32 0.0, %v536
    %v538 = vpop.f32.mrb[0].mxu0
    %v539 = vpop.f32.mrb[0].mxu0
    %v540 = vadd.f32 0.0, %v539
    %v541 = vpop.f32.mrb[0].mxu0
    %542 = vmatprep.mubr.bf16.mxu0 0
    %543 = vmatmul.mubr.bf16.gmra.mrb[0].mxu0 %v368
    %v544 = vpop.f32.mrb[0].mxu0
    %v545 = vadd.f32 0.0, %v544
    %v546 = vpop.f32.mrb[0].mxu0
    %v547 = vpop.f32.mrb[0].mxu0
    %v548 = vadd.f32 0.0, %v547
    %v549 = vpop.f32.mrb[0].mxu0
    %550 = vmatprep.mubr.bf16.mxu0 0
    %551 = vmatmul.mubr.bf16.gmra.mrb[0].mxu0 %v371
    %v552 = vpop.f32.mrb[0].mxu0
    %v553 = vadd.f32 0.0, %v552
    %v554 = vpop.f32.mrb[0].mxu0
    %v555 = vpop.f32.mrb[0].mxu0
    %v556 = vadd.f32 0.0, %v555
    %v557 = vpop.f32.mrb[0].mxu0
    %558 = vmatprep.mubr.bf16.mxu0 0
    %559 = vmatmul.mubr.bf16.gmra.mrb[0].mxu0 %v374
    %v560 = vpop.f32.mrb[0].mxu0
    %v561 = vadd.f32 0.0, %v560
    %v562 = vpop.f32.mrb[0].mxu0
    %v563 = vpop.f32.mrb[0].mxu0
    %v564 = vadd.f32 0.0, %v563
    %v565 = vpop.f32.mrb[0].mxu0
    %566 = vmatprep.mubr.bf16.mxu0 0
    %567 = vmatmul.mubr.bf16.gmra.mrb[0].mxu0 %v377
    %v568 = vpop.f32.mrb[0].mxu0
    %v569 = vadd.f32 0.0, %v568
    %v570 = vpop.f32.mrb[0].mxu0
    %v571 = vpop.f32.mrb[0].mxu0
    %v572 = vadd.f32 0.0, %v571
    %v573 = vpop.f32.mrb[0].mxu0
    %574 = vmatprep.mubr.bf16.mxu0 0
    %575 = vmatmul.mubr.bf16.gmra.mrb[0].mxu0 %v380
    %v576 = vpop.f32.mrb[0].mxu0
    %v577 = vadd.f32 0.0, %v576
    %v578 = vpop.f32.mrb[0].mxu0
    %v579 = vpop.f32.mrb[0].mxu0
    %v580 = vadd.f32 0.0, %v579
    %v581 = vpop.f32.mrb[0].mxu0
    %582 = vmatprep.mubr.bf16.mxu0 0
    %583 = vmatmul.mubr.bf16.gmra.mrb[0].mxu0 %v383
    %v584 = vpop.f32.mrb[0].mxu0
    %v585 = vadd.f32 0.0, %v584
    %v586 = vpop.f32.mrb[0].mxu0
    %v587 = vpop.f32.mrb[0].mxu0
    %v588 = vadd.f32 0.0, %v587
    %v589 = vpop.f32.mrb[0].mxu0
    %590 = vmatprep.mubr.bf16.mxu0 0
    %591 = vmatmul.mubr.bf16.gmra.mrb[0].mxu0 %v386
    %v592 = vpop.f32.mrb[0].mxu0
    %v593 = vadd.f32 0.0, %v592
    %v594 = vpop.f32.mrb[0].mxu0
    %v595 = vpop.f32.mrb[0].mxu0
    %v596 = vadd.f32 0.0, %v595
    %v597 = vpop.f32.mrb[0].mxu0
    %598 = vmatprep.mubr.bf16.mxu0 0
    %599 = vmatmul.mubr.bf16.gmra.mrb[0].mxu0 %v389
    %v600 = vpop.f32.mrb[0].mxu0
    %v601 = vadd.f32 0.0, %v600
    %v602 = vpop.f32.mrb[0].mxu0
    %v603 = vpop.f32.mrb[0].mxu0
    %v604 = vadd.f32 0.0, %v603
    %v605 = vpop.f32.mrb[0].mxu0
    %606 = vmatprep.mubr.bf16.mxu0 0
    %607 = vmatmul.mubr.bf16.gmra.mrb[0].mxu0 %v392
    %v608 = vpop.f32.mrb[0].mxu0
    %v609 = vadd.f32 0.0, %v608
    %v610 = vpop.f32.mrb[0].mxu0
    %v611 = vpop.f32.mrb[0].mxu0
    %v612 = vadd.f32 0.0, %v611
    %v613 = vpop.f32.mrb[0].mxu0
    %614 = vmatprep.mubr.bf16.mxu0 0
    %615 = vmatmul.mubr.bf16.gmra.mrb[0].mxu0 %v395
    %v616 = vpop.f32.mrb[0].mxu0
    %v617 = vadd.f32 0.0, %v616
    %v618 = vpop.f32.mrb[0].mxu0
    %v619 = vpop.f32.mrb[0].mxu0
    %v620 = vadd.f32 0.0, %v619
    %v621 = vpop.f32.mrb[0].mxu0
    %622 = vmatprep.mubr.bf16.mxu0 0
    %623 = vmatmul.mubr.bf16.gmra.mrb[0].mxu0 %v398
    %v624 = vpop.f32.mrb[0].mxu0
    %v625 = vadd.f32 0.0, %v624
    %v626 = vpop.f32.mrb[0].mxu0
    %v627 = vpop.f32.mrb[0].mxu0
    %v628 = vadd.f32 0.0, %v627
    %v629 = vpop.f32.mrb[0].mxu0
    %630 = vmatprep.mubr.bf16.mxu0 0
    %631 = vmatmul.mubr.bf16.gmra.mrb[0].mxu0 %v401
    %v632 = vpop.f32.mrb[0].mxu0
    %v633 = vadd.f32 0.0, %v632
    %v634 = vpop.f32.mrb[0].mxu0
    %v635 = vpop.f32.mrb[0].mxu0
    %v636 = vadd.f32 0.0, %v635
    %v637 = vpop.f32.mrb[0].mxu0
    %638 = vmatprep.mubr.bf16.mxu0 0
    %639 = vmatmul.mubr.bf16.gmra.mrb[0].mxu0 %v404
    %v640 = vpop.f32.mrb[0].mxu0
    %v641 = vadd.f32 0.0, %v640
    %v642 = vpop.f32.mrb[0].mxu0
    %v643 = vpop.f32.mrb[0].mxu0
    %v644 = vadd.f32 0.0, %v643
    %v645 = vpop.f32.mrb[0].mxu0
    %646 = vmatprep.mubr.bf16.mxu0 0
    %647 = vmatmul.mubr.bf16.gmra.mrb[0].mxu0 %v407
    %v648 = vpop.f32.mrb[0].mxu0
    %v649 = vadd.f32 0.0, %v648
    %v650 = vpop.f32.mrb[0].mxu0
    %v651 = vpop.f32.mrb[0].mxu0
    %v652 = vadd.f32 0.0, %v651
    %v653 = vpop.f32.mrb[0].mxu0
    %654 = vmatprep.mubr.bf16.mxu0 0
    %655 = vmatmul.mubr.bf16.gmra.mrb[0].mxu0 %v410
    %v656 = vpop.f32.mrb[0].mxu0
    %v657 = vadd.f32 0.0, %v656
    %v658 = vpop.f32.mrb[0].mxu0
    %v659 = vpop.f32.mrb[0].mxu0
    %v660 = vadd.f32 0.0, %v659
    %v661 = vpop.f32.mrb[0].mxu0
    %662 = vmatprep.mubr.bf16.mxu0 0
    %663 = vmatmul.mubr.bf16.gmra.mrb[0].mxu0 %v413
    %v664 = vpop.f32.mrb[0].mxu0
    %v665 = vadd.f32 0.0, %v664
    %v666 = vpop.f32.mrb[0].mxu0
    %v667 = vpop.f32.mrb[0].mxu0
    %v668 = vadd.f32 0.0, %v667
    %v669 = vpop.f32.mrb[0].mxu0
    %670 = vmatprep.mubr.bf16.mxu0 0
    %671 = vmatmul.mubr.bf16.gmra.mrb[0].mxu0 %v416
    %v672 = vpop.f32.mrb[0].mxu0
    %v673 = vadd.f32 0.0, %v672
    %v674 = vpop.f32.mrb[0].mxu0
    %v675 = vpop.f32.mrb[0].mxu0
    %v676 = vadd.f32 0.0, %v675
    %v677 = vpop.f32.mrb[0].mxu0
    %678 = vmatprep.mubr.bf16.mxu0 0
    %679 = vmatmul.mubr.bf16.gmra.mrb[0].mxu0 %v419
    %v680 = vpop.f32.mrb[0].mxu0
    %v681 = vadd.f32 0.0, %v680
    %v682 = vpop.f32.mrb[0].mxu0
    %v683 = vpop.f32.mrb[0].mxu0
    %v684 = vadd.f32 0.0, %v683
    %v685 = vpop.f32.mrb[0].mxu0
    %686 = vmatprep.mubr.bf16.mxu0 0
    %687 = vmatmul.mubr.bf16.gmra.mrb[0].mxu0 %v422
    %v688 = vpop.f32.mrb[0].mxu0
    %v689 = vadd.f32 0.0, %v688
    %v690 = vpop.f32.mrb[0].mxu0
    %v691 = vpop.f32.mrb[0].mxu0
    %v692 = vadd.f32 0.0, %v691
    %v693 = vpop.f32.mrb[0].mxu0
    %694 = vmatprep.mubr.bf16.mxu0 0
    %695 = vmatmul.mubr.bf16.gmra.mrb[0].mxu0 %v425
    %v696 = vpop.f32.mrb[0].mxu0
    %v697 = vadd.f32 0.0, %v696
    %v698 = vpop.f32.mrb[0].mxu0
    %v699 = vpop.f32.mrb[0].mxu0
    %v700 = vadd.f32 0.0, %v699
    %v701 = vpop.f32.mrb[0].mxu0
    %702 = vmatprep.mubr.bf16.mxu0 0
    %703 = vmatmul.mubr.bf16.gmra.mrb[0].mxu0 %v428
    %v704 = vpop.f32.mrb[0].mxu0
    %v705 = vadd.f32 0.0, %v704
    %v706 = vpop.f32.mrb[0].mxu0
    %v707 = vpop.f32.mrb[0].mxu0
    %v708 = vadd.f32 0.0, %v707
    %v709 = vpop.f32.mrb[0].mxu0
    %710 = vmatprep.mubr.bf16.mxu0 0
    %711 = vmatmul.mubr.bf16.gmra.mrb[0].mxu0 %v431
    %v712 = vpop.f32.mrb[0].mxu0
    %v713 = vadd.f32 0.0, %v712
    %v714 = vpop.f32.mrb[0].mxu0
    %v715 = vpop.f32.mrb[0].mxu0
    %v716 = vadd.f32 0.0, %v715
    %v717 = vpop.f32.mrb[0].mxu0
    %718 = vmatprep.mubr.bf16.mxu0 0
    %719 = vmatmul.mubr.bf16.gmra.mrb[0].mxu0 %v434
    %v720 = vpop.f32.mrb[0].mxu0
    %v721 = vadd.f32 0.0, %v720
    %v722 = vpop.f32.mrb[0].mxu0
    %v723 = vpop.f32.mrb[0].mxu0
    %v724 = vadd.f32 0.0, %v723
    %v725 = vpop.f32.mrb[0].mxu0
    %726 = vmatprep.mubr.bf16.mxu0 0
    %727 = vmatmul.mubr.bf16.gmra.mrb[0].mxu0 %v437
    %v728 = vpop.f32.mrb[0].mxu0
    %v729 = vadd.f32 0.0, %v728
    %v730 = vpop.f32.mrb[0].mxu0
    %v731 = vpop.f32.mrb[0].mxu0
    %v732 = vadd.f32 0.0, %v731
    %v733 = vpop.f32.mrb[0].mxu0
    %734 = vdwg.mxu0
    %v735 = vld [vmem:[%s2] sm:$0x1]
    %v736 = vld [vmem:[%s3] sm:$0x1]
    %vm737 = vcmask 48128
    %v738 = vsel %vm737, %v481, 0.0
    %v739 = vsel %vm737, %v484, 0.0
    %v740 = vadd.f32 %v738, %v739
    %v741 = vsel %vm737, %v489, 0.0
    %v742 = vadd.f32 %v740, %v741
    %v743 = vsel %vm737, %v492, 0.0
    %v744 = vadd.f32 %v742, %v743
    %v745 = vsel %vm737, %v497, 0.0
    %v746 = vadd.f32 %v744, %v745
    %v747 = vsel %vm737, %v500, 0.0
    %v748 = vadd.f32 %v746, %v747
    %v749 = vsel %vm737, %v505, 0.0
    %v750 = vadd.f32 %v748, %v749
    %v751 = vsel %vm737, %v508, 0.0
    %v752 = vadd.f32 %v750, %v751
    %v753 = vsel %vm737, %v513, 0.0
    %v754 = vadd.f32 %v752, %v753
    %v755 = vsel %vm737, %v516, 0.0
    %v756 = vadd.f32 %v754, %v755
    %v757 = vsel %vm737, %v521, 0.0
    %v758 = vadd.f32 %v756, %v757
    %v759 = vsel %vm737, %v524, 0.0
    %v760 = vadd.f32 %v758, %v759
    %v761 = vsel %vm737, %v529, 0.0
    %v762 = vadd.f32 %v760, %v761
    %v763 = vsel %vm737, %v532, 0.0
    %v764 = vadd.f32 %v762, %v763
    %v765 = vsel %vm737, %v537, 0.0
    %v766 = vadd.f32 %v764, %v765
    %v767 = vsel %vm737, %v540, 0.0
    %v768 = vadd.f32 %v766, %v767
    %v769 = vsel %vm737, %v545, 0.0
    %v770 = vadd.f32 %v768, %v769
    %v771 = vsel %vm737, %v548, 0.0
    %v772 = vadd.f32 %v770, %v771
    %v773 = vsel %vm737, %v553, 0.0
    %v774 = vadd.f32 %v772, %v773
    %v775 = vsel %vm737, %v556, 0.0
    %v776 = vadd.f32 %v774, %v775
    %v777 = vsel %vm737, %v561, 0.0
    %v778 = vadd.f32 %v776, %v777
    %v779 = vsel %vm737, %v564, 0.0
    %v780 = vadd.f32 %v778, %v779
    %v781 = vsel %vm737, %v569, 0.0
    %v782 = vadd.f32 %v780, %v781
    %v783 = vsel %vm737, %v572, 0.0
    %v784 = vadd.f32 %v782, %v783
    %v785 = vsel %vm737, %v577, 0.0
    %v786 = vadd.f32 %v784, %v785
    %v787 = vsel %vm737, %v580, 0.0
    %v788 = vadd.f32 %v786, %v787
    %v789 = vsel %vm737, %v585, 0.0
    %v790 = vadd.f32 %v788, %v789
    %v791 = vsel %vm737, %v588, 0.0
    %v792 = vadd.f32 %v790, %v791
    %v793 = vsel %vm737, %v593, 0.0
    %v794 = vadd.f32 %v792, %v793
    %v795 = vsel %vm737, %v596, 0.0
    %v796 = vadd.f32 %v794, %v795
    %v797 = vsel %vm737, %v601, 0.0
    %v798 = vadd.f32 %v796, %v797
    %v799 = vsel %vm737, %v604, 0.0
    %v800 = vadd.f32 %v798, %v799
    %v801 = vsel %vm737, %v609, 0.0
    %v802 = vadd.f32 %v800, %v801
    %v803 = vsel %vm737, %v612, 0.0
    %v804 = vadd.f32 %v802, %v803
    %v805 = vsel %vm737, %v617, 0.0
    %v806 = vadd.f32 %v804, %v805
    %v807 = vsel %vm737, %v620, 0.0
    %v808 = vadd.f32 %v806, %v807
    %v809 = vsel %vm737, %v625, 0.0
    %v810 = vadd.f32 %v808, %v809
    %v811 = vsel %vm737, %v628, 0.0
    %v812 = vadd.f32 %v810, %v811
    %v813 = vsel %vm737, %v633, 0.0
    %v814 = vadd.f32 %v812, %v813
    %v815 = vsel %vm737, %v636, 0.0
    %v816 = vadd.f32 %v814, %v815
    %v817 = vsel %vm737, %v641, 0.0
    %v818 = vadd.f32 %v816, %v817
    %v819 = vsel %vm737, %v644, 0.0
    %v820 = vadd.f32 %v818, %v819
    %v821 = vsel %vm737, %v649, 0.0
    %v822 = vadd.f32 %v820, %v821
    %v823 = vsel %vm737, %v652, 0.0
    %v824 = vadd.f32 %v822, %v823
    %v825 = vsel %vm737, %v657, 0.0
    %v826 = vadd.f32 %v824, %v825
    %v827 = vsel %vm737, %v660, 0.0
    %v828 = vadd.f32 %v826, %v827
    %v829 = vsel %vm737, %v665, 0.0
    %v830 = vadd.f32 %v828, %v829
    %v831 = vsel %vm737, %v668, 0.0
    %v832 = vadd.f32 %v830, %v831
    %v833 = vsel %vm737, %v673, 0.0
    %v834 = vadd.f32 %v832, %v833
    %v835 = vsel %vm737, %v676, 0.0
    %v836 = vadd.f32 %v834, %v835
    %v837 = vsel %vm737, %v681, 0.0
    %v838 = vadd.f32 %v836, %v837
    %v839 = vsel %vm737, %v684, 0.0
    %v840 = vadd.f32 %v838, %v839
    %v841 = vsel %vm737, %v689, 0.0
    %v842 = vadd.f32 %v840, %v841
    %v843 = vsel %vm737, %v692, 0.0
    %v844 = vadd.f32 %v842, %v843
    %v845 = vsel %vm737, %v697, 0.0
    %v846 = vadd.f32 %v844, %v845
    %v847 = vsel %vm737, %v700, 0.0
    %v848 = vadd.f32 %v846, %v847
    %v849 = vsel %vm737, %v705, 0.0
    %v850 = vadd.f32 %v848, %v849
    %v851 = vsel %vm737, %v708, 0.0
    %v852 = vadd.f32 %v850, %v851
    %v853 = vsel %vm737, %v713, 0.0
    %v854 = vadd.f32 %v852, %v853
    %v855 = vsel %vm737, %v716, 0.0
    %v856 = vadd.f32 %v854, %v855
    %v857 = vsel %vm737, %v721, 0.0
    %v858 = vadd.f32 %v856, %v857
    %v859 = vsel %vm737, %v724, 0.0
    %v860 = vadd.f32 %v858, %v859
    %v861 = vsel %vm737, %v729, 0.0
    %v862 = vadd.f32 %v860, %v861
    %v863 = vsel %vm737, %v732, 0.0
    %v864 = vadd.f32 %v862, %v863
    %v865 = vrot.slane %v864, 4
    %v866 = vadd.f32 %v864, %v865
    %v867 = vrot.slane %v866, 2
    %v868 = vadd.f32 %v866, %v867
    %v869 = vrot.slane %v868, 1
    %v870 = vadd.f32 %v868, %v869
    %v871 = vrcp.pop 512.0
    %v872 = vmul.f32 %v870, %v871
    %v873 = vmul.f32 %v481, %v481
    %v874 = vmul.f32 %v484, %v484
    %v875 = vmul.f32 %v489, %v489
    %v876 = vmul.f32 %v492, %v492
    %v877 = vmul.f32 %v497, %v497
    %v878 = vmul.f32 %v500, %v500
    %v879 = vmul.f32 %v505, %v505
    %v880 = vmul.f32 %v508, %v508
    %v881 = vmul.f32 %v513, %v513
    %v882 = vmul.f32 %v516, %v516
    %v883 = vmul.f32 %v521, %v521
    %v884 = vmul.f32 %v524, %v524
    %v885 = vmul.f32 %v529, %v529
    %v886 = vmul.f32 %v532, %v532
    %v887 = vmul.f32 %v537, %v537
    %v888 = vmul.f32 %v540, %v540
    %v889 = vmul.f32 %v545, %v545
    %v890 = vmul.f32 %v548, %v548
    %v891 = vmul.f32 %v553, %v553
    %v892 = vmul.f32 %v556, %v556
    %v893 = vmul.f32 %v561, %v561
    %v894 = vmul.f32 %v564, %v564
    %v895 = vmul.f32 %v569, %v569
    %v896 = vmul.f32 %v572, %v572
    %v897 = vmul.f32 %v577, %v577
    %v898 = vmul.f32 %v580, %v580
    %v899 = vmul.f32 %v585, %v585
    %v900 = vmul.f32 %v588, %v588
    %v901 = vmul.f32 %v593, %v593
    %v902 = vmul.f32 %v596, %v596
    %v903 = vmul.f32 %v601, %v601
    %v904 = vmul.f32 %v604, %v604
    %v905 = vmul.f32 %v609, %v609
    %v906 = vmul.f32 %v612, %v612
    %v907 = vmul.f32 %v617, %v617
    %v908 = vmul.f32 %v620, %v620
    %v909 = vmul.f32 %v625, %v625
    %v910 = vmul.f32 %v628, %v628
    %v911 = vmul.f32 %v633, %v633
    %v912 = vmul.f32 %v636, %v636
    %v913 = vmul.f32 %v641, %v641
    %v914 = vmul.f32 %v644, %v644
    %v915 = vmul.f32 %v649, %v649
    %v916 = vmul.f32 %v652, %v652
    %v917 = vmul.f32 %v657, %v657
    %v918 = vmul.f32 %v660, %v660
    %v919 = vmul.f32 %v665, %v665
    %v920 = vmul.f32 %v668, %v668
    %v921 = vmul.f32 %v673, %v673
    %v922 = vmul.f32 %v676, %v676
    %v923 = vmul.f32 %v681, %v681
    %v924 = vmul.f32 %v684, %v684
    %v925 = vmul.f32 %v689, %v689
    %v926 = vmul.f32 %v692, %v692
    %v927 = vmul.f32 %v697, %v697
    %v928 = vmul.f32 %v700, %v700
    %v929 = vmul.f32 %v705, %v705
    %v930 = vmul.f32 %v708, %v708
    %v931 = vmul.f32 %v713, %v713
    %v932 = vmul.f32 %v716, %v716
    %v933 = vmul.f32 %v721, %v721
    %v934 = vmul.f32 %v724, %v724
    %v935 = vmul.f32 %v729, %v729
    %v936 = vmul.f32 %v732, %v732
    %v937 = vsel %vm737, %v873, 0.0
    %v938 = vsel %vm737, %v874, 0.0
    %v939 = vadd.f32 %v937, %v938
    %v940 = vsel %vm737, %v875, 0.0
    %v941 = vadd.f32 %v939, %v940
    %v942 = vsel %vm737, %v876, 0.0
    %v943 = vadd.f32 %v941, %v942
    %v944 = vsel %vm737, %v877, 0.0
    %v945 = vadd.f32 %v943, %v944
    %v946 = vsel %vm737, %v878, 0.0
    %v947 = vadd.f32 %v945, %v946
    %v948 = vsel %vm737, %v879, 0.0
    %v949 = vadd.f32 %v947, %v948
    %v950 = vsel %vm737, %v880, 0.0
    %v951 = vadd.f32 %v949, %v950
    %v952 = vsel %vm737, %v881, 0.0
    %v953 = vadd.f32 %v951, %v952
    %v954 = vsel %vm737, %v882, 0.0
    %v955 = vadd.f32 %v953, %v954
    %v956 = vsel %vm737, %v883, 0.0
    %v957 = vadd.f32 %v955, %v956
    %v958 = vsel %vm737, %v884, 0.0
    %v959 = vadd.f32 %v957, %v958
    %v960 = vsel %vm737, %v885, 0.0
    %v961 = vadd.f32 %v959, %v960
    %v962 = vsel %vm737, %v886, 0.0
    %v963 = vadd.f32 %v961, %v962
    %v964 = vsel %vm737, %v887, 0.0
    %v965 = vadd.f32 %v963, %v964
    %v966 = vsel %vm737, %v888, 0.0
    %v967 = vadd.f32 %v965, %v966
    %v968 = vsel %vm737, %v889, 0.0
    %v969 = vadd.f32 %v967, %v968
    %v970 = vsel %vm737, %v890, 0.0
    %v971 = vadd.f32 %v969, %v970
    %v972 = vsel %vm737, %v891, 0.0
    %v973 = vadd.f32 %v971, %v972
    %v974 = vsel %vm737, %v892, 0.0
    %v975 = vadd.f32 %v973, %v974
    %v976 = vsel %vm737, %v893, 0.0
    %v977 = vadd.f32 %v975, %v976
    %v978 = vsel %vm737, %v894, 0.0
    %v979 = vadd.f32 %v977, %v978
    %v980 = vsel %vm737, %v895, 0.0
    %v981 = vadd.f32 %v979, %v980
    %v982 = vsel %vm737, %v896, 0.0
    %v983 = vadd.f32 %v981, %v982
    %v984 = vsel %vm737, %v897, 0.0
    %v985 = vadd.f32 %v983, %v984
    %v986 = vsel %vm737, %v898, 0.0
    %v987 = vadd.f32 %v985, %v986
    %v988 = vsel %vm737, %v899, 0.0
    %v989 = vadd.f32 %v987, %v988
    %v990 = vsel %vm737, %v900, 0.0
    %v991 = vadd.f32 %v989, %v990
    %v992 = vsel %vm737, %v901, 0.0
    %v993 = vadd.f32 %v991, %v992
    %v994 = vsel %vm737, %v902, 0.0
    %v995 = vadd.f32 %v993, %v994
    %v996 = vsel %vm737, %v903, 0.0
    %v997 = vadd.f32 %v995, %v996
    %v998 = vsel %vm737, %v904, 0.0
    %v999 = vadd.f32 %v997, %v998
    %v1000 = vsel %vm737, %v905, 0.0
    %v1001 = vadd.f32 %v999, %v1000
    %v1002 = vsel %vm737, %v906, 0.0
    %v1003 = vadd.f32 %v1001, %v1002
    %v1004 = vsel %vm737, %v907, 0.0
    %v1005 = vadd.f32 %v1003, %v1004
    %v1006 = vsel %vm737, %v908, 0.0
    %v1007 = vadd.f32 %v1005, %v1006
    %v1008 = vsel %vm737, %v909, 0.0
    %v1009 = vadd.f32 %v1007, %v1008
    %v1010 = vsel %vm737, %v910, 0.0
    %v1011 = vadd.f32 %v1009, %v1010
    %v1012 = vsel %vm737, %v911, 0.0
    %v1013 = vadd.f32 %v1011, %v1012
    %v1014 = vsel %vm737, %v912, 0.0
    %v1015 = vadd.f32 %v1013, %v1014
    %v1016 = vsel %vm737, %v913, 0.0
    %v1017 = vadd.f32 %v1015, %v1016
    %v1018 = vsel %vm737, %v914, 0.0
    %v1019 = vadd.f32 %v1017, %v1018
    %v1020 = vsel %vm737, %v915, 0.0
    %v1021 = vadd.f32 %v1019, %v1020
    %v1022 = vsel %vm737, %v916, 0.0
    %v1023 = vadd.f32 %v1021, %v1022
    %v1024 = vsel %vm737, %v917, 0.0
    %v1025 = vadd.f32 %v1023, %v1024
    %v1026 = vsel %vm737, %v918, 0.0
    %v1027 = vadd.f32 %v1025, %v1026
    %v1028 = vsel %vm737, %v919, 0.0
    %v1029 = vadd.f32 %v1027, %v1028
    %v1030 = vsel %vm737, %v920, 0.0
    %v1031 = vadd.f32 %v1029, %v1030
    %v1032 = vsel %vm737, %v921, 0.0
    %v1033 = vadd.f32 %v1031, %v1032
    %v1034 = vsel %vm737, %v922, 0.0
    %v1035 = vadd.f32 %v1033, %v1034
    %v1036 = vsel %vm737, %v923, 0.0
    %v1037 = vadd.f32 %v1035, %v1036
    %v1038 = vsel %vm737, %v924, 0.0
    %v1039 = vadd.f32 %v1037, %v1038
    %v1040 = vsel %vm737, %v925, 0.0
    %v1041 = vadd.f32 %v1039, %v1040
    %v1042 = vsel %vm737, %v926, 0.0
    %v1043 = vadd.f32 %v1041, %v1042
    %v1044 = vsel %vm737, %v927, 0.0
    %v1045 = vadd.f32 %v1043, %v1044
    %v1046 = vsel %vm737, %v928, 0.0
    %v1047 = vadd.f32 %v1045, %v1046
    %v1048 = vsel %vm737, %v929, 0.0
    %v1049 = vadd.f32 %v1047, %v1048
    %v1050 = vsel %vm737, %v930, 0.0
    %v1051 = vadd.f32 %v1049, %v1050
    %v1052 = vsel %vm737, %v931, 0.0
    %v1053 = vadd.f32 %v1051, %v1052
    %v1054 = vsel %vm737, %v932, 0.0
    %v1055 = vadd.f32 %v1053, %v1054
    %v1056 = vsel %vm737, %v933, 0.0
    %v1057 = vadd.f32 %v1055, %v1056
    %v1058 = vsel %vm737, %v934, 0.0
    %v1059 = vadd.f32 %v1057, %v1058
    %v1060 = vsel %vm737, %v935, 0.0
    %v1061 = vadd.f32 %v1059, %v1060
    %v1062 = vsel %vm737, %v936, 0.0
    %v1063 = vadd.f32 %v1061, %v1062
    %v1064 = vrot.slane %v1063, 4
    %v1065 = vadd.f32 %v1063, %v1064
    %v1066 = vrot.slane %v1065, 2
    %v1067 = vadd.f32 %v1065, %v1066
    %v1068 = vrot.slane %v1067, 1
    %v1069 = vadd.f32 %v1067, %v1068
    %v1070 = vmul.f32 %v1069, %v871
    %v1071 = vmul.f32 %v872, %v872
    %v1072 = vsub.f32 %v1070, %v1071
    %v1073 = vmax.f32 %v1072, 0.0
    %v1074 = vsub.f32 %v481, %v872
    %v1075 = vsub.f32 %v484, %v872
    %v1076 = vsub.f32 %v489, %v872
    %v1077 = vsub.f32 %v492, %v872
    %v1078 = vsub.f32 %v497, %v872
    %v1079 = vsub.f32 %v500, %v872
    %v1080 = vsub.f32 %v505, %v872
    %v1081 = vsub.f32 %v508, %v872
    %v1082 = vsub.f32 %v513, %v872
    %v1083 = vsub.f32 %v516, %v872
    %v1084 = vsub.f32 %v521, %v872
    %v1085 = vsub.f32 %v524, %v872
    %v1086 = vsub.f32 %v529, %v872
    %v1087 = vsub.f32 %v532, %v872
    %v1088 = vsub.f32 %v537, %v872
    %v1089 = vsub.f32 %v540, %v872
    %v1090 = vsub.f32 %v545, %v872
    %v1091 = vsub.f32 %v548, %v872
    %v1092 = vsub.f32 %v553, %v872
    %v1093 = vsub.f32 %v556, %v872
    %v1094 = vsub.f32 %v561, %v872
    %v1095 = vsub.f32 %v564, %v872
    %v1096 = vsub.f32 %v569, %v872
    %v1097 = vsub.f32 %v572, %v872
    %v1098 = vsub.f32 %v577, %v872
    %v1099 = vsub.f32 %v580, %v872
    %v1100 = vsub.f32 %v585, %v872
    %v1101 = vsub.f32 %v588, %v872
    %v1102 = vsub.f32 %v593, %v872
    %v1103 = vsub.f32 %v596, %v872
    %v1104 = vsub.f32 %v601, %v872
    %v1105 = vsub.f32 %v604, %v872
    %v1106 = vsub.f32 %v609, %v872
    %v1107 = vsub.f32 %v612, %v872
    %v1108 = vsub.f32 %v617, %v872
    %v1109 = vsub.f32 %v620, %v872
    %v1110 = vsub.f32 %v625, %v872
    %v1111 = vsub.f32 %v628, %v872
    %v1112 = vsub.f32 %v633, %v872
    %v1113 = vsub.f32 %v636, %v872
    %v1114 = vsub.f32 %v641, %v872
    %v1115 = vsub.f32 %v644, %v872
    %v1116 = vsub.f32 %v649, %v872
    %v1117 = vsub.f32 %v652, %v872
    %v1118 = vsub.f32 %v657, %v872
    %v1119 = vsub.f32 %v660, %v872
    %v1120 = vsub.f32 %v665, %v872
    %v1121 = vsub.f32 %v668, %v872
    %v1122 = vsub.f32 %v673, %v872
    %v1123 = vsub.f32 %v676, %v872
    %v1124 = vsub.f32 %v681, %v872
    %v1125 = vsub.f32 %v684, %v872
    %v1126 = vsub.f32 %v689, %v872
    %v1127 = vsub.f32 %v692, %v872
    %v1128 = vsub.f32 %v697, %v872
    %v1129 = vsub.f32 %v700, %v872
    %v1130 = vsub.f32 %v705, %v872
    %v1131 = vsub.f32 %v708, %v872
    %v1132 = vsub.f32 %v713, %v872
    %v1133 = vsub.f32 %v716, %v872
    %v1134 = vsub.f32 %v721, %v872
    %v1135 = vsub.f32 %v724, %v872
    %v1136 = vsub.f32 %v729, %v872
    %v1137 = vsub.f32 %v732, %v872
    %v1138 = vadd.f32 %v1073, 1e-05
    %v1139 = vrsqrt.pop %v1138
    %v1140 = vmul.f32 %v735, %v1139
    %v1142 = vlaneseq
    %v1143 = vshrl.u32 %v1142, 7
    %v1144 = vsub.s32 0, %v1143
    %v1145 = vrot.slane %v1140, %v1144
    %v1147 = vmul.f32 %v1074, %v1145
    %v1148 = vmul.f32 %v1075, %v1145
    %v1149 = vmul.f32 %v1076, %v1145
    %v1150 = vmul.f32 %v1077, %v1145
    %v1151 = vmul.f32 %v1078, %v1145
    %v1152 = vmul.f32 %v1079, %v1145
    %v1153 = vmul.f32 %v1080, %v1145
    %v1154 = vmul.f32 %v1081, %v1145
    %v1155 = vmul.f32 %v1082, %v1145
    %v1156 = vmul.f32 %v1083, %v1145
    %v1157 = vmul.f32 %v1084, %v1145
    %v1158 = vmul.f32 %v1085, %v1145
    %v1159 = vmul.f32 %v1086, %v1145
    %v1160 = vmul.f32 %v1087, %v1145
    %v1161 = vmul.f32 %v1088, %v1145
    %v1162 = vmul.f32 %v1089, %v1145
    %v1163 = vmul.f32 %v1090, %v1145
    %v1164 = vmul.f32 %v1091, %v1145
    %v1165 = vmul.f32 %v1092, %v1145
    %v1166 = vmul.f32 %v1093, %v1145
    %v1167 = vmul.f32 %v1094, %v1145
    %v1168 = vmul.f32 %v1095, %v1145
    %v1169 = vmul.f32 %v1096, %v1145
    %v1170 = vmul.f32 %v1097, %v1145
    %v1171 = vmul.f32 %v1098, %v1145
    %v1172 = vmul.f32 %v1099, %v1145
    %v1173 = vmul.f32 %v1100, %v1145
    %v1174 = vmul.f32 %v1101, %v1145
    %v1175 = vmul.f32 %v1102, %v1145
    %v1176 = vmul.f32 %v1103, %v1145
    %v1177 = vmul.f32 %v1104, %v1145
    %v1178 = vmul.f32 %v1105, %v1145
    %v1179 = vmul.f32 %v1106, %v1145
    %v1180 = vmul.f32 %v1107, %v1145
    %v1181 = vmul.f32 %v1108, %v1145
    %v1182 = vmul.f32 %v1109, %v1145
    %v1183 = vmul.f32 %v1110, %v1145
    %v1184 = vmul.f32 %v1111, %v1145
    %v1185 = vmul.f32 %v1112, %v1145
    %v1186 = vmul.f32 %v1113, %v1145
    %v1187 = vmul.f32 %v1114, %v1145
    %v1188 = vmul.f32 %v1115, %v1145
    %v1189 = vmul.f32 %v1116, %v1145
    %v1190 = vmul.f32 %v1117, %v1145
    %v1191 = vmul.f32 %v1118, %v1145
    %v1192 = vmul.f32 %v1119, %v1145
    %v1193 = vmul.f32 %v1120, %v1145
    %v1194 = vmul.f32 %v1121, %v1145
    %v1195 = vmul.f32 %v1122, %v1145
    %v1196 = vmul.f32 %v1123, %v1145
    %v1197 = vmul.f32 %v1124, %v1145
    %v1198 = vmul.f32 %v1125, %v1145
    %v1199 = vmul.f32 %v1126, %v1145
    %v1200 = vmul.f32 %v1127, %v1145
    %v1201 = vmul.f32 %v1128, %v1145
    %v1202 = vmul.f32 %v1129, %v1145
    %v1203 = vmul.f32 %v1130, %v1145
    %v1204 = vmul.f32 %v1131, %v1145
    %v1205 = vmul.f32 %v1132, %v1145
    %v1206 = vmul.f32 %v1133, %v1145
    %v1207 = vmul.f32 %v1134, %v1145
    %v1208 = vmul.f32 %v1135, %v1145
    %v1209 = vmul.f32 %v1136, %v1145
    %v1210 = vmul.f32 %v1137, %v1145
    %v1212 = vlaneseq
    %v1213 = vshrl.u32 %v1212, 7
    %v1214 = vsub.s32 0, %v1213
    %v1215 = vrot.slane %v736, %v1214
    %v1217 = vadd.f32 %v1147, %v1215
    %v1218 = vadd.f32 %v1148, %v1215
    %v1219 = vadd.f32 %v1149, %v1215
    %v1220 = vadd.f32 %v1150, %v1215
    %v1221 = vadd.f32 %v1151, %v1215
    %v1222 = vadd.f32 %v1152, %v1215
    %v1223 = vadd.f32 %v1153, %v1215
    %v1224 = vadd.f32 %v1154, %v1215
    %v1225 = vadd.f32 %v1155, %v1215
    %v1226 = vadd.f32 %v1156, %v1215
    %v1227 = vadd.f32 %v1157, %v1215
    %v1228 = vadd.f32 %v1158, %v1215
    %v1229 = vadd.f32 %v1159, %v1215
    %v1230 = vadd.f32 %v1160, %v1215
    %v1231 = vadd.f32 %v1161, %v1215
    %v1232 = vadd.f32 %v1162, %v1215
    %v1233 = vadd.f32 %v1163, %v1215
    %v1234 = vadd.f32 %v1164, %v1215
    %v1235 = vadd.f32 %v1165, %v1215
    %v1236 = vadd.f32 %v1166, %v1215
    %v1237 = vadd.f32 %v1167, %v1215
    %v1238 = vadd.f32 %v1168, %v1215
    %v1239 = vadd.f32 %v1169, %v1215
    %v1240 = vadd.f32 %v1170, %v1215
    %v1241 = vadd.f32 %v1171, %v1215
    %v1242 = vadd.f32 %v1172, %v1215
    %v1243 = vadd.f32 %v1173, %v1215
    %v1244 = vadd.f32 %v1174, %v1215
    %v1245 = vadd.f32 %v1175, %v1215
    %v1246 = vadd.f32 %v1176, %v1215
    %v1247 = vadd.f32 %v1177, %v1215
    %v1248 = vadd.f32 %v1178, %v1215
    %v1249 = vadd.f32 %v1179, %v1215
    %v1250 = vadd.f32 %v1180, %v1215
    %v1251 = vadd.f32 %v1181, %v1215
    %v1252 = vadd.f32 %v1182, %v1215
    %v1253 = vadd.f32 %v1183, %v1215
    %v1254 = vadd.f32 %v1184, %v1215
    %v1255 = vadd.f32 %v1185, %v1215
    %v1256 = vadd.f32 %v1186, %v1215
    %v1257 = vadd.f32 %v1187, %v1215
    %v1258 = vadd.f32 %v1188, %v1215
    %v1259 = vadd.f32 %v1189, %v1215
    %v1260 = vadd.f32 %v1190, %v1215
    %v1261 = vadd.f32 %v1191, %v1215
    %v1262 = vadd.f32 %v1192, %v1215
    %v1263 = vadd.f32 %v1193, %v1215
    %v1264 = vadd.f32 %v1194, %v1215
    %v1265 = vadd.f32 %v1195, %v1215
    %v1266 = vadd.f32 %v1196, %v1215
    %v1267 = vadd.f32 %v1197, %v1215
    %v1268 = vadd.f32 %v1198, %v1215
    %v1269 = vadd.f32 %v1199, %v1215
    %v1270 = vadd.f32 %v1200, %v1215
    %v1271 = vadd.f32 %v1201, %v1215
    %v1272 = vadd.f32 %v1202, %v1215
    %v1273 = vadd.f32 %v1203, %v1215
    %v1274 = vadd.f32 %v1204, %v1215
    %v1275 = vadd.f32 %v1205, %v1215
    %v1276 = vadd.f32 %v1206, %v1215
    %v1277 = vadd.f32 %v1207, %v1215
    %v1278 = vadd.f32 %v1208, %v1215
    %v1279 = vadd.f32 %v1209, %v1215
    %v1280 = vadd.f32 %v1210, %v1215
    %v1281 = vmax.f32 %v1217, 0.0
    %v1282 = vmax.f32 %v1218, 0.0
    %v1283 = vmax.f32 %v1219, 0.0
    %v1284 = vmax.f32 %v1220, 0.0
    %v1285 = vmax.f32 %v1221, 0.0
    %v1286 = vmax.f32 %v1222, 0.0
    %v1287 = vmax.f32 %v1223, 0.0
    %v1288 = vmax.f32 %v1224, 0.0
    %v1289 = vmax.f32 %v1225, 0.0
    %v1290 = vmax.f32 %v1226, 0.0
    %v1291 = vmax.f32 %v1227, 0.0
    %v1292 = vmax.f32 %v1228, 0.0
    %v1293 = vmax.f32 %v1229, 0.0
    %v1294 = vmax.f32 %v1230, 0.0
    %v1295 = vmax.f32 %v1231, 0.0
    %v1296 = vmax.f32 %v1232, 0.0
    %v1297 = vmax.f32 %v1233, 0.0
    %v1298 = vmax.f32 %v1234, 0.0
    %v1299 = vmax.f32 %v1235, 0.0
    %v1300 = vmax.f32 %v1236, 0.0
    %v1301 = vmax.f32 %v1237, 0.0
    %v1302 = vmax.f32 %v1238, 0.0
    %v1303 = vmax.f32 %v1239, 0.0
    %v1304 = vmax.f32 %v1240, 0.0
    %v1305 = vmax.f32 %v1241, 0.0
    %v1306 = vmax.f32 %v1242, 0.0
    %v1307 = vmax.f32 %v1243, 0.0
    %v1308 = vmax.f32 %v1244, 0.0
    %v1309 = vmax.f32 %v1245, 0.0
    %v1310 = vmax.f32 %v1246, 0.0
    %v1311 = vmax.f32 %v1247, 0.0
    %v1312 = vmax.f32 %v1248, 0.0
    %v1313 = vmax.f32 %v1249, 0.0
    %v1314 = vmax.f32 %v1250, 0.0
    %v1315 = vmax.f32 %v1251, 0.0
    %v1316 = vmax.f32 %v1252, 0.0
    %v1317 = vmax.f32 %v1253, 0.0
    %v1318 = vmax.f32 %v1254, 0.0
    %v1319 = vmax.f32 %v1255, 0.0
    %v1320 = vmax.f32 %v1256, 0.0
    %v1321 = vmax.f32 %v1257, 0.0
    %v1322 = vmax.f32 %v1258, 0.0
    %v1323 = vmax.f32 %v1259, 0.0
    %v1324 = vmax.f32 %v1260, 0.0
    %v1325 = vmax.f32 %v1261, 0.0
    %v1326 = vmax.f32 %v1262, 0.0
    %v1327 = vmax.f32 %v1263, 0.0
    %v1328 = vmax.f32 %v1264, 0.0
    %v1329 = vmax.f32 %v1265, 0.0
    %v1330 = vmax.f32 %v1266, 0.0
    %v1331 = vmax.f32 %v1267, 0.0
    %v1332 = vmax.f32 %v1268, 0.0
    %v1333 = vmax.f32 %v1269, 0.0
    %v1334 = vmax.f32 %v1270, 0.0
    %v1335 = vmax.f32 %v1271, 0.0
    %v1336 = vmax.f32 %v1272, 0.0
    %v1337 = vmax.f32 %v1273, 0.0
    %v1338 = vmax.f32 %v1274, 0.0
    %v1339 = vmax.f32 %v1275, 0.0
    %v1340 = vmax.f32 %v1276, 0.0
    %v1341 = vmax.f32 %v1277, 0.0
    %v1342 = vmax.f32 %v1278, 0.0
    %v1343 = vmax.f32 %v1279, 0.0
    %v1344 = vmax.f32 %v1280, 0.0
    %v1345 = vld [vmem:[%s4] sm:$0xff]
    %v1346 = vld [vmem:[%s4 + $0x8] sm:$0xff]
    %v1347 = vld [vmem:[%s4 + $0x10] sm:$0xff]
    %v1348 = vld [vmem:[%s4 + $0x18] sm:$0xff]
    %v1349 = vld [vmem:[%s4 + $0x20] sm:$0xff]
    %v1350 = vld [vmem:[%s4 + $0x28] sm:$0xff]
    %v1351 = vld [vmem:[%s4 + $0x30] sm:$0xff]
    %v1352 = vld [vmem:[%s4 + $0x38] sm:$0xff]
    %v1353 = vld [vmem:[%s4 + $0x40] sm:$0xff]
    %v1354 = vld [vmem:[%s4 + $0x48] sm:$0xff]
    %v1355 = vld [vmem:[%s4 + $0x50] sm:$0xff]
    %v1356 = vld [vmem:[%s4 + $0x58] sm:$0xff]
    %v1357 = vld [vmem:[%s4 + $0x60] sm:$0xff]
    %v1358 = vld [vmem:[%s4 + $0x68] sm:$0xff]
    %v1359 = vld [vmem:[%s4 + $0x70] sm:$0xff]
    %v1360 = vld [vmem:[%s4 + $0x78] sm:$0xff]
    %v1361 = vld [vmem:[%s4 + $0x80] sm:$0xff]
    %v1362 = vld [vmem:[%s4 + $0x88] sm:$0xff]
    %v1363 = vld [vmem:[%s4 + $0x90] sm:$0xff]
    %v1364 = vld [vmem:[%s4 + $0x98] sm:$0xff]
    %v1365 = vld [vmem:[%s4 + $0xa0] sm:$0xff]
    %v1366 = vld [vmem:[%s4 + $0xa8] sm:$0xff]
    %v1367 = vld [vmem:[%s4 + $0xb0] sm:$0xff]
    %v1368 = vld [vmem:[%s4 + $0xb8] sm:$0xff]
    %v1369 = vld [vmem:[%s4 + $0xc0] sm:$0xff]
    %v1370 = vld [vmem:[%s4 + $0xc8] sm:$0xff]
    %v1371 = vld [vmem:[%s4 + $0xd0] sm:$0xff]
    %v1372 = vld [vmem:[%s4 + $0xd8] sm:$0xff]
    %v1373 = vld [vmem:[%s4 + $0xe0] sm:$0xff]
    %v1374 = vld [vmem:[%s4 + $0xe8] sm:$0xff]
    %v1375 = vld [vmem:[%s4 + $0xf0] sm:$0xff]
    %v1376 = vld [vmem:[%s4 + $0xf8] sm:$0xff]
    %v1377 = vld [vmem:[%s4 + $0x100] sm:$0xff]
    %v1378 = vld [vmem:[%s4 + $0x108] sm:$0xff]
    %v1379 = vld [vmem:[%s4 + $0x110] sm:$0xff]
    %v1380 = vld [vmem:[%s4 + $0x118] sm:$0xff]
    %v1381 = vld [vmem:[%s4 + $0x120] sm:$0xff]
    %v1382 = vld [vmem:[%s4 + $0x128] sm:$0xff]
    %v1383 = vld [vmem:[%s4 + $0x130] sm:$0xff]
    %v1384 = vld [vmem:[%s4 + $0x138] sm:$0xff]
    %v1385 = vld [vmem:[%s4 + $0x140] sm:$0xff]
    %v1386 = vld [vmem:[%s4 + $0x148] sm:$0xff]
    %v1387 = vld [vmem:[%s4 + $0x150] sm:$0xff]
    %v1388 = vld [vmem:[%s4 + $0x158] sm:$0xff]
    %v1389 = vld [vmem:[%s4 + $0x160] sm:$0xff]
    %v1390 = vld [vmem:[%s4 + $0x168] sm:$0xff]
    %v1391 = vld [vmem:[%s4 + $0x170] sm:$0xff]
    %v1392 = vld [vmem:[%s4 + $0x178] sm:$0xff]
    %v1393 = vld [vmem:[%s4 + $0x180] sm:$0xff]
    %v1394 = vld [vmem:[%s4 + $0x188] sm:$0xff]
    %v1395 = vld [vmem:[%s4 + $0x190] sm:$0xff]
    %v1396 = vld [vmem:[%s4 + $0x198] sm:$0xff]
    %v1397 = vld [vmem:[%s4 + $0x1a0] sm:$0xff]
    %v1398 = vld [vmem:[%s4 + $0x1a8] sm:$0xff]
    %v1399 = vld [vmem:[%s4 + $0x1b0] sm:$0xff]
    %v1400 = vld [vmem:[%s4 + $0x1b8] sm:$0xff]
    %v1401 = vld [vmem:[%s4 + $0x1c0] sm:$0xff]
    %v1402 = vld [vmem:[%s4 + $0x1c8] sm:$0xff]
    %v1403 = vld [vmem:[%s4 + $0x1d0] sm:$0xff]
    %v1404 = vld [vmem:[%s4 + $0x1d8] sm:$0xff]
    %v1405 = vld [vmem:[%s4 + $0x1e0] sm:$0xff]
    %v1406 = vld [vmem:[%s4 + $0x1e8] sm:$0xff]
    %v1407 = vld [vmem:[%s4 + $0x1f0] sm:$0xff]
    %v1408 = vld [vmem:[%s4 + $0x1f8] sm:$0xff]
    %v1409 = vld [vmem:[%s4 + $0x200] sm:$0xff]
    %v1410 = vld [vmem:[%s4 + $0x208] sm:$0xff]
    %v1411 = vld [vmem:[%s4 + $0x210] sm:$0xff]
    %v1412 = vld [vmem:[%s4 + $0x218] sm:$0xff]
    %v1413 = vld [vmem:[%s4 + $0x220] sm:$0xff]
    %v1414 = vld [vmem:[%s4 + $0x228] sm:$0xff]
    %v1415 = vld [vmem:[%s4 + $0x230] sm:$0xff]
    %v1416 = vld [vmem:[%s4 + $0x238] sm:$0xff]
    %v1417 = vld [vmem:[%s4 + $0x240] sm:$0xff]
    %v1418 = vld [vmem:[%s4 + $0x248] sm:$0xff]
    %v1419 = vld [vmem:[%s4 + $0x250] sm:$0xff]
    %v1420 = vld [vmem:[%s4 + $0x258] sm:$0xff]
    %v1421 = vld [vmem:[%s4 + $0x260] sm:$0xff]
    %v1422 = vld [vmem:[%s4 + $0x268] sm:$0xff]
    %v1423 = vld [vmem:[%s4 + $0x270] sm:$0xff]
    %v1424 = vld [vmem:[%s4 + $0x278] sm:$0xff]
    %v1425 = vld [vmem:[%s4 + $0x280] sm:$0xff]
    %v1426 = vld [vmem:[%s4 + $0x288] sm:$0xff]
    %v1427 = vld [vmem:[%s4 + $0x290] sm:$0xff]
    %v1428 = vld [vmem:[%s4 + $0x298] sm:$0xff]
    %v1429 = vld [vmem:[%s4 + $0x2a0] sm:$0xff]
    %v1430 = vld [vmem:[%s4 + $0x2a8] sm:$0xff]
    %v1431 = vld [vmem:[%s4 + $0x2b0] sm:$0xff]
    %v1432 = vld [vmem:[%s4 + $0x2b8] sm:$0xff]
    %v1433 = vld [vmem:[%s4 + $0x2c0] sm:$0xff]
    %v1434 = vld [vmem:[%s4 + $0x2c8] sm:$0xff]
    %v1435 = vld [vmem:[%s4 + $0x2d0] sm:$0xff]
    %v1436 = vld [vmem:[%s4 + $0x2d8] sm:$0xff]
    %v1437 = vld [vmem:[%s4 + $0x2e0] sm:$0xff]
    %v1438 = vld [vmem:[%s4 + $0x2e8] sm:$0xff]
    %v1439 = vld [vmem:[%s4 + $0x2f0] sm:$0xff]
    %v1440 = vld [vmem:[%s4 + $0x2f8] sm:$0xff]
    %v1441 = vld [vmem:[%s4 + $0x300] sm:$0xff]
    %v1442 = vld [vmem:[%s4 + $0x308] sm:$0xff]
    %v1443 = vld [vmem:[%s4 + $0x310] sm:$0xff]
    %v1444 = vld [vmem:[%s4 + $0x318] sm:$0xff]
    %v1445 = vld [vmem:[%s4 + $0x320] sm:$0xff]
    %v1446 = vld [vmem:[%s4 + $0x328] sm:$0xff]
    %v1447 = vld [vmem:[%s4 + $0x330] sm:$0xff]
    %v1448 = vld [vmem:[%s4 + $0x338] sm:$0xff]
    %v1449 = vld [vmem:[%s4 + $0x340] sm:$0xff]
    %v1450 = vld [vmem:[%s4 + $0x348] sm:$0xff]
    %v1451 = vld [vmem:[%s4 + $0x350] sm:$0xff]
    %v1452 = vld [vmem:[%s4 + $0x358] sm:$0xff]
    %v1453 = vld [vmem:[%s4 + $0x360] sm:$0xff]
    %v1454 = vld [vmem:[%s4 + $0x368] sm:$0xff]
    %v1455 = vld [vmem:[%s4 + $0x370] sm:$0xff]
    %v1456 = vld [vmem:[%s4 + $0x378] sm:$0xff]
    %v1457 = vld [vmem:[%s4 + $0x380] sm:$0xff]
    %v1458 = vld [vmem:[%s4 + $0x388] sm:$0xff]
    %v1459 = vld [vmem:[%s4 + $0x390] sm:$0xff]
    %v1460 = vld [vmem:[%s4 + $0x398] sm:$0xff]
    %v1461 = vld [vmem:[%s4 + $0x3a0] sm:$0xff]
    %v1462 = vld [vmem:[%s4 + $0x3a8] sm:$0xff]
    %v1463 = vld [vmem:[%s4 + $0x3b0] sm:$0xff]
    %v1464 = vld [vmem:[%s4 + $0x3b8] sm:$0xff]
    %v1465 = vld [vmem:[%s4 + $0x3c0] sm:$0xff]
    %v1466 = vld [vmem:[%s4 + $0x3c8] sm:$0xff]
    %v1467 = vld [vmem:[%s4 + $0x3d0] sm:$0xff]
    %v1468 = vld [vmem:[%s4 + $0x3d8] sm:$0xff]
    %v1469 = vld [vmem:[%s4 + $0x3e0] sm:$0xff]
    %v1470 = vld [vmem:[%s4 + $0x3e8] sm:$0xff]
    %v1471 = vld [vmem:[%s4 + $0x3f0] sm:$0xff]
    %v1472 = vld [vmem:[%s4 + $0x3f8] sm:$0xff]
    %v1473 = vld [vmem:[%s4 + $0x400] sm:$0xff]
    %v1474 = vld [vmem:[%s4 + $0x408] sm:$0xff]
    %v1475 = vld [vmem:[%s4 + $0x410] sm:$0xff]
    %v1476 = vld [vmem:[%s4 + $0x418] sm:$0xff]
    %v1477 = vld [vmem:[%s4 + $0x420] sm:$0xff]
    %v1478 = vld [vmem:[%s4 + $0x428] sm:$0xff]
    %v1479 = vld [vmem:[%s4 + $0x430] sm:$0xff]
    %v1480 = vld [vmem:[%s4 + $0x438] sm:$0xff]
    %v1481 = vld [vmem:[%s4 + $0x440] sm:$0xff]
    %v1482 = vld [vmem:[%s4 + $0x448] sm:$0xff]
    %v1483 = vld [vmem:[%s4 + $0x450] sm:$0xff]
    %v1484 = vld [vmem:[%s4 + $0x458] sm:$0xff]
    %v1485 = vld [vmem:[%s4 + $0x460] sm:$0xff]
    %v1486 = vld [vmem:[%s4 + $0x468] sm:$0xff]
    %v1487 = vld [vmem:[%s4 + $0x470] sm:$0xff]
    %v1488 = vld [vmem:[%s4 + $0x478] sm:$0xff]
    %v1489 = vld [vmem:[%s4 + $0x480] sm:$0xff]
    %v1490 = vld [vmem:[%s4 + $0x488] sm:$0xff]
    %v1491 = vld [vmem:[%s4 + $0x490] sm:$0xff]
    %v1492 = vld [vmem:[%s4 + $0x498] sm:$0xff]
    %v1493 = vld [vmem:[%s4 + $0x4a0] sm:$0xff]
    %v1494 = vld [vmem:[%s4 + $0x4a8] sm:$0xff]
    %v1495 = vld [vmem:[%s4 + $0x4b0] sm:$0xff]
    %v1496 = vld [vmem:[%s4 + $0x4b8] sm:$0xff]
    %v1497 = vld [vmem:[%s4 + $0x4c0] sm:$0xff]
    %v1498 = vld [vmem:[%s4 + $0x4c8] sm:$0xff]
    %v1499 = vld [vmem:[%s4 + $0x4d0] sm:$0xff]
    %v1500 = vld [vmem:[%s4 + $0x4d8] sm:$0xff]
    %v1501 = vld [vmem:[%s4 + $0x4e0] sm:$0xff]
    %v1502 = vld [vmem:[%s4 + $0x4e8] sm:$0xff]
    %v1503 = vld [vmem:[%s4 + $0x4f0] sm:$0xff]
    %v1504 = vld [vmem:[%s4 + $0x4f8] sm:$0xff]
    %v1505 = vld [vmem:[%s4 + $0x500] sm:$0xff]
    %v1506 = vld [vmem:[%s4 + $0x508] sm:$0xff]
    %v1507 = vld [vmem:[%s4 + $0x510] sm:$0xff]
    %v1508 = vld [vmem:[%s4 + $0x518] sm:$0xff]
    %v1509 = vld [vmem:[%s4 + $0x520] sm:$0xff]
    %v1510 = vld [vmem:[%s4 + $0x528] sm:$0xff]
    %v1511 = vld [vmem:[%s4 + $0x530] sm:$0xff]
    %v1512 = vld [vmem:[%s4 + $0x538] sm:$0xff]
    %v1513 = vld [vmem:[%s4 + $0x540] sm:$0xff]
    %v1514 = vld [vmem:[%s4 + $0x548] sm:$0xff]
    %v1515 = vld [vmem:[%s4 + $0x550] sm:$0xff]
    %v1516 = vld [vmem:[%s4 + $0x558] sm:$0xff]
    %v1517 = vld [vmem:[%s4 + $0x560] sm:$0xff]
    %v1518 = vld [vmem:[%s4 + $0x568] sm:$0xff]
    %v1519 = vld [vmem:[%s4 + $0x570] sm:$0xff]
    %v1520 = vld [vmem:[%s4 + $0x578] sm:$0xff]
    %v1521 = vld [vmem:[%s4 + $0x580] sm:$0xff]
    %v1522 = vld [vmem:[%s4 + $0x588] sm:$0xff]
    %v1523 = vld [vmem:[%s4 + $0x590] sm:$0xff]
    %v1524 = vld [vmem:[%s4 + $0x598] sm:$0xff]
    %v1525 = vld [vmem:[%s4 + $0x5a0] sm:$0xff]
    %v1526 = vld [vmem:[%s4 + $0x5a8] sm:$0xff]
    %v1527 = vld [vmem:[%s4 + $0x5b0] sm:$0xff]
    %v1528 = vld [vmem:[%s4 + $0x5b8] sm:$0xff]
    %v1529 = vld [vmem:[%s4 + $0x5c0] sm:$0xff]
    %v1530 = vld [vmem:[%s4 + $0x5c8] sm:$0xff]
    %v1531 = vld [vmem:[%s4 + $0x5d0] sm:$0xff]
    %v1532 = vld [vmem:[%s4 + $0x5d8] sm:$0xff]
    %v1533 = vld [vmem:[%s4 + $0x5e0] sm:$0xff]
    %v1534 = vld [vmem:[%s4 + $0x5e8] sm:$0xff]
    %v1535 = vld [vmem:[%s4 + $0x5f0] sm:$0xff]
    %v1536 = vld [vmem:[%s4 + $0x5f8] sm:$0xff]
    %v1537 = vld [vmem:[%s4 + $0x600] sm:$0xff]
    %v1538 = vld [vmem:[%s4 + $0x608] sm:$0xff]
    %v1539 = vld [vmem:[%s4 + $0x610] sm:$0xff]
    %v1540 = vld [vmem:[%s4 + $0x618] sm:$0xff]
    %v1541 = vld [vmem:[%s4 + $0x620] sm:$0xff]
    %v1542 = vld [vmem:[%s4 + $0x628] sm:$0xff]
    %v1543 = vld [vmem:[%s4 + $0x630] sm:$0xff]
    %v1544 = vld [vmem:[%s4 + $0x638] sm:$0xff]
    %v1545 = vld [vmem:[%s4 + $0x640] sm:$0xff]
    %v1546 = vld [vmem:[%s4 + $0x648] sm:$0xff]
    %v1547 = vld [vmem:[%s4 + $0x650] sm:$0xff]
    %v1548 = vld [vmem:[%s4 + $0x658] sm:$0xff]
    %v1549 = vld [vmem:[%s4 + $0x660] sm:$0xff]
    %v1550 = vld [vmem:[%s4 + $0x668] sm:$0xff]
    %v1551 = vld [vmem:[%s4 + $0x670] sm:$0xff]
    %v1552 = vld [vmem:[%s4 + $0x678] sm:$0xff]
    %v1553 = vld [vmem:[%s4 + $0x680] sm:$0xff]
    %v1554 = vld [vmem:[%s4 + $0x688] sm:$0xff]
    %v1555 = vld [vmem:[%s4 + $0x690] sm:$0xff]
    %v1556 = vld [vmem:[%s4 + $0x698] sm:$0xff]
    %v1557 = vld [vmem:[%s4 + $0x6a0] sm:$0xff]
    %v1558 = vld [vmem:[%s4 + $0x6a8] sm:$0xff]
    %v1559 = vld [vmem:[%s4 + $0x6b0] sm:$0xff]
    %v1560 = vld [vmem:[%s4 + $0x6b8] sm:$0xff]
    %v1561 = vld [vmem:[%s4 + $0x6c0] sm:$0xff]
    %v1562 = vld [vmem:[%s4 + $0x6c8] sm:$0xff]
    %v1563 = vld [vmem:[%s4 + $0x6d0] sm:$0xff]
    %v1564 = vld [vmem:[%s4 + $0x6d8] sm:$0xff]
    %v1565 = vld [vmem:[%s4 + $0x6e0] sm:$0xff]
    %v1566 = vld [vmem:[%s4 + $0x6e8] sm:$0xff]
    %v1567 = vld [vmem:[%s4 + $0x6f0] sm:$0xff]
    %v1568 = vld [vmem:[%s4 + $0x6f8] sm:$0xff]
    %v1569 = vld [vmem:[%s4 + $0x700] sm:$0xff]
    %v1570 = vld [vmem:[%s4 + $0x708] sm:$0xff]
    %v1571 = vld [vmem:[%s4 + $0x710] sm:$0xff]
    %v1572 = vld [vmem:[%s4 + $0x718] sm:$0xff]
    %v1573 = vld [vmem:[%s4 + $0x720] sm:$0xff]
    %v1574 = vld [vmem:[%s4 + $0x728] sm:$0xff]
    %v1575 = vld [vmem:[%s4 + $0x730] sm:$0xff]
    %v1576 = vld [vmem:[%s4 + $0x738] sm:$0xff]
    %v1577 = vld [vmem:[%s4 + $0x740] sm:$0xff]
    %v1578 = vld [vmem:[%s4 + $0x748] sm:$0xff]
    %v1579 = vld [vmem:[%s4 + $0x750] sm:$0xff]
    %v1580 = vld [vmem:[%s4 + $0x758] sm:$0xff]
    %v1581 = vld [vmem:[%s4 + $0x760] sm:$0xff]
    %v1582 = vld [vmem:[%s4 + $0x768] sm:$0xff]
    %v1583 = vld [vmem:[%s4 + $0x770] sm:$0xff]
    %v1584 = vld [vmem:[%s4 + $0x778] sm:$0xff]
    %v1585 = vld [vmem:[%s4 + $0x780] sm:$0xff]
    %v1586 = vld [vmem:[%s4 + $0x788] sm:$0xff]
    %v1587 = vld [vmem:[%s4 + $0x790] sm:$0xff]
    %v1588 = vld [vmem:[%s4 + $0x798] sm:$0xff]
    %v1589 = vld [vmem:[%s4 + $0x7a0] sm:$0xff]
    %v1590 = vld [vmem:[%s4 + $0x7a8] sm:$0xff]
    %v1591 = vld [vmem:[%s4 + $0x7b0] sm:$0xff]
    %v1592 = vld [vmem:[%s4 + $0x7b8] sm:$0xff]
    %v1593 = vld [vmem:[%s4 + $0x7c0] sm:$0xff]
    %v1594 = vld [vmem:[%s4 + $0x7c8] sm:$0xff]
    %v1595 = vld [vmem:[%s4 + $0x7d0] sm:$0xff]
    %v1596 = vld [vmem:[%s4 + $0x7d8] sm:$0xff]
    %v1597 = vld [vmem:[%s4 + $0x7e0] sm:$0xff]
    %v1598 = vld [vmem:[%s4 + $0x7e8] sm:$0xff]
    %v1599 = vld [vmem:[%s4 + $0x7f0] sm:$0xff]
    %v1600 = vld [vmem:[%s4 + $0x7f8] sm:$0xff]
    %v1601 = vld [vmem:[%s4 + $0x800] sm:$0xff]
    %v1602 = vld [vmem:[%s4 + $0x808] sm:$0xff]
    %v1603 = vld [vmem:[%s4 + $0x810] sm:$0xff]
    %v1604 = vld [vmem:[%s4 + $0x818] sm:$0xff]
    %v1605 = vld [vmem:[%s4 + $0x820] sm:$0xff]
    %v1606 = vld [vmem:[%s4 + $0x828] sm:$0xff]
    %v1607 = vld [vmem:[%s4 + $0x830] sm:$0xff]
    %v1608 = vld [vmem:[%s4 + $0x838] sm:$0xff]
    %v1609 = vld [vmem:[%s4 + $0x840] sm:$0xff]
    %v1610 = vld [vmem:[%s4 + $0x848] sm:$0xff]
    %v1611 = vld [vmem:[%s4 + $0x850] sm:$0xff]
    %v1612 = vld [vmem:[%s4 + $0x858] sm:$0xff]
    %v1613 = vld [vmem:[%s4 + $0x860] sm:$0xff]
    %v1614 = vld [vmem:[%s4 + $0x868] sm:$0xff]
    %v1615 = vld [vmem:[%s4 + $0x870] sm:$0xff]
    %v1616 = vld [vmem:[%s4 + $0x878] sm:$0xff]
    %v1617 = vld [vmem:[%s4 + $0x880] sm:$0xff]
    %v1618 = vld [vmem:[%s4 + $0x888] sm:$0xff]
    %v1619 = vld [vmem:[%s4 + $0x890] sm:$0xff]
    %v1620 = vld [vmem:[%s4 + $0x898] sm:$0xff]
    %v1621 = vld [vmem:[%s4 + $0x8a0] sm:$0xff]
    %v1622 = vld [vmem:[%s4 + $0x8a8] sm:$0xff]
    %v1623 = vld [vmem:[%s4 + $0x8b0] sm:$0xff]
    %v1624 = vld [vmem:[%s4 + $0x8b8] sm:$0xff]
    %v1625 = vld [vmem:[%s4 + $0x8c0] sm:$0xff]
    %v1626 = vld [vmem:[%s4 + $0x8c8] sm:$0xff]
    %v1627 = vld [vmem:[%s4 + $0x8d0] sm:$0xff]
    %v1628 = vld [vmem:[%s4 + $0x8d8] sm:$0xff]
    %v1629 = vld [vmem:[%s4 + $0x8e0] sm:$0xff]
    %v1630 = vld [vmem:[%s4 + $0x8e8] sm:$0xff]
    %v1631 = vld [vmem:[%s4 + $0x8f0] sm:$0xff]
    %v1632 = vld [vmem:[%s4 + $0x8f8] sm:$0xff]
    %v1633 = vpack.c.bf16 %v1282, %v1281
    %v1634 = vpack.c.bf16 %v1284, %v1283
    %v1635 = vpack.c.bf16 %v1286, %v1285
    %v1636 = vpack.c.bf16 %v1288, %v1287
    %v1637 = vpack.c.bf16 %v1290, %v1289
    %v1638 = vpack.c.bf16 %v1292, %v1291
    %v1639 = vpack.c.bf16 %v1294, %v1293
    %v1640 = vpack.c.bf16 %v1296, %v1295
    %v1641 = vpack.c.bf16 %v1298, %v1297
    %v1642 = vpack.c.bf16 %v1300, %v1299
    %v1643 = vpack.c.bf16 %v1302, %v1301
    %v1644 = vpack.c.bf16 %v1304, %v1303
    %v1645 = vpack.c.bf16 %v1306, %v1305
    %v1646 = vpack.c.bf16 %v1308, %v1307
    %v1647 = vpack.c.bf16 %v1310, %v1309
    %v1648 = vpack.c.bf16 %v1312, %v1311
    %v1649 = vpack.c.bf16 %v1314, %v1313
    %v1650 = vpack.c.bf16 %v1316, %v1315
    %v1651 = vpack.c.bf16 %v1318, %v1317
    %v1652 = vpack.c.bf16 %v1320, %v1319
    %v1653 = vpack.c.bf16 %v1322, %v1321
    %v1654 = vpack.c.bf16 %v1324, %v1323
    %v1655 = vpack.c.bf16 %v1326, %v1325
    %v1656 = vpack.c.bf16 %v1328, %v1327
    %v1657 = vpack.c.bf16 %v1330, %v1329
    %v1658 = vpack.c.bf16 %v1332, %v1331
    %v1659 = vpack.c.bf16 %v1334, %v1333
    %v1660 = vpack.c.bf16 %v1336, %v1335
    %v1661 = vpack.c.bf16 %v1338, %v1337
    %v1662 = vpack.c.bf16 %v1340, %v1339
    %v1663 = vpack.c.bf16 %v1342, %v1341
    %v1664 = vpack.c.bf16 %v1344, %v1343
    %v1953 = vunpack.c.l.b16 %v1345
    %v1954 = vunpack.c.h.b16 %v1345
    %v1955 = vunpack.c.l.b16 %v1346
    %v1956 = vunpack.c.h.b16 %v1346
    %v1957 = vunpack.c.l.b16 %v1347
    %v1958 = vunpack.c.h.b16 %v1347
    %v1959 = vunpack.c.l.b16 %v1348
    %v1960 = vunpack.c.h.b16 %v1348
    %v1961 = vunpack.c.l.b16 %v1349
    %v1962 = vunpack.c.h.b16 %v1349
    %v1963 = vunpack.c.l.b16 %v1350
    %v1964 = vunpack.c.h.b16 %v1350
    %v1965 = vunpack.c.l.b16 %v1351
    %v1966 = vunpack.c.h.b16 %v1351
    %v1967 = vunpack.c.l.b16 %v1352
    %v1968 = vunpack.c.h.b16 %v1352
    %v1969 = vunpack.c.l.b16 %v1353
    %v1970 = vunpack.c.h.b16 %v1353
    %v1971 = vunpack.c.l.b16 %v1354
    %v1972 = vunpack.c.h.b16 %v1354
    %v1973 = vunpack.c.l.b16 %v1355
    %v1974 = vunpack.c.h.b16 %v1355
    %v1975 = vunpack.c.l.b16 %v1356
    %v1976 = vunpack.c.h.b16 %v1356
    %v1977 = vunpack.c.l.b16 %v1357
    %v1978 = vunpack.c.h.b16 %v1357
    %v1979 = vunpack.c.l.b16 %v1358
    %v1980 = vunpack.c.h.b16 %v1358
    %v1981 = vunpack.c.l.b16 %v1359
    %v1982 = vunpack.c.h.b16 %v1359
    %v1983 = vunpack.c.l.b16 %v1360
    %v1984 = vunpack.c.h.b16 %v1360
    %v1985 = vunpack.c.l.b16 %v1361
    %v1986 = vunpack.c.h.b16 %v1361
    %v1987 = vunpack.c.l.b16 %v1362
    %v1988 = vunpack.c.h.b16 %v1362
    %v1989 = vunpack.c.l.b16 %v1363
    %v1990 = vunpack.c.h.b16 %v1363
    %v1991 = vunpack.c.l.b16 %v1364
    %v1992 = vunpack.c.h.b16 %v1364
    %v1993 = vunpack.c.l.b16 %v1365
    %v1994 = vunpack.c.h.b16 %v1365
    %v1995 = vunpack.c.l.b16 %v1366
    %v1996 = vunpack.c.h.b16 %v1366
    %v1997 = vunpack.c.l.b16 %v1367
    %v1998 = vunpack.c.h.b16 %v1367
    %v1999 = vunpack.c.l.b16 %v1368
    %v2000 = vunpack.c.h.b16 %v1368
    %v2001 = vunpack.c.l.b16 %v1369
    %v2002 = vunpack.c.h.b16 %v1369
    %v2003 = vunpack.c.l.b16 %v1370
    %v2004 = vunpack.c.h.b16 %v1370
    %v2005 = vunpack.c.l.b16 %v1371
    %v2006 = vunpack.c.h.b16 %v1371
    %v2007 = vunpack.c.l.b16 %v1372
    %v2008 = vunpack.c.h.b16 %v1372
    %v2009 = vunpack.c.l.b16 %v1373
    %v2010 = vunpack.c.h.b16 %v1373
    %v2011 = vunpack.c.l.b16 %v1374
    %v2012 = vunpack.c.h.b16 %v1374
    %v2013 = vunpack.c.l.b16 %v1375
    %v2014 = vunpack.c.h.b16 %v1375
    %v2015 = vunpack.c.l.b16 %v1376
    %v2016 = vunpack.c.h.b16 %v1376
    %v2017 = vunpack.c.l.b16 %v1377
    %v2018 = vunpack.c.h.b16 %v1377
    %v2019 = vunpack.c.l.b16 %v1378
    %v2020 = vunpack.c.h.b16 %v1378
    %v2021 = vunpack.c.l.b16 %v1379
    %v2022 = vunpack.c.h.b16 %v1379
    %v2023 = vunpack.c.l.b16 %v1380
    %v2024 = vunpack.c.h.b16 %v1380
    %v2025 = vunpack.c.l.b16 %v1381
    %v2026 = vunpack.c.h.b16 %v1381
    %v2027 = vunpack.c.l.b16 %v1382
    %v2028 = vunpack.c.h.b16 %v1382
    %v2029 = vunpack.c.l.b16 %v1383
    %v2030 = vunpack.c.h.b16 %v1383
    %v2031 = vunpack.c.l.b16 %v1384
    %v2032 = vunpack.c.h.b16 %v1384
    %v2033 = vunpack.c.l.b16 %v1385
    %v2034 = vunpack.c.h.b16 %v1385
    %v2035 = vunpack.c.l.b16 %v1386
    %v2036 = vunpack.c.h.b16 %v1386
    %v2037 = vunpack.c.l.b16 %v1387
    %v2038 = vunpack.c.h.b16 %v1387
    %v2039 = vunpack.c.l.b16 %v1388
    %v2040 = vunpack.c.h.b16 %v1388
    %v2041 = vunpack.c.l.b16 %v1389
    %v2042 = vunpack.c.h.b16 %v1389
    %v2043 = vunpack.c.l.b16 %v1390
    %v2044 = vunpack.c.h.b16 %v1390
    %v2045 = vunpack.c.l.b16 %v1391
    %v2046 = vunpack.c.h.b16 %v1391
    %v2047 = vunpack.c.l.b16 %v1392
    %v2048 = vunpack.c.h.b16 %v1392
    %v2049 = vunpack.c.l.b16 %v1393
    %v2050 = vunpack.c.h.b16 %v1393
    %v2051 = vunpack.c.l.b16 %v1394
    %v2052 = vunpack.c.h.b16 %v1394
    %v2053 = vunpack.c.l.b16 %v1395
    %v2054 = vunpack.c.h.b16 %v1395
    %v2055 = vunpack.c.l.b16 %v1396
    %v2056 = vunpack.c.h.b16 %v1396
    %v2057 = vunpack.c.l.b16 %v1397
    %v2058 = vunpack.c.h.b16 %v1397
    %v2059 = vunpack.c.l.b16 %v1398
    %v2060 = vunpack.c.h.b16 %v1398
    %v2061 = vunpack.c.l.b16 %v1399
    %v2062 = vunpack.c.h.b16 %v1399
    %v2063 = vunpack.c.l.b16 %v1400
    %v2064 = vunpack.c.h.b16 %v1400
    %v2065 = vunpack.c.l.b16 %v1401
    %v2066 = vunpack.c.h.b16 %v1401
    %v2067 = vunpack.c.l.b16 %v1402
    %v2068 = vunpack.c.h.b16 %v1402
    %v2069 = vunpack.c.l.b16 %v1403
    %v2070 = vunpack.c.h.b16 %v1403
    %v2071 = vunpack.c.l.b16 %v1404
    %v2072 = vunpack.c.h.b16 %v1404
    %v2073 = vunpack.c.l.b16 %v1405
    %v2074 = vunpack.c.h.b16 %v1405
    %v2075 = vunpack.c.l.b16 %v1406
    %v2076 = vunpack.c.h.b16 %v1406
    %v2077 = vunpack.c.l.b16 %v1407
    %v2078 = vunpack.c.h.b16 %v1407
    %v2079 = vunpack.c.l.b16 %v1408
    %v2080 = vunpack.c.h.b16 %v1408
    %v2081 = vunpack.c.l.b16 %v1409
    %v2082 = vunpack.c.h.b16 %v1409
    %v2083 = vunpack.c.l.b16 %v1410
    %v2084 = vunpack.c.h.b16 %v1410
    %v2085 = vunpack.c.l.b16 %v1411
    %v2086 = vunpack.c.h.b16 %v1411
    %v2087 = vunpack.c.l.b16 %v1412
    %v2088 = vunpack.c.h.b16 %v1412
    %v2089 = vunpack.c.l.b16 %v1413
    %v2090 = vunpack.c.h.b16 %v1413
    %v2091 = vunpack.c.l.b16 %v1414
    %v2092 = vunpack.c.h.b16 %v1414
    %v2093 = vunpack.c.l.b16 %v1415
    %v2094 = vunpack.c.h.b16 %v1415
    %v2095 = vunpack.c.l.b16 %v1416
    %v2096 = vunpack.c.h.b16 %v1416
    %v2097 = vunpack.c.l.b16 %v1417
    %v2098 = vunpack.c.h.b16 %v1417
    %v2099 = vunpack.c.l.b16 %v1418
    %v2100 = vunpack.c.h.b16 %v1418
    %v2101 = vunpack.c.l.b16 %v1419
    %v2102 = vunpack.c.h.b16 %v1419
    %v2103 = vunpack.c.l.b16 %v1420
    %v2104 = vunpack.c.h.b16 %v1420
    %v2105 = vunpack.c.l.b16 %v1421
    %v2106 = vunpack.c.h.b16 %v1421
    %v2107 = vunpack.c.l.b16 %v1422
    %v2108 = vunpack.c.h.b16 %v1422
    %v2109 = vunpack.c.l.b16 %v1423
    %v2110 = vunpack.c.h.b16 %v1423
    %v2111 = vunpack.c.l.b16 %v1424
    %v2112 = vunpack.c.h.b16 %v1424
    %v2113 = vunpack.c.l.b16 %v1425
    %v2114 = vunpack.c.h.b16 %v1425
    %v2115 = vunpack.c.l.b16 %v1426
    %v2116 = vunpack.c.h.b16 %v1426
    %v2117 = vunpack.c.l.b16 %v1427
    %v2118 = vunpack.c.h.b16 %v1427
    %v2119 = vunpack.c.l.b16 %v1428
    %v2120 = vunpack.c.h.b16 %v1428
    %v2121 = vunpack.c.l.b16 %v1429
    %v2122 = vunpack.c.h.b16 %v1429
    %v2123 = vunpack.c.l.b16 %v1430
    %v2124 = vunpack.c.h.b16 %v1430
    %v2125 = vunpack.c.l.b16 %v1431
    %v2126 = vunpack.c.h.b16 %v1431
    %v2127 = vunpack.c.l.b16 %v1432
    %v2128 = vunpack.c.h.b16 %v1432
    %v2129 = vunpack.c.l.b16 %v1433
    %v2130 = vunpack.c.h.b16 %v1433
    %v2131 = vunpack.c.l.b16 %v1434
    %v2132 = vunpack.c.h.b16 %v1434
    %v2133 = vunpack.c.l.b16 %v1435
    %v2134 = vunpack.c.h.b16 %v1435
    %v2135 = vunpack.c.l.b16 %v1436
    %v2136 = vunpack.c.h.b16 %v1436
    %v2137 = vunpack.c.l.b16 %v1437
    %v2138 = vunpack.c.h.b16 %v1437
    %v2139 = vunpack.c.l.b16 %v1438
    %v2140 = vunpack.c.h.b16 %v1438
    %v2141 = vunpack.c.l.b16 %v1439
    %v2142 = vunpack.c.h.b16 %v1439
    %v2143 = vunpack.c.l.b16 %v1440
    %v2144 = vunpack.c.h.b16 %v1440
    %v2145 = vunpack.c.l.b16 %v1441
    %v2146 = vunpack.c.h.b16 %v1441
    %v2147 = vunpack.c.l.b16 %v1442
    %v2148 = vunpack.c.h.b16 %v1442
    %v2149 = vunpack.c.l.b16 %v1443
    %v2150 = vunpack.c.h.b16 %v1443
    %v2151 = vunpack.c.l.b16 %v1444
    %v2152 = vunpack.c.h.b16 %v1444
    %v2153 = vunpack.c.l.b16 %v1445
    %v2154 = vunpack.c.h.b16 %v1445
    %v2155 = vunpack.c.l.b16 %v1446
    %v2156 = vunpack.c.h.b16 %v1446
    %v2157 = vunpack.c.l.b16 %v1447
    %v2158 = vunpack.c.h.b16 %v1447
    %v2159 = vunpack.c.l.b16 %v1448
    %v2160 = vunpack.c.h.b16 %v1448
    %v2161 = vunpack.c.l.b16 %v1449
    %v2162 = vunpack.c.h.b16 %v1449
    %v2163 = vunpack.c.l.b16 %v1450
    %v2164 = vunpack.c.h.b16 %v1450
    %v2165 = vunpack.c.l.b16 %v1451
    %v2166 = vunpack.c.h.b16 %v1451
    %v2167 = vunpack.c.l.b16 %v1452
    %v2168 = vunpack.c.h.b16 %v1452
    %v2169 = vunpack.c.l.b16 %v1453
    %v2170 = vunpack.c.h.b16 %v1453
    %v2171 = vunpack.c.l.b16 %v1454
    %v2172 = vunpack.c.h.b16 %v1454
    %v2173 = vunpack.c.l.b16 %v1455
    %v2174 = vunpack.c.h.b16 %v1455
    %v2175 = vunpack.c.l.b16 %v1456
    %v2176 = vunpack.c.h.b16 %v1456
    %v2177 = vunpack.c.l.b16 %v1457
    %v2178 = vunpack.c.h.b16 %v1457
    %v2179 = vunpack.c.l.b16 %v1458
    %v2180 = vunpack.c.h.b16 %v1458
    %v2181 = vunpack.c.l.b16 %v1459
    %v2182 = vunpack.c.h.b16 %v1459
    %v2183 = vunpack.c.l.b16 %v1460
    %v2184 = vunpack.c.h.b16 %v1460
    %v2185 = vunpack.c.l.b16 %v1461
    %v2186 = vunpack.c.h.b16 %v1461
    %v2187 = vunpack.c.l.b16 %v1462
    %v2188 = vunpack.c.h.b16 %v1462
    %v2189 = vunpack.c.l.b16 %v1463
    %v2190 = vunpack.c.h.b16 %v1463
    %v2191 = vunpack.c.l.b16 %v1464
    %v2192 = vunpack.c.h.b16 %v1464
    %v2193 = vunpack.c.l.b16 %v1465
    %v2194 = vunpack.c.h.b16 %v1465
    %v2195 = vunpack.c.l.b16 %v1466
    %v2196 = vunpack.c.h.b16 %v1466
    %v2197 = vunpack.c.l.b16 %v1467
    %v2198 = vunpack.c.h.b16 %v1467
    %v2199 = vunpack.c.l.b16 %v1468
    %v2200 = vunpack.c.h.b16 %v1468
    %v2201 = vunpack.c.l.b16 %v1469
    %v2202 = vunpack.c.h.b16 %v1469
    %v2203 = vunpack.c.l.b16 %v1470
    %v2204 = vunpack.c.h.b16 %v1470
    %v2205 = vunpack.c.l.b16 %v1471
    %v2206 = vunpack.c.h.b16 %v1471
    %v2207 = vunpack.c.l.b16 %v1472
    %v2208 = vunpack.c.h.b16 %v1472
    %v2209 = vunpack.c.l.b16 %v1473
    %v2210 = vunpack.c.h.b16 %v1473
    %v2211 = vunpack.c.l.b16 %v1474
    %v2212 = vunpack.c.h.b16 %v1474
    %v2213 = vunpack.c.l.b16 %v1475
    %v2214 = vunpack.c.h.b16 %v1475
    %v2215 = vunpack.c.l.b16 %v1476
    %v2216 = vunpack.c.h.b16 %v1476
    %v2217 = vunpack.c.l.b16 %v1477
    %v2218 = vunpack.c.h.b16 %v1477
    %v2219 = vunpack.c.l.b16 %v1478
    %v2220 = vunpack.c.h.b16 %v1478
    %v2221 = vunpack.c.l.b16 %v1479
    %v2222 = vunpack.c.h.b16 %v1479
    %v2223 = vunpack.c.l.b16 %v1480
    %v2224 = vunpack.c.h.b16 %v1480
    %v2225 = vunpack.c.l.b16 %v1481
    %v2226 = vunpack.c.h.b16 %v1481
    %v2227 = vunpack.c.l.b16 %v1482
    %v2228 = vunpack.c.h.b16 %v1482
    %v2229 = vunpack.c.l.b16 %v1483
    %v2230 = vunpack.c.h.b16 %v1483
    %v2231 = vunpack.c.l.b16 %v1484
    %v2232 = vunpack.c.h.b16 %v1484
    %v2233 = vunpack.c.l.b16 %v1485
    %v2234 = vunpack.c.h.b16 %v1485
    %v2235 = vunpack.c.l.b16 %v1486
    %v2236 = vunpack.c.h.b16 %v1486
    %v2237 = vunpack.c.l.b16 %v1487
    %v2238 = vunpack.c.h.b16 %v1487
    %v2239 = vunpack.c.l.b16 %v1488
    %v2240 = vunpack.c.h.b16 %v1488
    %v2241 = vunpack.c.l.b16 %v1489
    %v2242 = vunpack.c.h.b16 %v1489
    %v2243 = vunpack.c.l.b16 %v1490
    %v2244 = vunpack.c.h.b16 %v1490
    %v2245 = vunpack.c.l.b16 %v1491
    %v2246 = vunpack.c.h.b16 %v1491
    %v2247 = vunpack.c.l.b16 %v1492
    %v2248 = vunpack.c.h.b16 %v1492
    %v2249 = vunpack.c.l.b16 %v1493
    %v2250 = vunpack.c.h.b16 %v1493
    %v2251 = vunpack.c.l.b16 %v1494
    %v2252 = vunpack.c.h.b16 %v1494
    %v2253 = vunpack.c.l.b16 %v1495
    %v2254 = vunpack.c.h.b16 %v1495
    %v2255 = vunpack.c.l.b16 %v1496
    %v2256 = vunpack.c.h.b16 %v1496
    %v2257 = vunpack.c.l.b16 %v1497
    %v2258 = vunpack.c.h.b16 %v1497
    %v2259 = vunpack.c.l.b16 %v1498
    %v2260 = vunpack.c.h.b16 %v1498
    %v2261 = vunpack.c.l.b16 %v1499
    %v2262 = vunpack.c.h.b16 %v1499
    %v2263 = vunpack.c.l.b16 %v1500
    %v2264 = vunpack.c.h.b16 %v1500
    %v2265 = vunpack.c.l.b16 %v1501
    %v2266 = vunpack.c.h.b16 %v1501
    %v2267 = vunpack.c.l.b16 %v1502
    %v2268 = vunpack.c.h.b16 %v1502
    %v2269 = vunpack.c.l.b16 %v1503
    %v2270 = vunpack.c.h.b16 %v1503
    %v2271 = vunpack.c.l.b16 %v1504
    %v2272 = vunpack.c.h.b16 %v1504
    %v2273 = vunpack.c.l.b16 %v1505
    %v2274 = vunpack.c.h.b16 %v1505
    %v2275 = vunpack.c.l.b16 %v1506
    %v2276 = vunpack.c.h.b16 %v1506
    %v2277 = vunpack.c.l.b16 %v1507
    %v2278 = vunpack.c.h.b16 %v1507
    %v2279 = vunpack.c.l.b16 %v1508
    %v2280 = vunpack.c.h.b16 %v1508
    %v2281 = vunpack.c.l.b16 %v1509
    %v2282 = vunpack.c.h.b16 %v1509
    %v2283 = vunpack.c.l.b16 %v1510
    %v2284 = vunpack.c.h.b16 %v1510
    %v2285 = vunpack.c.l.b16 %v1511
    %v2286 = vunpack.c.h.b16 %v1511
    %v2287 = vunpack.c.l.b16 %v1512
    %v2288 = vunpack.c.h.b16 %v1512
    %v2289 = vunpack.c.l.b16 %v1513
    %v2290 = vunpack.c.h.b16 %v1513
    %v2291 = vunpack.c.l.b16 %v1514
    %v2292 = vunpack.c.h.b16 %v1514
    %v2293 = vunpack.c.l.b16 %v1515
    %v2294 = vunpack.c.h.b16 %v1515
    %v2295 = vunpack.c.l.b16 %v1516
    %v2296 = vunpack.c.h.b16 %v1516
    %v2297 = vunpack.c.l.b16 %v1517
    %v2298 = vunpack.c.h.b16 %v1517
    %v2299 = vunpack.c.l.b16 %v1518
    %v2300 = vunpack.c.h.b16 %v1518
    %v2301 = vunpack.c.l.b16 %v1519
    %v2302 = vunpack.c.h.b16 %v1519
    %v2303 = vunpack.c.l.b16 %v1520
    %v2304 = vunpack.c.h.b16 %v1520
    %v2305 = vunpack.c.l.b16 %v1521
    %v2306 = vunpack.c.h.b16 %v1521
    %v2307 = vunpack.c.l.b16 %v1522
    %v2308 = vunpack.c.h.b16 %v1522
    %v2309 = vunpack.c.l.b16 %v1523
    %v2310 = vunpack.c.h.b16 %v1523
    %v2311 = vunpack.c.l.b16 %v1524
    %v2312 = vunpack.c.h.b16 %v1524
    %v2313 = vunpack.c.l.b16 %v1525
    %v2314 = vunpack.c.h.b16 %v1525
    %v2315 = vunpack.c.l.b16 %v1526
    %v2316 = vunpack.c.h.b16 %v1526
    %v2317 = vunpack.c.l.b16 %v1527
    %v2318 = vunpack.c.h.b16 %v1527
    %v2319 = vunpack.c.l.b16 %v1528
    %v2320 = vunpack.c.h.b16 %v1528
    %v2321 = vunpack.c.l.b16 %v1529
    %v2322 = vunpack.c.h.b16 %v1529
    %v2323 = vunpack.c.l.b16 %v1530
    %v2324 = vunpack.c.h.b16 %v1530
    %v2325 = vunpack.c.l.b16 %v1531
    %v2326 = vunpack.c.h.b16 %v1531
    %v2327 = vunpack.c.l.b16 %v1532
    %v2328 = vunpack.c.h.b16 %v1532
    %v2329 = vunpack.c.l.b16 %v1533
    %v2330 = vunpack.c.h.b16 %v1533
    %v2331 = vunpack.c.l.b16 %v1534
    %v2332 = vunpack.c.h.b16 %v1534
    %v2333 = vunpack.c.l.b16 %v1535
    %v2334 = vunpack.c.h.b16 %v1535
    %v2335 = vunpack.c.l.b16 %v1536
    %v2336 = vunpack.c.h.b16 %v1536
    %v2337 = vunpack.c.l.b16 %v1537
    %v2338 = vunpack.c.h.b16 %v1537
    %v2339 = vunpack.c.l.b16 %v1538
    %v2340 = vunpack.c.h.b16 %v1538
    %v2341 = vunpack.c.l.b16 %v1539
    %v2342 = vunpack.c.h.b16 %v1539
    %v2343 = vunpack.c.l.b16 %v1540
    %v2344 = vunpack.c.h.b16 %v1540
    %v2345 = vunpack.c.l.b16 %v1541
    %v2346 = vunpack.c.h.b16 %v1541
    %v2347 = vunpack.c.l.b16 %v1542
    %v2348 = vunpack.c.h.b16 %v1542
    %v2349 = vunpack.c.l.b16 %v1543
    %v2350 = vunpack.c.h.b16 %v1543
    %v2351 = vunpack.c.l.b16 %v1544
    %v2352 = vunpack.c.h.b16 %v1544
    %v2353 = vunpack.c.l.b16 %v1545
    %v2354 = vunpack.c.h.b16 %v1545
    %v2355 = vunpack.c.l.b16 %v1546
    %v2356 = vunpack.c.h.b16 %v1546
    %v2357 = vunpack.c.l.b16 %v1547
    %v2358 = vunpack.c.h.b16 %v1547
    %v2359 = vunpack.c.l.b16 %v1548
    %v2360 = vunpack.c.h.b16 %v1548
    %v2361 = vunpack.c.l.b16 %v1549
    %v2362 = vunpack.c.h.b16 %v1549
    %v2363 = vunpack.c.l.b16 %v1550
    %v2364 = vunpack.c.h.b16 %v1550
    %v2365 = vunpack.c.l.b16 %v1551
    %v2366 = vunpack.c.h.b16 %v1551
    %v2367 = vunpack.c.l.b16 %v1552
    %v2368 = vunpack.c.h.b16 %v1552
    %v2369 = vunpack.c.l.b16 %v1553
    %v2370 = vunpack.c.h.b16 %v1553
    %v2371 = vunpack.c.l.b16 %v1554
    %v2372 = vunpack.c.h.b16 %v1554
    %v2373 = vunpack.c.l.b16 %v1555
    %v2374 = vunpack.c.h.b16 %v1555
    %v2375 = vunpack.c.l.b16 %v1556
    %v2376 = vunpack.c.h.b16 %v1556
    %v2377 = vunpack.c.l.b16 %v1557
    %v2378 = vunpack.c.h.b16 %v1557
    %v2379 = vunpack.c.l.b16 %v1558
    %v2380 = vunpack.c.h.b16 %v1558
    %v2381 = vunpack.c.l.b16 %v1559
    %v2382 = vunpack.c.h.b16 %v1559
    %v2383 = vunpack.c.l.b16 %v1560
    %v2384 = vunpack.c.h.b16 %v1560
    %v2385 = vunpack.c.l.b16 %v1561
    %v2386 = vunpack.c.h.b16 %v1561
    %v2387 = vunpack.c.l.b16 %v1562
    %v2388 = vunpack.c.h.b16 %v1562
    %v2389 = vunpack.c.l.b16 %v1563
    %v2390 = vunpack.c.h.b16 %v1563
    %v2391 = vunpack.c.l.b16 %v1564
    %v2392 = vunpack.c.h.b16 %v1564
    %v2393 = vunpack.c.l.b16 %v1565
    %v2394 = vunpack.c.h.b16 %v1565
    %v2395 = vunpack.c.l.b16 %v1566
    %v2396 = vunpack.c.h.b16 %v1566
    %v2397 = vunpack.c.l.b16 %v1567
    %v2398 = vunpack.c.h.b16 %v1567
    %v2399 = vunpack.c.l.b16 %v1568
    %v2400 = vunpack.c.h.b16 %v1568
    %v2401 = vunpack.c.l.b16 %v1569
    %v2402 = vunpack.c.h.b16 %v1569
    %v2403 = vunpack.c.l.b16 %v1570
    %v2404 = vunpack.c.h.b16 %v1570
    %v2405 = vunpack.c.l.b16 %v1571
    %v2406 = vunpack.c.h.b16 %v1571
    %v2407 = vunpack.c.l.b16 %v1572
    %v2408 = vunpack.c.h.b16 %v1572
    %v2409 = vunpack.c.l.b16 %v1573
    %v2410 = vunpack.c.h.b16 %v1573
    %v2411 = vunpack.c.l.b16 %v1574
    %v2412 = vunpack.c.h.b16 %v1574
    %v2413 = vunpack.c.l.b16 %v1575
    %v2414 = vunpack.c.h.b16 %v1575
    %v2415 = vunpack.c.l.b16 %v1576
    %v2416 = vunpack.c.h.b16 %v1576
    %v2417 = vunpack.c.l.b16 %v1577
    %v2418 = vunpack.c.h.b16 %v1577
    %v2419 = vunpack.c.l.b16 %v1578
    %v2420 = vunpack.c.h.b16 %v1578
    %v2421 = vunpack.c.l.b16 %v1579
    %v2422 = vunpack.c.h.b16 %v1579
    %v2423 = vunpack.c.l.b16 %v1580
    %v2424 = vunpack.c.h.b16 %v1580
    %v2425 = vunpack.c.l.b16 %v1581
    %v2426 = vunpack.c.h.b16 %v1581
    %v2427 = vunpack.c.l.b16 %v1582
    %v2428 = vunpack.c.h.b16 %v1582
    %v2429 = vunpack.c.l.b16 %v1583
    %v2430 = vunpack.c.h.b16 %v1583
    %v2431 = vunpack.c.l.b16 %v1584
    %v2432 = vunpack.c.h.b16 %v1584
    %v2433 = vunpack.c.l.b16 %v1585
    %v2434 = vunpack.c.h.b16 %v1585
    %v2435 = vunpack.c.l.b16 %v1586
    %v2436 = vunpack.c.h.b16 %v1586
    %v2437 = vunpack.c.l.b16 %v1587
    %v2438 = vunpack.c.h.b16 %v1587
    %v2439 = vunpack.c.l.b16 %v1588
    %v2440 = vunpack.c.h.b16 %v1588
    %v2441 = vunpack.c.l.b16 %v1589
    %v2442 = vunpack.c.h.b16 %v1589
    %v2443 = vunpack.c.l.b16 %v1590
    %v2444 = vunpack.c.h.b16 %v1590
    %v2445 = vunpack.c.l.b16 %v1591
    %v2446 = vunpack.c.h.b16 %v1591
    %v2447 = vunpack.c.l.b16 %v1592
    %v2448 = vunpack.c.h.b16 %v1592
    %v2449 = vunpack.c.l.b16 %v1593
    %v2450 = vunpack.c.h.b16 %v1593
    %v2451 = vunpack.c.l.b16 %v1594
    %v2452 = vunpack.c.h.b16 %v1594
    %v2453 = vunpack.c.l.b16 %v1595
    %v2454 = vunpack.c.h.b16 %v1595
    %v2455 = vunpack.c.l.b16 %v1596
    %v2456 = vunpack.c.h.b16 %v1596
    %v2457 = vunpack.c.l.b16 %v1597
    %v2458 = vunpack.c.h.b16 %v1597
    %v2459 = vunpack.c.l.b16 %v1598
    %v2460 = vunpack.c.h.b16 %v1598
    %v2461 = vunpack.c.l.b16 %v1599
    %v2462 = vunpack.c.h.b16 %v1599
    %v2463 = vunpack.c.l.b16 %v1600
    %v2464 = vunpack.c.h.b16 %v1600
    %v2465 = vunpack.c.l.b16 %v1601
    %v2466 = vunpack.c.h.b16 %v1601
    %v2467 = vunpack.c.l.b16 %v1602
    %v2468 = vunpack.c.h.b16 %v1602
    %v2469 = vunpack.c.l.b16 %v1603
    %v2470 = vunpack.c.h.b16 %v1603
    %v2471 = vunpack.c.l.b16 %v1604
    %v2472 = vunpack.c.h.b16 %v1604
    %v2473 = vunpack.c.l.b16 %v1605
    %v2474 = vunpack.c.h.b16 %v1605
    %v2475 = vunpack.c.l.b16 %v1606
    %v2476 = vunpack.c.h.b16 %v1606
    %v2477 = vunpack.c.l.b16 %v1607
    %v2478 = vunpack.c.h.b16 %v1607
    %v2479 = vunpack.c.l.b16 %v1608
    %v2480 = vunpack.c.h.b16 %v1608
    %v2481 = vunpack.c.l.b16 %v1609
    %v2482 = vunpack.c.h.b16 %v1609
    %v2483 = vunpack.c.l.b16 %v1610
    %v2484 = vunpack.c.h.b16 %v1610
    %v2485 = vunpack.c.l.b16 %v1611
    %v2486 = vunpack.c.h.b16 %v1611
    %v2487 = vunpack.c.l.b16 %v1612
    %v2488 = vunpack.c.h.b16 %v1612
    %v2489 = vunpack.c.l.b16 %v1613
    %v2490 = vunpack.c.h.b16 %v1613
    %v2491 = vunpack.c.l.b16 %v1614
    %v2492 = vunpack.c.h.b16 %v1614
    %v2493 = vunpack.c.l.b16 %v1615
    %v2494 = vunpack.c.h.b16 %v1615
    %v2495 = vunpack.c.l.b16 %v1616
    %v2496 = vunpack.c.h.b16 %v1616
    %v2497 = vunpack.c.l.b16 %v1617
    %v2498 = vunpack.c.h.b16 %v1617
    %v2499 = vunpack.c.l.b16 %v1618
    %v2500 = vunpack.c.h.b16 %v1618
    %v2501 = vunpack.c.l.b16 %v1619
    %v2502 = vunpack.c.h.b16 %v1619
    %v2503 = vunpack.c.l.b16 %v1620
    %v2504 = vunpack.c.h.b16 %v1620
    %v2505 = vunpack.c.l.b16 %v1621
    %v2506 = vunpack.c.h.b16 %v1621
    %v2507 = vunpack.c.l.b16 %v1622
    %v2508 = vunpack.c.h.b16 %v1622
    %v2509 = vunpack.c.l.b16 %v1623
    %v2510 = vunpack.c.h.b16 %v1623
    %v2511 = vunpack.c.l.b16 %v1624
    %v2512 = vunpack.c.h.b16 %v1624
    %v2513 = vunpack.c.l.b16 %v1625
    %v2514 = vunpack.c.h.b16 %v1625
    %v2515 = vunpack.c.l.b16 %v1626
    %v2516 = vunpack.c.h.b16 %v1626
    %v2517 = vunpack.c.l.b16 %v1627
    %v2518 = vunpack.c.h.b16 %v1627
    %v2519 = vunpack.c.l.b16 %v1628
    %v2520 = vunpack.c.h.b16 %v1628
    %v2521 = vunpack.c.l.b16 %v1629
    %v2522 = vunpack.c.h.b16 %v1629
    %v2523 = vunpack.c.l.b16 %v1630
    %v2524 = vunpack.c.h.b16 %v1630
    %v2525 = vunpack.c.l.b16 %v1631
    %v2526 = vunpack.c.h.b16 %v1631
    %v2527 = vunpack.c.l.b16 %v1632
    %v2528 = vunpack.c.h.b16 %v1632
    %v2529 = vpack.c.b16 %v1957, %v1953
    %v2530 = vpack.c.b16 %v1958, %v1954
    %v2531 = vpack.c.b16 %v1959, %v1955
    %v2532 = vpack.c.b16 %v1960, %v1956
    %v2533 = vpack.c.b16 %v1965, %v1961
    %v2534 = vpack.c.b16 %v1966, %v1962
    %v2535 = vpack.c.b16 %v1967, %v1963
    %v2536 = vpack.c.b16 %v1968, %v1964
    %v2537 = vpack.c.b16 %v1973, %v1969
    %v2538 = vpack.c.b16 %v1974, %v1970
    %v2539 = vpack.c.b16 %v1975, %v1971
    %v2540 = vpack.c.b16 %v1976, %v1972
    %v2541 = vpack.c.b16 %v1981, %v1977
    %v2542 = vpack.c.b16 %v1982, %v1978
    %v2543 = vpack.c.b16 %v1983, %v1979
    %v2544 = vpack.c.b16 %v1984, %v1980
    %v2545 = vpack.c.b16 %v1989, %v1985
    %v2546 = vpack.c.b16 %v1990, %v1986
    %v2547 = vpack.c.b16 %v1991, %v1987
    %v2548 = vpack.c.b16 %v1992, %v1988
    %v2549 = vpack.c.b16 %v1997, %v1993
    %v2550 = vpack.c.b16 %v1998, %v1994
    %v2551 = vpack.c.b16 %v1999, %v1995
    %v2552 = vpack.c.b16 %v2000, %v1996
    %v2553 = vpack.c.b16 %v2005, %v2001
    %v2554 = vpack.c.b16 %v2006, %v2002
    %v2555 = vpack.c.b16 %v2007, %v2003
    %v2556 = vpack.c.b16 %v2008, %v2004
    %v2557 = vpack.c.b16 %v2013, %v2009
    %v2558 = vpack.c.b16 %v2014, %v2010
    %v2559 = vpack.c.b16 %v2015, %v2011
    %v2560 = vpack.c.b16 %v2016, %v2012
    %v2561 = vpack.c.b16 %v2021, %v2017
    %v2562 = vpack.c.b16 %v2022, %v2018
    %v2563 = vpack.c.b16 %v2023, %v2019
    %v2564 = vpack.c.b16 %v2024, %v2020
    %v2565 = vpack.c.b16 %v2029, %v2025
    %v2566 = vpack.c.b16 %v2030, %v2026
    %v2567 = vpack.c.b16 %v2031, %v2027
    %v2568 = vpack.c.b16 %v2032, %v2028
    %v2569 = vpack.c.b16 %v2037, %v2033
    %v2570 = vpack.c.b16 %v2038, %v2034
    %v2571 = vpack.c.b16 %v2039, %v2035
    %v2572 = vpack.c.b16 %v2040, %v2036
    %v2573 = vpack.c.b16 %v2045, %v2041
    %v2574 = vpack.c.b16 %v2046, %v2042
    %v2575 = vpack.c.b16 %v2047, %v2043
    %v2576 = vpack.c.b16 %v2048, %v2044
    %v2577 = vpack.c.b16 %v2053, %v2049
    %v2578 = vpack.c.b16 %v2054, %v2050
    %v2579 = vpack.c.b16 %v2055, %v2051
    %v2580 = vpack.c.b16 %v2056, %v2052
    %v2581 = vpack.c.b16 %v2061, %v2057
    %v2582 = vpack.c.b16 %v2062, %v2058
    %v2583 = vpack.c.b16 %v2063, %v2059
    %v2584 = vpack.c.b16 %v2064, %v2060
    %v2585 = vpack.c.b16 %v2069, %v2065
    %v2586 = vpack.c.b16 %v2070, %v2066
    %v2587 = vpack.c.b16 %v2071, %v2067
    %v2588 = vpack.c.b16 %v2072, %v2068
    %v2589 = vpack.c.b16 %v2077, %v2073
    %v2590 = vpack.c.b16 %v2078, %v2074
    %v2591 = vpack.c.b16 %v2079, %v2075
    %v2592 = vpack.c.b16 %v2080, %v2076
    %v2593 = vpack.c.b16 %v2085, %v2081
    %v2594 = vpack.c.b16 %v2086, %v2082
    %v2595 = vpack.c.b16 %v2087, %v2083
    %v2596 = vpack.c.b16 %v2088, %v2084
    %v2597 = vpack.c.b16 %v2093, %v2089
    %v2598 = vpack.c.b16 %v2094, %v2090
    %v2599 = vpack.c.b16 %v2095, %v2091
    %v2600 = vpack.c.b16 %v2096, %v2092
    %v2601 = vpack.c.b16 %v2101, %v2097
    %v2602 = vpack.c.b16 %v2102, %v2098
    %v2603 = vpack.c.b16 %v2103, %v2099
    %v2604 = vpack.c.b16 %v2104, %v2100
    %v2605 = vpack.c.b16 %v2109, %v2105
    %v2606 = vpack.c.b16 %v2110, %v2106
    %v2607 = vpack.c.b16 %v2111, %v2107
    %v2608 = vpack.c.b16 %v2112, %v2108
    %v2609 = vpack.c.b16 %v2117, %v2113
    %v2610 = vpack.c.b16 %v2118, %v2114
    %v2611 = vpack.c.b16 %v2119, %v2115
    %v2612 = vpack.c.b16 %v2120, %v2116
    %v2613 = vpack.c.b16 %v2125, %v2121
    %v2614 = vpack.c.b16 %v2126, %v2122
    %v2615 = vpack.c.b16 %v2127, %v2123
    %v2616 = vpack.c.b16 %v2128, %v2124
    %v2617 = vpack.c.b16 %v2133, %v2129
    %v2618 = vpack.c.b16 %v2134, %v2130
    %v2619 = vpack.c.b16 %v2135, %v2131
    %v2620 = vpack.c.b16 %v2136, %v2132
    %v2621 = vpack.c.b16 %v2141, %v2137
    %v2622 = vpack.c.b16 %v2142, %v2138
    %v2623 = vpack.c.b16 %v2143, %v2139
    %v2624 = vpack.c.b16 %v2144, %v2140
    %v2625 = vpack.c.b16 %v2149, %v2145
    %v2626 = vpack.c.b16 %v2150, %v2146
    %v2627 = vpack.c.b16 %v2151, %v2147
    %v2628 = vpack.c.b16 %v2152, %v2148
    %v2629 = vpack.c.b16 %v2157, %v2153
    %v2630 = vpack.c.b16 %v2158, %v2154
    %v2631 = vpack.c.b16 %v2159, %v2155
    %v2632 = vpack.c.b16 %v2160, %v2156
    %v2633 = vpack.c.b16 %v2165, %v2161
    %v2634 = vpack.c.b16 %v2166, %v2162
    %v2635 = vpack.c.b16 %v2167, %v2163
    %v2636 = vpack.c.b16 %v2168, %v2164
    %v2637 = vpack.c.b16 %v2173, %v2169
    %v2638 = vpack.c.b16 %v2174, %v2170
    %v2639 = vpack.c.b16 %v2175, %v2171
    %v2640 = vpack.c.b16 %v2176, %v2172
    %v2641 = vpack.c.b16 %v2181, %v2177
    %v2642 = vpack.c.b16 %v2182, %v2178
    %v2643 = vpack.c.b16 %v2183, %v2179
    %v2644 = vpack.c.b16 %v2184, %v2180
    %v2645 = vpack.c.b16 %v2189, %v2185
    %v2646 = vpack.c.b16 %v2190, %v2186
    %v2647 = vpack.c.b16 %v2191, %v2187
    %v2648 = vpack.c.b16 %v2192, %v2188
    %v2649 = vpack.c.b16 %v2197, %v2193
    %v2650 = vpack.c.b16 %v2198, %v2194
    %v2651 = vpack.c.b16 %v2199, %v2195
    %v2652 = vpack.c.b16 %v2200, %v2196
    %v2653 = vpack.c.b16 %v2205, %v2201
    %v2654 = vpack.c.b16 %v2206, %v2202
    %v2655 = vpack.c.b16 %v2207, %v2203
    %v2656 = vpack.c.b16 %v2208, %v2204
    %v2657 = vpack.c.b16 %v2213, %v2209
    %v2658 = vpack.c.b16 %v2214, %v2210
    %v2659 = vpack.c.b16 %v2215, %v2211
    %v2660 = vpack.c.b16 %v2216, %v2212
    %v2661 = vpack.c.b16 %v2221, %v2217
    %v2662 = vpack.c.b16 %v2222, %v2218
    %v2663 = vpack.c.b16 %v2223, %v2219
    %v2664 = vpack.c.b16 %v2224, %v2220
    %v2665 = vpack.c.b16 %v2229, %v2225
    %v2666 = vpack.c.b16 %v2230, %v2226
    %v2667 = vpack.c.b16 %v2231, %v2227
    %v2668 = vpack.c.b16 %v2232, %v2228
    %v2669 = vpack.c.b16 %v2237, %v2233
    %v2670 = vpack.c.b16 %v2238, %v2234
    %v2671 = vpack.c.b16 %v2239, %v2235
    %v2672 = vpack.c.b16 %v2240, %v2236
    %v2673 = vpack.c.b16 %v2245, %v2241
    %v2674 = vpack.c.b16 %v2246, %v2242
    %v2675 = vpack.c.b16 %v2247, %v2243
    %v2676 = vpack.c.b16 %v2248, %v2244
    %v2677 = vpack.c.b16 %v2253, %v2249
    %v2678 = vpack.c.b16 %v2254, %v2250
    %v2679 = vpack.c.b16 %v2255, %v2251
    %v2680 = vpack.c.b16 %v2256, %v2252
    %v2681 = vpack.c.b16 %v2261, %v2257
    %v2682 = vpack.c.b16 %v2262, %v2258
    %v2683 = vpack.c.b16 %v2263, %v2259
    %v2684 = vpack.c.b16 %v2264, %v2260
    %v2685 = vpack.c.b16 %v2269, %v2265
    %v2686 = vpack.c.b16 %v2270, %v2266
    %v2687 = vpack.c.b16 %v2271, %v2267
    %v2688 = vpack.c.b16 %v2272, %v2268
    %v2689 = vpack.c.b16 %v2277, %v2273
    %v2690 = vpack.c.b16 %v2278, %v2274
    %v2691 = vpack.c.b16 %v2279, %v2275
    %v2692 = vpack.c.b16 %v2280, %v2276
    %v2693 = vpack.c.b16 %v2285, %v2281
    %v2694 = vpack.c.b16 %v2286, %v2282
    %v2695 = vpack.c.b16 %v2287, %v2283
    %v2696 = vpack.c.b16 %v2288, %v2284
    %v2697 = vpack.c.b16 %v2293, %v2289
    %v2698 = vpack.c.b16 %v2294, %v2290
    %v2699 = vpack.c.b16 %v2295, %v2291
    %v2700 = vpack.c.b16 %v2296, %v2292
    %v2701 = vpack.c.b16 %v2301, %v2297
    %v2702 = vpack.c.b16 %v2302, %v2298
    %v2703 = vpack.c.b16 %v2303, %v2299
    %v2704 = vpack.c.b16 %v2304, %v2300
    %v2705 = vpack.c.b16 %v2309, %v2305
    %v2706 = vpack.c.b16 %v2310, %v2306
    %v2707 = vpack.c.b16 %v2311, %v2307
    %v2708 = vpack.c.b16 %v2312, %v2308
    %v2709 = vpack.c.b16 %v2317, %v2313
    %v2710 = vpack.c.b16 %v2318, %v2314
    %v2711 = vpack.c.b16 %v2319, %v2315
    %v2712 = vpack.c.b16 %v2320, %v2316
    %v2713 = vpack.c.b16 %v2325, %v2321
    %v2714 = vpack.c.b16 %v2326, %v2322
    %v2715 = vpack.c.b16 %v2327, %v2323
    %v2716 = vpack.c.b16 %v2328, %v2324
    %v2717 = vpack.c.b16 %v2333, %v2329
    %v2718 = vpack.c.b16 %v2334, %v2330
    %v2719 = vpack.c.b16 %v2335, %v2331
    %v2720 = vpack.c.b16 %v2336, %v2332
    %v2721 = vpack.c.b16 %v2341, %v2337
    %v2722 = vpack.c.b16 %v2342, %v2338
    %v2723 = vpack.c.b16 %v2343, %v2339
    %v2724 = vpack.c.b16 %v2344, %v2340
    %v2725 = vpack.c.b16 %v2349, %v2345
    %v2726 = vpack.c.b16 %v2350, %v2346
    %v2727 = vpack.c.b16 %v2351, %v2347
    %v2728 = vpack.c.b16 %v2352, %v2348
    %v2729 = vpack.c.b16 %v2357, %v2353
    %v2730 = vpack.c.b16 %v2358, %v2354
    %v2731 = vpack.c.b16 %v2359, %v2355
    %v2732 = vpack.c.b16 %v2360, %v2356
    %v2733 = vpack.c.b16 %v2365, %v2361
    %v2734 = vpack.c.b16 %v2366, %v2362
    %v2735 = vpack.c.b16 %v2367, %v2363
    %v2736 = vpack.c.b16 %v2368, %v2364
    %v2737 = vpack.c.b16 %v2373, %v2369
    %v2738 = vpack.c.b16 %v2374, %v2370
    %v2739 = vpack.c.b16 %v2375, %v2371
    %v2740 = vpack.c.b16 %v2376, %v2372
    %v2741 = vpack.c.b16 %v2381, %v2377
    %v2742 = vpack.c.b16 %v2382, %v2378
    %v2743 = vpack.c.b16 %v2383, %v2379
    %v2744 = vpack.c.b16 %v2384, %v2380
    %v2745 = vpack.c.b16 %v2389, %v2385
    %v2746 = vpack.c.b16 %v2390, %v2386
    %v2747 = vpack.c.b16 %v2391, %v2387
    %v2748 = vpack.c.b16 %v2392, %v2388
    %v2749 = vpack.c.b16 %v2397, %v2393
    %v2750 = vpack.c.b16 %v2398, %v2394
    %v2751 = vpack.c.b16 %v2399, %v2395
    %v2752 = vpack.c.b16 %v2400, %v2396
    %v2753 = vpack.c.b16 %v2405, %v2401
    %v2754 = vpack.c.b16 %v2406, %v2402
    %v2755 = vpack.c.b16 %v2407, %v2403
    %v2756 = vpack.c.b16 %v2408, %v2404
    %v2757 = vpack.c.b16 %v2413, %v2409
    %v2758 = vpack.c.b16 %v2414, %v2410
    %v2759 = vpack.c.b16 %v2415, %v2411
    %v2760 = vpack.c.b16 %v2416, %v2412
    %v2761 = vpack.c.b16 %v2421, %v2417
    %v2762 = vpack.c.b16 %v2422, %v2418
    %v2763 = vpack.c.b16 %v2423, %v2419
    %v2764 = vpack.c.b16 %v2424, %v2420
    %v2765 = vpack.c.b16 %v2429, %v2425
    %v2766 = vpack.c.b16 %v2430, %v2426
    %v2767 = vpack.c.b16 %v2431, %v2427
    %v2768 = vpack.c.b16 %v2432, %v2428
    %v2769 = vpack.c.b16 %v2437, %v2433
    %v2770 = vpack.c.b16 %v2438, %v2434
    %v2771 = vpack.c.b16 %v2439, %v2435
    %v2772 = vpack.c.b16 %v2440, %v2436
    %v2773 = vpack.c.b16 %v2445, %v2441
    %v2774 = vpack.c.b16 %v2446, %v2442
    %v2775 = vpack.c.b16 %v2447, %v2443
    %v2776 = vpack.c.b16 %v2448, %v2444
    %v2777 = vpack.c.b16 %v2453, %v2449
    %v2778 = vpack.c.b16 %v2454, %v2450
    %v2779 = vpack.c.b16 %v2455, %v2451
    %v2780 = vpack.c.b16 %v2456, %v2452
    %v2781 = vpack.c.b16 %v2461, %v2457
    %v2782 = vpack.c.b16 %v2462, %v2458
    %v2783 = vpack.c.b16 %v2463, %v2459
    %v2784 = vpack.c.b16 %v2464, %v2460
    %v2785 = vpack.c.b16 %v2469, %v2465
    %v2786 = vpack.c.b16 %v2470, %v2466
    %v2787 = vpack.c.b16 %v2471, %v2467
    %v2788 = vpack.c.b16 %v2472, %v2468
    %v2789 = vpack.c.b16 %v2477, %v2473
    %v2790 = vpack.c.b16 %v2478, %v2474
    %v2791 = vpack.c.b16 %v2479, %v2475
    %v2792 = vpack.c.b16 %v2480, %v2476
    %v2793 = vpack.c.b16 %v2485, %v2481
    %v2794 = vpack.c.b16 %v2486, %v2482
    %v2795 = vpack.c.b16 %v2487, %v2483
    %v2796 = vpack.c.b16 %v2488, %v2484
    %v2797 = vpack.c.b16 %v2493, %v2489
    %v2798 = vpack.c.b16 %v2494, %v2490
    %v2799 = vpack.c.b16 %v2495, %v2491
    %v2800 = vpack.c.b16 %v2496, %v2492
    %v2801 = vpack.c.b16 %v2501, %v2497
    %v2802 = vpack.c.b16 %v2502, %v2498
    %v2803 = vpack.c.b16 %v2503, %v2499
    %v2804 = vpack.c.b16 %v2504, %v2500
    %v2805 = vpack.c.b16 %v2509, %v2505
    %v2806 = vpack.c.b16 %v2510, %v2506
    %v2807 = vpack.c.b16 %v2511, %v2507
    %v2808 = vpack.c.b16 %v2512, %v2508
    %v2809 = vpack.c.b16 %v2517, %v2513
    %v2810 = vpack.c.b16 %v2518, %v2514
    %v2811 = vpack.c.b16 %v2519, %v2515
    %v2812 = vpack.c.b16 %v2520, %v2516
    %v2813 = vpack.c.b16 %v2525, %v2521
    %v2814 = vpack.c.b16 %v2526, %v2522
    %v2815 = vpack.c.b16 %v2527, %v2523
    %v2816 = vpack.c.b16 %v2528, %v2524
    %3105 = vmatprep.subr.bf16.mxu0 0
    %3106 = vmatpush1.bf16.msra.mxu0 %v1633
    %3107 = vmatprep.subr.bf16.mxu0 0
    %3108 = vmatpush1.bf16.msra.mxu0 %v1634
    %3109 = vmatprep.subr.bf16.mxu0 0
    %3110 = vmatpush1.bf16.msra.mxu0 %v1635
    %3111 = vmatprep.subr.bf16.mxu0 0
    %3112 = vmatpush1.bf16.msra.mxu0 %v1636
    %3113 = vmatprep.subr.bf16.mxu0 0
    %3114 = vmatpush1.bf16.msra.mxu0 %v1637
    %3115 = vmatprep.subr.bf16.mxu0 0
    %3116 = vmatpush1.bf16.msra.mxu0 %v1638
    %3117 = vmatprep.subr.bf16.mxu0 0
    %3118 = vmatpush1.bf16.msra.mxu0 %v1639
    %3119 = vmatprep.subr.bf16.mxu0 0
    %3120 = vmatpush1.bf16.msra.mxu0 %v1640
    %3121 = vmatprep.subr.bf16.mxu0 0
    %3122 = vmatpush1.bf16.msra.mxu0 %v1641
    %3123 = vmatprep.subr.bf16.mxu0 0
    %3124 = vmatpush1.bf16.msra.mxu0 %v1642
    %3125 = vmatprep.subr.bf16.mxu0 0
    %3126 = vmatpush1.bf16.msra.mxu0 %v1643
    %3127 = vmatprep.subr.bf16.mxu0 0
    %3128 = vmatpush1.bf16.msra.mxu0 %v1644
    %3129 = vmatprep.subr.bf16.mxu0 0
    %3130 = vmatpush1.bf16.msra.mxu0 %v1645
    %3131 = vmatprep.subr.bf16.mxu0 0
    %3132 = vmatpush1.bf16.msra.mxu0 %v1646
    %3133 = vmatprep.subr.bf16.mxu0 0
    %3134 = vmatpush1.bf16.msra.mxu0 %v1647
    %3135 = vmatprep.subr.bf16.mxu0 0
    %3136 = vmatpush1.bf16.msra.mxu0 %v1648
    %3137 = vmatprep.mubr.bf16.mxu0 %v2530
    %3138 = vmatmul.mubr.bf16.gmra.mrb[0].mxu0 %v2529
    %v3139 = vpop.f32.mrb[0].mxu0
    %v3140 = vadd.f32 0.0, %v3139
    %v3141 = vpop.f32.mrb[0].mxu0
    %v3142 = vpop.f32.mrb[0].mxu0
    %v3143 = vadd.f32 0.0, %v3142
    %v3144 = vpop.f32.mrb[0].mxu0
    %3145 = vmatprep.mubr.bf16.mxu0 %v2534
    %3146 = vmatmul.mubr.bf16.gmra.mrb[0].mxu0 %v2533
    %v3147 = vpop.f32.mrb[0].mxu0
    %v3148 = vadd.f32 0.0, %v3147
    %v3149 = vpop.f32.mrb[0].mxu0
    %v3150 = vpop.f32.mrb[0].mxu0
    %v3151 = vadd.f32 0.0, %v3150
    %v3152 = vpop.f32.mrb[0].mxu0
    %3153 = vmatprep.mubr.bf16.mxu0 %v2538
    %3154 = vmatmul.mubr.bf16.gmra.mrb[0].mxu0 %v2537
    %v3155 = vpop.f32.mrb[0].mxu0
    %v3156 = vadd.f32 0.0, %v3155
    %v3157 = vpop.f32.mrb[0].mxu0
    %v3158 = vpop.f32.mrb[0].mxu0
    %v3159 = vadd.f32 0.0, %v3158
    %v3160 = vpop.f32.mrb[0].mxu0
    %3161 = vmatprep.mubr.bf16.mxu0 %v2542
    %3162 = vmatmul.mubr.bf16.gmra.mrb[0].mxu0 %v2541
    %v3163 = vpop.f32.mrb[0].mxu0
    %v3164 = vadd.f32 0.0, %v3163
    %v3165 = vpop.f32.mrb[0].mxu0
    %v3166 = vpop.f32.mrb[0].mxu0
    %v3167 = vadd.f32 0.0, %v3166
    %v3168 = vpop.f32.mrb[0].mxu0
    %3169 = vmatprep.mubr.bf16.mxu0 %v2546
    %3170 = vmatmul.mubr.bf16.gmra.mrb[0].mxu0 %v2545
    %v3171 = vpop.f32.mrb[0].mxu0
    %v3172 = vadd.f32 0.0, %v3171
    %v3173 = vpop.f32.mrb[0].mxu0
    %v3174 = vpop.f32.mrb[0].mxu0
    %v3175 = vadd.f32 0.0, %v3174
    %v3176 = vpop.f32.mrb[0].mxu0
    %3177 = vmatprep.mubr.bf16.mxu0 %v2550
    %3178 = vmatmul.mubr.bf16.gmra.mrb[0].mxu0 %v2549
    %v3179 = vpop.f32.mrb[0].mxu0
    %v3180 = vadd.f32 0.0, %v3179
    %v3181 = vpop.f32.mrb[0].mxu0
    %v3182 = vpop.f32.mrb[0].mxu0
    %v3183 = vadd.f32 0.0, %v3182
    %v3184 = vpop.f32.mrb[0].mxu0
    %3185 = vmatprep.mubr.bf16.mxu0 %v2554
    %3186 = vmatmul.mubr.bf16.gmra.mrb[0].mxu0 %v2553
    %v3187 = vpop.f32.mrb[0].mxu0
    %v3188 = vadd.f32 0.0, %v3187
    %v3189 = vpop.f32.mrb[0].mxu0
    %v3190 = vpop.f32.mrb[0].mxu0
    %v3191 = vadd.f32 0.0, %v3190
    %v3192 = vpop.f32.mrb[0].mxu0
    %3193 = vmatprep.mubr.bf16.mxu0 %v2558
    %3194 = vmatmul.mubr.bf16.gmra.mrb[0].mxu0 %v2557
    %v3195 = vpop.f32.mrb[0].mxu0
    %v3196 = vadd.f32 0.0, %v3195
    %v3197 = vpop.f32.mrb[0].mxu0
    %v3198 = vpop.f32.mrb[0].mxu0
    %v3199 = vadd.f32 0.0, %v3198
    %v3200 = vpop.f32.mrb[0].mxu0
    %3201 = vmatprep.mubr.bf16.mxu0 %v2562
    %3202 = vmatmul.mubr.bf16.gmra.mrb[0].mxu0 %v2561
    %v3203 = vpop.f32.mrb[0].mxu0
    %v3204 = vadd.f32 0.0, %v3203
    %v3205 = vpop.f32.mrb[0].mxu0
    %v3206 = vpop.f32.mrb[0].mxu0
    %v3207 = vadd.f32 0.0, %v3206
    %v3208 = vpop.f32.mrb[0].mxu0
    %3209 = vmatprep.mubr.bf16.mxu0 %v2566
    %3210 = vmatmul.mubr.bf16.gmra.mrb[0].mxu0 %v2565
    %v3211 = vpop.f32.mrb[0].mxu0
    %v3212 = vadd.f32 0.0, %v3211
    %v3213 = vpop.f32.mrb[0].mxu0
    %v3214 = vpop.f32.mrb[0].mxu0
    %v3215 = vadd.f32 0.0, %v3214
    %v3216 = vpop.f32.mrb[0].mxu0
    %3217 = vmatprep.mubr.bf16.mxu0 %v2570
    %3218 = vmatmul.mubr.bf16.gmra.mrb[0].mxu0 %v2569
    %v3219 = vpop.f32.mrb[0].mxu0
    %v3220 = vadd.f32 0.0, %v3219
    %v3221 = vpop.f32.mrb[0].mxu0
    %v3222 = vpop.f32.mrb[0].mxu0
    %v3223 = vadd.f32 0.0, %v3222
    %v3224 = vpop.f32.mrb[0].mxu0
    %3225 = vmatprep.mubr.bf16.mxu0 %v2574
    %3226 = vmatmul.mubr.bf16.gmra.mrb[0].mxu0 %v2573
    %v3227 = vpop.f32.mrb[0].mxu0
    %v3228 = vadd.f32 0.0, %v3227
    %v3229 = vpop.f32.mrb[0].mxu0
    %v3230 = vpop.f32.mrb[0].mxu0
    %v3231 = vadd.f32 0.0, %v3230
    %v3232 = vpop.f32.mrb[0].mxu0
    %3233 = vmatprep.mubr.bf16.mxu0 %v2578
    %3234 = vmatmul.mubr.bf16.gmra.mrb[0].mxu0 %v2577
    %v3235 = vpop.f32.mrb[0].mxu0
    %v3236 = vadd.f32 0.0, %v3235
    %v3237 = vpop.f32.mrb[0].mxu0
    %v3238 = vpop.f32.mrb[0].mxu0
    %v3239 = vadd.f32 0.0, %v3238
    %v3240 = vpop.f32.mrb[0].mxu0
    %3241 = vmatprep.mubr.bf16.mxu0 %v2582
    %3242 = vmatmul.mubr.bf16.gmra.mrb[0].mxu0 %v2581
    %v3243 = vpop.f32.mrb[0].mxu0
    %v3244 = vadd.f32 0.0, %v3243
    %v3245 = vpop.f32.mrb[0].mxu0
    %v3246 = vpop.f32.mrb[0].mxu0
    %v3247 = vadd.f32 0.0, %v3246
    %v3248 = vpop.f32.mrb[0].mxu0
    %3249 = vmatprep.mubr.bf16.mxu0 %v2586
    %3250 = vmatmul.mubr.bf16.gmra.mrb[0].mxu0 %v2585
    %v3251 = vpop.f32.mrb[0].mxu0
    %v3252 = vadd.f32 0.0, %v3251
    %v3253 = vpop.f32.mrb[0].mxu0
    %v3254 = vpop.f32.mrb[0].mxu0
    %v3255 = vadd.f32 0.0, %v3254
    %v3256 = vpop.f32.mrb[0].mxu0
    %3257 = vmatprep.mubr.bf16.mxu0 %v2590
    %3258 = vmatmul.mubr.bf16.gmra.mrb[0].mxu0 %v2589
    %v3259 = vpop.f32.mrb[0].mxu0
    %v3260 = vadd.f32 0.0, %v3259
    %v3261 = vpop.f32.mrb[0].mxu0
    %v3262 = vpop.f32.mrb[0].mxu0
    %v3263 = vadd.f32 0.0, %v3262
    %v3264 = vpop.f32.mrb[0].mxu0
    %3265 = vmatprep.mubr.bf16.mxu0 %v2594
    %3266 = vmatmul.mubr.bf16.gmra.mrb[0].mxu0 %v2593
    %v3267 = vpop.f32.mrb[0].mxu0
    %v3268 = vadd.f32 0.0, %v3267
    %v3269 = vpop.f32.mrb[0].mxu0
    %v3270 = vpop.f32.mrb[0].mxu0
    %v3271 = vadd.f32 0.0, %v3270
    %v3272 = vpop.f32.mrb[0].mxu0
    %3273 = vmatprep.mubr.bf16.mxu0 %v2598
    %3274 = vmatmul.mubr.bf16.gmra.mrb[0].mxu0 %v2597
    %v3275 = vpop.f32.mrb[0].mxu0
    %v3276 = vadd.f32 0.0, %v3275
    %v3277 = vpop.f32.mrb[0].mxu0
    %v3278 = vpop.f32.mrb[0].mxu0
    %v3279 = vadd.f32 0.0, %v3278
    %v3280 = vpop.f32.mrb[0].mxu0
    %3281 = vmatprep.mubr.bf16.mxu0 %v2602
    %3282 = vmatmul.mubr.bf16.gmra.mrb[0].mxu0 %v2601
    %v3283 = vpop.f32.mrb[0].mxu0
    %v3284 = vadd.f32 0.0, %v3283
    %v3285 = vpop.f32.mrb[0].mxu0
    %v3286 = vpop.f32.mrb[0].mxu0
    %v3287 = vadd.f32 0.0, %v3286
    %v3288 = vpop.f32.mrb[0].mxu0
    %3289 = vmatprep.mubr.bf16.mxu0 %v2606
    %3290 = vmatmul.mubr.bf16.gmra.mrb[0].mxu0 %v2605
    %v3291 = vpop.f32.mrb[0].mxu0
    %v3292 = vadd.f32 0.0, %v3291
    %v3293 = vpop.f32.mrb[0].mxu0
    %v3294 = vpop.f32.mrb[0].mxu0
    %v3295 = vadd.f32 0.0, %v3294
    %v3296 = vpop.f32.mrb[0].mxu0
    %3297 = vmatprep.mubr.bf16.mxu0 %v2610
    %3298 = vmatmul.mubr.bf16.gmra.mrb[0].mxu0 %v2609
    %v3299 = vpop.f32.mrb[0].mxu0
    %v3300 = vadd.f32 0.0, %v3299
    %v3301 = vpop.f32.mrb[0].mxu0
    %v3302 = vpop.f32.mrb[0].mxu0
    %v3303 = vadd.f32 0.0, %v3302
    %v3304 = vpop.f32.mrb[0].mxu0
    %3305 = vmatprep.mubr.bf16.mxu0 %v2614
    %3306 = vmatmul.mubr.bf16.gmra.mrb[0].mxu0 %v2613
    %v3307 = vpop.f32.mrb[0].mxu0
    %v3308 = vadd.f32 0.0, %v3307
    %v3309 = vpop.f32.mrb[0].mxu0
    %v3310 = vpop.f32.mrb[0].mxu0
    %v3311 = vadd.f32 0.0, %v3310
    %v3312 = vpop.f32.mrb[0].mxu0
    %3313 = vmatprep.mubr.bf16.mxu0 %v2618
    %3314 = vmatmul.mubr.bf16.gmra.mrb[0].mxu0 %v2617
    %v3315 = vpop.f32.mrb[0].mxu0
    %v3316 = vadd.f32 0.0, %v3315
    %v3317 = vpop.f32.mrb[0].mxu0
    %v3318 = vpop.f32.mrb[0].mxu0
    %v3319 = vadd.f32 0.0, %v3318
    %v3320 = vpop.f32.mrb[0].mxu0
    %3321 = vmatprep.mubr.bf16.mxu0 %v2622
    %3322 = vmatmul.mubr.bf16.gmra.mrb[0].mxu0 %v2621
    %v3323 = vpop.f32.mrb[0].mxu0
    %v3324 = vadd.f32 0.0, %v3323
    %v3325 = vpop.f32.mrb[0].mxu0
    %v3326 = vpop.f32.mrb[0].mxu0
    %v3327 = vadd.f32 0.0, %v3326
    %v3328 = vpop.f32.mrb[0].mxu0
    %3329 = vmatprep.mubr.bf16.mxu0 %v2626
    %3330 = vmatmul.mubr.bf16.gmra.mrb[0].mxu0 %v2625
    %v3331 = vpop.f32.mrb[0].mxu0
    %v3332 = vadd.f32 0.0, %v3331
    %v3333 = vpop.f32.mrb[0].mxu0
    %v3334 = vpop.f32.mrb[0].mxu0
    %v3335 = vadd.f32 0.0, %v3334
    %v3336 = vpop.f32.mrb[0].mxu0
    %3337 = vmatprep.mubr.bf16.mxu0 %v2630
    %3338 = vmatmul.mubr.bf16.gmra.mrb[0].mxu0 %v2629
    %v3339 = vpop.f32.mrb[0].mxu0
    %v3340 = vadd.f32 0.0, %v3339
    %v3341 = vpop.f32.mrb[0].mxu0
    %v3342 = vpop.f32.mrb[0].mxu0
    %v3343 = vadd.f32 0.0, %v3342
    %v3344 = vpop.f32.mrb[0].mxu0
    %3345 = vmatprep.mubr.bf16.mxu0 %v2634
    %3346 = vmatmul.mubr.bf16.gmra.mrb[0].mxu0 %v2633
    %v3347 = vpop.f32.mrb[0].mxu0
    %v3348 = vadd.f32 0.0, %v3347
    %v3349 = vpop.f32.mrb[0].mxu0
    %v3350 = vpop.f32.mrb[0].mxu0
    %v3351 = vadd.f32 0.0, %v3350
    %v3352 = vpop.f32.mrb[0].mxu0
    %3353 = vmatprep.mubr.bf16.mxu0 %v2638
    %3354 = vmatmul.mubr.bf16.gmra.mrb[0].mxu0 %v2637
    %v3355 = vpop.f32.mrb[0].mxu0
    %v3356 = vadd.f32 0.0, %v3355
    %v3357 = vpop.f32.mrb[0].mxu0
    %v3358 = vpop.f32.mrb[0].mxu0
    %v3359 = vadd.f32 0.0, %v3358
    %v3360 = vpop.f32.mrb[0].mxu0
    %3361 = vmatprep.mubr.bf16.mxu0 %v2642
    %3362 = vmatmul.mubr.bf16.gmra.mrb[0].mxu0 %v2641
    %v3363 = vpop.f32.mrb[0].mxu0
    %v3364 = vadd.f32 0.0, %v3363
    %v3365 = vpop.f32.mrb[0].mxu0
    %v3366 = vpop.f32.mrb[0].mxu0
    %v3367 = vadd.f32 0.0, %v3366
    %v3368 = vpop.f32.mrb[0].mxu0
    %3369 = vmatprep.mubr.bf16.mxu0 %v2646
    %3370 = vmatmul.mubr.bf16.gmra.mrb[0].mxu0 %v2645
    %v3371 = vpop.f32.mrb[0].mxu0
    %v3372 = vadd.f32 0.0, %v3371
    %v3373 = vpop.f32.mrb[0].mxu0
    %v3374 = vpop.f32.mrb[0].mxu0
    %v3375 = vadd.f32 0.0, %v3374
    %v3376 = vpop.f32.mrb[0].mxu0
    %3377 = vmatprep.mubr.bf16.mxu0 %v2650
    %3378 = vmatmul.mubr.bf16.gmra.mrb[0].mxu0 %v2649
    %v3379 = vpop.f32.mrb[0].mxu0
    %v3380 = vadd.f32 0.0, %v3379
    %v3381 = vpop.f32.mrb[0].mxu0
    %v3382 = vpop.f32.mrb[0].mxu0
    %v3383 = vadd.f32 0.0, %v3382
    %v3384 = vpop.f32.mrb[0].mxu0
    %3385 = vmatprep.mubr.bf16.mxu0 %v2654
    %3386 = vmatmul.mubr.bf16.gmra.mrb[0].mxu0 %v2653
    %v3387 = vpop.f32.mrb[0].mxu0
    %v3388 = vadd.f32 0.0, %v3387
    %v3389 = vpop.f32.mrb[0].mxu0
    %v3390 = vpop.f32.mrb[0].mxu0
    %v3391 = vadd.f32 0.0, %v3390
    %v3392 = vpop.f32.mrb[0].mxu0
    %3393 = vmatprep.mubr.bf16.mxu0 %v2658
    %3394 = vmatmul.mubr.bf16.gmra.mrb[0].mxu0 %v2657
    %v3395 = vpop.f32.mrb[0].mxu0
    %v3396 = vadd.f32 0.0, %v3395
    %v3397 = vpop.f32.mrb[0].mxu0
    %v3398 = vpop.f32.mrb[0].mxu0
    %v3399 = vadd.f32 0.0, %v3398
    %v3400 = vpop.f32.mrb[0].mxu0
    %3401 = vmatprep.mubr.bf16.mxu0 %v2662
    %3402 = vmatmul.mubr.bf16.gmra.mrb[0].mxu0 %v2661
    %v3403 = vpop.f32.mrb[0].mxu0
    %v3404 = vadd.f32 0.0, %v3403
    %v3405 = vpop.f32.mrb[0].mxu0
    %v3406 = vpop.f32.mrb[0].mxu0
    %v3407 = vadd.f32 0.0, %v3406
    %v3408 = vpop.f32.mrb[0].mxu0
    %3409 = vmatprep.mubr.bf16.mxu0 %v2666
    %3410 = vmatmul.mubr.bf16.gmra.mrb[0].mxu0 %v2665
    %v3411 = vpop.f32.mrb[0].mxu0
    %v3412 = vadd.f32 0.0, %v3411
    %v3413 = vpop.f32.mrb[0].mxu0
    %v3414 = vpop.f32.mrb[0].mxu0
    %v3415 = vadd.f32 0.0, %v3414
    %v3416 = vpop.f32.mrb[0].mxu0
    %3417 = vmatprep.mubr.bf16.mxu0 %v2670
    %3418 = vmatmul.mubr.bf16.gmra.mrb[0].mxu0 %v2669
    %v3419 = vpop.f32.mrb[0].mxu0
    %v3420 = vadd.f32 0.0, %v3419
    %v3421 = vpop.f32.mrb[0].mxu0
    %v3422 = vpop.f32.mrb[0].mxu0
    %v3423 = vadd.f32 0.0, %v3422
    %v3424 = vpop.f32.mrb[0].mxu0
    %3425 = vmatprep.mubr.bf16.mxu0 %v2674
    %3426 = vmatmul.mubr.bf16.gmra.mrb[0].mxu0 %v2673
    %v3427 = vpop.f32.mrb[0].mxu0
    %v3428 = vadd.f32 0.0, %v3427
    %v3429 = vpop.f32.mrb[0].mxu0
    %v3430 = vpop.f32.mrb[0].mxu0
    %v3431 = vadd.f32 0.0, %v3430
    %v3432 = vpop.f32.mrb[0].mxu0
    %3433 = vmatprep.mubr.bf16.mxu0 %v2678
    %3434 = vmatmul.mubr.bf16.gmra.mrb[0].mxu0 %v2677
    %v3435 = vpop.f32.mrb[0].mxu0
    %v3436 = vadd.f32 0.0, %v3435
    %v3437 = vpop.f32.mrb[0].mxu0
    %v3438 = vpop.f32.mrb[0].mxu0
    %v3439 = vadd.f32 0.0, %v3438
    %v3440 = vpop.f32.mrb[0].mxu0
    %3441 = vmatprep.mubr.bf16.mxu0 %v2682
    %3442 = vmatmul.mubr.bf16.gmra.mrb[0].mxu0 %v2681
    %v3443 = vpop.f32.mrb[0].mxu0
    %v3444 = vadd.f32 0.0, %v3443
    %v3445 = vpop.f32.mrb[0].mxu0
    %v3446 = vpop.f32.mrb[0].mxu0
    %v3447 = vadd.f32 0.0, %v3446
    %v3448 = vpop.f32.mrb[0].mxu0
    %3449 = vmatprep.mubr.bf16.mxu0 %v2686
    %3450 = vmatmul.mubr.bf16.gmra.mrb[0].mxu0 %v2685
    %v3451 = vpop.f32.mrb[0].mxu0
    %v3452 = vadd.f32 0.0, %v3451
    %v3453 = vpop.f32.mrb[0].mxu0
    %v3454 = vpop.f32.mrb[0].mxu0
    %v3455 = vadd.f32 0.0, %v3454
    %v3456 = vpop.f32.mrb[0].mxu0
    %3457 = vmatprep.mubr.bf16.mxu0 %v2690
    %3458 = vmatmul.mubr.bf16.gmra.mrb[0].mxu0 %v2689
    %v3459 = vpop.f32.mrb[0].mxu0
    %v3460 = vadd.f32 0.0, %v3459
    %v3461 = vpop.f32.mrb[0].mxu0
    %v3462 = vpop.f32.mrb[0].mxu0
    %v3463 = vadd.f32 0.0, %v3462
    %v3464 = vpop.f32.mrb[0].mxu0
    %3465 = vmatprep.mubr.bf16.mxu0 %v2694
    %3466 = vmatmul.mubr.bf16.gmra.mrb[0].mxu0 %v2693
    %v3467 = vpop.f32.mrb[0].mxu0
    %v3468 = vadd.f32 0.0, %v3467
    %v3469 = vpop.f32.mrb[0].mxu0
    %v3470 = vpop.f32.mrb[0].mxu0
    %v3471 = vadd.f32 0.0, %v3470
    %v3472 = vpop.f32.mrb[0].mxu0
    %3473 = vmatprep.mubr.bf16.mxu0 %v2698
    %3474 = vmatmul.mubr.bf16.gmra.mrb[0].mxu0 %v2697
    %v3475 = vpop.f32.mrb[0].mxu0
    %v3476 = vadd.f32 0.0, %v3475
    %v3477 = vpop.f32.mrb[0].mxu0
    %v3478 = vpop.f32.mrb[0].mxu0
    %v3479 = vadd.f32 0.0, %v3478
    %v3480 = vpop.f32.mrb[0].mxu0
    %3481 = vmatprep.mubr.bf16.mxu0 %v2702
    %3482 = vmatmul.mubr.bf16.gmra.mrb[0].mxu0 %v2701
    %v3483 = vpop.f32.mrb[0].mxu0
    %v3484 = vadd.f32 0.0, %v3483
    %v3485 = vpop.f32.mrb[0].mxu0
    %v3486 = vpop.f32.mrb[0].mxu0
    %v3487 = vadd.f32 0.0, %v3486
    %v3488 = vpop.f32.mrb[0].mxu0
    %3489 = vmatprep.mubr.bf16.mxu0 %v2706
    %3490 = vmatmul.mubr.bf16.gmra.mrb[0].mxu0 %v2705
    %v3491 = vpop.f32.mrb[0].mxu0
    %v3492 = vadd.f32 0.0, %v3491
    %v3493 = vpop.f32.mrb[0].mxu0
    %v3494 = vpop.f32.mrb[0].mxu0
    %v3495 = vadd.f32 0.0, %v3494
    %v3496 = vpop.f32.mrb[0].mxu0
    %3497 = vmatprep.mubr.bf16.mxu0 %v2710
    %3498 = vmatmul.mubr.bf16.gmra.mrb[0].mxu0 %v2709
    %v3499 = vpop.f32.mrb[0].mxu0
    %v3500 = vadd.f32 0.0, %v3499
    %v3501 = vpop.f32.mrb[0].mxu0
    %v3502 = vpop.f32.mrb[0].mxu0
    %v3503 = vadd.f32 0.0, %v3502
    %v3504 = vpop.f32.mrb[0].mxu0
    %3505 = vmatprep.mubr.bf16.mxu0 %v2714
    %3506 = vmatmul.mubr.bf16.gmra.mrb[0].mxu0 %v2713
    %v3507 = vpop.f32.mrb[0].mxu0
    %v3508 = vadd.f32 0.0, %v3507
    %v3509 = vpop.f32.mrb[0].mxu0
    %v3510 = vpop.f32.mrb[0].mxu0
    %v3511 = vadd.f32 0.0, %v3510
    %v3512 = vpop.f32.mrb[0].mxu0
    %3513 = vmatprep.mubr.bf16.mxu0 %v2718
    %3514 = vmatmul.mubr.bf16.gmra.mrb[0].mxu0 %v2717
    %v3515 = vpop.f32.mrb[0].mxu0
    %v3516 = vadd.f32 0.0, %v3515
    %v3517 = vpop.f32.mrb[0].mxu0
    %v3518 = vpop.f32.mrb[0].mxu0
    %v3519 = vadd.f32 0.0, %v3518
    %v3520 = vpop.f32.mrb[0].mxu0
    %3521 = vmatprep.mubr.bf16.mxu0 %v2722
    %3522 = vmatmul.mubr.bf16.gmra.mrb[0].mxu0 %v2721
    %v3523 = vpop.f32.mrb[0].mxu0
    %v3524 = vadd.f32 0.0, %v3523
    %v3525 = vpop.f32.mrb[0].mxu0
    %v3526 = vpop.f32.mrb[0].mxu0
    %v3527 = vadd.f32 0.0, %v3526
    %v3528 = vpop.f32.mrb[0].mxu0
    %3529 = vmatprep.mubr.bf16.mxu0 %v2726
    %3530 = vmatmul.mubr.bf16.gmra.mrb[0].mxu0 %v2725
    %v3531 = vpop.f32.mrb[0].mxu0
    %v3532 = vadd.f32 0.0, %v3531
    %v3533 = vpop.f32.mrb[0].mxu0
    %v3534 = vpop.f32.mrb[0].mxu0
    %v3535 = vadd.f32 0.0, %v3534
    %v3536 = vpop.f32.mrb[0].mxu0
    %3537 = vmatprep.mubr.bf16.mxu0 %v2730
    %3538 = vmatmul.mubr.bf16.gmra.mrb[0].mxu0 %v2729
    %v3539 = vpop.f32.mrb[0].mxu0
    %v3540 = vadd.f32 0.0, %v3539
    %v3541 = vpop.f32.mrb[0].mxu0
    %v3542 = vpop.f32.mrb[0].mxu0
    %v3543 = vadd.f32 0.0, %v3542
    %v3544 = vpop.f32.mrb[0].mxu0
    %3545 = vmatprep.mubr.bf16.mxu0 %v2734
    %3546 = vmatmul.mubr.bf16.gmra.mrb[0].mxu0 %v2733
    %v3547 = vpop.f32.mrb[0].mxu0
    %v3548 = vadd.f32 0.0, %v3547
    %v3549 = vpop.f32.mrb[0].mxu0
    %v3550 = vpop.f32.mrb[0].mxu0
    %v3551 = vadd.f32 0.0, %v3550
    %v3552 = vpop.f32.mrb[0].mxu0
    %3553 = vmatprep.mubr.bf16.mxu0 %v2738
    %3554 = vmatmul.mubr.bf16.gmra.mrb[0].mxu0 %v2737
    %v3555 = vpop.f32.mrb[0].mxu0
    %v3556 = vadd.f32 0.0, %v3555
    %v3557 = vpop.f32.mrb[0].mxu0
    %v3558 = vpop.f32.mrb[0].mxu0
    %v3559 = vadd.f32 0.0, %v3558
    %v3560 = vpop.f32.mrb[0].mxu0
    %3561 = vmatprep.mubr.bf16.mxu0 %v2742
    %3562 = vmatmul.mubr.bf16.gmra.mrb[0].mxu0 %v2741
    %v3563 = vpop.f32.mrb[0].mxu0
    %v3564 = vadd.f32 0.0, %v3563
    %v3565 = vpop.f32.mrb[0].mxu0
    %v3566 = vpop.f32.mrb[0].mxu0
    %v3567 = vadd.f32 0.0, %v3566
    %v3568 = vpop.f32.mrb[0].mxu0
    %3569 = vmatprep.mubr.bf16.mxu0 %v2746
    %3570 = vmatmul.mubr.bf16.gmra.mrb[0].mxu0 %v2745
    %v3571 = vpop.f32.mrb[0].mxu0
    %v3572 = vadd.f32 0.0, %v3571
    %v3573 = vpop.f32.mrb[0].mxu0
    %v3574 = vpop.f32.mrb[0].mxu0
    %v3575 = vadd.f32 0.0, %v3574
    %v3576 = vpop.f32.mrb[0].mxu0
    %3577 = vmatprep.mubr.bf16.mxu0 %v2750
    %3578 = vmatmul.mubr.bf16.gmra.mrb[0].mxu0 %v2749
    %v3579 = vpop.f32.mrb[0].mxu0
    %v3580 = vadd.f32 0.0, %v3579
    %v3581 = vpop.f32.mrb[0].mxu0
    %v3582 = vpop.f32.mrb[0].mxu0
    %v3583 = vadd.f32 0.0, %v3582
    %v3584 = vpop.f32.mrb[0].mxu0
    %3585 = vmatprep.mubr.bf16.mxu0 %v2754
    %3586 = vmatmul.mubr.bf16.gmra.mrb[0].mxu0 %v2753
    %v3587 = vpop.f32.mrb[0].mxu0
    %v3588 = vadd.f32 0.0, %v3587
    %v3589 = vpop.f32.mrb[0].mxu0
    %v3590 = vpop.f32.mrb[0].mxu0
    %v3591 = vadd.f32 0.0, %v3590
    %v3592 = vpop.f32.mrb[0].mxu0
    %3593 = vmatprep.mubr.bf16.mxu0 %v2758
    %3594 = vmatmul.mubr.bf16.gmra.mrb[0].mxu0 %v2757
    %v3595 = vpop.f32.mrb[0].mxu0
    %v3596 = vadd.f32 0.0, %v3595
    %v3597 = vpop.f32.mrb[0].mxu0
    %v3598 = vpop.f32.mrb[0].mxu0
    %v3599 = vadd.f32 0.0, %v3598
    %v3600 = vpop.f32.mrb[0].mxu0
    %3601 = vmatprep.mubr.bf16.mxu0 %v2762
    %3602 = vmatmul.mubr.bf16.gmra.mrb[0].mxu0 %v2761
    %v3603 = vpop.f32.mrb[0].mxu0
    %v3604 = vadd.f32 0.0, %v3603
    %v3605 = vpop.f32.mrb[0].mxu0
    %v3606 = vpop.f32.mrb[0].mxu0
    %v3607 = vadd.f32 0.0, %v3606
    %v3608 = vpop.f32.mrb[0].mxu0
    %3609 = vmatprep.mubr.bf16.mxu0 %v2766
    %3610 = vmatmul.mubr.bf16.gmra.mrb[0].mxu0 %v2765
    %v3611 = vpop.f32.mrb[0].mxu0
    %v3612 = vadd.f32 0.0, %v3611
    %v3613 = vpop.f32.mrb[0].mxu0
    %v3614 = vpop.f32.mrb[0].mxu0
    %v3615 = vadd.f32 0.0, %v3614
    %v3616 = vpop.f32.mrb[0].mxu0
    %3617 = vmatprep.mubr.bf16.mxu0 %v2770
    %3618 = vmatmul.mubr.bf16.gmra.mrb[0].mxu0 %v2769
    %v3619 = vpop.f32.mrb[0].mxu0
    %v3620 = vadd.f32 0.0, %v3619
    %v3621 = vpop.f32.mrb[0].mxu0
    %v3622 = vpop.f32.mrb[0].mxu0
    %v3623 = vadd.f32 0.0, %v3622
    %v3624 = vpop.f32.mrb[0].mxu0
    %3625 = vmatprep.mubr.bf16.mxu0 %v2774
    %3626 = vmatmul.mubr.bf16.gmra.mrb[0].mxu0 %v2773
    %v3627 = vpop.f32.mrb[0].mxu0
    %v3628 = vadd.f32 0.0, %v3627
    %v3629 = vpop.f32.mrb[0].mxu0
    %v3630 = vpop.f32.mrb[0].mxu0
    %v3631 = vadd.f32 0.0, %v3630
    %v3632 = vpop.f32.mrb[0].mxu0
    %3633 = vmatprep.mubr.bf16.mxu0 %v2778
    %3634 = vmatmul.mubr.bf16.gmra.mrb[0].mxu0 %v2777
    %v3635 = vpop.f32.mrb[0].mxu0
    %v3636 = vadd.f32 0.0, %v3635
    %v3637 = vpop.f32.mrb[0].mxu0
    %v3638 = vpop.f32.mrb[0].mxu0
    %v3639 = vadd.f32 0.0, %v3638
    %v3640 = vpop.f32.mrb[0].mxu0
    %3641 = vmatprep.mubr.bf16.mxu0 %v2782
    %3642 = vmatmul.mubr.bf16.gmra.mrb[0].mxu0 %v2781
    %v3643 = vpop.f32.mrb[0].mxu0
    %v3644 = vadd.f32 0.0, %v3643
    %v3645 = vpop.f32.mrb[0].mxu0
    %v3646 = vpop.f32.mrb[0].mxu0
    %v3647 = vadd.f32 0.0, %v3646
    %v3648 = vpop.f32.mrb[0].mxu0
    %3649 = vmatprep.mubr.bf16.mxu0 %v2786
    %3650 = vmatmul.mubr.bf16.gmra.mrb[0].mxu0 %v2785
    %v3651 = vpop.f32.mrb[0].mxu0
    %v3652 = vadd.f32 0.0, %v3651
    %v3653 = vpop.f32.mrb[0].mxu0
    %v3654 = vpop.f32.mrb[0].mxu0
    %v3655 = vadd.f32 0.0, %v3654
    %v3656 = vpop.f32.mrb[0].mxu0
    %3657 = vmatprep.mubr.bf16.mxu0 %v2790
    %3658 = vmatmul.mubr.bf16.gmra.mrb[0].mxu0 %v2789
    %v3659 = vpop.f32.mrb[0].mxu0
    %v3660 = vadd.f32 0.0, %v3659
    %v3661 = vpop.f32.mrb[0].mxu0
    %v3662 = vpop.f32.mrb[0].mxu0
    %v3663 = vadd.f32 0.0, %v3662
    %v3664 = vpop.f32.mrb[0].mxu0
    %3665 = vmatprep.mubr.bf16.mxu0 %v2794
    %3666 = vmatmul.mubr.bf16.gmra.mrb[0].mxu0 %v2793
    %v3667 = vpop.f32.mrb[0].mxu0
    %v3668 = vadd.f32 0.0, %v3667
    %v3669 = vpop.f32.mrb[0].mxu0
    %v3670 = vpop.f32.mrb[0].mxu0
    %v3671 = vadd.f32 0.0, %v3670
    %v3672 = vpop.f32.mrb[0].mxu0
    %3673 = vmatprep.mubr.bf16.mxu0 %v2798
    %3674 = vmatmul.mubr.bf16.gmra.mrb[0].mxu0 %v2797
    %v3675 = vpop.f32.mrb[0].mxu0
    %v3676 = vadd.f32 0.0, %v3675
    %v3677 = vpop.f32.mrb[0].mxu0
    %v3678 = vpop.f32.mrb[0].mxu0
    %v3679 = vadd.f32 0.0, %v3678
    %v3680 = vpop.f32.mrb[0].mxu0
    %3681 = vmatprep.mubr.bf16.mxu0 %v2802
    %3682 = vmatmul.mubr.bf16.gmra.mrb[0].mxu0 %v2801
    %v3683 = vpop.f32.mrb[0].mxu0
    %v3684 = vadd.f32 0.0, %v3683
    %v3685 = vpop.f32.mrb[0].mxu0
    %v3686 = vpop.f32.mrb[0].mxu0
    %v3687 = vadd.f32 0.0, %v3686
    %v3688 = vpop.f32.mrb[0].mxu0
    %3689 = vmatprep.mubr.bf16.mxu0 %v2806
    %3690 = vmatmul.mubr.bf16.gmra.mrb[0].mxu0 %v2805
    %v3691 = vpop.f32.mrb[0].mxu0
    %v3692 = vadd.f32 0.0, %v3691
    %v3693 = vpop.f32.mrb[0].mxu0
    %v3694 = vpop.f32.mrb[0].mxu0
    %v3695 = vadd.f32 0.0, %v3694
    %v3696 = vpop.f32.mrb[0].mxu0
    %3697 = vmatprep.mubr.bf16.mxu0 %v2810
    %3698 = vmatmul.mubr.bf16.gmra.mrb[0].mxu0 %v2809
    %v3699 = vpop.f32.mrb[0].mxu0
    %v3700 = vadd.f32 0.0, %v3699
    %v3701 = vpop.f32.mrb[0].mxu0
    %v3702 = vpop.f32.mrb[0].mxu0
    %v3703 = vadd.f32 0.0, %v3702
    %v3704 = vpop.f32.mrb[0].mxu0
    %3705 = vmatprep.mubr.bf16.mxu0 %v2814
    %3706 = vmatmul.mubr.bf16.gmra.mrb[0].mxu0 %v2813
    %v3707 = vpop.f32.mrb[0].mxu0
    %v3708 = vadd.f32 0.0, %v3707
    %v3709 = vpop.f32.mrb[0].mxu0
    %v3710 = vpop.f32.mrb[0].mxu0
    %v3711 = vadd.f32 0.0, %v3710
    %v3712 = vpop.f32.mrb[0].mxu0
    %3713 = vdwg.mxu0
    %3714 = vmatprep.subr.bf16.mxu0 0
    %3715 = vmatpush1.bf16.msra.mxu0 %v1649
    %3716 = vmatprep.subr.bf16.mxu0 0
    %3717 = vmatpush1.bf16.msra.mxu0 %v1650
    %3718 = vmatprep.subr.bf16.mxu0 0
    %3719 = vmatpush1.bf16.msra.mxu0 %v1651
    %3720 = vmatprep.subr.bf16.mxu0 0
    %3721 = vmatpush1.bf16.msra.mxu0 %v1652
    %3722 = vmatprep.subr.bf16.mxu0 0
    %3723 = vmatpush1.bf16.msra.mxu0 %v1653
    %3724 = vmatprep.subr.bf16.mxu0 0
    %3725 = vmatpush1.bf16.msra.mxu0 %v1654
    %3726 = vmatprep.subr.bf16.mxu0 0
    %3727 = vmatpush1.bf16.msra.mxu0 %v1655
    %3728 = vmatprep.subr.bf16.mxu0 0
    %3729 = vmatpush1.bf16.msra.mxu0 %v1656
    %3730 = vmatprep.subr.bf16.mxu0 0
    %3731 = vmatpush1.bf16.msra.mxu0 %v1657
    %3732 = vmatprep.subr.bf16.mxu0 0
    %3733 = vmatpush1.bf16.msra.mxu0 %v1658
    %3734 = vmatprep.subr.bf16.mxu0 0
    %3735 = vmatpush1.bf16.msra.mxu0 %v1659
    %3736 = vmatprep.subr.bf16.mxu0 0
    %3737 = vmatpush1.bf16.msra.mxu0 %v1660
    %3738 = vmatprep.subr.bf16.mxu0 0
    %3739 = vmatpush1.bf16.msra.mxu0 %v1661
    %3740 = vmatprep.subr.bf16.mxu0 0
    %3741 = vmatpush1.bf16.msra.mxu0 %v1662
    %3742 = vmatprep.subr.bf16.mxu0 0
    %3743 = vmatpush1.bf16.msra.mxu0 %v1663
    %3744 = vmatprep.subr.bf16.mxu0 0
    %3745 = vmatpush1.bf16.msra.mxu0 %v1664
    %3746 = vmatprep.mubr.bf16.mxu0 %v2532
    %3747 = vmatmul.mubr.bf16.gmra.mrb[0].mxu0 %v2531
    %v3748 = vpop.f32.mrb[0].mxu0
    %v3749 = vadd.f32 %v3140, %v3748
    %v3750 = vpop.f32.mrb[0].mxu0
    %v3751 = vpop.f32.mrb[0].mxu0
    %v3752 = vadd.f32 %v3143, %v3751
    %v3753 = vpop.f32.mrb[0].mxu0
    %3754 = vmatprep.mubr.bf16.mxu0 %v2536
    %3755 = vmatmul.mubr.bf16.gmra.mrb[0].mxu0 %v2535
    %v3756 = vpop.f32.mrb[0].mxu0
    %v3757 = vadd.f32 %v3148, %v3756
    %v3758 = vpop.f32.mrb[0].mxu0
    %v3759 = vpop.f32.mrb[0].mxu0
    %v3760 = vadd.f32 %v3151, %v3759
    %v3761 = vpop.f32.mrb[0].mxu0
    %3762 = vmatprep.mubr.bf16.mxu0 %v2540
    %3763 = vmatmul.mubr.bf16.gmra.mrb[0].mxu0 %v2539
    %v3764 = vpop.f32.mrb[0].mxu0
    %v3765 = vadd.f32 %v3156, %v3764
    %v3766 = vpop.f32.mrb[0].mxu0
    %v3767 = vpop.f32.mrb[0].mxu0
    %v3768 = vadd.f32 %v3159, %v3767
    %v3769 = vpop.f32.mrb[0].mxu0
    %3770 = vmatprep.mubr.bf16.mxu0 %v2544
    %3771 = vmatmul.mubr.bf16.gmra.mrb[0].mxu0 %v2543
    %v3772 = vpop.f32.mrb[0].mxu0
    %v3773 = vadd.f32 %v3164, %v3772
    %v3774 = vpop.f32.mrb[0].mxu0
    %v3775 = vpop.f32.mrb[0].mxu0
    %v3776 = vadd.f32 %v3167, %v3775
    %v3777 = vpop.f32.mrb[0].mxu0
    %3778 = vmatprep.mubr.bf16.mxu0 %v2548
    %3779 = vmatmul.mubr.bf16.gmra.mrb[0].mxu0 %v2547
    %v3780 = vpop.f32.mrb[0].mxu0
    %v3781 = vadd.f32 %v3172, %v3780
    %v3782 = vpop.f32.mrb[0].mxu0
    %v3783 = vpop.f32.mrb[0].mxu0
    %v3784 = vadd.f32 %v3175, %v3783
    %v3785 = vpop.f32.mrb[0].mxu0
    %3786 = vmatprep.mubr.bf16.mxu0 %v2552
    %3787 = vmatmul.mubr.bf16.gmra.mrb[0].mxu0 %v2551
    %v3788 = vpop.f32.mrb[0].mxu0
    %v3789 = vadd.f32 %v3180, %v3788
    %v3790 = vpop.f32.mrb[0].mxu0
    %v3791 = vpop.f32.mrb[0].mxu0
    %v3792 = vadd.f32 %v3183, %v3791
    %v3793 = vpop.f32.mrb[0].mxu0
    %3794 = vmatprep.mubr.bf16.mxu0 %v2556
    %3795 = vmatmul.mubr.bf16.gmra.mrb[0].mxu0 %v2555
    %v3796 = vpop.f32.mrb[0].mxu0
    %v3797 = vadd.f32 %v3188, %v3796
    %v3798 = vpop.f32.mrb[0].mxu0
    %v3799 = vpop.f32.mrb[0].mxu0
    %v3800 = vadd.f32 %v3191, %v3799
    %v3801 = vpop.f32.mrb[0].mxu0
    %3802 = vmatprep.mubr.bf16.mxu0 %v2560
    %3803 = vmatmul.mubr.bf16.gmra.mrb[0].mxu0 %v2559
    %v3804 = vpop.f32.mrb[0].mxu0
    %v3805 = vadd.f32 %v3196, %v3804
    %v3806 = vpop.f32.mrb[0].mxu0
    %v3807 = vpop.f32.mrb[0].mxu0
    %v3808 = vadd.f32 %v3199, %v3807
    %v3809 = vpop.f32.mrb[0].mxu0
    %3810 = vmatprep.mubr.bf16.mxu0 %v2564
    %3811 = vmatmul.mubr.bf16.gmra.mrb[0].mxu0 %v2563
    %v3812 = vpop.f32.mrb[0].mxu0
    %v3813 = vadd.f32 %v3204, %v3812
    %v3814 = vpop.f32.mrb[0].mxu0
    %v3815 = vpop.f32.mrb[0].mxu0
    %v3816 = vadd.f32 %v3207, %v3815
    %v3817 = vpop.f32.mrb[0].mxu0
    %3818 = vmatprep.mubr.bf16.mxu0 %v2568
    %3819 = vmatmul.mubr.bf16.gmra.mrb[0].mxu0 %v2567
    %v3820 = vpop.f32.mrb[0].mxu0
    %v3821 = vadd.f32 %v3212, %v3820
    %v3822 = vpop.f32.mrb[0].mxu0
    %v3823 = vpop.f32.mrb[0].mxu0
    %v3824 = vadd.f32 %v3215, %v3823
    %v3825 = vpop.f32.mrb[0].mxu0
    %3826 = vmatprep.mubr.bf16.mxu0 %v2572
    %3827 = vmatmul.mubr.bf16.gmra.mrb[0].mxu0 %v2571
    %v3828 = vpop.f32.mrb[0].mxu0
    %v3829 = vadd.f32 %v3220, %v3828
    %v3830 = vpop.f32.mrb[0].mxu0
    %v3831 = vpop.f32.mrb[0].mxu0
    %v3832 = vadd.f32 %v3223, %v3831
    %v3833 = vpop.f32.mrb[0].mxu0
    %3834 = vmatprep.mubr.bf16.mxu0 %v2576
    %3835 = vmatmul.mubr.bf16.gmra.mrb[0].mxu0 %v2575
    %v3836 = vpop.f32.mrb[0].mxu0
    %v3837 = vadd.f32 %v3228, %v3836
    %v3838 = vpop.f32.mrb[0].mxu0
    %v3839 = vpop.f32.mrb[0].mxu0
    %v3840 = vadd.f32 %v3231, %v3839
    %v3841 = vpop.f32.mrb[0].mxu0
    %3842 = vmatprep.mubr.bf16.mxu0 %v2580
    %3843 = vmatmul.mubr.bf16.gmra.mrb[0].mxu0 %v2579
    %v3844 = vpop.f32.mrb[0].mxu0
    %v3845 = vadd.f32 %v3236, %v3844
    %v3846 = vpop.f32.mrb[0].mxu0
    %v3847 = vpop.f32.mrb[0].mxu0
    %v3848 = vadd.f32 %v3239, %v3847
    %v3849 = vpop.f32.mrb[0].mxu0
    %3850 = vmatprep.mubr.bf16.mxu0 %v2584
    %3851 = vmatmul.mubr.bf16.gmra.mrb[0].mxu0 %v2583
    %v3852 = vpop.f32.mrb[0].mxu0
    %v3853 = vadd.f32 %v3244, %v3852
    %v3854 = vpop.f32.mrb[0].mxu0
    %v3855 = vpop.f32.mrb[0].mxu0
    %v3856 = vadd.f32 %v3247, %v3855
    %v3857 = vpop.f32.mrb[0].mxu0
    %3858 = vmatprep.mubr.bf16.mxu0 %v2588
    %3859 = vmatmul.mubr.bf16.gmra.mrb[0].mxu0 %v2587
    %v3860 = vpop.f32.mrb[0].mxu0
    %v3861 = vadd.f32 %v3252, %v3860
    %v3862 = vpop.f32.mrb[0].mxu0
    %v3863 = vpop.f32.mrb[0].mxu0
    %v3864 = vadd.f32 %v3255, %v3863
    %v3865 = vpop.f32.mrb[0].mxu0
    %3866 = vmatprep.mubr.bf16.mxu0 %v2592
    %3867 = vmatmul.mubr.bf16.gmra.mrb[0].mxu0 %v2591
    %v3868 = vpop.f32.mrb[0].mxu0
    %v3869 = vadd.f32 %v3260, %v3868
    %v3870 = vpop.f32.mrb[0].mxu0
    %v3871 = vpop.f32.mrb[0].mxu0
    %v3872 = vadd.f32 %v3263, %v3871
    %v3873 = vpop.f32.mrb[0].mxu0
    %3874 = vmatprep.mubr.bf16.mxu0 %v2596
    %3875 = vmatmul.mubr.bf16.gmra.mrb[0].mxu0 %v2595
    %v3876 = vpop.f32.mrb[0].mxu0
    %v3877 = vadd.f32 %v3268, %v3876
    %v3878 = vpop.f32.mrb[0].mxu0
    %v3879 = vpop.f32.mrb[0].mxu0
    %v3880 = vadd.f32 %v3271, %v3879
    %v3881 = vpop.f32.mrb[0].mxu0
    %3882 = vmatprep.mubr.bf16.mxu0 %v2600
    %3883 = vmatmul.mubr.bf16.gmra.mrb[0].mxu0 %v2599
    %v3884 = vpop.f32.mrb[0].mxu0
    %v3885 = vadd.f32 %v3276, %v3884
    %v3886 = vpop.f32.mrb[0].mxu0
    %v3887 = vpop.f32.mrb[0].mxu0
    %v3888 = vadd.f32 %v3279, %v3887
    %v3889 = vpop.f32.mrb[0].mxu0
    %3890 = vmatprep.mubr.bf16.mxu0 %v2604
    %3891 = vmatmul.mubr.bf16.gmra.mrb[0].mxu0 %v2603
    %v3892 = vpop.f32.mrb[0].mxu0
    %v3893 = vadd.f32 %v3284, %v3892
    %v3894 = vpop.f32.mrb[0].mxu0
    %v3895 = vpop.f32.mrb[0].mxu0
    %v3896 = vadd.f32 %v3287, %v3895
    %v3897 = vpop.f32.mrb[0].mxu0
    %3898 = vmatprep.mubr.bf16.mxu0 %v2608
    %3899 = vmatmul.mubr.bf16.gmra.mrb[0].mxu0 %v2607
    %v3900 = vpop.f32.mrb[0].mxu0
    %v3901 = vadd.f32 %v3292, %v3900
    %v3902 = vpop.f32.mrb[0].mxu0
    %v3903 = vpop.f32.mrb[0].mxu0
    %v3904 = vadd.f32 %v3295, %v3903
    %v3905 = vpop.f32.mrb[0].mxu0
    %3906 = vmatprep.mubr.bf16.mxu0 %v2612
    %3907 = vmatmul.mubr.bf16.gmra.mrb[0].mxu0 %v2611
    %v3908 = vpop.f32.mrb[0].mxu0
    %v3909 = vadd.f32 %v3300, %v3908
    %v3910 = vpop.f32.mrb[0].mxu0
    %v3911 = vpop.f32.mrb[0].mxu0
    %v3912 = vadd.f32 %v3303, %v3911
    %v3913 = vpop.f32.mrb[0].mxu0
    %3914 = vmatprep.mubr.bf16.mxu0 %v2616
    %3915 = vmatmul.mubr.bf16.gmra.mrb[0].mxu0 %v2615
    %v3916 = vpop.f32.mrb[0].mxu0
    %v3917 = vadd.f32 %v3308, %v3916
    %v3918 = vpop.f32.mrb[0].mxu0
    %v3919 = vpop.f32.mrb[0].mxu0
    %v3920 = vadd.f32 %v3311, %v3919
    %v3921 = vpop.f32.mrb[0].mxu0
    %3922 = vmatprep.mubr.bf16.mxu0 %v2620
    %3923 = vmatmul.mubr.bf16.gmra.mrb[0].mxu0 %v2619
    %v3924 = vpop.f32.mrb[0].mxu0
    %v3925 = vadd.f32 %v3316, %v3924
    %v3926 = vpop.f32.mrb[0].mxu0
    %v3927 = vpop.f32.mrb[0].mxu0
    %v3928 = vadd.f32 %v3319, %v3927
    %v3929 = vpop.f32.mrb[0].mxu0
    %3930 = vmatprep.mubr.bf16.mxu0 %v2624
    %3931 = vmatmul.mubr.bf16.gmra.mrb[0].mxu0 %v2623
    %v3932 = vpop.f32.mrb[0].mxu0
    %v3933 = vadd.f32 %v3324, %v3932
    %v3934 = vpop.f32.mrb[0].mxu0
    %v3935 = vpop.f32.mrb[0].mxu0
    %v3936 = vadd.f32 %v3327, %v3935
    %v3937 = vpop.f32.mrb[0].mxu0
    %3938 = vmatprep.mubr.bf16.mxu0 %v2628
    %3939 = vmatmul.mubr.bf16.gmra.mrb[0].mxu0 %v2627
    %v3940 = vpop.f32.mrb[0].mxu0
    %v3941 = vadd.f32 %v3332, %v3940
    %v3942 = vpop.f32.mrb[0].mxu0
    %v3943 = vpop.f32.mrb[0].mxu0
    %v3944 = vadd.f32 %v3335, %v3943
    %v3945 = vpop.f32.mrb[0].mxu0
    %3946 = vmatprep.mubr.bf16.mxu0 %v2632
    %3947 = vmatmul.mubr.bf16.gmra.mrb[0].mxu0 %v2631
    %v3948 = vpop.f32.mrb[0].mxu0
    %v3949 = vadd.f32 %v3340, %v3948
    %v3950 = vpop.f32.mrb[0].mxu0
    %v3951 = vpop.f32.mrb[0].mxu0
    %v3952 = vadd.f32 %v3343, %v3951
    %v3953 = vpop.f32.mrb[0].mxu0
    %3954 = vmatprep.mubr.bf16.mxu0 %v2636
    %3955 = vmatmul.mubr.bf16.gmra.mrb[0].mxu0 %v2635
    %v3956 = vpop.f32.mrb[0].mxu0
    %v3957 = vadd.f32 %v3348, %v3956
    %v3958 = vpop.f32.mrb[0].mxu0
    %v3959 = vpop.f32.mrb[0].mxu0
    %v3960 = vadd.f32 %v3351, %v3959
    %v3961 = vpop.f32.mrb[0].mxu0
    %3962 = vmatprep.mubr.bf16.mxu0 %v2640
    %3963 = vmatmul.mubr.bf16.gmra.mrb[0].mxu0 %v2639
    %v3964 = vpop.f32.mrb[0].mxu0
    %v3965 = vadd.f32 %v3356, %v3964
    %v3966 = vpop.f32.mrb[0].mxu0
    %v3967 = vpop.f32.mrb[0].mxu0
    %v3968 = vadd.f32 %v3359, %v3967
    %v3969 = vpop.f32.mrb[0].mxu0
    %3970 = vmatprep.mubr.bf16.mxu0 %v2644
    %3971 = vmatmul.mubr.bf16.gmra.mrb[0].mxu0 %v2643
    %v3972 = vpop.f32.mrb[0].mxu0
    %v3973 = vadd.f32 %v3364, %v3972
    %v3974 = vpop.f32.mrb[0].mxu0
    %v3975 = vpop.f32.mrb[0].mxu0
    %v3976 = vadd.f32 %v3367, %v3975
    %v3977 = vpop.f32.mrb[0].mxu0
    %3978 = vmatprep.mubr.bf16.mxu0 %v2648
    %3979 = vmatmul.mubr.bf16.gmra.mrb[0].mxu0 %v2647
    %v3980 = vpop.f32.mrb[0].mxu0
    %v3981 = vadd.f32 %v3372, %v3980
    %v3982 = vpop.f32.mrb[0].mxu0
    %v3983 = vpop.f32.mrb[0].mxu0
    %v3984 = vadd.f32 %v3375, %v3983
    %v3985 = vpop.f32.mrb[0].mxu0
    %3986 = vmatprep.mubr.bf16.mxu0 %v2652
    %3987 = vmatmul.mubr.bf16.gmra.mrb[0].mxu0 %v2651
    %v3988 = vpop.f32.mrb[0].mxu0
    %v3989 = vadd.f32 %v3380, %v3988
    %v3990 = vpop.f32.mrb[0].mxu0
    %v3991 = vpop.f32.mrb[0].mxu0
    %v3992 = vadd.f32 %v3383, %v3991
    %v3993 = vpop.f32.mrb[0].mxu0
    %3994 = vmatprep.mubr.bf16.mxu0 %v2656
    %3995 = vmatmul.mubr.bf16.gmra.mrb[0].mxu0 %v2655
    %v3996 = vpop.f32.mrb[0].mxu0
    %v3997 = vadd.f32 %v3388, %v3996
    %v3998 = vpop.f32.mrb[0].mxu0
    %v3999 = vpop.f32.mrb[0].mxu0
    %v4000 = vadd.f32 %v3391, %v3999
    %v4001 = vpop.f32.mrb[0].mxu0
    %4002 = vmatprep.mubr.bf16.mxu0 %v2660
    %4003 = vmatmul.mubr.bf16.gmra.mrb[0].mxu0 %v2659
    %v4004 = vpop.f32.mrb[0].mxu0
    %v4005 = vadd.f32 %v3396, %v4004
    %v4006 = vpop.f32.mrb[0].mxu0
    %v4007 = vpop.f32.mrb[0].mxu0
    %v4008 = vadd.f32 %v3399, %v4007
    %v4009 = vpop.f32.mrb[0].mxu0
    %4010 = vmatprep.mubr.bf16.mxu0 %v2664
    %4011 = vmatmul.mubr.bf16.gmra.mrb[0].mxu0 %v2663
    %v4012 = vpop.f32.mrb[0].mxu0
    %v4013 = vadd.f32 %v3404, %v4012
    %v4014 = vpop.f32.mrb[0].mxu0
    %v4015 = vpop.f32.mrb[0].mxu0
    %v4016 = vadd.f32 %v3407, %v4015
    %v4017 = vpop.f32.mrb[0].mxu0
    %4018 = vmatprep.mubr.bf16.mxu0 %v2668
    %4019 = vmatmul.mubr.bf16.gmra.mrb[0].mxu0 %v2667
    %v4020 = vpop.f32.mrb[0].mxu0
    %v4021 = vadd.f32 %v3412, %v4020
    %v4022 = vpop.f32.mrb[0].mxu0
    %v4023 = vpop.f32.mrb[0].mxu0
    %v4024 = vadd.f32 %v3415, %v4023
    %v4025 = vpop.f32.mrb[0].mxu0
    %4026 = vmatprep.mubr.bf16.mxu0 %v2672
    %4027 = vmatmul.mubr.bf16.gmra.mrb[0].mxu0 %v2671
    %v4028 = vpop.f32.mrb[0].mxu0
    %v4029 = vadd.f32 %v3420, %v4028
    %v4030 = vpop.f32.mrb[0].mxu0
    %v4031 = vpop.f32.mrb[0].mxu0
    %v4032 = vadd.f32 %v3423, %v4031
    %v4033 = vpop.f32.mrb[0].mxu0
    %4034 = vmatprep.mubr.bf16.mxu0 %v2676
    %4035 = vmatmul.mubr.bf16.gmra.mrb[0].mxu0 %v2675
    %v4036 = vpop.f32.mrb[0].mxu0
    %v4037 = vadd.f32 %v3428, %v4036
    %v4038 = vpop.f32.mrb[0].mxu0
    %v4039 = vpop.f32.mrb[0].mxu0
    %v4040 = vadd.f32 %v3431, %v4039
    %v4041 = vpop.f32.mrb[0].mxu0
    %4042 = vmatprep.mubr.bf16.mxu0 %v2680
    %4043 = vmatmul.mubr.bf16.gmra.mrb[0].mxu0 %v2679
    %v4044 = vpop.f32.mrb[0].mxu0
    %v4045 = vadd.f32 %v3436, %v4044
    %v4046 = vpop.f32.mrb[0].mxu0
    %v4047 = vpop.f32.mrb[0].mxu0
    %v4048 = vadd.f32 %v3439, %v4047
    %v4049 = vpop.f32.mrb[0].mxu0
    %4050 = vmatprep.mubr.bf16.mxu0 %v2684
    %4051 = vmatmul.mubr.bf16.gmra.mrb[0].mxu0 %v2683
    %v4052 = vpop.f32.mrb[0].mxu0
    %v4053 = vadd.f32 %v3444, %v4052
    %v4054 = vpop.f32.mrb[0].mxu0
    %v4055 = vpop.f32.mrb[0].mxu0
    %v4056 = vadd.f32 %v3447, %v4055
    %v4057 = vpop.f32.mrb[0].mxu0
    %4058 = vmatprep.mubr.bf16.mxu0 %v2688
    %4059 = vmatmul.mubr.bf16.gmra.mrb[0].mxu0 %v2687
    %v4060 = vpop.f32.mrb[0].mxu0
    %v4061 = vadd.f32 %v3452, %v4060
    %v4062 = vpop.f32.mrb[0].mxu0
    %v4063 = vpop.f32.mrb[0].mxu0
    %v4064 = vadd.f32 %v3455, %v4063
    %v4065 = vpop.f32.mrb[0].mxu0
    %4066 = vmatprep.mubr.bf16.mxu0 %v2692
    %4067 = vmatmul.mubr.bf16.gmra.mrb[0].mxu0 %v2691
    %v4068 = vpop.f32.mrb[0].mxu0
    %v4069 = vadd.f32 %v3460, %v4068
    %v4070 = vpop.f32.mrb[0].mxu0
    %v4071 = vpop.f32.mrb[0].mxu0
    %v4072 = vadd.f32 %v3463, %v4071
    %v4073 = vpop.f32.mrb[0].mxu0
    %4074 = vmatprep.mubr.bf16.mxu0 %v2696
    %4075 = vmatmul.mubr.bf16.gmra.mrb[0].mxu0 %v2695
    %v4076 = vpop.f32.mrb[0].mxu0
    %v4077 = vadd.f32 %v3468, %v4076
    %v4078 = vpop.f32.mrb[0].mxu0
    %v4079 = vpop.f32.mrb[0].mxu0
    %v4080 = vadd.f32 %v3471, %v4079
    %v4081 = vpop.f32.mrb[0].mxu0
    %4082 = vmatprep.mubr.bf16.mxu0 %v2700
    %4083 = vmatmul.mubr.bf16.gmra.mrb[0].mxu0 %v2699
    %v4084 = vpop.f32.mrb[0].mxu0
    %v4085 = vadd.f32 %v3476, %v4084
    %v4086 = vpop.f32.mrb[0].mxu0
    %v4087 = vpop.f32.mrb[0].mxu0
    %v4088 = vadd.f32 %v3479, %v4087
    %v4089 = vpop.f32.mrb[0].mxu0
    %4090 = vmatprep.mubr.bf16.mxu0 %v2704
    %4091 = vmatmul.mubr.bf16.gmra.mrb[0].mxu0 %v2703
    %v4092 = vpop.f32.mrb[0].mxu0
    %v4093 = vadd.f32 %v3484, %v4092
    %v4094 = vpop.f32.mrb[0].mxu0
    %v4095 = vpop.f32.mrb[0].mxu0
    %v4096 = vadd.f32 %v3487, %v4095
    %v4097 = vpop.f32.mrb[0].mxu0
    %4098 = vmatprep.mubr.bf16.mxu0 %v2708
    %4099 = vmatmul.mubr.bf16.gmra.mrb[0].mxu0 %v2707
    %v4100 = vpop.f32.mrb[0].mxu0
    %v4101 = vadd.f32 %v3492, %v4100
    %v4102 = vpop.f32.mrb[0].mxu0
    %v4103 = vpop.f32.mrb[0].mxu0
    %v4104 = vadd.f32 %v3495, %v4103
    %v4105 = vpop.f32.mrb[0].mxu0
    %4106 = vmatprep.mubr.bf16.mxu0 %v2712
    %4107 = vmatmul.mubr.bf16.gmra.mrb[0].mxu0 %v2711
    %v4108 = vpop.f32.mrb[0].mxu0
    %v4109 = vadd.f32 %v3500, %v4108
    %v4110 = vpop.f32.mrb[0].mxu0
    %v4111 = vpop.f32.mrb[0].mxu0
    %v4112 = vadd.f32 %v3503, %v4111
    %v4113 = vpop.f32.mrb[0].mxu0
    %4114 = vmatprep.mubr.bf16.mxu0 %v2716
    %4115 = vmatmul.mubr.bf16.gmra.mrb[0].mxu0 %v2715
    %v4116 = vpop.f32.mrb[0].mxu0
    %v4117 = vadd.f32 %v3508, %v4116
    %v4118 = vpop.f32.mrb[0].mxu0
    %v4119 = vpop.f32.mrb[0].mxu0
    %v4120 = vadd.f32 %v3511, %v4119
    %v4121 = vpop.f32.mrb[0].mxu0
    %4122 = vmatprep.mubr.bf16.mxu0 %v2720
    %4123 = vmatmul.mubr.bf16.gmra.mrb[0].mxu0 %v2719
    %v4124 = vpop.f32.mrb[0].mxu0
    %v4125 = vadd.f32 %v3516, %v4124
    %v4126 = vpop.f32.mrb[0].mxu0
    %v4127 = vpop.f32.mrb[0].mxu0
    %v4128 = vadd.f32 %v3519, %v4127
    %v4129 = vpop.f32.mrb[0].mxu0
    %4130 = vmatprep.mubr.bf16.mxu0 %v2724
    %4131 = vmatmul.mubr.bf16.gmra.mrb[0].mxu0 %v2723
    %v4132 = vpop.f32.mrb[0].mxu0
    %v4133 = vadd.f32 %v3524, %v4132
    %v4134 = vpop.f32.mrb[0].mxu0
    %v4135 = vpop.f32.mrb[0].mxu0
    %v4136 = vadd.f32 %v3527, %v4135
    %v4137 = vpop.f32.mrb[0].mxu0
    %4138 = vmatprep.mubr.bf16.mxu0 %v2728
    %4139 = vmatmul.mubr.bf16.gmra.mrb[0].mxu0 %v2727
    %v4140 = vpop.f32.mrb[0].mxu0
    %v4141 = vadd.f32 %v3532, %v4140
    %v4142 = vpop.f32.mrb[0].mxu0
    %v4143 = vpop.f32.mrb[0].mxu0
    %v4144 = vadd.f32 %v3535, %v4143
    %v4145 = vpop.f32.mrb[0].mxu0
    %4146 = vmatprep.mubr.bf16.mxu0 %v2732
    %4147 = vmatmul.mubr.bf16.gmra.mrb[0].mxu0 %v2731
    %v4148 = vpop.f32.mrb[0].mxu0
    %v4149 = vadd.f32 %v3540, %v4148
    %v4150 = vpop.f32.mrb[0].mxu0
    %v4151 = vpop.f32.mrb[0].mxu0
    %v4152 = vadd.f32 %v3543, %v4151
    %v4153 = vpop.f32.mrb[0].mxu0
    %4154 = vmatprep.mubr.bf16.mxu0 %v2736
    %4155 = vmatmul.mubr.bf16.gmra.mrb[0].mxu0 %v2735
    %v4156 = vpop.f32.mrb[0].mxu0
    %v4157 = vadd.f32 %v3548, %v4156
    %v4158 = vpop.f32.mrb[0].mxu0
    %v4159 = vpop.f32.mrb[0].mxu0
    %v4160 = vadd.f32 %v3551, %v4159
    %v4161 = vpop.f32.mrb[0].mxu0
    %4162 = vmatprep.mubr.bf16.mxu0 %v2740
    %4163 = vmatmul.mubr.bf16.gmra.mrb[0].mxu0 %v2739
    %v4164 = vpop.f32.mrb[0].mxu0
    %v4165 = vadd.f32 %v3556, %v4164
    %v4166 = vpop.f32.mrb[0].mxu0
    %v4167 = vpop.f32.mrb[0].mxu0
    %v4168 = vadd.f32 %v3559, %v4167
    %v4169 = vpop.f32.mrb[0].mxu0
    %4170 = vmatprep.mubr.bf16.mxu0 %v2744
    %4171 = vmatmul.mubr.bf16.gmra.mrb[0].mxu0 %v2743
    %v4172 = vpop.f32.mrb[0].mxu0
    %v4173 = vadd.f32 %v3564, %v4172
    %v4174 = vpop.f32.mrb[0].mxu0
    %v4175 = vpop.f32.mrb[0].mxu0
    %v4176 = vadd.f32 %v3567, %v4175
    %v4177 = vpop.f32.mrb[0].mxu0
    %4178 = vmatprep.mubr.bf16.mxu0 %v2748
    %4179 = vmatmul.mubr.bf16.gmra.mrb[0].mxu0 %v2747
    %v4180 = vpop.f32.mrb[0].mxu0
    %v4181 = vadd.f32 %v3572, %v4180
    %v4182 = vpop.f32.mrb[0].mxu0
    %v4183 = vpop.f32.mrb[0].mxu0
    %v4184 = vadd.f32 %v3575, %v4183
    %v4185 = vpop.f32.mrb[0].mxu0
    %4186 = vmatprep.mubr.bf16.mxu0 %v2752
    %4187 = vmatmul.mubr.bf16.gmra.mrb[0].mxu0 %v2751
    %v4188 = vpop.f32.mrb[0].mxu0
    %v4189 = vadd.f32 %v3580, %v4188
    %v4190 = vpop.f32.mrb[0].mxu0
    %v4191 = vpop.f32.mrb[0].mxu0
    %v4192 = vadd.f32 %v3583, %v4191
    %v4193 = vpop.f32.mrb[0].mxu0
    %4194 = vmatprep.mubr.bf16.mxu0 %v2756
    %4195 = vmatmul.mubr.bf16.gmra.mrb[0].mxu0 %v2755
    %v4196 = vpop.f32.mrb[0].mxu0
    %v4197 = vadd.f32 %v3588, %v4196
    %v4198 = vpop.f32.mrb[0].mxu0
    %v4199 = vpop.f32.mrb[0].mxu0
    %v4200 = vadd.f32 %v3591, %v4199
    %v4201 = vpop.f32.mrb[0].mxu0
    %4202 = vmatprep.mubr.bf16.mxu0 %v2760
    %4203 = vmatmul.mubr.bf16.gmra.mrb[0].mxu0 %v2759
    %v4204 = vpop.f32.mrb[0].mxu0
    %v4205 = vadd.f32 %v3596, %v4204
    %v4206 = vpop.f32.mrb[0].mxu0
    %v4207 = vpop.f32.mrb[0].mxu0
    %v4208 = vadd.f32 %v3599, %v4207
    %v4209 = vpop.f32.mrb[0].mxu0
    %4210 = vmatprep.mubr.bf16.mxu0 %v2764
    %4211 = vmatmul.mubr.bf16.gmra.mrb[0].mxu0 %v2763
    %v4212 = vpop.f32.mrb[0].mxu0
    %v4213 = vadd.f32 %v3604, %v4212
    %v4214 = vpop.f32.mrb[0].mxu0
    %v4215 = vpop.f32.mrb[0].mxu0
    %v4216 = vadd.f32 %v3607, %v4215
    %v4217 = vpop.f32.mrb[0].mxu0
    %4218 = vmatprep.mubr.bf16.mxu0 %v2768
    %4219 = vmatmul.mubr.bf16.gmra.mrb[0].mxu0 %v2767
    %v4220 = vpop.f32.mrb[0].mxu0
    %v4221 = vadd.f32 %v3612, %v4220
    %v4222 = vpop.f32.mrb[0].mxu0
    %v4223 = vpop.f32.mrb[0].mxu0
    %v4224 = vadd.f32 %v3615, %v4223
    %v4225 = vpop.f32.mrb[0].mxu0
    %4226 = vmatprep.mubr.bf16.mxu0 %v2772
    %4227 = vmatmul.mubr.bf16.gmra.mrb[0].mxu0 %v2771
    %v4228 = vpop.f32.mrb[0].mxu0
    %v4229 = vadd.f32 %v3620, %v4228
    %v4230 = vpop.f32.mrb[0].mxu0
    %v4231 = vpop.f32.mrb[0].mxu0
    %v4232 = vadd.f32 %v3623, %v4231
    %v4233 = vpop.f32.mrb[0].mxu0
    %4234 = vmatprep.mubr.bf16.mxu0 %v2776
    %4235 = vmatmul.mubr.bf16.gmra.mrb[0].mxu0 %v2775
    %v4236 = vpop.f32.mrb[0].mxu0
    %v4237 = vadd.f32 %v3628, %v4236
    %v4238 = vpop.f32.mrb[0].mxu0
    %v4239 = vpop.f32.mrb[0].mxu0
    %v4240 = vadd.f32 %v3631, %v4239
    %v4241 = vpop.f32.mrb[0].mxu0
    %4242 = vmatprep.mubr.bf16.mxu0 %v2780
    %4243 = vmatmul.mubr.bf16.gmra.mrb[0].mxu0 %v2779
    %v4244 = vpop.f32.mrb[0].mxu0
    %v4245 = vadd.f32 %v3636, %v4244
    %v4246 = vpop.f32.mrb[0].mxu0
    %v4247 = vpop.f32.mrb[0].mxu0
    %v4248 = vadd.f32 %v3639, %v4247
    %v4249 = vpop.f32.mrb[0].mxu0
    %4250 = vmatprep.mubr.bf16.mxu0 %v2784
    %4251 = vmatmul.mubr.bf16.gmra.mrb[0].mxu0 %v2783
    %v4252 = vpop.f32.mrb[0].mxu0
    %v4253 = vadd.f32 %v3644, %v4252
    %v4254 = vpop.f32.mrb[0].mxu0
    %v4255 = vpop.f32.mrb[0].mxu0
    %v4256 = vadd.f32 %v3647, %v4255
    %v4257 = vpop.f32.mrb[0].mxu0
    %4258 = vmatprep.mubr.bf16.mxu0 %v2788
    %4259 = vmatmul.mubr.bf16.gmra.mrb[0].mxu0 %v2787
    %v4260 = vpop.f32.mrb[0].mxu0
    %v4261 = vadd.f32 %v3652, %v4260
    %v4262 = vpop.f32.mrb[0].mxu0
    %v4263 = vpop.f32.mrb[0].mxu0
    %v4264 = vadd.f32 %v3655, %v4263
    %v4265 = vpop.f32.mrb[0].mxu0
    %4266 = vmatprep.mubr.bf16.mxu0 %v2792
    %4267 = vmatmul.mubr.bf16.gmra.mrb[0].mxu0 %v2791
    %v4268 = vpop.f32.mrb[0].mxu0
    %v4269 = vadd.f32 %v3660, %v4268
    %v4270 = vpop.f32.mrb[0].mxu0
    %v4271 = vpop.f32.mrb[0].mxu0
    %v4272 = vadd.f32 %v3663, %v4271
    %v4273 = vpop.f32.mrb[0].mxu0
    %4274 = vmatprep.mubr.bf16.mxu0 %v2796
    %4275 = vmatmul.mubr.bf16.gmra.mrb[0].mxu0 %v2795
    %v4276 = vpop.f32.mrb[0].mxu0
    %v4277 = vadd.f32 %v3668, %v4276
    %v4278 = vpop.f32.mrb[0].mxu0
    %v4279 = vpop.f32.mrb[0].mxu0
    %v4280 = vadd.f32 %v3671, %v4279
    %v4281 = vpop.f32.mrb[0].mxu0
    %4282 = vmatprep.mubr.bf16.mxu0 %v2800
    %4283 = vmatmul.mubr.bf16.gmra.mrb[0].mxu0 %v2799
    %v4284 = vpop.f32.mrb[0].mxu0
    %v4285 = vadd.f32 %v3676, %v4284
    %v4286 = vpop.f32.mrb[0].mxu0
    %v4287 = vpop.f32.mrb[0].mxu0
    %v4288 = vadd.f32 %v3679, %v4287
    %v4289 = vpop.f32.mrb[0].mxu0
    %4290 = vmatprep.mubr.bf16.mxu0 %v2804
    %4291 = vmatmul.mubr.bf16.gmra.mrb[0].mxu0 %v2803
    %v4292 = vpop.f32.mrb[0].mxu0
    %v4293 = vadd.f32 %v3684, %v4292
    %v4294 = vpop.f32.mrb[0].mxu0
    %v4295 = vpop.f32.mrb[0].mxu0
    %v4296 = vadd.f32 %v3687, %v4295
    %v4297 = vpop.f32.mrb[0].mxu0
    %4298 = vmatprep.mubr.bf16.mxu0 %v2808
    %4299 = vmatmul.mubr.bf16.gmra.mrb[0].mxu0 %v2807
    %v4300 = vpop.f32.mrb[0].mxu0
    %v4301 = vadd.f32 %v3692, %v4300
    %v4302 = vpop.f32.mrb[0].mxu0
    %v4303 = vpop.f32.mrb[0].mxu0
    %v4304 = vadd.f32 %v3695, %v4303
    %v4305 = vpop.f32.mrb[0].mxu0
    %4306 = vmatprep.mubr.bf16.mxu0 %v2812
    %4307 = vmatmul.mubr.bf16.gmra.mrb[0].mxu0 %v2811
    %v4308 = vpop.f32.mrb[0].mxu0
    %v4309 = vadd.f32 %v3700, %v4308
    %v4310 = vpop.f32.mrb[0].mxu0
    %v4311 = vpop.f32.mrb[0].mxu0
    %v4312 = vadd.f32 %v3703, %v4311
    %v4313 = vpop.f32.mrb[0].mxu0
    %4314 = vmatprep.mubr.bf16.mxu0 %v2816
    %4315 = vmatmul.mubr.bf16.gmra.mrb[0].mxu0 %v2815
    %v4316 = vpop.f32.mrb[0].mxu0
    %v4317 = vadd.f32 %v3708, %v4316
    %v4318 = vpop.f32.mrb[0].mxu0
    %v4319 = vpop.f32.mrb[0].mxu0
    %v4320 = vadd.f32 %v3711, %v4319
    %v4321 = vpop.f32.mrb[0].mxu0
    %4322 = vdwg.mxu0
    %v4323 = vpack.c.bf16 %v3752, %v3749
    %v4324 = vpack.c.bf16 %v3760, %v3757
    %v4325 = vpack.c.bf16 %v3768, %v3765
    %v4326 = vpack.c.bf16 %v3776, %v3773
    %v4327 = vpack.c.bf16 %v3784, %v3781
    %v4328 = vpack.c.bf16 %v3792, %v3789
    %v4329 = vpack.c.bf16 %v3800, %v3797
    %v4330 = vpack.c.bf16 %v3808, %v3805
    %v4331 = vpack.c.bf16 %v3816, %v3813
    %v4332 = vpack.c.bf16 %v3824, %v3821
    %v4333 = vpack.c.bf16 %v3832, %v3829
    %v4334 = vpack.c.bf16 %v3840, %v3837
    %v4335 = vpack.c.bf16 %v3848, %v3845
    %v4336 = vpack.c.bf16 %v3856, %v3853
    %v4337 = vpack.c.bf16 %v3864, %v3861
    %v4338 = vpack.c.bf16 %v3872, %v3869
    %v4339 = vpack.c.bf16 %v3880, %v3877
    %v4340 = vpack.c.bf16 %v3888, %v3885
    %v4341 = vpack.c.bf16 %v3896, %v3893
    %v4342 = vpack.c.bf16 %v3904, %v3901
    %v4343 = vpack.c.bf16 %v3912, %v3909
    %v4344 = vpack.c.bf16 %v3920, %v3917
    %v4345 = vpack.c.bf16 %v3928, %v3925
    %v4346 = vpack.c.bf16 %v3936, %v3933
    %v4347 = vpack.c.bf16 %v3944, %v3941
    %v4348 = vpack.c.bf16 %v3952, %v3949
    %v4349 = vpack.c.bf16 %v3960, %v3957
    %v4350 = vpack.c.bf16 %v3968, %v3965
    %v4351 = vpack.c.bf16 %v3976, %v3973
    %v4352 = vpack.c.bf16 %v3984, %v3981
    %v4353 = vpack.c.bf16 %v3992, %v3989
    %v4354 = vpack.c.bf16 %v4000, %v3997
    %v4355 = vpack.c.bf16 %v4008, %v4005
    %v4356 = vpack.c.bf16 %v4016, %v4013
    %v4357 = vpack.c.bf16 %v4024, %v4021
    %v4358 = vpack.c.bf16 %v4032, %v4029
    %v4359 = vpack.c.bf16 %v4040, %v4037
    %v4360 = vpack.c.bf16 %v4048, %v4045
    %v4361 = vpack.c.bf16 %v4056, %v4053
    %v4362 = vpack.c.bf16 %v4064, %v4061
    %v4363 = vpack.c.bf16 %v4072, %v4069
    %v4364 = vpack.c.bf16 %v4080, %v4077
    %v4365 = vpack.c.bf16 %v4088, %v4085
    %v4366 = vpack.c.bf16 %v4096, %v4093
    %v4367 = vpack.c.bf16 %v4104, %v4101
    %v4368 = vpack.c.bf16 %v4112, %v4109
    %v4369 = vpack.c.bf16 %v4120, %v4117
    %v4370 = vpack.c.bf16 %v4128, %v4125
    %v4371 = vpack.c.bf16 %v4136, %v4133
    %v4372 = vpack.c.bf16 %v4144, %v4141
    %v4373 = vpack.c.bf16 %v4152, %v4149
    %v4374 = vpack.c.bf16 %v4160, %v4157
    %v4375 = vpack.c.bf16 %v4168, %v4165
    %v4376 = vpack.c.bf16 %v4176, %v4173
    %v4377 = vpack.c.bf16 %v4184, %v4181
    %v4378 = vpack.c.bf16 %v4192, %v4189
    %v4379 = vpack.c.bf16 %v4200, %v4197
    %v4380 = vpack.c.bf16 %v4208, %v4205
    %v4381 = vpack.c.bf16 %v4216, %v4213
    %v4382 = vpack.c.bf16 %v4224, %v4221
    %v4383 = vpack.c.bf16 %v4232, %v4229
    %v4384 = vpack.c.bf16 %v4240, %v4237
    %v4385 = vpack.c.bf16 %v4248, %v4245
    %v4386 = vpack.c.bf16 %v4256, %v4253
    %v4387 = vpack.c.bf16 %v4264, %v4261
    %v4388 = vpack.c.bf16 %v4272, %v4269
    %v4389 = vpack.c.bf16 %v4280, %v4277
    %v4390 = vpack.c.bf16 %v4288, %v4285
    %v4391 = vpack.c.bf16 %v4296, %v4293
    %v4392 = vpack.c.bf16 %v4304, %v4301
    %v4393 = vpack.c.bf16 %v4312, %v4309
    %v4394 = vpack.c.bf16 %v4320, %v4317
    %v4395 = vld [vmem:[%s5] sm:$0x7]
    %s4396 = scalar_lea.vmem %s5, 4
    %v4397 = vld [vmem:[%s4396] sm:$0x7]
    %v4399 = vsel %vm737, %v4331, 0
    %v4402 = vsel %vm737, %v4332, 0
    %v4405 = vsel %vm737, %v4333, 0
    %v4408 = vsel %vm737, %v4334, 0
    %v4411 = vsel %vm737, %v4335, 0
    %v4414 = vsel %vm737, %v4336, 0
    %v4417 = vsel %vm737, %v4337, 0
    %v4420 = vsel %vm737, %v4338, 0
    %vm4422 = vcmask 1042432
    %v4424 = vsel %vm4422, %v4397, 0
    %4426 = vmatprep.subr.bf16.mxu0 0
    %4427 = vmatpush1.bf16.msra.mxu0 %v4424
    %4428 = vmatprep.subr.bf16.mxu0 0
    %4429 = vmatpush1.bf16.msra.mxu0 0
    %4430 = vmatprep.subr.bf16.mxu0 0
    %4431 = vmatpush1.bf16.msra.mxu0 0
    %4432 = vmatprep.subr.bf16.mxu0 0
    %4433 = vmatpush1.bf16.msra.mxu0 0
    %4434 = vmatprep.subr.bf16.mxu0 0
    %4435 = vmatpush1.bf16.msra.mxu0 0
    %4436 = vmatprep.subr.bf16.mxu0 0
    %4437 = vmatpush1.bf16.msra.mxu0 0
    %4438 = vmatprep.subr.bf16.mxu0 0
    %4439 = vmatpush1.bf16.msra.mxu0 0
    %4440 = vmatprep.subr.bf16.mxu0 0
    %4441 = vmatpush1.bf16.msra.mxu0 0
    %4442 = vmatprep.subr.bf16.mxu0 0
    %4443 = vmatpush1.bf16.msra.mxu0 0
    %4444 = vmatprep.subr.bf16.mxu0 0
    %4445 = vmatpush1.bf16.msra.mxu0 0
    %4446 = vmatprep.subr.bf16.mxu0 0
    %4447 = vmatpush1.bf16.msra.mxu0 0
    %4448 = vmatprep.subr.bf16.mxu0 0
    %4449 = vmatpush1.bf16.msra.mxu0 0
    %4450 = vmatprep.subr.bf16.mxu0 0
    %4451 = vmatpush1.bf16.msra.mxu0 0
    %4452 = vmatprep.subr.bf16.mxu0 0
    %4453 = vmatpush1.bf16.msra.mxu0 0
    %4454 = vmatprep.subr.bf16.mxu0 0
    %4455 = vmatpush1.bf16.msra.mxu0 0
    %4456 = vmatprep.subr.bf16.mxu0 0
    %4457 = vmatpush1.bf16.msra.mxu0 0
    %4458 = vmatprep.mubr.bf16.mxu0 0
    %4459 = vmatmul.mubr.bf16.gmra.mrb[0].mxu0 %v4399
    %v4460 = vpop.f32.mrb[0].mxu0
    %v4461 = vadd.f32 0.0, %v4460
    %v4462 = vpop.f32.mrb[0].mxu0
    %v4463 = vpop.f32.mrb[0].mxu0
    %v4464 = vadd.f32 0.0, %v4463
    %v4465 = vpop.f32.mrb[0].mxu0
    %4466 = vmatprep.mubr.bf16.mxu0 0
    %4467 = vmatmul.mubr.bf16.gmra.mrb[0].mxu0 %v4402
    %v4468 = vpop.f32.mrb[0].mxu0
    %v4469 = vadd.f32 0.0, %v4468
    %v4470 = vpop.f32.mrb[0].mxu0
    %v4471 = vpop.f32.mrb[0].mxu0
    %v4472 = vadd.f32 0.0, %v4471
    %v4473 = vpop.f32.mrb[0].mxu0
    %4474 = vmatprep.mubr.bf16.mxu0 0
    %4475 = vmatmul.mubr.bf16.gmra.mrb[0].mxu0 %v4405
    %v4476 = vpop.f32.mrb[0].mxu0
    %v4477 = vadd.f32 0.0, %v4476
    %v4478 = vpop.f32.mrb[0].mxu0
    %v4479 = vpop.f32.mrb[0].mxu0
    %v4480 = vadd.f32 0.0, %v4479
    %v4481 = vpop.f32.mrb[0].mxu0
    %4482 = vmatprep.mubr.bf16.mxu0 0
    %4483 = vmatmul.mubr.bf16.gmra.mrb[0].mxu0 %v4408
    %v4484 = vpop.f32.mrb[0].mxu0
    %v4485 = vadd.f32 0.0, %v4484
    %v4486 = vpop.f32.mrb[0].mxu0
    %v4487 = vpop.f32.mrb[0].mxu0
    %v4488 = vadd.f32 0.0, %v4487
    %v4489 = vpop.f32.mrb[0].mxu0
    %4490 = vmatprep.mubr.bf16.mxu0 0
    %4491 = vmatmul.mubr.bf16.gmra.mrb[0].mxu0 %v4411
    %v4492 = vpop.f32.mrb[0].mxu0
    %v4493 = vadd.f32 0.0, %v4492
    %v4494 = vpop.f32.mrb[0].mxu0
    %v4495 = vpop.f32.mrb[0].mxu0
    %v4496 = vadd.f32 0.0, %v4495
    %v4497 = vpop.f32.mrb[0].mxu0
    %4498 = vmatprep.mubr.bf16.mxu0 0
    %4499 = vmatmul.mubr.bf16.gmra.mrb[0].mxu0 %v4414
    %v4500 = vpop.f32.mrb[0].mxu0
    %v4501 = vadd.f32 0.0, %v4500
    %v4502 = vpop.f32.mrb[0].mxu0
    %v4503 = vpop.f32.mrb[0].mxu0
    %v4504 = vadd.f32 0.0, %v4503
    %v4505 = vpop.f32.mrb[0].mxu0
    %4506 = vmatprep.mubr.bf16.mxu0 0
    %4507 = vmatmul.mubr.bf16.gmra.mrb[0].mxu0 %v4417
    %v4508 = vpop.f32.mrb[0].mxu0
    %v4509 = vadd.f32 0.0, %v4508
    %v4510 = vpop.f32.mrb[0].mxu0
    %v4511 = vpop.f32.mrb[0].mxu0
    %v4512 = vadd.f32 0.0, %v4511
    %v4513 = vpop.f32.mrb[0].mxu0
    %4514 = vmatprep.mubr.bf16.mxu0 0
    %4515 = vmatmul.mubr.bf16.gmra.mrb[0].mxu0 %v4420
    %v4516 = vpop.f32.mrb[0].mxu0
    %v4517 = vadd.f32 0.0, %v4516
    %v4518 = vpop.f32.mrb[0].mxu0
    %v4519 = vpop.f32.mrb[0].mxu0
    %v4520 = vadd.f32 0.0, %v4519
    %v4521 = vpop.f32.mrb[0].mxu0
    %4522 = vdwg.mxu0
    %v4524 = vsel %vm737, %v4323, 0
    %v4527 = vsel %vm737, %v4324, 0
    %v4530 = vsel %vm737, %v4325, 0
    %v4533 = vsel %vm737, %v4326, 0
    %v4536 = vsel %vm737, %v4327, 0
    %v4539 = vsel %vm737, %v4328, 0
    %v4542 = vsel %vm737, %v4329, 0
    %v4545 = vsel %vm737, %v4330, 0
    %v4548 = vsel %vm4422, %v4395, 0
    %4550 = vmatprep.subr.bf16.mxu0 0
    %4551 = vmatpush1.bf16.msra.mxu0 %v4548
    %4552 = vmatprep.subr.bf16.mxu0 0
    %4553 = vmatpush1.bf16.msra.mxu0 0
    %4554 = vmatprep.subr.bf16.mxu0 0
    %4555 = vmatpush1.bf16.msra.mxu0 0
    %4556 = vmatprep.subr.bf16.mxu0 0
    %4557 = vmatpush1.bf16.msra.mxu0 0
    %4558 = vmatprep.subr.bf16.mxu0 0
    %4559 = vmatpush1.bf16.msra.mxu0 0
    %4560 = vmatprep.subr.bf16.mxu0 0
    %4561 = vmatpush1.bf16.msra.mxu0 0
    %4562 = vmatprep.subr.bf16.mxu0 0
    %4563 = vmatpush1.bf16.msra.mxu0 0
    %4564 = vmatprep.subr.bf16.mxu0 0
    %4565 = vmatpush1.bf16.msra.mxu0 0
    %4566 = vmatprep.subr.bf16.mxu0 0
    %4567 = vmatpush1.bf16.msra.mxu0 0
    %4568 = vmatprep.subr.bf16.mxu0 0
    %4569 = vmatpush1.bf16.msra.mxu0 0
    %4570 = vmatprep.subr.bf16.mxu0 0
    %4571 = vmatpush1.bf16.msra.mxu0 0
    %4572 = vmatprep.subr.bf16.mxu0 0
    %4573 = vmatpush1.bf16.msra.mxu0 0
    %4574 = vmatprep.subr.bf16.mxu0 0
    %4575 = vmatpush1.bf16.msra.mxu0 0
    %4576 = vmatprep.subr.bf16.mxu0 0
    %4577 = vmatpush1.bf16.msra.mxu0 0
    %4578 = vmatprep.subr.bf16.mxu0 0
    %4579 = vmatpush1.bf16.msra.mxu0 0
    %4580 = vmatprep.subr.bf16.mxu0 0
    %4581 = vmatpush1.bf16.msra.mxu0 0
    %4582 = vmatprep.mubr.bf16.mxu0 0
    %4583 = vmatmul.mubr.bf16.gmra.mrb[0].mxu0 %v4524
    %v4584 = vpop.f32.mrb[0].mxu0
    %v4585 = vadd.f32 %v4461, %v4584
    %v4586 = vpop.f32.mrb[0].mxu0
    %v4587 = vpop.f32.mrb[0].mxu0
    %v4588 = vadd.f32 %v4464, %v4587
    %v4589 = vpop.f32.mrb[0].mxu0
    %4590 = vmatprep.mubr.bf16.mxu0 0
    %4591 = vmatmul.mubr.bf16.gmra.mrb[0].mxu0 %v4527
    %v4592 = vpop.f32.mrb[0].mxu0
    %v4593 = vadd.f32 %v4469, %v4592
    %v4594 = vpop.f32.mrb[0].mxu0
    %v4595 = vpop.f32.mrb[0].mxu0
    %v4596 = vadd.f32 %v4472, %v4595
    %v4597 = vpop.f32.mrb[0].mxu0
    %4598 = vmatprep.mubr.bf16.mxu0 0
    %4599 = vmatmul.mubr.bf16.gmra.mrb[0].mxu0 %v4530
    %v4600 = vpop.f32.mrb[0].mxu0
    %v4601 = vadd.f32 %v4477, %v4600
    %v4602 = vpop.f32.mrb[0].mxu0
    %v4603 = vpop.f32.mrb[0].mxu0
    %v4604 = vadd.f32 %v4480, %v4603
    %v4605 = vpop.f32.mrb[0].mxu0
    %4606 = vmatprep.mubr.bf16.mxu0 0
    %4607 = vmatmul.mubr.bf16.gmra.mrb[0].mxu0 %v4533
    %v4608 = vpop.f32.mrb[0].mxu0
    %v4609 = vadd.f32 %v4485, %v4608
    %v4610 = vpop.f32.mrb[0].mxu0
    %v4611 = vpop.f32.mrb[0].mxu0
    %v4612 = vadd.f32 %v4488, %v4611
    %v4613 = vpop.f32.mrb[0].mxu0
    %4614 = vmatprep.mubr.bf16.mxu0 0
    %4615 = vmatmul.mubr.bf16.gmra.mrb[0].mxu0 %v4536
    %v4616 = vpop.f32.mrb[0].mxu0
    %v4617 = vadd.f32 %v4493, %v4616
    %v4618 = vpop.f32.mrb[0].mxu0
    %v4619 = vpop.f32.mrb[0].mxu0
    %v4620 = vadd.f32 %v4496, %v4619
    %v4621 = vpop.f32.mrb[0].mxu0
    %4622 = vmatprep.mubr.bf16.mxu0 0
    %4623 = vmatmul.mubr.bf16.gmra.mrb[0].mxu0 %v4539
    %v4624 = vpop.f32.mrb[0].mxu0
    %v4625 = vadd.f32 %v4501, %v4624
    %v4626 = vpop.f32.mrb[0].mxu0
    %v4627 = vpop.f32.mrb[0].mxu0
    %v4628 = vadd.f32 %v4504, %v4627
    %v4629 = vpop.f32.mrb[0].mxu0
    %4630 = vmatprep.mubr.bf16.mxu0 0
    %4631 = vmatmul.mubr.bf16.gmra.mrb[0].mxu0 %v4542
    %v4632 = vpop.f32.mrb[0].mxu0
    %v4633 = vadd.f32 %v4509, %v4632
    %v4634 = vpop.f32.mrb[0].mxu0
    %v4635 = vpop.f32.mrb[0].mxu0
    %v4636 = vadd.f32 %v4512, %v4635
    %v4637 = vpop.f32.mrb[0].mxu0
    %4638 = vmatprep.mubr.bf16.mxu0 0
    %4639 = vmatmul.mubr.bf16.gmra.mrb[0].mxu0 %v4545
    %v4640 = vpop.f32.mrb[0].mxu0
    %v4641 = vadd.f32 %v4517, %v4640
    %v4642 = vpop.f32.mrb[0].mxu0
    %v4643 = vpop.f32.mrb[0].mxu0
    %v4644 = vadd.f32 %v4520, %v4643
    %v4645 = vpop.f32.mrb[0].mxu0
    %4646 = vdwg.mxu0
    %s4647 = scalar_lea.vmem %s5, 8
    %v4648 = vld [vmem:[%s4647] sm:$0x7]
    %v4650 = vsel %vm737, %v4339, 0
    %v4653 = vsel %vm737, %v4340, 0
    %v4656 = vsel %vm737, %v4341, 0
    %v4659 = vsel %vm737, %v4342, 0
    %v4662 = vsel %vm737, %v4343, 0
    %v4665 = vsel %vm737, %v4344, 0
    %v4668 = vsel %vm737, %v4345, 0
    %v4671 = vsel %vm737, %v4346, 0
    %v4674 = vsel %vm4422, %v4648, 0
    %4676 = vmatprep.subr.bf16.mxu0 0
    %4677 = vmatpush1.bf16.msra.mxu0 %v4674
    %4678 = vmatprep.subr.bf16.mxu0 0
    %4679 = vmatpush1.bf16.msra.mxu0 0
    %4680 = vmatprep.subr.bf16.mxu0 0
    %4681 = vmatpush1.bf16.msra.mxu0 0
    %4682 = vmatprep.subr.bf16.mxu0 0
    %4683 = vmatpush1.bf16.msra.mxu0 0
    %4684 = vmatprep.subr.bf16.mxu0 0
    %4685 = vmatpush1.bf16.msra.mxu0 0
    %4686 = vmatprep.subr.bf16.mxu0 0
    %4687 = vmatpush1.bf16.msra.mxu0 0
    %4688 = vmatprep.subr.bf16.mxu0 0
    %4689 = vmatpush1.bf16.msra.mxu0 0
    %4690 = vmatprep.subr.bf16.mxu0 0
    %4691 = vmatpush1.bf16.msra.mxu0 0
    %4692 = vmatprep.subr.bf16.mxu0 0
    %4693 = vmatpush1.bf16.msra.mxu0 0
    %4694 = vmatprep.subr.bf16.mxu0 0
    %4695 = vmatpush1.bf16.msra.mxu0 0
    %4696 = vmatprep.subr.bf16.mxu0 0
    %4697 = vmatpush1.bf16.msra.mxu0 0
    %4698 = vmatprep.subr.bf16.mxu0 0
    %4699 = vmatpush1.bf16.msra.mxu0 0
    %4700 = vmatprep.subr.bf16.mxu0 0
    %4701 = vmatpush1.bf16.msra.mxu0 0
    %4702 = vmatprep.subr.bf16.mxu0 0
    %4703 = vmatpush1.bf16.msra.mxu0 0
    %4704 = vmatprep.subr.bf16.mxu0 0
    %4705 = vmatpush1.bf16.msra.mxu0 0
    %4706 = vmatprep.subr.bf16.mxu0 0
    %4707 = vmatpush1.bf16.msra.mxu0 0
    %4708 = vmatprep.mubr.bf16.mxu0 0
    %4709 = vmatmul.mubr.bf16.gmra.mrb[0].mxu0 %v4650
    %v4710 = vpop.f32.mrb[0].mxu0
    %v4711 = vadd.f32 0.0, %v4710
    %v4712 = vpop.f32.mrb[0].mxu0
    %v4713 = vpop.f32.mrb[0].mxu0
    %v4714 = vadd.f32 0.0, %v4713
    %v4715 = vpop.f32.mrb[0].mxu0
    %4716 = vmatprep.mubr.bf16.mxu0 0
    %4717 = vmatmul.mubr.bf16.gmra.mrb[0].mxu0 %v4653
    %v4718 = vpop.f32.mrb[0].mxu0
    %v4719 = vadd.f32 0.0, %v4718
    %v4720 = vpop.f32.mrb[0].mxu0
    %v4721 = vpop.f32.mrb[0].mxu0
    %v4722 = vadd.f32 0.0, %v4721
    %v4723 = vpop.f32.mrb[0].mxu0
    %4724 = vmatprep.mubr.bf16.mxu0 0
    %4725 = vmatmul.mubr.bf16.gmra.mrb[0].mxu0 %v4656
    %v4726 = vpop.f32.mrb[0].mxu0
    %v4727 = vadd.f32 0.0, %v4726
    %v4728 = vpop.f32.mrb[0].mxu0
    %v4729 = vpop.f32.mrb[0].mxu0
    %v4730 = vadd.f32 0.0, %v4729
    %v4731 = vpop.f32.mrb[0].mxu0
    %4732 = vmatprep.mubr.bf16.mxu0 0
    %4733 = vmatmul.mubr.bf16.gmra.mrb[0].mxu0 %v4659
    %v4734 = vpop.f32.mrb[0].mxu0
    %v4735 = vadd.f32 0.0, %v4734
    %v4736 = vpop.f32.mrb[0].mxu0
    %v4737 = vpop.f32.mrb[0].mxu0
    %v4738 = vadd.f32 0.0, %v4737
    %v4739 = vpop.f32.mrb[0].mxu0
    %4740 = vmatprep.mubr.bf16.mxu0 0
    %4741 = vmatmul.mubr.bf16.gmra.mrb[0].mxu0 %v4662
    %v4742 = vpop.f32.mrb[0].mxu0
    %v4743 = vadd.f32 0.0, %v4742
    %v4744 = vpop.f32.mrb[0].mxu0
    %v4745 = vpop.f32.mrb[0].mxu0
    %v4746 = vadd.f32 0.0, %v4745
    %v4747 = vpop.f32.mrb[0].mxu0
    %4748 = vmatprep.mubr.bf16.mxu0 0
    %4749 = vmatmul.mubr.bf16.gmra.mrb[0].mxu0 %v4665
    %v4750 = vpop.f32.mrb[0].mxu0
    %v4751 = vadd.f32 0.0, %v4750
    %v4752 = vpop.f32.mrb[0].mxu0
    %v4753 = vpop.f32.mrb[0].mxu0
    %v4754 = vadd.f32 0.0, %v4753
    %v4755 = vpop.f32.mrb[0].mxu0
    %4756 = vmatprep.mubr.bf16.mxu0 0
    %4757 = vmatmul.mubr.bf16.gmra.mrb[0].mxu0 %v4668
    %v4758 = vpop.f32.mrb[0].mxu0
    %v4759 = vadd.f32 0.0, %v4758
    %v4760 = vpop.f32.mrb[0].mxu0
    %v4761 = vpop.f32.mrb[0].mxu0
    %v4762 = vadd.f32 0.0, %v4761
    %v4763 = vpop.f32.mrb[0].mxu0
    %4764 = vmatprep.mubr.bf16.mxu0 0
    %4765 = vmatmul.mubr.bf16.gmra.mrb[0].mxu0 %v4671
    %v4766 = vpop.f32.mrb[0].mxu0
    %v4767 = vadd.f32 0.0, %v4766
    %v4768 = vpop.f32.mrb[0].mxu0
    %v4769 = vpop.f32.mrb[0].mxu0
    %v4770 = vadd.f32 0.0, %v4769
    %v4771 = vpop.f32.mrb[0].mxu0
    %4772 = vdwg.mxu0
    %v4773 = vadd.f32 %v4585, %v4711
    %v4774 = vadd.f32 %v4588, %v4714
    %v4775 = vadd.f32 %v4593, %v4719
    %v4776 = vadd.f32 %v4596, %v4722
    %v4777 = vadd.f32 %v4601, %v4727
    %v4778 = vadd.f32 %v4604, %v4730
    %v4779 = vadd.f32 %v4609, %v4735
    %v4780 = vadd.f32 %v4612, %v4738
    %v4781 = vadd.f32 %v4617, %v4743
    %v4782 = vadd.f32 %v4620, %v4746
    %v4783 = vadd.f32 %v4625, %v4751
    %v4784 = vadd.f32 %v4628, %v4754
    %v4785 = vadd.f32 %v4633, %v4759
    %v4786 = vadd.f32 %v4636, %v4762
    %v4787 = vadd.f32 %v4641, %v4767
    %v4788 = vadd.f32 %v4644, %v4770
    %s4789 = scalar_lea.vmem %s5, 12
    %v4790 = vld [vmem:[%s4789] sm:$0x7]
    %v4792 = vsel %vm737, %v4347, 0
    %v4795 = vsel %vm737, %v4348, 0
    %v4798 = vsel %vm737, %v4349, 0
    %v4801 = vsel %vm737, %v4350, 0
    %v4804 = vsel %vm737, %v4351, 0
    %v4807 = vsel %vm737, %v4352, 0
    %v4810 = vsel %vm737, %v4353, 0
    %v4813 = vsel %vm737, %v4354, 0
    %v4816 = vsel %vm4422, %v4790, 0
    %4818 = vmatprep.subr.bf16.mxu0 0
    %4819 = vmatpush1.bf16.msra.mxu0 %v4816
    %4820 = vmatprep.subr.bf16.mxu0 0
    %4821 = vmatpush1.bf16.msra.mxu0 0
    %4822 = vmatprep.subr.bf16.mxu0 0
    %4823 = vmatpush1.bf16.msra.mxu0 0
    %4824 = vmatprep.subr.bf16.mxu0 0
    %4825 = vmatpush1.bf16.msra.mxu0 0
    %4826 = vmatprep.subr.bf16.mxu0 0
    %4827 = vmatpush1.bf16.msra.mxu0 0
    %4828 = vmatprep.subr.bf16.mxu0 0
    %4829 = vmatpush1.bf16.msra.mxu0 0
    %4830 = vmatprep.subr.bf16.mxu0 0
    %4831 = vmatpush1.bf16.msra.mxu0 0
    %4832 = vmatprep.subr.bf16.mxu0 0
    %4833 = vmatpush1.bf16.msra.mxu0 0
    %4834 = vmatprep.subr.bf16.mxu0 0
    %4835 = vmatpush1.bf16.msra.mxu0 0
    %4836 = vmatprep.subr.bf16.mxu0 0
    %4837 = vmatpush1.bf16.msra.mxu0 0
    %4838 = vmatprep.subr.bf16.mxu0 0
    %4839 = vmatpush1.bf16.msra.mxu0 0
    %4840 = vmatprep.subr.bf16.mxu0 0
    %4841 = vmatpush1.bf16.msra.mxu0 0
    %4842 = vmatprep.subr.bf16.mxu0 0
    %4843 = vmatpush1.bf16.msra.mxu0 0
    %4844 = vmatprep.subr.bf16.mxu0 0
    %4845 = vmatpush1.bf16.msra.mxu0 0
    %4846 = vmatprep.subr.bf16.mxu0 0
    %4847 = vmatpush1.bf16.msra.mxu0 0
    %4848 = vmatprep.subr.bf16.mxu0 0
    %4849 = vmatpush1.bf16.msra.mxu0 0
    %4850 = vmatprep.mubr.bf16.mxu0 0
    %4851 = vmatmul.mubr.bf16.gmra.mrb[0].mxu0 %v4792
    %v4852 = vpop.f32.mrb[0].mxu0
    %v4853 = vadd.f32 0.0, %v4852
    %v4854 = vpop.f32.mrb[0].mxu0
    %v4855 = vpop.f32.mrb[0].mxu0
    %v4856 = vadd.f32 0.0, %v4855
    %v4857 = vpop.f32.mrb[0].mxu0
    %4858 = vmatprep.mubr.bf16.mxu0 0
    %4859 = vmatmul.mubr.bf16.gmra.mrb[0].mxu0 %v4795
    %v4860 = vpop.f32.mrb[0].mxu0
    %v4861 = vadd.f32 0.0, %v4860
    %v4862 = vpop.f32.mrb[0].mxu0
    %v4863 = vpop.f32.mrb[0].mxu0
    %v4864 = vadd.f32 0.0, %v4863
    %v4865 = vpop.f32.mrb[0].mxu0
    %4866 = vmatprep.mubr.bf16.mxu0 0
    %4867 = vmatmul.mubr.bf16.gmra.mrb[0].mxu0 %v4798
    %v4868 = vpop.f32.mrb[0].mxu0
    %v4869 = vadd.f32 0.0, %v4868
    %v4870 = vpop.f32.mrb[0].mxu0
    %v4871 = vpop.f32.mrb[0].mxu0
    %v4872 = vadd.f32 0.0, %v4871
    %v4873 = vpop.f32.mrb[0].mxu0
    %4874 = vmatprep.mubr.bf16.mxu0 0
    %4875 = vmatmul.mubr.bf16.gmra.mrb[0].mxu0 %v4801
    %v4876 = vpop.f32.mrb[0].mxu0
    %v4877 = vadd.f32 0.0, %v4876
    %v4878 = vpop.f32.mrb[0].mxu0
    %v4879 = vpop.f32.mrb[0].mxu0
    %v4880 = vadd.f32 0.0, %v4879
    %v4881 = vpop.f32.mrb[0].mxu0
    %4882 = vmatprep.mubr.bf16.mxu0 0
    %4883 = vmatmul.mubr.bf16.gmra.mrb[0].mxu0 %v4804
    %v4884 = vpop.f32.mrb[0].mxu0
    %v4885 = vadd.f32 0.0, %v4884
    %v4886 = vpop.f32.mrb[0].mxu0
    %v4887 = vpop.f32.mrb[0].mxu0
    %v4888 = vadd.f32 0.0, %v4887
    %v4889 = vpop.f32.mrb[0].mxu0
    %4890 = vmatprep.mubr.bf16.mxu0 0
    %4891 = vmatmul.mubr.bf16.gmra.mrb[0].mxu0 %v4807
    %v4892 = vpop.f32.mrb[0].mxu0
    %v4893 = vadd.f32 0.0, %v4892
    %v4894 = vpop.f32.mrb[0].mxu0
    %v4895 = vpop.f32.mrb[0].mxu0
    %v4896 = vadd.f32 0.0, %v4895
    %v4897 = vpop.f32.mrb[0].mxu0
    %4898 = vmatprep.mubr.bf16.mxu0 0
    %4899 = vmatmul.mubr.bf16.gmra.mrb[0].mxu0 %v4810
    %v4900 = vpop.f32.mrb[0].mxu0
    %v4901 = vadd.f32 0.0, %v4900
    %v4902 = vpop.f32.mrb[0].mxu0
    %v4903 = vpop.f32.mrb[0].mxu0
    %v4904 = vadd.f32 0.0, %v4903
    %v4905 = vpop.f32.mrb[0].mxu0
    %4906 = vmatprep.mubr.bf16.mxu0 0
    %4907 = vmatmul.mubr.bf16.gmra.mrb[0].mxu0 %v4813
    %v4908 = vpop.f32.mrb[0].mxu0
    %v4909 = vadd.f32 0.0, %v4908
    %v4910 = vpop.f32.mrb[0].mxu0
    %v4911 = vpop.f32.mrb[0].mxu0
    %v4912 = vadd.f32 0.0, %v4911
    %v4913 = vpop.f32.mrb[0].mxu0
    %4914 = vdwg.mxu0
    %v4915 = vadd.f32 %v4773, %v4853
    %v4916 = vadd.f32 %v4774, %v4856
    %v4917 = vadd.f32 %v4775, %v4861
    %v4918 = vadd.f32 %v4776, %v4864
    %v4919 = vadd.f32 %v4777, %v4869
    %v4920 = vadd.f32 %v4778, %v4872
    %v4921 = vadd.f32 %v4779, %v4877
    %v4922 = vadd.f32 %v4780, %v4880
    %v4923 = vadd.f32 %v4781, %v4885
    %v4924 = vadd.f32 %v4782, %v4888
    %v4925 = vadd.f32 %v4783, %v4893
    %v4926 = vadd.f32 %v4784, %v4896
    %v4927 = vadd.f32 %v4785, %v4901
    %v4928 = vadd.f32 %v4786, %v4904
    %v4929 = vadd.f32 %v4787, %v4909
    %v4930 = vadd.f32 %v4788, %v4912
    %s4931 = scalar_lea.vmem %s5, 16
    %v4932 = vld [vmem:[%s4931] sm:$0x7]
    %v4934 = vsel %vm737, %v4355, 0
    %v4937 = vsel %vm737, %v4356, 0
    %v4940 = vsel %vm737, %v4357, 0
    %v4943 = vsel %vm737, %v4358, 0
    %v4946 = vsel %vm737, %v4359, 0
    %v4949 = vsel %vm737, %v4360, 0
    %v4952 = vsel %vm737, %v4361, 0
    %v4955 = vsel %vm737, %v4362, 0
    %v4958 = vsel %vm4422, %v4932, 0
    %4960 = vmatprep.subr.bf16.mxu0 0
    %4961 = vmatpush1.bf16.msra.mxu0 %v4958
    %4962 = vmatprep.subr.bf16.mxu0 0
    %4963 = vmatpush1.bf16.msra.mxu0 0
    %4964 = vmatprep.subr.bf16.mxu0 0
    %4965 = vmatpush1.bf16.msra.mxu0 0
    %4966 = vmatprep.subr.bf16.mxu0 0
    %4967 = vmatpush1.bf16.msra.mxu0 0
    %4968 = vmatprep.subr.bf16.mxu0 0
    %4969 = vmatpush1.bf16.msra.mxu0 0
    %4970 = vmatprep.subr.bf16.mxu0 0
    %4971 = vmatpush1.bf16.msra.mxu0 0
    %4972 = vmatprep.subr.bf16.mxu0 0
    %4973 = vmatpush1.bf16.msra.mxu0 0
    %4974 = vmatprep.subr.bf16.mxu0 0
    %4975 = vmatpush1.bf16.msra.mxu0 0
    %4976 = vmatprep.subr.bf16.mxu0 0
    %4977 = vmatpush1.bf16.msra.mxu0 0
    %4978 = vmatprep.subr.bf16.mxu0 0
    %4979 = vmatpush1.bf16.msra.mxu0 0
    %4980 = vmatprep.subr.bf16.mxu0 0
    %4981 = vmatpush1.bf16.msra.mxu0 0
    %4982 = vmatprep.subr.bf16.mxu0 0
    %4983 = vmatpush1.bf16.msra.mxu0 0
    %4984 = vmatprep.subr.bf16.mxu0 0
    %4985 = vmatpush1.bf16.msra.mxu0 0
    %4986 = vmatprep.subr.bf16.mxu0 0
    %4987 = vmatpush1.bf16.msra.mxu0 0
    %4988 = vmatprep.subr.bf16.mxu0 0
    %4989 = vmatpush1.bf16.msra.mxu0 0
    %4990 = vmatprep.subr.bf16.mxu0 0
    %4991 = vmatpush1.bf16.msra.mxu0 0
    %4992 = vmatprep.mubr.bf16.mxu0 0
    %4993 = vmatmul.mubr.bf16.gmra.mrb[0].mxu0 %v4934
    %v4994 = vpop.f32.mrb[0].mxu0
    %v4995 = vadd.f32 0.0, %v4994
    %v4996 = vpop.f32.mrb[0].mxu0
    %v4997 = vpop.f32.mrb[0].mxu0
    %v4998 = vadd.f32 0.0, %v4997
    %v4999 = vpop.f32.mrb[0].mxu0
    %5000 = vmatprep.mubr.bf16.mxu0 0
    %5001 = vmatmul.mubr.bf16.gmra.mrb[0].mxu0 %v4937
    %v5002 = vpop.f32.mrb[0].mxu0
    %v5003 = vadd.f32 0.0, %v5002
    %v5004 = vpop.f32.mrb[0].mxu0
    %v5005 = vpop.f32.mrb[0].mxu0
    %v5006 = vadd.f32 0.0, %v5005
    %v5007 = vpop.f32.mrb[0].mxu0
    %5008 = vmatprep.mubr.bf16.mxu0 0
    %5009 = vmatmul.mubr.bf16.gmra.mrb[0].mxu0 %v4940
    %v5010 = vpop.f32.mrb[0].mxu0
    %v5011 = vadd.f32 0.0, %v5010
    %v5012 = vpop.f32.mrb[0].mxu0
    %v5013 = vpop.f32.mrb[0].mxu0
    %v5014 = vadd.f32 0.0, %v5013
    %v5015 = vpop.f32.mrb[0].mxu0
    %5016 = vmatprep.mubr.bf16.mxu0 0
    %5017 = vmatmul.mubr.bf16.gmra.mrb[0].mxu0 %v4943
    %v5018 = vpop.f32.mrb[0].mxu0
    %v5019 = vadd.f32 0.0, %v5018
    %v5020 = vpop.f32.mrb[0].mxu0
    %v5021 = vpop.f32.mrb[0].mxu0
    %v5022 = vadd.f32 0.0, %v5021
    %v5023 = vpop.f32.mrb[0].mxu0
    %5024 = vmatprep.mubr.bf16.mxu0 0
    %5025 = vmatmul.mubr.bf16.gmra.mrb[0].mxu0 %v4946
    %v5026 = vpop.f32.mrb[0].mxu0
    %v5027 = vadd.f32 0.0, %v5026
    %v5028 = vpop.f32.mrb[0].mxu0
    %v5029 = vpop.f32.mrb[0].mxu0
    %v5030 = vadd.f32 0.0, %v5029
    %v5031 = vpop.f32.mrb[0].mxu0
    %5032 = vmatprep.mubr.bf16.mxu0 0
    %5033 = vmatmul.mubr.bf16.gmra.mrb[0].mxu0 %v4949
    %v5034 = vpop.f32.mrb[0].mxu0
    %v5035 = vadd.f32 0.0, %v5034
    %v5036 = vpop.f32.mrb[0].mxu0
    %v5037 = vpop.f32.mrb[0].mxu0
    %v5038 = vadd.f32 0.0, %v5037
    %v5039 = vpop.f32.mrb[0].mxu0
    %5040 = vmatprep.mubr.bf16.mxu0 0
    %5041 = vmatmul.mubr.bf16.gmra.mrb[0].mxu0 %v4952
    %v5042 = vpop.f32.mrb[0].mxu0
    %v5043 = vadd.f32 0.0, %v5042
    %v5044 = vpop.f32.mrb[0].mxu0
    %v5045 = vpop.f32.mrb[0].mxu0
    %v5046 = vadd.f32 0.0, %v5045
    %v5047 = vpop.f32.mrb[0].mxu0
    %5048 = vmatprep.mubr.bf16.mxu0 0
    %5049 = vmatmul.mubr.bf16.gmra.mrb[0].mxu0 %v4955
    %v5050 = vpop.f32.mrb[0].mxu0
    %v5051 = vadd.f32 0.0, %v5050
    %v5052 = vpop.f32.mrb[0].mxu0
    %v5053 = vpop.f32.mrb[0].mxu0
    %v5054 = vadd.f32 0.0, %v5053
    %v5055 = vpop.f32.mrb[0].mxu0
    %5056 = vdwg.mxu0
    %v5057 = vadd.f32 %v4915, %v4995
    %v5058 = vadd.f32 %v4916, %v4998
    %v5059 = vadd.f32 %v4917, %v5003
    %v5060 = vadd.f32 %v4918, %v5006
    %v5061 = vadd.f32 %v4919, %v5011
    %v5062 = vadd.f32 %v4920, %v5014
    %v5063 = vadd.f32 %v4921, %v5019
    %v5064 = vadd.f32 %v4922, %v5022
    %v5065 = vadd.f32 %v4923, %v5027
    %v5066 = vadd.f32 %v4924, %v5030
    %v5067 = vadd.f32 %v4925, %v5035
    %v5068 = vadd.f32 %v4926, %v5038
    %v5069 = vadd.f32 %v4927, %v5043
    %v5070 = vadd.f32 %v4928, %v5046
    %v5071 = vadd.f32 %v4929, %v5051
    %v5072 = vadd.f32 %v4930, %v5054
    %s5073 = scalar_lea.vmem %s5, 20
    %v5074 = vld [vmem:[%s5073] sm:$0x7]
    %v5076 = vsel %vm737, %v4363, 0
    %v5079 = vsel %vm737, %v4364, 0
    %v5082 = vsel %vm737, %v4365, 0
    %v5085 = vsel %vm737, %v4366, 0
    %v5088 = vsel %vm737, %v4367, 0
    %v5091 = vsel %vm737, %v4368, 0
    %v5094 = vsel %vm737, %v4369, 0
    %v5097 = vsel %vm737, %v4370, 0
    %v5100 = vsel %vm4422, %v5074, 0
    %5102 = vmatprep.subr.bf16.mxu0 0
    %5103 = vmatpush1.bf16.msra.mxu0 %v5100
    %5104 = vmatprep.subr.bf16.mxu0 0
    %5105 = vmatpush1.bf16.msra.mxu0 0
    %5106 = vmatprep.subr.bf16.mxu0 0
    %5107 = vmatpush1.bf16.msra.mxu0 0
    %5108 = vmatprep.subr.bf16.mxu0 0
    %5109 = vmatpush1.bf16.msra.mxu0 0
    %5110 = vmatprep.subr.bf16.mxu0 0
    %5111 = vmatpush1.bf16.msra.mxu0 0
    %5112 = vmatprep.subr.bf16.mxu0 0
    %5113 = vmatpush1.bf16.msra.mxu0 0
    %5114 = vmatprep.subr.bf16.mxu0 0
    %5115 = vmatpush1.bf16.msra.mxu0 0
    %5116 = vmatprep.subr.bf16.mxu0 0
    %5117 = vmatpush1.bf16.msra.mxu0 0
    %5118 = vmatprep.subr.bf16.mxu0 0
    %5119 = vmatpush1.bf16.msra.mxu0 0
    %5120 = vmatprep.subr.bf16.mxu0 0
    %5121 = vmatpush1.bf16.msra.mxu0 0
    %5122 = vmatprep.subr.bf16.mxu0 0
    %5123 = vmatpush1.bf16.msra.mxu0 0
    %5124 = vmatprep.subr.bf16.mxu0 0
    %5125 = vmatpush1.bf16.msra.mxu0 0
    %5126 = vmatprep.subr.bf16.mxu0 0
    %5127 = vmatpush1.bf16.msra.mxu0 0
    %5128 = vmatprep.subr.bf16.mxu0 0
    %5129 = vmatpush1.bf16.msra.mxu0 0
    %5130 = vmatprep.subr.bf16.mxu0 0
    %5131 = vmatpush1.bf16.msra.mxu0 0
    %5132 = vmatprep.subr.bf16.mxu0 0
    %5133 = vmatpush1.bf16.msra.mxu0 0
    %5134 = vmatprep.mubr.bf16.mxu0 0
    %5135 = vmatmul.mubr.bf16.gmra.mrb[0].mxu0 %v5076
    %v5136 = vpop.f32.mrb[0].mxu0
    %v5137 = vadd.f32 0.0, %v5136
    %v5138 = vpop.f32.mrb[0].mxu0
    %v5139 = vpop.f32.mrb[0].mxu0
    %v5140 = vadd.f32 0.0, %v5139
    %v5141 = vpop.f32.mrb[0].mxu0
    %5142 = vmatprep.mubr.bf16.mxu0 0
    %5143 = vmatmul.mubr.bf16.gmra.mrb[0].mxu0 %v5079
    %v5144 = vpop.f32.mrb[0].mxu0
    %v5145 = vadd.f32 0.0, %v5144
    %v5146 = vpop.f32.mrb[0].mxu0
    %v5147 = vpop.f32.mrb[0].mxu0
    %v5148 = vadd.f32 0.0, %v5147
    %v5149 = vpop.f32.mrb[0].mxu0
    %5150 = vmatprep.mubr.bf16.mxu0 0
    %5151 = vmatmul.mubr.bf16.gmra.mrb[0].mxu0 %v5082
    %v5152 = vpop.f32.mrb[0].mxu0
    %v5153 = vadd.f32 0.0, %v5152
    %v5154 = vpop.f32.mrb[0].mxu0
    %v5155 = vpop.f32.mrb[0].mxu0
    %v5156 = vadd.f32 0.0, %v5155
    %v5157 = vpop.f32.mrb[0].mxu0
    %5158 = vmatprep.mubr.bf16.mxu0 0
    %5159 = vmatmul.mubr.bf16.gmra.mrb[0].mxu0 %v5085
    %v5160 = vpop.f32.mrb[0].mxu0
    %v5161 = vadd.f32 0.0, %v5160
    %v5162 = vpop.f32.mrb[0].mxu0
    %v5163 = vpop.f32.mrb[0].mxu0
    %v5164 = vadd.f32 0.0, %v5163
    %v5165 = vpop.f32.mrb[0].mxu0
    %5166 = vmatprep.mubr.bf16.mxu0 0
    %5167 = vmatmul.mubr.bf16.gmra.mrb[0].mxu0 %v5088
    %v5168 = vpop.f32.mrb[0].mxu0
    %v5169 = vadd.f32 0.0, %v5168
    %v5170 = vpop.f32.mrb[0].mxu0
    %v5171 = vpop.f32.mrb[0].mxu0
    %v5172 = vadd.f32 0.0, %v5171
    %v5173 = vpop.f32.mrb[0].mxu0
    %5174 = vmatprep.mubr.bf16.mxu0 0
    %5175 = vmatmul.mubr.bf16.gmra.mrb[0].mxu0 %v5091
    %v5176 = vpop.f32.mrb[0].mxu0
    %v5177 = vadd.f32 0.0, %v5176
    %v5178 = vpop.f32.mrb[0].mxu0
    %v5179 = vpop.f32.mrb[0].mxu0
    %v5180 = vadd.f32 0.0, %v5179
    %v5181 = vpop.f32.mrb[0].mxu0
    %5182 = vmatprep.mubr.bf16.mxu0 0
    %5183 = vmatmul.mubr.bf16.gmra.mrb[0].mxu0 %v5094
    %v5184 = vpop.f32.mrb[0].mxu0
    %v5185 = vadd.f32 0.0, %v5184
    %v5186 = vpop.f32.mrb[0].mxu0
    %v5187 = vpop.f32.mrb[0].mxu0
    %v5188 = vadd.f32 0.0, %v5187
    %v5189 = vpop.f32.mrb[0].mxu0
    %5190 = vmatprep.mubr.bf16.mxu0 0
    %5191 = vmatmul.mubr.bf16.gmra.mrb[0].mxu0 %v5097
    %v5192 = vpop.f32.mrb[0].mxu0
    %v5193 = vadd.f32 0.0, %v5192
    %v5194 = vpop.f32.mrb[0].mxu0
    %v5195 = vpop.f32.mrb[0].mxu0
    %v5196 = vadd.f32 0.0, %v5195
    %v5197 = vpop.f32.mrb[0].mxu0
    %5198 = vdwg.mxu0
    %v5199 = vadd.f32 %v5057, %v5137
    %v5200 = vadd.f32 %v5058, %v5140
    %v5201 = vadd.f32 %v5059, %v5145
    %v5202 = vadd.f32 %v5060, %v5148
    %v5203 = vadd.f32 %v5061, %v5153
    %v5204 = vadd.f32 %v5062, %v5156
    %v5205 = vadd.f32 %v5063, %v5161
    %v5206 = vadd.f32 %v5064, %v5164
    %v5207 = vadd.f32 %v5065, %v5169
    %v5208 = vadd.f32 %v5066, %v5172
    %v5209 = vadd.f32 %v5067, %v5177
    %v5210 = vadd.f32 %v5068, %v5180
    %v5211 = vadd.f32 %v5069, %v5185
    %v5212 = vadd.f32 %v5070, %v5188
    %v5213 = vadd.f32 %v5071, %v5193
    %v5214 = vadd.f32 %v5072, %v5196
    %s5215 = scalar_lea.vmem %s5, 24
    %v5216 = vld [vmem:[%s5215] sm:$0x7]
    %v5218 = vsel %vm737, %v4371, 0
    %v5221 = vsel %vm737, %v4372, 0
    %v5224 = vsel %vm737, %v4373, 0
    %v5227 = vsel %vm737, %v4374, 0
    %v5230 = vsel %vm737, %v4375, 0
    %v5233 = vsel %vm737, %v4376, 0
    %v5236 = vsel %vm737, %v4377, 0
    %v5239 = vsel %vm737, %v4378, 0
    %v5242 = vsel %vm4422, %v5216, 0
    %5244 = vmatprep.subr.bf16.mxu0 0
    %5245 = vmatpush1.bf16.msra.mxu0 %v5242
    %5246 = vmatprep.subr.bf16.mxu0 0
    %5247 = vmatpush1.bf16.msra.mxu0 0
    %5248 = vmatprep.subr.bf16.mxu0 0
    %5249 = vmatpush1.bf16.msra.mxu0 0
    %5250 = vmatprep.subr.bf16.mxu0 0
    %5251 = vmatpush1.bf16.msra.mxu0 0
    %5252 = vmatprep.subr.bf16.mxu0 0
    %5253 = vmatpush1.bf16.msra.mxu0 0
    %5254 = vmatprep.subr.bf16.mxu0 0
    %5255 = vmatpush1.bf16.msra.mxu0 0
    %5256 = vmatprep.subr.bf16.mxu0 0
    %5257 = vmatpush1.bf16.msra.mxu0 0
    %5258 = vmatprep.subr.bf16.mxu0 0
    %5259 = vmatpush1.bf16.msra.mxu0 0
    %5260 = vmatprep.subr.bf16.mxu0 0
    %5261 = vmatpush1.bf16.msra.mxu0 0
    %5262 = vmatprep.subr.bf16.mxu0 0
    %5263 = vmatpush1.bf16.msra.mxu0 0
    %5264 = vmatprep.subr.bf16.mxu0 0
    %5265 = vmatpush1.bf16.msra.mxu0 0
    %5266 = vmatprep.subr.bf16.mxu0 0
    %5267 = vmatpush1.bf16.msra.mxu0 0
    %5268 = vmatprep.subr.bf16.mxu0 0
    %5269 = vmatpush1.bf16.msra.mxu0 0
    %5270 = vmatprep.subr.bf16.mxu0 0
    %5271 = vmatpush1.bf16.msra.mxu0 0
    %5272 = vmatprep.subr.bf16.mxu0 0
    %5273 = vmatpush1.bf16.msra.mxu0 0
    %5274 = vmatprep.subr.bf16.mxu0 0
    %5275 = vmatpush1.bf16.msra.mxu0 0
    %5276 = vmatprep.mubr.bf16.mxu0 0
    %5277 = vmatmul.mubr.bf16.gmra.mrb[0].mxu0 %v5218
    %v5278 = vpop.f32.mrb[0].mxu0
    %v5279 = vadd.f32 0.0, %v5278
    %v5280 = vpop.f32.mrb[0].mxu0
    %v5281 = vpop.f32.mrb[0].mxu0
    %v5282 = vadd.f32 0.0, %v5281
    %v5283 = vpop.f32.mrb[0].mxu0
    %5284 = vmatprep.mubr.bf16.mxu0 0
    %5285 = vmatmul.mubr.bf16.gmra.mrb[0].mxu0 %v5221
    %v5286 = vpop.f32.mrb[0].mxu0
    %v5287 = vadd.f32 0.0, %v5286
    %v5288 = vpop.f32.mrb[0].mxu0
    %v5289 = vpop.f32.mrb[0].mxu0
    %v5290 = vadd.f32 0.0, %v5289
    %v5291 = vpop.f32.mrb[0].mxu0
    %5292 = vmatprep.mubr.bf16.mxu0 0
    %5293 = vmatmul.mubr.bf16.gmra.mrb[0].mxu0 %v5224
    %v5294 = vpop.f32.mrb[0].mxu0
    %v5295 = vadd.f32 0.0, %v5294
    %v5296 = vpop.f32.mrb[0].mxu0
    %v5297 = vpop.f32.mrb[0].mxu0
    %v5298 = vadd.f32 0.0, %v5297
    %v5299 = vpop.f32.mrb[0].mxu0
    %5300 = vmatprep.mubr.bf16.mxu0 0
    %5301 = vmatmul.mubr.bf16.gmra.mrb[0].mxu0 %v5227
    %v5302 = vpop.f32.mrb[0].mxu0
    %v5303 = vadd.f32 0.0, %v5302
    %v5304 = vpop.f32.mrb[0].mxu0
    %v5305 = vpop.f32.mrb[0].mxu0
    %v5306 = vadd.f32 0.0, %v5305
    %v5307 = vpop.f32.mrb[0].mxu0
    %5308 = vmatprep.mubr.bf16.mxu0 0
    %5309 = vmatmul.mubr.bf16.gmra.mrb[0].mxu0 %v5230
    %v5310 = vpop.f32.mrb[0].mxu0
    %v5311 = vadd.f32 0.0, %v5310
    %v5312 = vpop.f32.mrb[0].mxu0
    %v5313 = vpop.f32.mrb[0].mxu0
    %v5314 = vadd.f32 0.0, %v5313
    %v5315 = vpop.f32.mrb[0].mxu0
    %5316 = vmatprep.mubr.bf16.mxu0 0
    %5317 = vmatmul.mubr.bf16.gmra.mrb[0].mxu0 %v5233
    %v5318 = vpop.f32.mrb[0].mxu0
    %v5319 = vadd.f32 0.0, %v5318
    %v5320 = vpop.f32.mrb[0].mxu0
    %v5321 = vpop.f32.mrb[0].mxu0
    %v5322 = vadd.f32 0.0, %v5321
    %v5323 = vpop.f32.mrb[0].mxu0
    %5324 = vmatprep.mubr.bf16.mxu0 0
    %5325 = vmatmul.mubr.bf16.gmra.mrb[0].mxu0 %v5236
    %v5326 = vpop.f32.mrb[0].mxu0
    %v5327 = vadd.f32 0.0, %v5326
    %v5328 = vpop.f32.mrb[0].mxu0
    %v5329 = vpop.f32.mrb[0].mxu0
    %v5330 = vadd.f32 0.0, %v5329
    %v5331 = vpop.f32.mrb[0].mxu0
    %5332 = vmatprep.mubr.bf16.mxu0 0
    %5333 = vmatmul.mubr.bf16.gmra.mrb[0].mxu0 %v5239
    %v5334 = vpop.f32.mrb[0].mxu0
    %v5335 = vadd.f32 0.0, %v5334
    %v5336 = vpop.f32.mrb[0].mxu0
    %v5337 = vpop.f32.mrb[0].mxu0
    %v5338 = vadd.f32 0.0, %v5337
    %v5339 = vpop.f32.mrb[0].mxu0
    %5340 = vdwg.mxu0
    %v5341 = vadd.f32 %v5199, %v5279
    %v5342 = vadd.f32 %v5200, %v5282
    %v5343 = vadd.f32 %v5201, %v5287
    %v5344 = vadd.f32 %v5202, %v5290
    %v5345 = vadd.f32 %v5203, %v5295
    %v5346 = vadd.f32 %v5204, %v5298
    %v5347 = vadd.f32 %v5205, %v5303
    %v5348 = vadd.f32 %v5206, %v5306
    %v5349 = vadd.f32 %v5207, %v5311
    %v5350 = vadd.f32 %v5208, %v5314
    %v5351 = vadd.f32 %v5209, %v5319
    %v5352 = vadd.f32 %v5210, %v5322
    %v5353 = vadd.f32 %v5211, %v5327
    %v5354 = vadd.f32 %v5212, %v5330
    %v5355 = vadd.f32 %v5213, %v5335
    %v5356 = vadd.f32 %v5214, %v5338
    %s5357 = scalar_lea.vmem %s5, 28
    %v5358 = vld [vmem:[%s5357] sm:$0x7]
    %v5360 = vsel %vm737, %v4379, 0
    %v5363 = vsel %vm737, %v4380, 0
    %v5366 = vsel %vm737, %v4381, 0
    %v5369 = vsel %vm737, %v4382, 0
    %v5372 = vsel %vm737, %v4383, 0
    %v5375 = vsel %vm737, %v4384, 0
    %v5378 = vsel %vm737, %v4385, 0
    %v5381 = vsel %vm737, %v4386, 0
    %v5384 = vsel %vm4422, %v5358, 0
    %5386 = vmatprep.subr.bf16.mxu0 0
    %5387 = vmatpush1.bf16.msra.mxu0 %v5384
    %5388 = vmatprep.subr.bf16.mxu0 0
    %5389 = vmatpush1.bf16.msra.mxu0 0
    %5390 = vmatprep.subr.bf16.mxu0 0
    %5391 = vmatpush1.bf16.msra.mxu0 0
    %5392 = vmatprep.subr.bf16.mxu0 0
    %5393 = vmatpush1.bf16.msra.mxu0 0
    %5394 = vmatprep.subr.bf16.mxu0 0
    %5395 = vmatpush1.bf16.msra.mxu0 0
    %5396 = vmatprep.subr.bf16.mxu0 0
    %5397 = vmatpush1.bf16.msra.mxu0 0
    %5398 = vmatprep.subr.bf16.mxu0 0
    %5399 = vmatpush1.bf16.msra.mxu0 0
    %5400 = vmatprep.subr.bf16.mxu0 0
    %5401 = vmatpush1.bf16.msra.mxu0 0
    %5402 = vmatprep.subr.bf16.mxu0 0
    %5403 = vmatpush1.bf16.msra.mxu0 0
    %5404 = vmatprep.subr.bf16.mxu0 0
    %5405 = vmatpush1.bf16.msra.mxu0 0
    %5406 = vmatprep.subr.bf16.mxu0 0
    %5407 = vmatpush1.bf16.msra.mxu0 0
    %5408 = vmatprep.subr.bf16.mxu0 0
    %5409 = vmatpush1.bf16.msra.mxu0 0
    %5410 = vmatprep.subr.bf16.mxu0 0
    %5411 = vmatpush1.bf16.msra.mxu0 0
    %5412 = vmatprep.subr.bf16.mxu0 0
    %5413 = vmatpush1.bf16.msra.mxu0 0
    %5414 = vmatprep.subr.bf16.mxu0 0
    %5415 = vmatpush1.bf16.msra.mxu0 0
    %5416 = vmatprep.subr.bf16.mxu0 0
    %5417 = vmatpush1.bf16.msra.mxu0 0
    %5418 = vmatprep.mubr.bf16.mxu0 0
    %5419 = vmatmul.mubr.bf16.gmra.mrb[0].mxu0 %v5360
    %v5420 = vpop.f32.mrb[0].mxu0
    %v5421 = vadd.f32 0.0, %v5420
    %v5422 = vpop.f32.mrb[0].mxu0
    %v5423 = vpop.f32.mrb[0].mxu0
    %v5424 = vadd.f32 0.0, %v5423
    %v5425 = vpop.f32.mrb[0].mxu0
    %5426 = vmatprep.mubr.bf16.mxu0 0
    %5427 = vmatmul.mubr.bf16.gmra.mrb[0].mxu0 %v5363
    %v5428 = vpop.f32.mrb[0].mxu0
    %v5429 = vadd.f32 0.0, %v5428
    %v5430 = vpop.f32.mrb[0].mxu0
    %v5431 = vpop.f32.mrb[0].mxu0
    %v5432 = vadd.f32 0.0, %v5431
    %v5433 = vpop.f32.mrb[0].mxu0
    %5434 = vmatprep.mubr.bf16.mxu0 0
    %5435 = vmatmul.mubr.bf16.gmra.mrb[0].mxu0 %v5366
    %v5436 = vpop.f32.mrb[0].mxu0
    %v5437 = vadd.f32 0.0, %v5436
    %v5438 = vpop.f32.mrb[0].mxu0
    %v5439 = vpop.f32.mrb[0].mxu0
    %v5440 = vadd.f32 0.0, %v5439
    %v5441 = vpop.f32.mrb[0].mxu0
    %5442 = vmatprep.mubr.bf16.mxu0 0
    %5443 = vmatmul.mubr.bf16.gmra.mrb[0].mxu0 %v5369
    %v5444 = vpop.f32.mrb[0].mxu0
    %v5445 = vadd.f32 0.0, %v5444
    %v5446 = vpop.f32.mrb[0].mxu0
    %v5447 = vpop.f32.mrb[0].mxu0
    %v5448 = vadd.f32 0.0, %v5447
    %v5449 = vpop.f32.mrb[0].mxu0
    %5450 = vmatprep.mubr.bf16.mxu0 0
    %5451 = vmatmul.mubr.bf16.gmra.mrb[0].mxu0 %v5372
    %v5452 = vpop.f32.mrb[0].mxu0
    %v5453 = vadd.f32 0.0, %v5452
    %v5454 = vpop.f32.mrb[0].mxu0
    %v5455 = vpop.f32.mrb[0].mxu0
    %v5456 = vadd.f32 0.0, %v5455
    %v5457 = vpop.f32.mrb[0].mxu0
    %5458 = vmatprep.mubr.bf16.mxu0 0
    %5459 = vmatmul.mubr.bf16.gmra.mrb[0].mxu0 %v5375
    %v5460 = vpop.f32.mrb[0].mxu0
    %v5461 = vadd.f32 0.0, %v5460
    %v5462 = vpop.f32.mrb[0].mxu0
    %v5463 = vpop.f32.mrb[0].mxu0
    %v5464 = vadd.f32 0.0, %v5463
    %v5465 = vpop.f32.mrb[0].mxu0
    %5466 = vmatprep.mubr.bf16.mxu0 0
    %5467 = vmatmul.mubr.bf16.gmra.mrb[0].mxu0 %v5378
    %v5468 = vpop.f32.mrb[0].mxu0
    %v5469 = vadd.f32 0.0, %v5468
    %v5470 = vpop.f32.mrb[0].mxu0
    %v5471 = vpop.f32.mrb[0].mxu0
    %v5472 = vadd.f32 0.0, %v5471
    %v5473 = vpop.f32.mrb[0].mxu0
    %5474 = vmatprep.mubr.bf16.mxu0 0
    %5475 = vmatmul.mubr.bf16.gmra.mrb[0].mxu0 %v5381
    %v5476 = vpop.f32.mrb[0].mxu0
    %v5477 = vadd.f32 0.0, %v5476
    %v5478 = vpop.f32.mrb[0].mxu0
    %v5479 = vpop.f32.mrb[0].mxu0
    %v5480 = vadd.f32 0.0, %v5479
    %v5481 = vpop.f32.mrb[0].mxu0
    %5482 = vdwg.mxu0
    %v5483 = vadd.f32 %v5341, %v5421
    %v5484 = vadd.f32 %v5342, %v5424
    %v5485 = vadd.f32 %v5343, %v5429
    %v5486 = vadd.f32 %v5344, %v5432
    %v5487 = vadd.f32 %v5345, %v5437
    %v5488 = vadd.f32 %v5346, %v5440
    %v5489 = vadd.f32 %v5347, %v5445
    %v5490 = vadd.f32 %v5348, %v5448
    %v5491 = vadd.f32 %v5349, %v5453
    %v5492 = vadd.f32 %v5350, %v5456
    %v5493 = vadd.f32 %v5351, %v5461
    %v5494 = vadd.f32 %v5352, %v5464
    %v5495 = vadd.f32 %v5353, %v5469
    %v5496 = vadd.f32 %v5354, %v5472
    %v5497 = vadd.f32 %v5355, %v5477
    %v5498 = vadd.f32 %v5356, %v5480
    %s5499 = scalar_lea.vmem %s5, 32
    %v5500 = vld [vmem:[%s5499] sm:$0x7]
    %v5502 = vsel %vm737, %v4387, 0
    %v5505 = vsel %vm737, %v4388, 0
    %v5508 = vsel %vm737, %v4389, 0
    %v5511 = vsel %vm737, %v4390, 0
    %v5514 = vsel %vm737, %v4391, 0
    %v5517 = vsel %vm737, %v4392, 0
    %v5520 = vsel %vm737, %v4393, 0
    %v5523 = vsel %vm737, %v4394, 0
    %v5526 = vsel %vm4422, %v5500, 0
    %5528 = vmatprep.subr.bf16.mxu0 0
    %5529 = vmatpush1.bf16.msra.mxu0 %v5526
    %5530 = vmatprep.subr.bf16.mxu0 0
    %5531 = vmatpush1.bf16.msra.mxu0 0
    %5532 = vmatprep.subr.bf16.mxu0 0
    %5533 = vmatpush1.bf16.msra.mxu0 0
    %5534 = vmatprep.subr.bf16.mxu0 0
    %5535 = vmatpush1.bf16.msra.mxu0 0
    %5536 = vmatprep.subr.bf16.mxu0 0
    %5537 = vmatpush1.bf16.msra.mxu0 0
    %5538 = vmatprep.subr.bf16.mxu0 0
    %5539 = vmatpush1.bf16.msra.mxu0 0
    %5540 = vmatprep.subr.bf16.mxu0 0
    %5541 = vmatpush1.bf16.msra.mxu0 0
    %5542 = vmatprep.subr.bf16.mxu0 0
    %5543 = vmatpush1.bf16.msra.mxu0 0
    %5544 = vmatprep.subr.bf16.mxu0 0
    %5545 = vmatpush1.bf16.msra.mxu0 0
    %5546 = vmatprep.subr.bf16.mxu0 0
    %5547 = vmatpush1.bf16.msra.mxu0 0
    %5548 = vmatprep.subr.bf16.mxu0 0
    %5549 = vmatpush1.bf16.msra.mxu0 0
    %5550 = vmatprep.subr.bf16.mxu0 0
    %5551 = vmatpush1.bf16.msra.mxu0 0
    %5552 = vmatprep.subr.bf16.mxu0 0
    %5553 = vmatpush1.bf16.msra.mxu0 0
    %5554 = vmatprep.subr.bf16.mxu0 0
    %5555 = vmatpush1.bf16.msra.mxu0 0
    %5556 = vmatprep.subr.bf16.mxu0 0
    %5557 = vmatpush1.bf16.msra.mxu0 0
    %5558 = vmatprep.subr.bf16.mxu0 0
    %5559 = vmatpush1.bf16.msra.mxu0 0
    %5560 = vmatprep.mubr.bf16.mxu0 0
    %5561 = vmatmul.mubr.bf16.gmra.mrb[0].mxu0 %v5502
    %v5562 = vpop.f32.mrb[0].mxu0
    %v5563 = vadd.f32 0.0, %v5562
    %v5564 = vpop.f32.mrb[0].mxu0
    %v5565 = vpop.f32.mrb[0].mxu0
    %v5566 = vadd.f32 0.0, %v5565
    %v5567 = vpop.f32.mrb[0].mxu0
    %5568 = vmatprep.mubr.bf16.mxu0 0
    %5569 = vmatmul.mubr.bf16.gmra.mrb[0].mxu0 %v5505
    %v5570 = vpop.f32.mrb[0].mxu0
    %v5571 = vadd.f32 0.0, %v5570
    %v5572 = vpop.f32.mrb[0].mxu0
    %v5573 = vpop.f32.mrb[0].mxu0
    %v5574 = vadd.f32 0.0, %v5573
    %v5575 = vpop.f32.mrb[0].mxu0
    %5576 = vmatprep.mubr.bf16.mxu0 0
    %5577 = vmatmul.mubr.bf16.gmra.mrb[0].mxu0 %v5508
    %v5578 = vpop.f32.mrb[0].mxu0
    %v5579 = vadd.f32 0.0, %v5578
    %v5580 = vpop.f32.mrb[0].mxu0
    %v5581 = vpop.f32.mrb[0].mxu0
    %v5582 = vadd.f32 0.0, %v5581
    %v5583 = vpop.f32.mrb[0].mxu0
    %5584 = vmatprep.mubr.bf16.mxu0 0
    %5585 = vmatmul.mubr.bf16.gmra.mrb[0].mxu0 %v5511
    %v5586 = vpop.f32.mrb[0].mxu0
    %v5587 = vadd.f32 0.0, %v5586
    %v5588 = vpop.f32.mrb[0].mxu0
    %v5589 = vpop.f32.mrb[0].mxu0
    %v5590 = vadd.f32 0.0, %v5589
    %v5591 = vpop.f32.mrb[0].mxu0
    %5592 = vmatprep.mubr.bf16.mxu0 0
    %5593 = vmatmul.mubr.bf16.gmra.mrb[0].mxu0 %v5514
    %v5594 = vpop.f32.mrb[0].mxu0
    %v5595 = vadd.f32 0.0, %v5594
    %v5596 = vpop.f32.mrb[0].mxu0
    %v5597 = vpop.f32.mrb[0].mxu0
    %v5598 = vadd.f32 0.0, %v5597
    %v5599 = vpop.f32.mrb[0].mxu0
    %5600 = vmatprep.mubr.bf16.mxu0 0
    %5601 = vmatmul.mubr.bf16.gmra.mrb[0].mxu0 %v5517
    %v5602 = vpop.f32.mrb[0].mxu0
    %v5603 = vadd.f32 0.0, %v5602
    %v5604 = vpop.f32.mrb[0].mxu0
    %v5605 = vpop.f32.mrb[0].mxu0
    %v5606 = vadd.f32 0.0, %v5605
    %v5607 = vpop.f32.mrb[0].mxu0
    %5608 = vmatprep.mubr.bf16.mxu0 0
    %5609 = vmatmul.mubr.bf16.gmra.mrb[0].mxu0 %v5520
    %v5610 = vpop.f32.mrb[0].mxu0
    %v5611 = vadd.f32 0.0, %v5610
    %v5612 = vpop.f32.mrb[0].mxu0
    %v5613 = vpop.f32.mrb[0].mxu0
    %v5614 = vadd.f32 0.0, %v5613
    %v5615 = vpop.f32.mrb[0].mxu0
    %5616 = vmatprep.mubr.bf16.mxu0 0
    %5617 = vmatmul.mubr.bf16.gmra.mrb[0].mxu0 %v5523
    %v5618 = vpop.f32.mrb[0].mxu0
    %v5619 = vadd.f32 0.0, %v5618
    %v5620 = vpop.f32.mrb[0].mxu0
    %v5621 = vpop.f32.mrb[0].mxu0
    %v5622 = vadd.f32 0.0, %v5621
    %v5623 = vpop.f32.mrb[0].mxu0
    %5624 = vdwg.mxu0
    %v5625 = vadd.f32 %v5483, %v5563
    %v5626 = vadd.f32 %v5484, %v5566
    %v5627 = vadd.f32 %v5485, %v5571
    %v5628 = vadd.f32 %v5486, %v5574
    %v5629 = vadd.f32 %v5487, %v5579
    %v5630 = vadd.f32 %v5488, %v5582
    %v5631 = vadd.f32 %v5489, %v5587
    %v5632 = vadd.f32 %v5490, %v5590
    %v5633 = vadd.f32 %v5491, %v5595
    %v5634 = vadd.f32 %v5492, %v5598
    %v5635 = vadd.f32 %v5493, %v5603
    %v5636 = vadd.f32 %v5494, %v5606
    %v5637 = vadd.f32 %v5495, %v5611
    %v5638 = vadd.f32 %v5496, %v5614
    %v5639 = vadd.f32 %v5497, %v5619
    %v5640 = vadd.f32 %v5498, %v5622
    %v5641 = vld [vmem:[%s6] sm:$0x1]
    %v5642 = vld [vmem:[%s7] sm:$0x1]
    %vm5643 = vcmask 261120
    %v5644 = vsel %vm5643, %v5625, 0.0
    %v5645 = vsel %vm5643, %v5626, 0.0
    %v5646 = vadd.f32 %v5644, %v5645
    %v5647 = vsel %vm5643, %v5627, 0.0
    %v5648 = vadd.f32 %v5646, %v5647
    %v5649 = vsel %vm5643, %v5628, 0.0
    %v5650 = vadd.f32 %v5648, %v5649
    %v5651 = vsel %vm5643, %v5629, 0.0
    %v5652 = vadd.f32 %v5650, %v5651
    %v5653 = vsel %vm5643, %v5630, 0.0
    %v5654 = vadd.f32 %v5652, %v5653
    %v5655 = vsel %vm5643, %v5631, 0.0
    %v5656 = vadd.f32 %v5654, %v5655
    %v5657 = vsel %vm5643, %v5632, 0.0
    %v5658 = vadd.f32 %v5656, %v5657
    %v5659 = vsel %vm5643, %v5633, 0.0
    %v5660 = vadd.f32 %v5658, %v5659
    %v5661 = vsel %vm5643, %v5634, 0.0
    %v5662 = vadd.f32 %v5660, %v5661
    %v5663 = vsel %vm5643, %v5635, 0.0
    %v5664 = vadd.f32 %v5662, %v5663
    %v5665 = vsel %vm5643, %v5636, 0.0
    %v5666 = vadd.f32 %v5664, %v5665
    %v5667 = vsel %vm5643, %v5637, 0.0
    %v5668 = vadd.f32 %v5666, %v5667
    %v5669 = vsel %vm5643, %v5638, 0.0
    %v5670 = vadd.f32 %v5668, %v5669
    %v5671 = vsel %vm5643, %v5639, 0.0
    %v5672 = vadd.f32 %v5670, %v5671
    %v5673 = vsel %vm5643, %v5640, 0.0
    %v5674 = vadd.f32 %v5672, %v5673
    %v5675 = vrot.slane %v5674, 4
    %v5676 = vadd.f32 %v5674, %v5675
    %v5677 = vrot.slane %v5676, 2
    %v5678 = vadd.f32 %v5676, %v5677
    %v5679 = vrot.slane %v5678, 1
    %v5680 = vadd.f32 %v5678, %v5679
    %v5681 = vrcp.pop 128.0
    %v5682 = vmul.f32 %v5680, %v5681
    %v5683 = vmul.f32 %v5625, %v5625
    %v5684 = vmul.f32 %v5626, %v5626
    %v5685 = vmul.f32 %v5627, %v5627
    %v5686 = vmul.f32 %v5628, %v5628
    %v5687 = vmul.f32 %v5629, %v5629
    %v5688 = vmul.f32 %v5630, %v5630
    %v5689 = vmul.f32 %v5631, %v5631
    %v5690 = vmul.f32 %v5632, %v5632
    %v5691 = vmul.f32 %v5633, %v5633
    %v5692 = vmul.f32 %v5634, %v5634
    %v5693 = vmul.f32 %v5635, %v5635
    %v5694 = vmul.f32 %v5636, %v5636
    %v5695 = vmul.f32 %v5637, %v5637
    %v5696 = vmul.f32 %v5638, %v5638
    %v5697 = vmul.f32 %v5639, %v5639
    %v5698 = vmul.f32 %v5640, %v5640
    %v5699 = vsel %vm5643, %v5683, 0.0
    %v5700 = vsel %vm5643, %v5684, 0.0
    %v5701 = vadd.f32 %v5699, %v5700
    %v5702 = vsel %vm5643, %v5685, 0.0
    %v5703 = vadd.f32 %v5701, %v5702
    %v5704 = vsel %vm5643, %v5686, 0.0
    %v5705 = vadd.f32 %v5703, %v5704
    %v5706 = vsel %vm5643, %v5687, 0.0
    %v5707 = vadd.f32 %v5705, %v5706
    %v5708 = vsel %vm5643, %v5688, 0.0
    %v5709 = vadd.f32 %v5707, %v5708
    %v5710 = vsel %vm5643, %v5689, 0.0
    %v5711 = vadd.f32 %v5709, %v5710
    %v5712 = vsel %vm5643, %v5690, 0.0
    %v5713 = vadd.f32 %v5711, %v5712
    %v5714 = vsel %vm5643, %v5691, 0.0
    %v5715 = vadd.f32 %v5713, %v5714
    %v5716 = vsel %vm5643, %v5692, 0.0
    %v5717 = vadd.f32 %v5715, %v5716
    %v5718 = vsel %vm5643, %v5693, 0.0
    %v5719 = vadd.f32 %v5717, %v5718
    %v5720 = vsel %vm5643, %v5694, 0.0
    %v5721 = vadd.f32 %v5719, %v5720
    %v5722 = vsel %vm5643, %v5695, 0.0
    %v5723 = vadd.f32 %v5721, %v5722
    %v5724 = vsel %vm5643, %v5696, 0.0
    %v5725 = vadd.f32 %v5723, %v5724
    %v5726 = vsel %vm5643, %v5697, 0.0
    %v5727 = vadd.f32 %v5725, %v5726
    %v5728 = vsel %vm5643, %v5698, 0.0
    %v5729 = vadd.f32 %v5727, %v5728
    %v5730 = vrot.slane %v5729, 4
    %v5731 = vadd.f32 %v5729, %v5730
    %v5732 = vrot.slane %v5731, 2
    %v5733 = vadd.f32 %v5731, %v5732
    %v5734 = vrot.slane %v5733, 1
    %v5735 = vadd.f32 %v5733, %v5734
    %v5736 = vmul.f32 %v5735, %v5681
    %v5737 = vmul.f32 %v5682, %v5682
    %v5738 = vsub.f32 %v5736, %v5737
    %v5739 = vmax.f32 %v5738, 0.0
    %v5740 = vsub.f32 %v5625, %v5682
    %v5741 = vsub.f32 %v5626, %v5682
    %v5742 = vsub.f32 %v5627, %v5682
    %v5743 = vsub.f32 %v5628, %v5682
    %v5744 = vsub.f32 %v5629, %v5682
    %v5745 = vsub.f32 %v5630, %v5682
    %v5746 = vsub.f32 %v5631, %v5682
    %v5747 = vsub.f32 %v5632, %v5682
    %v5748 = vsub.f32 %v5633, %v5682
    %v5749 = vsub.f32 %v5634, %v5682
    %v5750 = vsub.f32 %v5635, %v5682
    %v5751 = vsub.f32 %v5636, %v5682
    %v5752 = vsub.f32 %v5637, %v5682
    %v5753 = vsub.f32 %v5638, %v5682
    %v5754 = vsub.f32 %v5639, %v5682
    %v5755 = vsub.f32 %v5640, %v5682
    %v5756 = vadd.f32 %v5739, 1e-05
    %v5757 = vrsqrt.pop %v5756
    %v5758 = vmul.f32 %v5641, %v5757
    %v5760 = vlaneseq
    %v5761 = vshrl.u32 %v5760, 7
    %v5762 = vsub.s32 0, %v5761
    %v5763 = vrot.slane %v5758, %v5762
    %v5765 = vmul.f32 %v5740, %v5763
    %v5766 = vmul.f32 %v5741, %v5763
    %v5767 = vmul.f32 %v5742, %v5763
    %v5768 = vmul.f32 %v5743, %v5763
    %v5769 = vmul.f32 %v5744, %v5763
    %v5770 = vmul.f32 %v5745, %v5763
    %v5771 = vmul.f32 %v5746, %v5763
    %v5772 = vmul.f32 %v5747, %v5763
    %v5773 = vmul.f32 %v5748, %v5763
    %v5774 = vmul.f32 %v5749, %v5763
    %v5775 = vmul.f32 %v5750, %v5763
    %v5776 = vmul.f32 %v5751, %v5763
    %v5777 = vmul.f32 %v5752, %v5763
    %v5778 = vmul.f32 %v5753, %v5763
    %v5779 = vmul.f32 %v5754, %v5763
    %v5780 = vmul.f32 %v5755, %v5763
    %v5782 = vlaneseq
    %v5783 = vshrl.u32 %v5782, 7
    %v5784 = vsub.s32 0, %v5783
    %v5785 = vrot.slane %v5642, %v5784
    %v5787 = vadd.f32 %v5765, %v5785
    %v5788 = vadd.f32 %v5766, %v5785
    %v5789 = vadd.f32 %v5767, %v5785
    %v5790 = vadd.f32 %v5768, %v5785
    %v5791 = vadd.f32 %v5769, %v5785
    %v5792 = vadd.f32 %v5770, %v5785
    %v5793 = vadd.f32 %v5771, %v5785
    %v5794 = vadd.f32 %v5772, %v5785
    %v5795 = vadd.f32 %v5773, %v5785
    %v5796 = vadd.f32 %v5774, %v5785
    %v5797 = vadd.f32 %v5775, %v5785
    %v5798 = vadd.f32 %v5776, %v5785
    %v5799 = vadd.f32 %v5777, %v5785
    %v5800 = vadd.f32 %v5778, %v5785
    %v5801 = vadd.f32 %v5779, %v5785
    %v5802 = vadd.f32 %v5780, %v5785
    %v5803 = vlaneseq
    %v5804 = vshrl.u32 %v5803, 7
    %v5805 = vadd.s32 %v5804, 8
    %v5806 = vadd.s32 %v5804, 16
    %v5807 = vadd.s32 %v5804, 24
    %v5808 = vlaneseq
    %v5809 = vand.u32 %v5808, 127
    %vm5810 = vcmp.eq.s32.totalorder %v5804, %v5809
    %vm5811 = vcmp.eq.s32.totalorder %v5805, %v5809
    %vm5812 = vcmp.eq.s32.totalorder %v5806, %v5809
    %vm5813 = vcmp.eq.s32.totalorder %v5807, %v5809
    %v5814 = vsel %vm5810, 1, 0
    %v5815 = vsel %vm5811, 1, 0
    %v5816 = vsel %vm5812, 1, 0
    %v5817 = vsel %vm5813, 1, 0
    %v5818 = vcvt.s32.f32 %v5814
    %v5819 = vcvt.s32.f32 %v5815
    %v5820 = vcvt.s32.f32 %v5816
    %v5821 = vcvt.s32.f32 %v5817
    %v5823 = vsel %vm5643, %v5787, 0
    %v5826 = vsel %vm5643, %v5788, 0
    %v5829 = vsel %vm5643, %v5789, 0
    %v5832 = vsel %vm5643, %v5790, 0
    %v5835 = vsel %vm5643, %v5791, 0
    %v5838 = vsel %vm5643, %v5792, 0
    %v5841 = vsel %vm5643, %v5793, 0
    %v5844 = vsel %vm5643, %v5794, 0
    %v5847 = vsel %vm5643, %v5795, 0
    %v5850 = vsel %vm5643, %v5796, 0
    %v5853 = vsel %vm5643, %v5797, 0
    %v5856 = vsel %vm5643, %v5798, 0
    %v5859 = vsel %vm5643, %v5799, 0
    %v5862 = vsel %vm5643, %v5800, 0
    %v5865 = vsel %vm5643, %v5801, 0
    %v5868 = vsel %vm5643, %v5802, 0
    %5870 = vmatprep.subr.mxu0 0.0
    %5871 = vmatpush1.msra.mxu0 %v5818
    %5872 = vmatprep.subr.mxu0 0.0
    %5873 = vmatpush1.msra.mxu0 %v5819
    %5874 = vmatprep.subr.mxu0 0.0
    %5875 = vmatpush1.msra.mxu0 %v5820
    %5876 = vmatprep.subr.mxu0 0.0
    %5877 = vmatpush1.msra.mxu0 %v5821
    %5878 = vmatprep.subr.mxu0 0.0
    %5879 = vmatpush1.msra.mxu0 0.0
    %5880 = vmatprep.subr.mxu0 0.0
    %5881 = vmatpush1.msra.mxu0 0.0
    %5882 = vmatprep.subr.mxu0 0.0
    %5883 = vmatpush1.msra.mxu0 0.0
    %5884 = vmatprep.subr.mxu0 0.0
    %5885 = vmatpush1.msra.mxu0 0.0
    %5886 = vmatprep.subr.mxu0 0.0
    %5887 = vmatpush1.msra.mxu0 0.0
    %5888 = vmatprep.subr.mxu0 0.0
    %5889 = vmatpush1.msra.mxu0 0.0
    %5890 = vmatprep.subr.mxu0 0.0
    %5891 = vmatpush1.msra.mxu0 0.0
    %5892 = vmatprep.subr.mxu0 0.0
    %5893 = vmatpush1.msra.mxu0 0.0
    %5894 = vmatprep.subr.mxu0 0.0
    %5895 = vmatpush1.msra.mxu0 0.0
    %5896 = vmatprep.subr.mxu0 0.0
    %5897 = vmatpush1.msra.mxu0 0.0
    %5898 = vmatprep.subr.mxu0 0.0
    %5899 = vmatpush1.msra.mxu0 0.0
    %5900 = vmatprep.subr.mxu0 0.0
    %5901 = vmatpush1.msra.mxu0 0.0
    %5902 = vmatprep.subr.mxu0 0.0
    %5903 = vmatpush1.msra.mxu0 0.0
    %5904 = vmatprep.subr.mxu0 0.0
    %5905 = vmatpush1.msra.mxu0 0.0
    %5906 = vmatprep.subr.mxu0 0.0
    %5907 = vmatpush1.msra.mxu0 0.0
    %5908 = vmatprep.subr.mxu0 0.0
    %5909 = vmatpush1.msra.mxu0 0.0
    %5910 = vmatprep.subr.mxu0 0.0
    %5911 = vmatpush1.msra.mxu0 0.0
    %5912 = vmatprep.subr.mxu0 0.0
    %5913 = vmatpush1.msra.mxu0 0.0
    %5914 = vmatprep.subr.mxu0 0.0
    %5915 = vmatpush1.msra.mxu0 0.0
    %5916 = vmatprep.subr.mxu0 0.0
    %5917 = vmatpush1.msra.mxu0 0.0
    %5918 = vmatprep.subr.mxu0 0.0
    %5919 = vmatpush1.msra.mxu0 0.0
    %5920 = vmatprep.subr.mxu0 0.0
    %5921 = vmatpush1.msra.mxu0 0.0
    %5922 = vmatprep.subr.mxu0 0.0
    %5923 = vmatpush1.msra.mxu0 0.0
    %5924 = vmatprep.subr.mxu0 0.0
    %5925 = vmatpush1.msra.mxu0 0.0
    %5926 = vmatprep.subr.mxu0 0.0
    %5927 = vmatpush1.msra.mxu0 0.0
    %5928 = vmatprep.subr.mxu0 0.0
    %5929 = vmatpush1.msra.mxu0 0.0
    %5930 = vmatprep.subr.mxu0 0.0
    %5931 = vmatpush1.msra.mxu0 0.0
    %5932 = vmatprep.subr.mxu0 0.0
    %5933 = vmatpush1.msra.mxu0 0.0
    %5934 = vmatprep.mubr.f32.mxu0 0.0
    %5935 = vmatmul.mubr.f32.gmra.mrb[0].mxu0 %v5823
    %v5936 = vpop.f32.mrb[0].mxu0
    %v5937 = vadd.f32 0.0, %v5936
    %v5938 = vpop.f32.mrb[0].mxu0
    %5939 = vmatprep.mubr.f32.mxu0 0.0
    %5940 = vmatmul.mubr.f32.gmra.mrb[0].mxu0 %v5826
    %v5941 = vpop.f32.mrb[0].mxu0
    %v5942 = vadd.f32 0.0, %v5941
    %v5943 = vpop.f32.mrb[0].mxu0
    %5944 = vmatprep.mubr.f32.mxu0 0.0
    %5945 = vmatmul.mubr.f32.gmra.mrb[0].mxu0 %v5829
    %v5946 = vpop.f32.mrb[0].mxu0
    %v5947 = vadd.f32 0.0, %v5946
    %v5948 = vpop.f32.mrb[0].mxu0
    %5949 = vmatprep.mubr.f32.mxu0 0.0
    %5950 = vmatmul.mubr.f32.gmra.mrb[0].mxu0 %v5832
    %v5951 = vpop.f32.mrb[0].mxu0
    %v5952 = vadd.f32 0.0, %v5951
    %v5953 = vpop.f32.mrb[0].mxu0
    %5954 = vmatprep.mubr.f32.mxu0 0.0
    %5955 = vmatmul.mubr.f32.gmra.mrb[0].mxu0 %v5835
    %v5956 = vpop.f32.mrb[0].mxu0
    %v5957 = vadd.f32 0.0, %v5956
    %v5958 = vpop.f32.mrb[0].mxu0
    %5959 = vmatprep.mubr.f32.mxu0 0.0
    %5960 = vmatmul.mubr.f32.gmra.mrb[0].mxu0 %v5838
    %v5961 = vpop.f32.mrb[0].mxu0
    %v5962 = vadd.f32 0.0, %v5961
    %v5963 = vpop.f32.mrb[0].mxu0
    %5964 = vmatprep.mubr.f32.mxu0 0.0
    %5965 = vmatmul.mubr.f32.gmra.mrb[0].mxu0 %v5841
    %v5966 = vpop.f32.mrb[0].mxu0
    %v5967 = vadd.f32 0.0, %v5966
    %v5968 = vpop.f32.mrb[0].mxu0
    %5969 = vmatprep.mubr.f32.mxu0 0.0
    %5970 = vmatmul.mubr.f32.gmra.mrb[0].mxu0 %v5844
    %v5971 = vpop.f32.mrb[0].mxu0
    %v5972 = vadd.f32 0.0, %v5971
    %v5973 = vpop.f32.mrb[0].mxu0
    %5974 = vmatprep.mubr.f32.mxu0 0.0
    %5975 = vmatmul.mubr.f32.gmra.mrb[0].mxu0 %v5847
    %v5976 = vpop.f32.mrb[0].mxu0
    %v5977 = vadd.f32 0.0, %v5976
    %v5978 = vpop.f32.mrb[0].mxu0
    %5979 = vmatprep.mubr.f32.mxu0 0.0
    %5980 = vmatmul.mubr.f32.gmra.mrb[0].mxu0 %v5850
    %v5981 = vpop.f32.mrb[0].mxu0
    %v5982 = vadd.f32 0.0, %v5981
    %v5983 = vpop.f32.mrb[0].mxu0
    %5984 = vmatprep.mubr.f32.mxu0 0.0
    %5985 = vmatmul.mubr.f32.gmra.mrb[0].mxu0 %v5853
    %v5986 = vpop.f32.mrb[0].mxu0
    %v5987 = vadd.f32 0.0, %v5986
    %v5988 = vpop.f32.mrb[0].mxu0
    %5989 = vmatprep.mubr.f32.mxu0 0.0
    %5990 = vmatmul.mubr.f32.gmra.mrb[0].mxu0 %v5856
    %v5991 = vpop.f32.mrb[0].mxu0
    %v5992 = vadd.f32 0.0, %v5991
    %v5993 = vpop.f32.mrb[0].mxu0
    %5994 = vmatprep.mubr.f32.mxu0 0.0
    %5995 = vmatmul.mubr.f32.gmra.mrb[0].mxu0 %v5859
    %v5996 = vpop.f32.mrb[0].mxu0
    %v5997 = vadd.f32 0.0, %v5996
    %v5998 = vpop.f32.mrb[0].mxu0
    %5999 = vmatprep.mubr.f32.mxu0 0.0
    %6000 = vmatmul.mubr.f32.gmra.mrb[0].mxu0 %v5862
    %v6001 = vpop.f32.mrb[0].mxu0
    %v6002 = vadd.f32 0.0, %v6001
    %v6003 = vpop.f32.mrb[0].mxu0
    %6004 = vmatprep.mubr.f32.mxu0 0.0
    %6005 = vmatmul.mubr.f32.gmra.mrb[0].mxu0 %v5865
    %v6006 = vpop.f32.mrb[0].mxu0
    %v6007 = vadd.f32 0.0, %v6006
    %v6008 = vpop.f32.mrb[0].mxu0
    %6009 = vmatprep.mubr.f32.mxu0 0.0
    %6010 = vmatmul.mubr.f32.gmra.mrb[0].mxu0 %v5868
    %v6011 = vpop.f32.mrb[0].mxu0
    %v6012 = vadd.f32 0.0, %v6011
    %v6013 = vpop.f32.mrb[0].mxu0
    %6014 = vdwg.mxu0
    %v6015 = vadd.s32 %v5809, 16
    %vm6016 = vcmp.eq.s32.totalorder %v5804, %v6015
    %vm6017 = vcmp.eq.s32.totalorder %v5805, %v6015
    %vm6018 = vcmp.eq.s32.totalorder %v5806, %v6015
    %vm6019 = vcmp.eq.s32.totalorder %v5807, %v6015
    %v6020 = vsel %vm6016, 1, 0
    %v6021 = vsel %vm6017, 1, 0
    %v6022 = vsel %vm6018, 1, 0
    %v6023 = vsel %vm6019, 1, 0
    %v6024 = vcvt.s32.f32 %v6020
    %v6025 = vcvt.s32.f32 %v6021
    %v6026 = vcvt.s32.f32 %v6022
    %v6027 = vcvt.s32.f32 %v6023
    %6028 = vmatprep.subr.mxu0 0.0
    %6029 = vmatpush1.msra.mxu0 %v6024
    %6030 = vmatprep.subr.mxu0 0.0
    %6031 = vmatpush1.msra.mxu0 %v6025
    %6032 = vmatprep.subr.mxu0 0.0
    %6033 = vmatpush1.msra.mxu0 %v6026
    %6034 = vmatprep.subr.mxu0 0.0
    %6035 = vmatpush1.msra.mxu0 %v6027
    %6036 = vmatprep.subr.mxu0 0.0
    %6037 = vmatpush1.msra.mxu0 0.0
    %6038 = vmatprep.subr.mxu0 0.0
    %6039 = vmatpush1.msra.mxu0 0.0
    %6040 = vmatprep.subr.mxu0 0.0
    %6041 = vmatpush1.msra.mxu0 0.0
    %6042 = vmatprep.subr.mxu0 0.0
    %6043 = vmatpush1.msra.mxu0 0.0
    %6044 = vmatprep.subr.mxu0 0.0
    %6045 = vmatpush1.msra.mxu0 0.0
    %6046 = vmatprep.subr.mxu0 0.0
    %6047 = vmatpush1.msra.mxu0 0.0
    %6048 = vmatprep.subr.mxu0 0.0
    %6049 = vmatpush1.msra.mxu0 0.0
    %6050 = vmatprep.subr.mxu0 0.0
    %6051 = vmatpush1.msra.mxu0 0.0
    %6052 = vmatprep.subr.mxu0 0.0
    %6053 = vmatpush1.msra.mxu0 0.0
    %6054 = vmatprep.subr.mxu0 0.0
    %6055 = vmatpush1.msra.mxu0 0.0
    %6056 = vmatprep.subr.mxu0 0.0
    %6057 = vmatpush1.msra.mxu0 0.0
    %6058 = vmatprep.subr.mxu0 0.0
    %6059 = vmatpush1.msra.mxu0 0.0
    %6060 = vmatprep.subr.mxu0 0.0
    %6061 = vmatpush1.msra.mxu0 0.0
    %6062 = vmatprep.subr.mxu0 0.0
    %6063 = vmatpush1.msra.mxu0 0.0
    %6064 = vmatprep.subr.mxu0 0.0
    %6065 = vmatpush1.msra.mxu0 0.0
    %6066 = vmatprep.subr.mxu0 0.0
    %6067 = vmatpush1.msra.mxu0 0.0
    %6068 = vmatprep.subr.mxu0 0.0
    %6069 = vmatpush1.msra.mxu0 0.0
    %6070 = vmatprep.subr.mxu0 0.0
    %6071 = vmatpush1.msra.mxu0 0.0
    %6072 = vmatprep.subr.mxu0 0.0
    %6073 = vmatpush1.msra.mxu0 0.0
    %6074 = vmatprep.subr.mxu0 0.0
    %6075 = vmatpush1.msra.mxu0 0.0
    %6076 = vmatprep.subr.mxu0 0.0
    %6077 = vmatpush1.msra.mxu0 0.0
    %6078 = vmatprep.subr.mxu0 0.0
    %6079 = vmatpush1.msra.mxu0 0.0
    %6080 = vmatprep.subr.mxu0 0.0
    %6081 = vmatpush1.msra.mxu0 0.0
    %6082 = vmatprep.subr.mxu0 0.0
    %6083 = vmatpush1.msra.mxu0 0.0
    %6084 = vmatprep.subr.mxu0 0.0
    %6085 = vmatpush1.msra.mxu0 0.0
    %6086 = vmatprep.subr.mxu0 0.0
    %6087 = vmatpush1.msra.mxu0 0.0
    %6088 = vmatprep.subr.mxu0 0.0
    %6089 = vmatpush1.msra.mxu0 0.0
    %6090 = vmatprep.subr.mxu0 0.0
    %6091 = vmatpush1.msra.mxu0 0.0
    %6092 = vmatprep.mubr.f32.mxu0 0.0
    %6093 = vmatmul.mubr.f32.gmra.mrb[0].mxu0 %v5823
    %v6094 = vpop.f32.mrb[0].mxu0
    %v6095 = vadd.f32 0.0, %v6094
    %v6096 = vpop.f32.mrb[0].mxu0
    %6097 = vmatprep.mubr.f32.mxu0 0.0
    %6098 = vmatmul.mubr.f32.gmra.mrb[0].mxu0 %v5826
    %v6099 = vpop.f32.mrb[0].mxu0
    %v6100 = vadd.f32 0.0, %v6099
    %v6101 = vpop.f32.mrb[0].mxu0
    %6102 = vmatprep.mubr.f32.mxu0 0.0
    %6103 = vmatmul.mubr.f32.gmra.mrb[0].mxu0 %v5829
    %v6104 = vpop.f32.mrb[0].mxu0
    %v6105 = vadd.f32 0.0, %v6104
    %v6106 = vpop.f32.mrb[0].mxu0
    %6107 = vmatprep.mubr.f32.mxu0 0.0
    %6108 = vmatmul.mubr.f32.gmra.mrb[0].mxu0 %v5832
    %v6109 = vpop.f32.mrb[0].mxu0
    %v6110 = vadd.f32 0.0, %v6109
    %v6111 = vpop.f32.mrb[0].mxu0
    %6112 = vmatprep.mubr.f32.mxu0 0.0
    %6113 = vmatmul.mubr.f32.gmra.mrb[0].mxu0 %v5835
    %v6114 = vpop.f32.mrb[0].mxu0
    %v6115 = vadd.f32 0.0, %v6114
    %v6116 = vpop.f32.mrb[0].mxu0
    %6117 = vmatprep.mubr.f32.mxu0 0.0
    %6118 = vmatmul.mubr.f32.gmra.mrb[0].mxu0 %v5838
    %v6119 = vpop.f32.mrb[0].mxu0
    %v6120 = vadd.f32 0.0, %v6119
    %v6121 = vpop.f32.mrb[0].mxu0
    %6122 = vmatprep.mubr.f32.mxu0 0.0
    %6123 = vmatmul.mubr.f32.gmra.mrb[0].mxu0 %v5841
    %v6124 = vpop.f32.mrb[0].mxu0
    %v6125 = vadd.f32 0.0, %v6124
    %v6126 = vpop.f32.mrb[0].mxu0
    %6127 = vmatprep.mubr.f32.mxu0 0.0
    %6128 = vmatmul.mubr.f32.gmra.mrb[0].mxu0 %v5844
    %v6129 = vpop.f32.mrb[0].mxu0
    %v6130 = vadd.f32 0.0, %v6129
    %v6131 = vpop.f32.mrb[0].mxu0
    %6132 = vmatprep.mubr.f32.mxu0 0.0
    %6133 = vmatmul.mubr.f32.gmra.mrb[0].mxu0 %v5847
    %v6134 = vpop.f32.mrb[0].mxu0
    %v6135 = vadd.f32 0.0, %v6134
    %v6136 = vpop.f32.mrb[0].mxu0
    %6137 = vmatprep.mubr.f32.mxu0 0.0
    %6138 = vmatmul.mubr.f32.gmra.mrb[0].mxu0 %v5850
    %v6139 = vpop.f32.mrb[0].mxu0
    %v6140 = vadd.f32 0.0, %v6139
    %v6141 = vpop.f32.mrb[0].mxu0
    %6142 = vmatprep.mubr.f32.mxu0 0.0
    %6143 = vmatmul.mubr.f32.gmra.mrb[0].mxu0 %v5853
    %v6144 = vpop.f32.mrb[0].mxu0
    %v6145 = vadd.f32 0.0, %v6144
    %v6146 = vpop.f32.mrb[0].mxu0
    %6147 = vmatprep.mubr.f32.mxu0 0.0
    %6148 = vmatmul.mubr.f32.gmra.mrb[0].mxu0 %v5856
    %v6149 = vpop.f32.mrb[0].mxu0
    %v6150 = vadd.f32 0.0, %v6149
    %v6151 = vpop.f32.mrb[0].mxu0
    %6152 = vmatprep.mubr.f32.mxu0 0.0
    %6153 = vmatmul.mubr.f32.gmra.mrb[0].mxu0 %v5859
    %v6154 = vpop.f32.mrb[0].mxu0
    %v6155 = vadd.f32 0.0, %v6154
    %v6156 = vpop.f32.mrb[0].mxu0
    %6157 = vmatprep.mubr.f32.mxu0 0.0
    %6158 = vmatmul.mubr.f32.gmra.mrb[0].mxu0 %v5862
    %v6159 = vpop.f32.mrb[0].mxu0
    %v6160 = vadd.f32 0.0, %v6159
    %v6161 = vpop.f32.mrb[0].mxu0
    %6162 = vmatprep.mubr.f32.mxu0 0.0
    %6163 = vmatmul.mubr.f32.gmra.mrb[0].mxu0 %v5865
    %v6164 = vpop.f32.mrb[0].mxu0
    %v6165 = vadd.f32 0.0, %v6164
    %v6166 = vpop.f32.mrb[0].mxu0
    %6167 = vmatprep.mubr.f32.mxu0 0.0
    %6168 = vmatmul.mubr.f32.gmra.mrb[0].mxu0 %v5868
    %v6169 = vpop.f32.mrb[0].mxu0
    %v6170 = vadd.f32 0.0, %v6169
    %v6171 = vpop.f32.mrb[0].mxu0
    %6172 = vdwg.mxu0
    %v6173 = vmax.f32 %v5937, 0.0
    %v6174 = vmax.f32 %v5942, 0.0
    %v6175 = vmax.f32 %v5947, 0.0
    %v6176 = vmax.f32 %v5952, 0.0
    %v6177 = vmax.f32 %v5957, 0.0
    %v6178 = vmax.f32 %v5962, 0.0
    %v6179 = vmax.f32 %v5967, 0.0
    %v6180 = vmax.f32 %v5972, 0.0
    %v6181 = vmax.f32 %v5977, 0.0
    %v6182 = vmax.f32 %v5982, 0.0
    %v6183 = vmax.f32 %v5987, 0.0
    %v6184 = vmax.f32 %v5992, 0.0
    %v6185 = vmax.f32 %v5997, 0.0
    %v6186 = vmax.f32 %v6002, 0.0
    %v6187 = vmax.f32 %v6007, 0.0
    %v6188 = vmax.f32 %v6012, 0.0
    %v6189 = vld [vmem:[%s8] sm:$0xf]
    %v6190 = vld [vmem:[%s8 + $0x4] sm:$0xf]
    %v6191 = vld [vmem:[%s8 + $0x8] sm:$0xf]
    %v6192 = vld [vmem:[%s8 + $0xc] sm:$0xf]
    %v6193 = vld [vmem:[%s8 + $0x10] sm:$0xf]
    %v6194 = vld [vmem:[%s8 + $0x14] sm:$0xf]
    %v6195 = vld [vmem:[%s8 + $0x18] sm:$0xf]
    %v6196 = vld [vmem:[%s8 + $0x1c] sm:$0xf]
    %v6197 = vld [vmem:[%s8 + $0x20] sm:$0xf]
    %v6198 = vld [vmem:[%s8 + $0x24] sm:$0xf]
    %v6199 = vld [vmem:[%s8 + $0x28] sm:$0xf]
    %v6200 = vld [vmem:[%s8 + $0x2c] sm:$0xf]
    %v6201 = vld [vmem:[%s8 + $0x30] sm:$0xf]
    %v6202 = vld [vmem:[%s8 + $0x34] sm:$0xf]
    %v6203 = vld [vmem:[%s8 + $0x38] sm:$0xf]
    %v6204 = vld [vmem:[%s8 + $0x3c] sm:$0xf]
    %v6205 = vld [vmem:[%s8 + $0x40] sm:$0xf]
    %v6206 = vld [vmem:[%s8 + $0x44] sm:$0xf]
    %v6207 = vld [vmem:[%s8 + $0x48] sm:$0xf]
    %v6208 = vld [vmem:[%s8 + $0x4c] sm:$0xf]
    %v6209 = vld [vmem:[%s8 + $0x50] sm:$0xf]
    %v6210 = vld [vmem:[%s8 + $0x54] sm:$0xf]
    %v6211 = vld [vmem:[%s8 + $0x58] sm:$0xf]
    %v6212 = vld [vmem:[%s8 + $0x5c] sm:$0xf]
    %v6213 = vld [vmem:[%s8 + $0x60] sm:$0xf]
    %v6214 = vld [vmem:[%s8 + $0x64] sm:$0xf]
    %v6215 = vld [vmem:[%s8 + $0x68] sm:$0xf]
    %v6216 = vld [vmem:[%s8 + $0x6c] sm:$0xf]
    %v6217 = vld [vmem:[%s8 + $0x70] sm:$0xf]
    %v6218 = vld [vmem:[%s8 + $0x74] sm:$0xf]
    %v6219 = vld [vmem:[%s8 + $0x78] sm:$0xf]
    %v6220 = vld [vmem:[%s8 + $0x7c] sm:$0xf]
    %v6221 = vld [vmem:[%s8 + $0x80] sm:$0xf]
    %v6222 = vld [vmem:[%s8 + $0x84] sm:$0xf]
    %v6223 = vld [vmem:[%s8 + $0x88] sm:$0xf]
    %v6224 = vld [vmem:[%s8 + $0x8c] sm:$0xf]
    %v6225 = vld [vmem:[%s8 + $0x90] sm:$0xf]
    %v6226 = vld [vmem:[%s8 + $0x94] sm:$0xf]
    %v6227 = vld [vmem:[%s8 + $0x98] sm:$0xf]
    %v6228 = vld [vmem:[%s8 + $0x9c] sm:$0xf]
    %v6229 = vld [vmem:[%s8 + $0xa0] sm:$0xf]
    %v6230 = vld [vmem:[%s8 + $0xa4] sm:$0xf]
    %v6231 = vld [vmem:[%s8 + $0xa8] sm:$0xf]
    %v6232 = vld [vmem:[%s8 + $0xac] sm:$0xf]
    %v6233 = vld [vmem:[%s8 + $0xb0] sm:$0xf]
    %v6234 = vld [vmem:[%s8 + $0xb4] sm:$0xf]
    %v6235 = vld [vmem:[%s8 + $0xb8] sm:$0xf]
    %v6236 = vld [vmem:[%s8 + $0xbc] sm:$0xf]
    %v6237 = vld [vmem:[%s8 + $0xc0] sm:$0xf]
    %v6238 = vld [vmem:[%s8 + $0xc4] sm:$0xf]
    %v6239 = vld [vmem:[%s8 + $0xc8] sm:$0xf]
    %v6240 = vld [vmem:[%s8 + $0xcc] sm:$0xf]
    %v6241 = vld [vmem:[%s8 + $0xd0] sm:$0xf]
    %v6242 = vld [vmem:[%s8 + $0xd4] sm:$0xf]
    %v6243 = vld [vmem:[%s8 + $0xd8] sm:$0xf]
    %v6244 = vld [vmem:[%s8 + $0xdc] sm:$0xf]
    %v6245 = vld [vmem:[%s8 + $0xe0] sm:$0xf]
    %v6246 = vld [vmem:[%s8 + $0xe4] sm:$0xf]
    %v6247 = vld [vmem:[%s8 + $0xe8] sm:$0xf]
    %v6248 = vld [vmem:[%s8 + $0xec] sm:$0xf]
    %v6249 = vld [vmem:[%s8 + $0xf0] sm:$0xf]
    %v6250 = vld [vmem:[%s8 + $0xf4] sm:$0xf]
    %v6251 = vld [vmem:[%s8 + $0xf8] sm:$0xf]
    %v6252 = vld [vmem:[%s8 + $0xfc] sm:$0xf]
    %v6253 = vld [vmem:[%s8 + $0x100] sm:$0xf]
    %v6254 = vld [vmem:[%s8 + $0x104] sm:$0xf]
    %v6255 = vld [vmem:[%s8 + $0x108] sm:$0xf]
    %v6256 = vld [vmem:[%s8 + $0x10c] sm:$0xf]
    %v6257 = vld [vmem:[%s8 + $0x110] sm:$0xf]
    %v6258 = vld [vmem:[%s8 + $0x114] sm:$0xf]
    %v6259 = vld [vmem:[%s8 + $0x118] sm:$0xf]
    %v6260 = vld [vmem:[%s8 + $0x11c] sm:$0xf]
    %v6261 = vld [vmem:[%s8 + $0x120] sm:$0xf]
    %v6262 = vld [vmem:[%s8 + $0x124] sm:$0xf]
    %v6263 = vld [vmem:[%s8 + $0x128] sm:$0xf]
    %v6264 = vld [vmem:[%s8 + $0x12c] sm:$0xf]
    %v6265 = vld [vmem:[%s8 + $0x130] sm:$0xf]
    %v6266 = vld [vmem:[%s8 + $0x134] sm:$0xf]
    %v6267 = vld [vmem:[%s8 + $0x138] sm:$0xf]
    %v6268 = vld [vmem:[%s8 + $0x13c] sm:$0xf]
    %v6269 = vld [vmem:[%s8 + $0x140] sm:$0xf]
    %v6270 = vld [vmem:[%s8 + $0x144] sm:$0xf]
    %v6271 = vld [vmem:[%s8 + $0x148] sm:$0xf]
    %v6272 = vld [vmem:[%s8 + $0x14c] sm:$0xf]
    %v6273 = vld [vmem:[%s8 + $0x150] sm:$0xf]
    %v6274 = vld [vmem:[%s8 + $0x154] sm:$0xf]
    %v6275 = vld [vmem:[%s8 + $0x158] sm:$0xf]
    %v6276 = vld [vmem:[%s8 + $0x15c] sm:$0xf]
    %v6277 = vld [vmem:[%s8 + $0x160] sm:$0xf]
    %v6278 = vld [vmem:[%s8 + $0x164] sm:$0xf]
    %v6279 = vld [vmem:[%s8 + $0x168] sm:$0xf]
    %v6280 = vld [vmem:[%s8 + $0x16c] sm:$0xf]
    %v6281 = vld [vmem:[%s8 + $0x170] sm:$0xf]
    %v6282 = vld [vmem:[%s8 + $0x174] sm:$0xf]
    %v6283 = vld [vmem:[%s8 + $0x178] sm:$0xf]
    %v6284 = vld [vmem:[%s8 + $0x17c] sm:$0xf]
    %v6285 = vld [vmem:[%s8 + $0x180] sm:$0xf]
    %v6286 = vld [vmem:[%s8 + $0x184] sm:$0xf]
    %v6287 = vld [vmem:[%s8 + $0x188] sm:$0xf]
    %v6288 = vld [vmem:[%s8 + $0x18c] sm:$0xf]
    %v6289 = vld [vmem:[%s8 + $0x190] sm:$0xf]
    %v6290 = vld [vmem:[%s8 + $0x194] sm:$0xf]
    %v6291 = vld [vmem:[%s8 + $0x198] sm:$0xf]
    %v6292 = vld [vmem:[%s8 + $0x19c] sm:$0xf]
    %v6293 = vld [vmem:[%s8 + $0x1a0] sm:$0xf]
    %v6294 = vld [vmem:[%s8 + $0x1a4] sm:$0xf]
    %v6295 = vld [vmem:[%s8 + $0x1a8] sm:$0xf]
    %v6296 = vld [vmem:[%s8 + $0x1ac] sm:$0xf]
    %v6297 = vld [vmem:[%s8 + $0x1b0] sm:$0xf]
    %v6298 = vld [vmem:[%s8 + $0x1b4] sm:$0xf]
    %v6299 = vld [vmem:[%s8 + $0x1b8] sm:$0xf]
    %v6300 = vld [vmem:[%s8 + $0x1bc] sm:$0xf]
    %v6301 = vld [vmem:[%s8 + $0x1c0] sm:$0xf]
    %v6302 = vld [vmem:[%s8 + $0x1c4] sm:$0xf]
    %v6303 = vld [vmem:[%s8 + $0x1c8] sm:$0xf]
    %v6304 = vld [vmem:[%s8 + $0x1cc] sm:$0xf]
    %v6305 = vld [vmem:[%s8 + $0x1d0] sm:$0xf]
    %v6306 = vld [vmem:[%s8 + $0x1d4] sm:$0xf]
    %v6307 = vld [vmem:[%s8 + $0x1d8] sm:$0xf]
    %v6308 = vld [vmem:[%s8 + $0x1dc] sm:$0xf]
    %v6309 = vld [vmem:[%s8 + $0x1e0] sm:$0xf]
    %v6310 = vld [vmem:[%s8 + $0x1e4] sm:$0xf]
    %v6311 = vld [vmem:[%s8 + $0x1e8] sm:$0xf]
    %v6312 = vld [vmem:[%s8 + $0x1ec] sm:$0xf]
    %v6313 = vld [vmem:[%s8 + $0x1f0] sm:$0xf]
    %v6314 = vld [vmem:[%s8 + $0x1f4] sm:$0xf]
    %v6315 = vld [vmem:[%s8 + $0x1f8] sm:$0xf]
    %v6316 = vld [vmem:[%s8 + $0x1fc] sm:$0xf]
    %v6317 = vld [vmem:[%s8 + $0x200] sm:$0xf]
    %v6318 = vld [vmem:[%s8 + $0x204] sm:$0xf]
    %v6319 = vld [vmem:[%s8 + $0x208] sm:$0xf]
    %v6320 = vld [vmem:[%s8 + $0x20c] sm:$0xf]
    %v6321 = vld [vmem:[%s8 + $0x210] sm:$0xf]
    %v6322 = vld [vmem:[%s8 + $0x214] sm:$0xf]
    %v6323 = vld [vmem:[%s8 + $0x218] sm:$0xf]
    %v6324 = vld [vmem:[%s8 + $0x21c] sm:$0xf]
    %v6325 = vld [vmem:[%s8 + $0x220] sm:$0xf]
    %v6326 = vld [vmem:[%s8 + $0x224] sm:$0xf]
    %v6327 = vld [vmem:[%s8 + $0x228] sm:$0xf]
    %v6328 = vld [vmem:[%s8 + $0x22c] sm:$0xf]
    %v6329 = vld [vmem:[%s8 + $0x230] sm:$0xf]
    %v6330 = vld [vmem:[%s8 + $0x234] sm:$0xf]
    %v6331 = vld [vmem:[%s8 + $0x238] sm:$0xf]
    %v6332 = vld [vmem:[%s8 + $0x23c] sm:$0xf]
    %v6333 = vpack.c.bf16 %v6174, %v6173
    %v6334 = vpack.c.bf16 %v6176, %v6175
    %v6335 = vpack.c.bf16 %v6178, %v6177
    %v6336 = vpack.c.bf16 %v6180, %v6179
    %v6337 = vpack.c.bf16 %v6182, %v6181
    %v6338 = vpack.c.bf16 %v6184, %v6183
    %v6339 = vpack.c.bf16 %v6186, %v6185
    %v6340 = vpack.c.bf16 %v6188, %v6187
    %v6485 = vunpack.c.l.b16 %v6189
    %v6486 = vunpack.c.l.b16 %v6190
    %v6487 = vunpack.c.l.b16 %v6191
    %v6488 = vunpack.c.l.b16 %v6192
    %v6489 = vunpack.c.l.b16 %v6193
    %v6490 = vunpack.c.l.b16 %v6194
    %v6491 = vunpack.c.l.b16 %v6195
    %v6492 = vunpack.c.l.b16 %v6196
    %v6493 = vunpack.c.l.b16 %v6197
    %v6494 = vunpack.c.l.b16 %v6198
    %v6495 = vunpack.c.l.b16 %v6199
    %v6496 = vunpack.c.l.b16 %v6200
    %v6497 = vunpack.c.l.b16 %v6201
    %v6498 = vunpack.c.l.b16 %v6202
    %v6499 = vunpack.c.l.b16 %v6203
    %v6500 = vunpack.c.l.b16 %v6204
    %v6501 = vunpack.c.l.b16 %v6205
    %v6502 = vunpack.c.l.b16 %v6206
    %v6503 = vunpack.c.l.b16 %v6207
    %v6504 = vunpack.c.l.b16 %v6208
    %v6505 = vunpack.c.l.b16 %v6209
    %v6506 = vunpack.c.l.b16 %v6210
    %v6507 = vunpack.c.l.b16 %v6211
    %v6508 = vunpack.c.l.b16 %v6212
    %v6509 = vunpack.c.l.b16 %v6213
    %v6510 = vunpack.c.l.b16 %v6214
    %v6511 = vunpack.c.l.b16 %v6215
    %v6512 = vunpack.c.l.b16 %v6216
    %v6513 = vunpack.c.l.b16 %v6217
    %v6514 = vunpack.c.l.b16 %v6218
    %v6515 = vunpack.c.l.b16 %v6219
    %v6516 = vunpack.c.l.b16 %v6220
    %v6517 = vunpack.c.l.b16 %v6221
    %v6518 = vunpack.c.l.b16 %v6222
    %v6519 = vunpack.c.l.b16 %v6223
    %v6520 = vunpack.c.l.b16 %v6224
    %v6521 = vunpack.c.l.b16 %v6225
    %v6522 = vunpack.c.l.b16 %v6226
    %v6523 = vunpack.c.l.b16 %v6227
    %v6524 = vunpack.c.l.b16 %v6228
    %v6525 = vunpack.c.l.b16 %v6229
    %v6526 = vunpack.c.l.b16 %v6230
    %v6527 = vunpack.c.l.b16 %v6231
    %v6528 = vunpack.c.l.b16 %v6232
    %v6529 = vunpack.c.l.b16 %v6233
    %v6530 = vunpack.c.l.b16 %v6234
    %v6531 = vunpack.c.l.b16 %v6235
    %v6532 = vunpack.c.l.b16 %v6236
    %v6533 = vunpack.c.l.b16 %v6237
    %v6534 = vunpack.c.l.b16 %v6238
    %v6535 = vunpack.c.l.b16 %v6239
    %v6536 = vunpack.c.l.b16 %v6240
    %v6537 = vunpack.c.l.b16 %v6241
    %v6538 = vunpack.c.l.b16 %v6242
    %v6539 = vunpack.c.l.b16 %v6243
    %v6540 = vunpack.c.l.b16 %v6244
    %v6541 = vunpack.c.l.b16 %v6245
    %v6542 = vunpack.c.l.b16 %v6246
    %v6543 = vunpack.c.l.b16 %v6247
    %v6544 = vunpack.c.l.b16 %v6248
    %v6545 = vunpack.c.l.b16 %v6249
    %v6546 = vunpack.c.l.b16 %v6250
    %v6547 = vunpack.c.l.b16 %v6251
    %v6548 = vunpack.c.l.b16 %v6252
    %v6549 = vunpack.c.l.b16 %v6253
    %v6550 = vunpack.c.l.b16 %v6254
    %v6551 = vunpack.c.l.b16 %v6255
    %v6552 = vunpack.c.l.b16 %v6256
    %v6553 = vunpack.c.l.b16 %v6257
    %v6554 = vunpack.c.l.b16 %v6258
    %v6555 = vunpack.c.l.b16 %v6259
    %v6556 = vunpack.c.l.b16 %v6260
    %v6557 = vunpack.c.l.b16 %v6261
    %v6558 = vunpack.c.l.b16 %v6262
    %v6559 = vunpack.c.l.b16 %v6263
    %v6560 = vunpack.c.l.b16 %v6264
    %v6561 = vunpack.c.l.b16 %v6265
    %v6562 = vunpack.c.l.b16 %v6266
    %v6563 = vunpack.c.l.b16 %v6267
    %v6564 = vunpack.c.l.b16 %v6268
    %v6565 = vunpack.c.l.b16 %v6269
    %v6566 = vunpack.c.l.b16 %v6270
    %v6567 = vunpack.c.l.b16 %v6271
    %v6568 = vunpack.c.l.b16 %v6272
    %v6569 = vunpack.c.l.b16 %v6273
    %v6570 = vunpack.c.l.b16 %v6274
    %v6571 = vunpack.c.l.b16 %v6275
    %v6572 = vunpack.c.l.b16 %v6276
    %v6573 = vunpack.c.l.b16 %v6277
    %v6574 = vunpack.c.l.b16 %v6278
    %v6575 = vunpack.c.l.b16 %v6279
    %v6576 = vunpack.c.l.b16 %v6280
    %v6577 = vunpack.c.l.b16 %v6281
    %v6578 = vunpack.c.l.b16 %v6282
    %v6579 = vunpack.c.l.b16 %v6283
    %v6580 = vunpack.c.l.b16 %v6284
    %v6581 = vunpack.c.l.b16 %v6285
    %v6582 = vunpack.c.l.b16 %v6286
    %v6583 = vunpack.c.l.b16 %v6287
    %v6584 = vunpack.c.l.b16 %v6288
    %v6585 = vunpack.c.l.b16 %v6289
    %v6586 = vunpack.c.l.b16 %v6290
    %v6587 = vunpack.c.l.b16 %v6291
    %v6588 = vunpack.c.l.b16 %v6292
    %v6589 = vunpack.c.l.b16 %v6293
    %v6590 = vunpack.c.l.b16 %v6294
    %v6591 = vunpack.c.l.b16 %v6295
    %v6592 = vunpack.c.l.b16 %v6296
    %v6593 = vunpack.c.l.b16 %v6297
    %v6594 = vunpack.c.l.b16 %v6298
    %v6595 = vunpack.c.l.b16 %v6299
    %v6596 = vunpack.c.l.b16 %v6300
    %v6597 = vunpack.c.l.b16 %v6301
    %v6598 = vunpack.c.l.b16 %v6302
    %v6599 = vunpack.c.l.b16 %v6303
    %v6600 = vunpack.c.l.b16 %v6304
    %v6601 = vunpack.c.l.b16 %v6305
    %v6602 = vunpack.c.l.b16 %v6306
    %v6603 = vunpack.c.l.b16 %v6307
    %v6604 = vunpack.c.l.b16 %v6308
    %v6605 = vunpack.c.l.b16 %v6309
    %v6606 = vunpack.c.l.b16 %v6310
    %v6607 = vunpack.c.l.b16 %v6311
    %v6608 = vunpack.c.l.b16 %v6312
    %v6609 = vunpack.c.l.b16 %v6313
    %v6610 = vunpack.c.l.b16 %v6314
    %v6611 = vunpack.c.l.b16 %v6315
    %v6612 = vunpack.c.l.b16 %v6316
    %v6613 = vunpack.c.l.b16 %v6317
    %v6614 = vunpack.c.l.b16 %v6318
    %v6615 = vunpack.c.l.b16 %v6319
    %v6616 = vunpack.c.l.b16 %v6320
    %v6617 = vunpack.c.l.b16 %v6321
    %v6618 = vunpack.c.l.b16 %v6322
    %v6619 = vunpack.c.l.b16 %v6323
    %v6620 = vunpack.c.l.b16 %v6324
    %v6621 = vunpack.c.l.b16 %v6325
    %v6622 = vunpack.c.l.b16 %v6326
    %v6623 = vunpack.c.l.b16 %v6327
    %v6624 = vunpack.c.l.b16 %v6328
    %v6625 = vunpack.c.l.b16 %v6329
    %v6626 = vunpack.c.l.b16 %v6330
    %v6627 = vunpack.c.l.b16 %v6331
    %v6628 = vunpack.c.l.b16 %v6332
    %v6629 = vpack.c.b16 %v6486, %v6485
    %v6630 = vpack.c.b16 %v6488, %v6487
    %v6631 = vpack.c.b16 %v6490, %v6489
    %v6632 = vpack.c.b16 %v6492, %v6491
    %v6633 = vpack.c.b16 %v6494, %v6493
    %v6634 = vpack.c.b16 %v6496, %v6495
    %v6635 = vpack.c.b16 %v6498, %v6497
    %v6636 = vpack.c.b16 %v6500, %v6499
    %v6637 = vpack.c.b16 %v6502, %v6501
    %v6638 = vpack.c.b16 %v6504, %v6503
    %v6639 = vpack.c.b16 %v6506, %v6505
    %v6640 = vpack.c.b16 %v6508, %v6507
    %v6641 = vpack.c.b16 %v6510, %v6509
    %v6642 = vpack.c.b16 %v6512, %v6511
    %v6643 = vpack.c.b16 %v6514, %v6513
    %v6644 = vpack.c.b16 %v6516, %v6515
    %v6645 = vpack.c.b16 %v6518, %v6517
    %v6646 = vpack.c.b16 %v6520, %v6519
    %v6647 = vpack.c.b16 %v6522, %v6521
    %v6648 = vpack.c.b16 %v6524, %v6523
    %v6649 = vpack.c.b16 %v6526, %v6525
    %v6650 = vpack.c.b16 %v6528, %v6527
    %v6651 = vpack.c.b16 %v6530, %v6529
    %v6652 = vpack.c.b16 %v6532, %v6531
    %v6653 = vpack.c.b16 %v6534, %v6533
    %v6654 = vpack.c.b16 %v6536, %v6535
    %v6655 = vpack.c.b16 %v6538, %v6537
    %v6656 = vpack.c.b16 %v6540, %v6539
    %v6657 = vpack.c.b16 %v6542, %v6541
    %v6658 = vpack.c.b16 %v6544, %v6543
    %v6659 = vpack.c.b16 %v6546, %v6545
    %v6660 = vpack.c.b16 %v6548, %v6547
    %v6661 = vpack.c.b16 %v6550, %v6549
    %v6662 = vpack.c.b16 %v6552, %v6551
    %v6663 = vpack.c.b16 %v6554, %v6553
    %v6664 = vpack.c.b16 %v6556, %v6555
    %v6665 = vpack.c.b16 %v6558, %v6557
    %v6666 = vpack.c.b16 %v6560, %v6559
    %v6667 = vpack.c.b16 %v6562, %v6561
    %v6668 = vpack.c.b16 %v6564, %v6563
    %v6669 = vpack.c.b16 %v6566, %v6565
    %v6670 = vpack.c.b16 %v6568, %v6567
    %v6671 = vpack.c.b16 %v6570, %v6569
    %v6672 = vpack.c.b16 %v6572, %v6571
    %v6673 = vpack.c.b16 %v6574, %v6573
    %v6674 = vpack.c.b16 %v6576, %v6575
    %v6675 = vpack.c.b16 %v6578, %v6577
    %v6676 = vpack.c.b16 %v6580, %v6579
    %v6677 = vpack.c.b16 %v6582, %v6581
    %v6678 = vpack.c.b16 %v6584, %v6583
    %v6679 = vpack.c.b16 %v6586, %v6585
    %v6680 = vpack.c.b16 %v6588, %v6587
    %v6681 = vpack.c.b16 %v6590, %v6589
    %v6682 = vpack.c.b16 %v6592, %v6591
    %v6683 = vpack.c.b16 %v6594, %v6593
    %v6684 = vpack.c.b16 %v6596, %v6595
    %v6685 = vpack.c.b16 %v6598, %v6597
    %v6686 = vpack.c.b16 %v6600, %v6599
    %v6687 = vpack.c.b16 %v6602, %v6601
    %v6688 = vpack.c.b16 %v6604, %v6603
    %v6689 = vpack.c.b16 %v6606, %v6605
    %v6690 = vpack.c.b16 %v6608, %v6607
    %v6691 = vpack.c.b16 %v6610, %v6609
    %v6692 = vpack.c.b16 %v6612, %v6611
    %v6693 = vpack.c.b16 %v6614, %v6613
    %v6694 = vpack.c.b16 %v6616, %v6615
    %v6695 = vpack.c.b16 %v6618, %v6617
    %v6696 = vpack.c.b16 %v6620, %v6619
    %v6697 = vpack.c.b16 %v6622, %v6621
    %v6698 = vpack.c.b16 %v6624, %v6623
    %v6699 = vpack.c.b16 %v6626, %v6625
    %v6700 = vpack.c.b16 %v6628, %v6627
    %6773 = vmatprep.subr.bf16.mxu0 0
    %6774 = vmatpush1.bf16.msra.mxu0 %v6333
    %6775 = vmatprep.subr.bf16.mxu0 0
    %6776 = vmatpush1.bf16.msra.mxu0 %v6334
    %6777 = vmatprep.subr.bf16.mxu0 0
    %6778 = vmatpush1.bf16.msra.mxu0 %v6335
    %6779 = vmatprep.subr.bf16.mxu0 0
    %6780 = vmatpush1.bf16.msra.mxu0 %v6336
    %6781 = vmatprep.subr.bf16.mxu0 0
    %6782 = vmatpush1.bf16.msra.mxu0 %v6337
    %6783 = vmatprep.subr.bf16.mxu0 0
    %6784 = vmatpush1.bf16.msra.mxu0 %v6338
    %6785 = vmatprep.subr.bf16.mxu0 0
    %6786 = vmatpush1.bf16.msra.mxu0 %v6339
    %6787 = vmatprep.subr.bf16.mxu0 0
    %6788 = vmatpush1.bf16.msra.mxu0 %v6340
    %6789 = vmatprep.subr.bf16.mxu0 0
    %6790 = vmatpush1.bf16.msra.mxu0 0
    %6791 = vmatprep.subr.bf16.mxu0 0
    %6792 = vmatpush1.bf16.msra.mxu0 0
    %6793 = vmatprep.subr.bf16.mxu0 0
    %6794 = vmatpush1.bf16.msra.mxu0 0
    %6795 = vmatprep.subr.bf16.mxu0 0
    %6796 = vmatpush1.bf16.msra.mxu0 0
    %6797 = vmatprep.subr.bf16.mxu0 0
    %6798 = vmatpush1.bf16.msra.mxu0 0
    %6799 = vmatprep.subr.bf16.mxu0 0
    %6800 = vmatpush1.bf16.msra.mxu0 0
    %6801 = vmatprep.subr.bf16.mxu0 0
    %6802 = vmatpush1.bf16.msra.mxu0 0
    %6803 = vmatprep.subr.bf16.mxu0 0
    %6804 = vmatpush1.bf16.msra.mxu0 0
    %6805 = vmatprep.mubr.bf16.mxu0 0
    %6806 = vmatmul.mubr.bf16.gmra.mrb[0].mxu0 %v6629
    %v6807 = vpop.f32.mrb[0].mxu0
    %v6808 = vadd.f32 0.0, %v6807
    %v6809 = vpop.f32.mrb[0].mxu0
    %v6810 = vpop.f32.mrb[0].mxu0
    %v6811 = vadd.f32 0.0, %v6810
    %v6812 = vpop.f32.mrb[0].mxu0
    %6813 = vmatprep.mubr.bf16.mxu0 0
    %6814 = vmatmul.mubr.bf16.gmra.mrb[0].mxu0 %v6630
    %v6815 = vpop.f32.mrb[0].mxu0
    %v6816 = vadd.f32 0.0, %v6815
    %v6817 = vpop.f32.mrb[0].mxu0
    %v6818 = vpop.f32.mrb[0].mxu0
    %v6819 = vadd.f32 0.0, %v6818
    %v6820 = vpop.f32.mrb[0].mxu0
    %6821 = vmatprep.mubr.bf16.mxu0 0
    %6822 = vmatmul.mubr.bf16.gmra.mrb[0].mxu0 %v6631
    %v6823 = vpop.f32.mrb[0].mxu0
    %v6824 = vadd.f32 0.0, %v6823
    %v6825 = vpop.f32.mrb[0].mxu0
    %v6826 = vpop.f32.mrb[0].mxu0
    %v6827 = vadd.f32 0.0, %v6826
    %v6828 = vpop.f32.mrb[0].mxu0
    %6829 = vmatprep.mubr.bf16.mxu0 0
    %6830 = vmatmul.mubr.bf16.gmra.mrb[0].mxu0 %v6632
    %v6831 = vpop.f32.mrb[0].mxu0
    %v6832 = vadd.f32 0.0, %v6831
    %v6833 = vpop.f32.mrb[0].mxu0
    %v6834 = vpop.f32.mrb[0].mxu0
    %v6835 = vadd.f32 0.0, %v6834
    %v6836 = vpop.f32.mrb[0].mxu0
    %6837 = vmatprep.mubr.bf16.mxu0 0
    %6838 = vmatmul.mubr.bf16.gmra.mrb[0].mxu0 %v6633
    %v6839 = vpop.f32.mrb[0].mxu0
    %v6840 = vadd.f32 0.0, %v6839
    %v6841 = vpop.f32.mrb[0].mxu0
    %v6842 = vpop.f32.mrb[0].mxu0
    %v6843 = vadd.f32 0.0, %v6842
    %v6844 = vpop.f32.mrb[0].mxu0
    %6845 = vmatprep.mubr.bf16.mxu0 0
    %6846 = vmatmul.mubr.bf16.gmra.mrb[0].mxu0 %v6634
    %v6847 = vpop.f32.mrb[0].mxu0
    %v6848 = vadd.f32 0.0, %v6847
    %v6849 = vpop.f32.mrb[0].mxu0
    %v6850 = vpop.f32.mrb[0].mxu0
    %v6851 = vadd.f32 0.0, %v6850
    %v6852 = vpop.f32.mrb[0].mxu0
    %6853 = vmatprep.mubr.bf16.mxu0 0
    %6854 = vmatmul.mubr.bf16.gmra.mrb[0].mxu0 %v6635
    %v6855 = vpop.f32.mrb[0].mxu0
    %v6856 = vadd.f32 0.0, %v6855
    %v6857 = vpop.f32.mrb[0].mxu0
    %v6858 = vpop.f32.mrb[0].mxu0
    %v6859 = vadd.f32 0.0, %v6858
    %v6860 = vpop.f32.mrb[0].mxu0
    %6861 = vmatprep.mubr.bf16.mxu0 0
    %6862 = vmatmul.mubr.bf16.gmra.mrb[0].mxu0 %v6636
    %v6863 = vpop.f32.mrb[0].mxu0
    %v6864 = vadd.f32 0.0, %v6863
    %v6865 = vpop.f32.mrb[0].mxu0
    %v6866 = vpop.f32.mrb[0].mxu0
    %v6867 = vadd.f32 0.0, %v6866
    %v6868 = vpop.f32.mrb[0].mxu0
    %6869 = vmatprep.mubr.bf16.mxu0 0
    %6870 = vmatmul.mubr.bf16.gmra.mrb[0].mxu0 %v6637
    %v6871 = vpop.f32.mrb[0].mxu0
    %v6872 = vadd.f32 0.0, %v6871
    %v6873 = vpop.f32.mrb[0].mxu0
    %v6874 = vpop.f32.mrb[0].mxu0
    %v6875 = vadd.f32 0.0, %v6874
    %v6876 = vpop.f32.mrb[0].mxu0
    %6877 = vmatprep.mubr.bf16.mxu0 0
    %6878 = vmatmul.mubr.bf16.gmra.mrb[0].mxu0 %v6638
    %v6879 = vpop.f32.mrb[0].mxu0
    %v6880 = vadd.f32 0.0, %v6879
    %v6881 = vpop.f32.mrb[0].mxu0
    %v6882 = vpop.f32.mrb[0].mxu0
    %v6883 = vadd.f32 0.0, %v6882
    %v6884 = vpop.f32.mrb[0].mxu0
    %6885 = vmatprep.mubr.bf16.mxu0 0
    %6886 = vmatmul.mubr.bf16.gmra.mrb[0].mxu0 %v6639
    %v6887 = vpop.f32.mrb[0].mxu0
    %v6888 = vadd.f32 0.0, %v6887
    %v6889 = vpop.f32.mrb[0].mxu0
    %v6890 = vpop.f32.mrb[0].mxu0
    %v6891 = vadd.f32 0.0, %v6890
    %v6892 = vpop.f32.mrb[0].mxu0
    %6893 = vmatprep.mubr.bf16.mxu0 0
    %6894 = vmatmul.mubr.bf16.gmra.mrb[0].mxu0 %v6640
    %v6895 = vpop.f32.mrb[0].mxu0
    %v6896 = vadd.f32 0.0, %v6895
    %v6897 = vpop.f32.mrb[0].mxu0
    %v6898 = vpop.f32.mrb[0].mxu0
    %v6899 = vadd.f32 0.0, %v6898
    %v6900 = vpop.f32.mrb[0].mxu0
    %6901 = vmatprep.mubr.bf16.mxu0 0
    %6902 = vmatmul.mubr.bf16.gmra.mrb[0].mxu0 %v6641
    %v6903 = vpop.f32.mrb[0].mxu0
    %v6904 = vadd.f32 0.0, %v6903
    %v6905 = vpop.f32.mrb[0].mxu0
    %v6906 = vpop.f32.mrb[0].mxu0
    %v6907 = vadd.f32 0.0, %v6906
    %v6908 = vpop.f32.mrb[0].mxu0
    %6909 = vmatprep.mubr.bf16.mxu0 0
    %6910 = vmatmul.mubr.bf16.gmra.mrb[0].mxu0 %v6642
    %v6911 = vpop.f32.mrb[0].mxu0
    %v6912 = vadd.f32 0.0, %v6911
    %v6913 = vpop.f32.mrb[0].mxu0
    %v6914 = vpop.f32.mrb[0].mxu0
    %v6915 = vadd.f32 0.0, %v6914
    %v6916 = vpop.f32.mrb[0].mxu0
    %6917 = vmatprep.mubr.bf16.mxu0 0
    %6918 = vmatmul.mubr.bf16.gmra.mrb[0].mxu0 %v6643
    %v6919 = vpop.f32.mrb[0].mxu0
    %v6920 = vadd.f32 0.0, %v6919
    %v6921 = vpop.f32.mrb[0].mxu0
    %v6922 = vpop.f32.mrb[0].mxu0
    %v6923 = vadd.f32 0.0, %v6922
    %v6924 = vpop.f32.mrb[0].mxu0
    %6925 = vmatprep.mubr.bf16.mxu0 0
    %6926 = vmatmul.mubr.bf16.gmra.mrb[0].mxu0 %v6644
    %v6927 = vpop.f32.mrb[0].mxu0
    %v6928 = vadd.f32 0.0, %v6927
    %v6929 = vpop.f32.mrb[0].mxu0
    %v6930 = vpop.f32.mrb[0].mxu0
    %v6931 = vadd.f32 0.0, %v6930
    %v6932 = vpop.f32.mrb[0].mxu0
    %6933 = vmatprep.mubr.bf16.mxu0 0
    %6934 = vmatmul.mubr.bf16.gmra.mrb[0].mxu0 %v6645
    %v6935 = vpop.f32.mrb[0].mxu0
    %v6936 = vadd.f32 0.0, %v6935
    %v6937 = vpop.f32.mrb[0].mxu0
    %v6938 = vpop.f32.mrb[0].mxu0
    %v6939 = vadd.f32 0.0, %v6938
    %v6940 = vpop.f32.mrb[0].mxu0
    %6941 = vmatprep.mubr.bf16.mxu0 0
    %6942 = vmatmul.mubr.bf16.gmra.mrb[0].mxu0 %v6646
    %v6943 = vpop.f32.mrb[0].mxu0
    %v6944 = vadd.f32 0.0, %v6943
    %v6945 = vpop.f32.mrb[0].mxu0
    %v6946 = vpop.f32.mrb[0].mxu0
    %v6947 = vadd.f32 0.0, %v6946
    %v6948 = vpop.f32.mrb[0].mxu0
    %6949 = vmatprep.mubr.bf16.mxu0 0
    %6950 = vmatmul.mubr.bf16.gmra.mrb[0].mxu0 %v6647
    %v6951 = vpop.f32.mrb[0].mxu0
    %v6952 = vadd.f32 0.0, %v6951
    %v6953 = vpop.f32.mrb[0].mxu0
    %v6954 = vpop.f32.mrb[0].mxu0
    %v6955 = vadd.f32 0.0, %v6954
    %v6956 = vpop.f32.mrb[0].mxu0
    %6957 = vmatprep.mubr.bf16.mxu0 0
    %6958 = vmatmul.mubr.bf16.gmra.mrb[0].mxu0 %v6648
    %v6959 = vpop.f32.mrb[0].mxu0
    %v6960 = vadd.f32 0.0, %v6959
    %v6961 = vpop.f32.mrb[0].mxu0
    %v6962 = vpop.f32.mrb[0].mxu0
    %v6963 = vadd.f32 0.0, %v6962
    %v6964 = vpop.f32.mrb[0].mxu0
    %6965 = vmatprep.mubr.bf16.mxu0 0
    %6966 = vmatmul.mubr.bf16.gmra.mrb[0].mxu0 %v6649
    %v6967 = vpop.f32.mrb[0].mxu0
    %v6968 = vadd.f32 0.0, %v6967
    %v6969 = vpop.f32.mrb[0].mxu0
    %v6970 = vpop.f32.mrb[0].mxu0
    %v6971 = vadd.f32 0.0, %v6970
    %v6972 = vpop.f32.mrb[0].mxu0
    %6973 = vmatprep.mubr.bf16.mxu0 0
    %6974 = vmatmul.mubr.bf16.gmra.mrb[0].mxu0 %v6650
    %v6975 = vpop.f32.mrb[0].mxu0
    %v6976 = vadd.f32 0.0, %v6975
    %v6977 = vpop.f32.mrb[0].mxu0
    %v6978 = vpop.f32.mrb[0].mxu0
    %v6979 = vadd.f32 0.0, %v6978
    %v6980 = vpop.f32.mrb[0].mxu0
    %6981 = vmatprep.mubr.bf16.mxu0 0
    %6982 = vmatmul.mubr.bf16.gmra.mrb[0].mxu0 %v6651
    %v6983 = vpop.f32.mrb[0].mxu0
    %v6984 = vadd.f32 0.0, %v6983
    %v6985 = vpop.f32.mrb[0].mxu0
    %v6986 = vpop.f32.mrb[0].mxu0
    %v6987 = vadd.f32 0.0, %v6986
    %v6988 = vpop.f32.mrb[0].mxu0
    %6989 = vmatprep.mubr.bf16.mxu0 0
    %6990 = vmatmul.mubr.bf16.gmra.mrb[0].mxu0 %v6652
    %v6991 = vpop.f32.mrb[0].mxu0
    %v6992 = vadd.f32 0.0, %v6991
    %v6993 = vpop.f32.mrb[0].mxu0
    %v6994 = vpop.f32.mrb[0].mxu0
    %v6995 = vadd.f32 0.0, %v6994
    %v6996 = vpop.f32.mrb[0].mxu0
    %6997 = vmatprep.mubr.bf16.mxu0 0
    %6998 = vmatmul.mubr.bf16.gmra.mrb[0].mxu0 %v6653
    %v6999 = vpop.f32.mrb[0].mxu0
    %v7000 = vadd.f32 0.0, %v6999
    %v7001 = vpop.f32.mrb[0].mxu0
    %v7002 = vpop.f32.mrb[0].mxu0
    %v7003 = vadd.f32 0.0, %v7002
    %v7004 = vpop.f32.mrb[0].mxu0
    %7005 = vmatprep.mubr.bf16.mxu0 0
    %7006 = vmatmul.mubr.bf16.gmra.mrb[0].mxu0 %v6654
    %v7007 = vpop.f32.mrb[0].mxu0
    %v7008 = vadd.f32 0.0, %v7007
    %v7009 = vpop.f32.mrb[0].mxu0
    %v7010 = vpop.f32.mrb[0].mxu0
    %v7011 = vadd.f32 0.0, %v7010
    %v7012 = vpop.f32.mrb[0].mxu0
    %7013 = vmatprep.mubr.bf16.mxu0 0
    %7014 = vmatmul.mubr.bf16.gmra.mrb[0].mxu0 %v6655
    %v7015 = vpop.f32.mrb[0].mxu0
    %v7016 = vadd.f32 0.0, %v7015
    %v7017 = vpop.f32.mrb[0].mxu0
    %v7018 = vpop.f32.mrb[0].mxu0
    %v7019 = vadd.f32 0.0, %v7018
    %v7020 = vpop.f32.mrb[0].mxu0
    %7021 = vmatprep.mubr.bf16.mxu0 0
    %7022 = vmatmul.mubr.bf16.gmra.mrb[0].mxu0 %v6656
    %v7023 = vpop.f32.mrb[0].mxu0
    %v7024 = vadd.f32 0.0, %v7023
    %v7025 = vpop.f32.mrb[0].mxu0
    %v7026 = vpop.f32.mrb[0].mxu0
    %v7027 = vadd.f32 0.0, %v7026
    %v7028 = vpop.f32.mrb[0].mxu0
    %7029 = vmatprep.mubr.bf16.mxu0 0
    %7030 = vmatmul.mubr.bf16.gmra.mrb[0].mxu0 %v6657
    %v7031 = vpop.f32.mrb[0].mxu0
    %v7032 = vadd.f32 0.0, %v7031
    %v7033 = vpop.f32.mrb[0].mxu0
    %v7034 = vpop.f32.mrb[0].mxu0
    %v7035 = vadd.f32 0.0, %v7034
    %v7036 = vpop.f32.mrb[0].mxu0
    %7037 = vmatprep.mubr.bf16.mxu0 0
    %7038 = vmatmul.mubr.bf16.gmra.mrb[0].mxu0 %v6658
    %v7039 = vpop.f32.mrb[0].mxu0
    %v7040 = vadd.f32 0.0, %v7039
    %v7041 = vpop.f32.mrb[0].mxu0
    %v7042 = vpop.f32.mrb[0].mxu0
    %v7043 = vadd.f32 0.0, %v7042
    %v7044 = vpop.f32.mrb[0].mxu0
    %7045 = vmatprep.mubr.bf16.mxu0 0
    %7046 = vmatmul.mubr.bf16.gmra.mrb[0].mxu0 %v6659
    %v7047 = vpop.f32.mrb[0].mxu0
    %v7048 = vadd.f32 0.0, %v7047
    %v7049 = vpop.f32.mrb[0].mxu0
    %v7050 = vpop.f32.mrb[0].mxu0
    %v7051 = vadd.f32 0.0, %v7050
    %v7052 = vpop.f32.mrb[0].mxu0
    %7053 = vmatprep.mubr.bf16.mxu0 0
    %7054 = vmatmul.mubr.bf16.gmra.mrb[0].mxu0 %v6660
    %v7055 = vpop.f32.mrb[0].mxu0
    %v7056 = vadd.f32 0.0, %v7055
    %v7057 = vpop.f32.mrb[0].mxu0
    %v7058 = vpop.f32.mrb[0].mxu0
    %v7059 = vadd.f32 0.0, %v7058
    %v7060 = vpop.f32.mrb[0].mxu0
    %7061 = vmatprep.mubr.bf16.mxu0 0
    %7062 = vmatmul.mubr.bf16.gmra.mrb[0].mxu0 %v6661
    %v7063 = vpop.f32.mrb[0].mxu0
    %v7064 = vadd.f32 0.0, %v7063
    %v7065 = vpop.f32.mrb[0].mxu0
    %v7066 = vpop.f32.mrb[0].mxu0
    %v7067 = vadd.f32 0.0, %v7066
    %v7068 = vpop.f32.mrb[0].mxu0
    %7069 = vmatprep.mubr.bf16.mxu0 0
    %7070 = vmatmul.mubr.bf16.gmra.mrb[0].mxu0 %v6662
    %v7071 = vpop.f32.mrb[0].mxu0
    %v7072 = vadd.f32 0.0, %v7071
    %v7073 = vpop.f32.mrb[0].mxu0
    %v7074 = vpop.f32.mrb[0].mxu0
    %v7075 = vadd.f32 0.0, %v7074
    %v7076 = vpop.f32.mrb[0].mxu0
    %7077 = vmatprep.mubr.bf16.mxu0 0
    %7078 = vmatmul.mubr.bf16.gmra.mrb[0].mxu0 %v6663
    %v7079 = vpop.f32.mrb[0].mxu0
    %v7080 = vadd.f32 0.0, %v7079
    %v7081 = vpop.f32.mrb[0].mxu0
    %v7082 = vpop.f32.mrb[0].mxu0
    %v7083 = vadd.f32 0.0, %v7082
    %v7084 = vpop.f32.mrb[0].mxu0
    %7085 = vmatprep.mubr.bf16.mxu0 0
    %7086 = vmatmul.mubr.bf16.gmra.mrb[0].mxu0 %v6664
    %v7087 = vpop.f32.mrb[0].mxu0
    %v7088 = vadd.f32 0.0, %v7087
    %v7089 = vpop.f32.mrb[0].mxu0
    %v7090 = vpop.f32.mrb[0].mxu0
    %v7091 = vadd.f32 0.0, %v7090
    %v7092 = vpop.f32.mrb[0].mxu0
    %7093 = vmatprep.mubr.bf16.mxu0 0
    %7094 = vmatmul.mubr.bf16.gmra.mrb[0].mxu0 %v6665
    %v7095 = vpop.f32.mrb[0].mxu0
    %v7096 = vadd.f32 0.0, %v7095
    %v7097 = vpop.f32.mrb[0].mxu0
    %v7098 = vpop.f32.mrb[0].mxu0
    %v7099 = vadd.f32 0.0, %v7098
    %v7100 = vpop.f32.mrb[0].mxu0
    %7101 = vmatprep.mubr.bf16.mxu0 0
    %7102 = vmatmul.mubr.bf16.gmra.mrb[0].mxu0 %v6666
    %v7103 = vpop.f32.mrb[0].mxu0
    %v7104 = vadd.f32 0.0, %v7103
    %v7105 = vpop.f32.mrb[0].mxu0
    %v7106 = vpop.f32.mrb[0].mxu0
    %v7107 = vadd.f32 0.0, %v7106
    %v7108 = vpop.f32.mrb[0].mxu0
    %7109 = vmatprep.mubr.bf16.mxu0 0
    %7110 = vmatmul.mubr.bf16.gmra.mrb[0].mxu0 %v6667
    %v7111 = vpop.f32.mrb[0].mxu0
    %v7112 = vadd.f32 0.0, %v7111
    %v7113 = vpop.f32.mrb[0].mxu0
    %v7114 = vpop.f32.mrb[0].mxu0
    %v7115 = vadd.f32 0.0, %v7114
    %v7116 = vpop.f32.mrb[0].mxu0
    %7117 = vmatprep.mubr.bf16.mxu0 0
    %7118 = vmatmul.mubr.bf16.gmra.mrb[0].mxu0 %v6668
    %v7119 = vpop.f32.mrb[0].mxu0
    %v7120 = vadd.f32 0.0, %v7119
    %v7121 = vpop.f32.mrb[0].mxu0
    %v7122 = vpop.f32.mrb[0].mxu0
    %v7123 = vadd.f32 0.0, %v7122
    %v7124 = vpop.f32.mrb[0].mxu0
    %7125 = vmatprep.mubr.bf16.mxu0 0
    %7126 = vmatmul.mubr.bf16.gmra.mrb[0].mxu0 %v6669
    %v7127 = vpop.f32.mrb[0].mxu0
    %v7128 = vadd.f32 0.0, %v7127
    %v7129 = vpop.f32.mrb[0].mxu0
    %v7130 = vpop.f32.mrb[0].mxu0
    %v7131 = vadd.f32 0.0, %v7130
    %v7132 = vpop.f32.mrb[0].mxu0
    %7133 = vmatprep.mubr.bf16.mxu0 0
    %7134 = vmatmul.mubr.bf16.gmra.mrb[0].mxu0 %v6670
    %v7135 = vpop.f32.mrb[0].mxu0
    %v7136 = vadd.f32 0.0, %v7135
    %v7137 = vpop.f32.mrb[0].mxu0
    %v7138 = vpop.f32.mrb[0].mxu0
    %v7139 = vadd.f32 0.0, %v7138
    %v7140 = vpop.f32.mrb[0].mxu0
    %7141 = vmatprep.mubr.bf16.mxu0 0
    %7142 = vmatmul.mubr.bf16.gmra.mrb[0].mxu0 %v6671
    %v7143 = vpop.f32.mrb[0].mxu0
    %v7144 = vadd.f32 0.0, %v7143
    %v7145 = vpop.f32.mrb[0].mxu0
    %v7146 = vpop.f32.mrb[0].mxu0
    %v7147 = vadd.f32 0.0, %v7146
    %v7148 = vpop.f32.mrb[0].mxu0
    %7149 = vmatprep.mubr.bf16.mxu0 0
    %7150 = vmatmul.mubr.bf16.gmra.mrb[0].mxu0 %v6672
    %v7151 = vpop.f32.mrb[0].mxu0
    %v7152 = vadd.f32 0.0, %v7151
    %v7153 = vpop.f32.mrb[0].mxu0
    %v7154 = vpop.f32.mrb[0].mxu0
    %v7155 = vadd.f32 0.0, %v7154
    %v7156 = vpop.f32.mrb[0].mxu0
    %7157 = vmatprep.mubr.bf16.mxu0 0
    %7158 = vmatmul.mubr.bf16.gmra.mrb[0].mxu0 %v6673
    %v7159 = vpop.f32.mrb[0].mxu0
    %v7160 = vadd.f32 0.0, %v7159
    %v7161 = vpop.f32.mrb[0].mxu0
    %v7162 = vpop.f32.mrb[0].mxu0
    %v7163 = vadd.f32 0.0, %v7162
    %v7164 = vpop.f32.mrb[0].mxu0
    %7165 = vmatprep.mubr.bf16.mxu0 0
    %7166 = vmatmul.mubr.bf16.gmra.mrb[0].mxu0 %v6674
    %v7167 = vpop.f32.mrb[0].mxu0
    %v7168 = vadd.f32 0.0, %v7167
    %v7169 = vpop.f32.mrb[0].mxu0
    %v7170 = vpop.f32.mrb[0].mxu0
    %v7171 = vadd.f32 0.0, %v7170
    %v7172 = vpop.f32.mrb[0].mxu0
    %7173 = vmatprep.mubr.bf16.mxu0 0
    %7174 = vmatmul.mubr.bf16.gmra.mrb[0].mxu0 %v6675
    %v7175 = vpop.f32.mrb[0].mxu0
    %v7176 = vadd.f32 0.0, %v7175
    %v7177 = vpop.f32.mrb[0].mxu0
    %v7178 = vpop.f32.mrb[0].mxu0
    %v7179 = vadd.f32 0.0, %v7178
    %v7180 = vpop.f32.mrb[0].mxu0
    %7181 = vmatprep.mubr.bf16.mxu0 0
    %7182 = vmatmul.mubr.bf16.gmra.mrb[0].mxu0 %v6676
    %v7183 = vpop.f32.mrb[0].mxu0
    %v7184 = vadd.f32 0.0, %v7183
    %v7185 = vpop.f32.mrb[0].mxu0
    %v7186 = vpop.f32.mrb[0].mxu0
    %v7187 = vadd.f32 0.0, %v7186
    %v7188 = vpop.f32.mrb[0].mxu0
    %7189 = vmatprep.mubr.bf16.mxu0 0
    %7190 = vmatmul.mubr.bf16.gmra.mrb[0].mxu0 %v6677
    %v7191 = vpop.f32.mrb[0].mxu0
    %v7192 = vadd.f32 0.0, %v7191
    %v7193 = vpop.f32.mrb[0].mxu0
    %v7194 = vpop.f32.mrb[0].mxu0
    %v7195 = vadd.f32 0.0, %v7194
    %v7196 = vpop.f32.mrb[0].mxu0
    %7197 = vmatprep.mubr.bf16.mxu0 0
    %7198 = vmatmul.mubr.bf16.gmra.mrb[0].mxu0 %v6678
    %v7199 = vpop.f32.mrb[0].mxu0
    %v7200 = vadd.f32 0.0, %v7199
    %v7201 = vpop.f32.mrb[0].mxu0
    %v7202 = vpop.f32.mrb[0].mxu0
    %v7203 = vadd.f32 0.0, %v7202
    %v7204 = vpop.f32.mrb[0].mxu0
    %7205 = vmatprep.mubr.bf16.mxu0 0
    %7206 = vmatmul.mubr.bf16.gmra.mrb[0].mxu0 %v6679
    %v7207 = vpop.f32.mrb[0].mxu0
    %v7208 = vadd.f32 0.0, %v7207
    %v7209 = vpop.f32.mrb[0].mxu0
    %v7210 = vpop.f32.mrb[0].mxu0
    %v7211 = vadd.f32 0.0, %v7210
    %v7212 = vpop.f32.mrb[0].mxu0
    %7213 = vmatprep.mubr.bf16.mxu0 0
    %7214 = vmatmul.mubr.bf16.gmra.mrb[0].mxu0 %v6680
    %v7215 = vpop.f32.mrb[0].mxu0
    %v7216 = vadd.f32 0.0, %v7215
    %v7217 = vpop.f32.mrb[0].mxu0
    %v7218 = vpop.f32.mrb[0].mxu0
    %v7219 = vadd.f32 0.0, %v7218
    %v7220 = vpop.f32.mrb[0].mxu0
    %7221 = vmatprep.mubr.bf16.mxu0 0
    %7222 = vmatmul.mubr.bf16.gmra.mrb[0].mxu0 %v6681
    %v7223 = vpop.f32.mrb[0].mxu0
    %v7224 = vadd.f32 0.0, %v7223
    %v7225 = vpop.f32.mrb[0].mxu0
    %v7226 = vpop.f32.mrb[0].mxu0
    %v7227 = vadd.f32 0.0, %v7226
    %v7228 = vpop.f32.mrb[0].mxu0
    %7229 = vmatprep.mubr.bf16.mxu0 0
    %7230 = vmatmul.mubr.bf16.gmra.mrb[0].mxu0 %v6682
    %v7231 = vpop.f32.mrb[0].mxu0
    %v7232 = vadd.f32 0.0, %v7231
    %v7233 = vpop.f32.mrb[0].mxu0
    %v7234 = vpop.f32.mrb[0].mxu0
    %v7235 = vadd.f32 0.0, %v7234
    %v7236 = vpop.f32.mrb[0].mxu0
    %7237 = vmatprep.mubr.bf16.mxu0 0
    %7238 = vmatmul.mubr.bf16.gmra.mrb[0].mxu0 %v6683
    %v7239 = vpop.f32.mrb[0].mxu0
    %v7240 = vadd.f32 0.0, %v7239
    %v7241 = vpop.f32.mrb[0].mxu0
    %v7242 = vpop.f32.mrb[0].mxu0
    %v7243 = vadd.f32 0.0, %v7242
    %v7244 = vpop.f32.mrb[0].mxu0
    %7245 = vmatprep.mubr.bf16.mxu0 0
    %7246 = vmatmul.mubr.bf16.gmra.mrb[0].mxu0 %v6684
    %v7247 = vpop.f32.mrb[0].mxu0
    %v7248 = vadd.f32 0.0, %v7247
    %v7249 = vpop.f32.mrb[0].mxu0
    %v7250 = vpop.f32.mrb[0].mxu0
    %v7251 = vadd.f32 0.0, %v7250
    %v7252 = vpop.f32.mrb[0].mxu0
    %7253 = vmatprep.mubr.bf16.mxu0 0
    %7254 = vmatmul.mubr.bf16.gmra.mrb[0].mxu0 %v6685
    %v7255 = vpop.f32.mrb[0].mxu0
    %v7256 = vadd.f32 0.0, %v7255
    %v7257 = vpop.f32.mrb[0].mxu0
    %v7258 = vpop.f32.mrb[0].mxu0
    %v7259 = vadd.f32 0.0, %v7258
    %v7260 = vpop.f32.mrb[0].mxu0
    %7261 = vmatprep.mubr.bf16.mxu0 0
    %7262 = vmatmul.mubr.bf16.gmra.mrb[0].mxu0 %v6686
    %v7263 = vpop.f32.mrb[0].mxu0
    %v7264 = vadd.f32 0.0, %v7263
    %v7265 = vpop.f32.mrb[0].mxu0
    %v7266 = vpop.f32.mrb[0].mxu0
    %v7267 = vadd.f32 0.0, %v7266
    %v7268 = vpop.f32.mrb[0].mxu0
    %7269 = vmatprep.mubr.bf16.mxu0 0
    %7270 = vmatmul.mubr.bf16.gmra.mrb[0].mxu0 %v6687
    %v7271 = vpop.f32.mrb[0].mxu0
    %v7272 = vadd.f32 0.0, %v7271
    %v7273 = vpop.f32.mrb[0].mxu0
    %v7274 = vpop.f32.mrb[0].mxu0
    %v7275 = vadd.f32 0.0, %v7274
    %v7276 = vpop.f32.mrb[0].mxu0
    %7277 = vmatprep.mubr.bf16.mxu0 0
    %7278 = vmatmul.mubr.bf16.gmra.mrb[0].mxu0 %v6688
    %v7279 = vpop.f32.mrb[0].mxu0
    %v7280 = vadd.f32 0.0, %v7279
    %v7281 = vpop.f32.mrb[0].mxu0
    %v7282 = vpop.f32.mrb[0].mxu0
    %v7283 = vadd.f32 0.0, %v7282
    %v7284 = vpop.f32.mrb[0].mxu0
    %7285 = vmatprep.mubr.bf16.mxu0 0
    %7286 = vmatmul.mubr.bf16.gmra.mrb[0].mxu0 %v6689
    %v7287 = vpop.f32.mrb[0].mxu0
    %v7288 = vadd.f32 0.0, %v7287
    %v7289 = vpop.f32.mrb[0].mxu0
    %v7290 = vpop.f32.mrb[0].mxu0
    %v7291 = vadd.f32 0.0, %v7290
    %v7292 = vpop.f32.mrb[0].mxu0
    %7293 = vmatprep.mubr.bf16.mxu0 0
    %7294 = vmatmul.mubr.bf16.gmra.mrb[0].mxu0 %v6690
    %v7295 = vpop.f32.mrb[0].mxu0
    %v7296 = vadd.f32 0.0, %v7295
    %v7297 = vpop.f32.mrb[0].mxu0
    %v7298 = vpop.f32.mrb[0].mxu0
    %v7299 = vadd.f32 0.0, %v7298
    %v7300 = vpop.f32.mrb[0].mxu0
    %7301 = vmatprep.mubr.bf16.mxu0 0
    %7302 = vmatmul.mubr.bf16.gmra.mrb[0].mxu0 %v6691
    %v7303 = vpop.f32.mrb[0].mxu0
    %v7304 = vadd.f32 0.0, %v7303
    %v7305 = vpop.f32.mrb[0].mxu0
    %v7306 = vpop.f32.mrb[0].mxu0
    %v7307 = vadd.f32 0.0, %v7306
    %v7308 = vpop.f32.mrb[0].mxu0
    %7309 = vmatprep.mubr.bf16.mxu0 0
    %7310 = vmatmul.mubr.bf16.gmra.mrb[0].mxu0 %v6692
    %v7311 = vpop.f32.mrb[0].mxu0
    %v7312 = vadd.f32 0.0, %v7311
    %v7313 = vpop.f32.mrb[0].mxu0
    %v7314 = vpop.f32.mrb[0].mxu0
    %v7315 = vadd.f32 0.0, %v7314
    %v7316 = vpop.f32.mrb[0].mxu0
    %7317 = vmatprep.mubr.bf16.mxu0 0
    %7318 = vmatmul.mubr.bf16.gmra.mrb[0].mxu0 %v6693
    %v7319 = vpop.f32.mrb[0].mxu0
    %v7320 = vadd.f32 0.0, %v7319
    %v7321 = vpop.f32.mrb[0].mxu0
    %v7322 = vpop.f32.mrb[0].mxu0
    %v7323 = vadd.f32 0.0, %v7322
    %v7324 = vpop.f32.mrb[0].mxu0
    %7325 = vmatprep.mubr.bf16.mxu0 0
    %7326 = vmatmul.mubr.bf16.gmra.mrb[0].mxu0 %v6694
    %v7327 = vpop.f32.mrb[0].mxu0
    %v7328 = vadd.f32 0.0, %v7327
    %v7329 = vpop.f32.mrb[0].mxu0
    %v7330 = vpop.f32.mrb[0].mxu0
    %v7331 = vadd.f32 0.0, %v7330
    %v7332 = vpop.f32.mrb[0].mxu0
    %7333 = vmatprep.mubr.bf16.mxu0 0
    %7334 = vmatmul.mubr.bf16.gmra.mrb[0].mxu0 %v6695
    %v7335 = vpop.f32.mrb[0].mxu0
    %v7336 = vadd.f32 0.0, %v7335
    %v7337 = vpop.f32.mrb[0].mxu0
    %v7338 = vpop.f32.mrb[0].mxu0
    %v7339 = vadd.f32 0.0, %v7338
    %v7340 = vpop.f32.mrb[0].mxu0
    %7341 = vmatprep.mubr.bf16.mxu0 0
    %7342 = vmatmul.mubr.bf16.gmra.mrb[0].mxu0 %v6696
    %v7343 = vpop.f32.mrb[0].mxu0
    %v7344 = vadd.f32 0.0, %v7343
    %v7345 = vpop.f32.mrb[0].mxu0
    %v7346 = vpop.f32.mrb[0].mxu0
    %v7347 = vadd.f32 0.0, %v7346
    %v7348 = vpop.f32.mrb[0].mxu0
    %7349 = vmatprep.mubr.bf16.mxu0 0
    %7350 = vmatmul.mubr.bf16.gmra.mrb[0].mxu0 %v6697
    %v7351 = vpop.f32.mrb[0].mxu0
    %v7352 = vadd.f32 0.0, %v7351
    %v7353 = vpop.f32.mrb[0].mxu0
    %v7354 = vpop.f32.mrb[0].mxu0
    %v7355 = vadd.f32 0.0, %v7354
    %v7356 = vpop.f32.mrb[0].mxu0
    %7357 = vmatprep.mubr.bf16.mxu0 0
    %7358 = vmatmul.mubr.bf16.gmra.mrb[0].mxu0 %v6698
    %v7359 = vpop.f32.mrb[0].mxu0
    %v7360 = vadd.f32 0.0, %v7359
    %v7361 = vpop.f32.mrb[0].mxu0
    %v7362 = vpop.f32.mrb[0].mxu0
    %v7363 = vadd.f32 0.0, %v7362
    %v7364 = vpop.f32.mrb[0].mxu0
    %7365 = vmatprep.mubr.bf16.mxu0 0
    %7366 = vmatmul.mubr.bf16.gmra.mrb[0].mxu0 %v6699
    %v7367 = vpop.f32.mrb[0].mxu0
    %v7368 = vadd.f32 0.0, %v7367
    %v7369 = vpop.f32.mrb[0].mxu0
    %v7370 = vpop.f32.mrb[0].mxu0
    %v7371 = vadd.f32 0.0, %v7370
    %v7372 = vpop.f32.mrb[0].mxu0
    %7373 = vmatprep.mubr.bf16.mxu0 0
    %7374 = vmatmul.mubr.bf16.gmra.mrb[0].mxu0 %v6700
    %v7375 = vpop.f32.mrb[0].mxu0
    %v7376 = vadd.f32 0.0, %v7375
    %v7377 = vpop.f32.mrb[0].mxu0
    %v7378 = vpop.f32.mrb[0].mxu0
    %v7379 = vadd.f32 0.0, %v7378
    %v7380 = vpop.f32.mrb[0].mxu0
    %7381 = vdwg.mxu0
    %v7382 = vpack.c.bf16 %v6811, %v6808
    %v7383 = vpack.c.bf16 %v6819, %v6816
    %v7384 = vpack.c.bf16 %v6827, %v6824
    %v7385 = vpack.c.bf16 %v6835, %v6832
    %v7386 = vpack.c.bf16 %v6843, %v6840
    %v7387 = vpack.c.bf16 %v6851, %v6848
    %v7388 = vpack.c.bf16 %v6859, %v6856
    %v7389 = vpack.c.bf16 %v6867, %v6864
    %v7390 = vpack.c.bf16 %v6875, %v6872
    %v7391 = vpack.c.bf16 %v6883, %v6880
    %v7392 = vpack.c.bf16 %v6891, %v6888
    %v7393 = vpack.c.bf16 %v6899, %v6896
    %v7394 = vpack.c.bf16 %v6907, %v6904
    %v7395 = vpack.c.bf16 %v6915, %v6912
    %v7396 = vpack.c.bf16 %v6923, %v6920
    %v7397 = vpack.c.bf16 %v6931, %v6928
    %v7398 = vpack.c.bf16 %v6939, %v6936
    %v7399 = vpack.c.bf16 %v6947, %v6944
    %v7400 = vpack.c.bf16 %v6955, %v6952
    %v7401 = vpack.c.bf16 %v6963, %v6960
    %v7402 = vpack.c.bf16 %v6971, %v6968
    %v7403 = vpack.c.bf16 %v6979, %v6976
    %v7404 = vpack.c.bf16 %v6987, %v6984
    %v7405 = vpack.c.bf16 %v6995, %v6992
    %v7406 = vpack.c.bf16 %v7003, %v7000
    %v7407 = vpack.c.bf16 %v7011, %v7008
    %v7408 = vpack.c.bf16 %v7019, %v7016
    %v7409 = vpack.c.bf16 %v7027, %v7024
    %v7410 = vpack.c.bf16 %v7035, %v7032
    %v7411 = vpack.c.bf16 %v7043, %v7040
    %v7412 = vpack.c.bf16 %v7051, %v7048
    %v7413 = vpack.c.bf16 %v7059, %v7056
    %v7414 = vpack.c.bf16 %v7067, %v7064
    %v7415 = vpack.c.bf16 %v7075, %v7072
    %v7416 = vpack.c.bf16 %v7083, %v7080
    %v7417 = vpack.c.bf16 %v7091, %v7088
    %v7418 = vpack.c.bf16 %v7099, %v7096
    %v7419 = vpack.c.bf16 %v7107, %v7104
    %v7420 = vpack.c.bf16 %v7115, %v7112
    %v7421 = vpack.c.bf16 %v7123, %v7120
    %v7422 = vpack.c.bf16 %v7131, %v7128
    %v7423 = vpack.c.bf16 %v7139, %v7136
    %v7424 = vpack.c.bf16 %v7147, %v7144
    %v7425 = vpack.c.bf16 %v7155, %v7152
    %v7426 = vpack.c.bf16 %v7163, %v7160
    %v7427 = vpack.c.bf16 %v7171, %v7168
    %v7428 = vpack.c.bf16 %v7179, %v7176
    %v7429 = vpack.c.bf16 %v7187, %v7184
    %v7430 = vpack.c.bf16 %v7195, %v7192
    %v7431 = vpack.c.bf16 %v7203, %v7200
    %v7432 = vpack.c.bf16 %v7211, %v7208
    %v7433 = vpack.c.bf16 %v7219, %v7216
    %v7434 = vpack.c.bf16 %v7227, %v7224
    %v7435 = vpack.c.bf16 %v7235, %v7232
    %v7436 = vpack.c.bf16 %v7243, %v7240
    %v7437 = vpack.c.bf16 %v7251, %v7248
    %v7438 = vpack.c.bf16 %v7259, %v7256
    %v7439 = vpack.c.bf16 %v7267, %v7264
    %v7440 = vpack.c.bf16 %v7275, %v7272
    %v7441 = vpack.c.bf16 %v7283, %v7280
    %v7442 = vpack.c.bf16 %v7291, %v7288
    %v7443 = vpack.c.bf16 %v7299, %v7296
    %v7444 = vpack.c.bf16 %v7307, %v7304
    %v7445 = vpack.c.bf16 %v7315, %v7312
    %v7446 = vpack.c.bf16 %v7323, %v7320
    %v7447 = vpack.c.bf16 %v7331, %v7328
    %v7448 = vpack.c.bf16 %v7339, %v7336
    %v7449 = vpack.c.bf16 %v7347, %v7344
    %v7450 = vpack.c.bf16 %v7355, %v7352
    %v7451 = vpack.c.bf16 %v7363, %v7360
    %v7452 = vpack.c.bf16 %v7371, %v7368
    %v7453 = vpack.c.bf16 %v7379, %v7376
    %v7454 = vld [vmem:[%s9] sm:$0xf]
    %v7455 = vld [vmem:[%s9 + $0x4] sm:$0xf]
    %s7456 = scalar_lea.vmem %s9, 8
    %v7457 = vld [vmem:[%s7456] sm:$0xf]
    %v7458 = vld [vmem:[%s7456 + $0x4] sm:$0xf]
    %v7461 = vunpack.c.l.b16 %v7457
    %v7462 = vunpack.c.l.b16 %v7458
    %v7463 = vpack.c.b16 %v7462, %v7461
    %vm7465 = vcmask 130048
    %v7467 = vsel %vm7465, %v7390, 0
    %v7470 = vsel %vm7465, %v7391, 0
    %v7473 = vsel %vm7465, %v7392, 0
    %v7476 = vsel %vm7465, %v7393, 0
    %v7479 = vsel %vm7465, %v7394, 0
    %v7482 = vsel %vm7465, %v7395, 0
    %v7485 = vsel %vm7465, %v7396, 0
    %v7488 = vsel %vm7465, %v7397, 0
    %7490 = vmatprep.subr.bf16.mxu0 0
    %7491 = vmatpush1.bf16.msra.mxu0 %v7463
    %7492 = vmatprep.subr.bf16.mxu0 0
    %7493 = vmatpush1.bf16.msra.mxu0 0
    %7494 = vmatprep.subr.bf16.mxu0 0
    %7495 = vmatpush1.bf16.msra.mxu0 0
    %7496 = vmatprep.subr.bf16.mxu0 0
    %7497 = vmatpush1.bf16.msra.mxu0 0
    %7498 = vmatprep.subr.bf16.mxu0 0
    %7499 = vmatpush1.bf16.msra.mxu0 0
    %7500 = vmatprep.subr.bf16.mxu0 0
    %7501 = vmatpush1.bf16.msra.mxu0 0
    %7502 = vmatprep.subr.bf16.mxu0 0
    %7503 = vmatpush1.bf16.msra.mxu0 0
    %7504 = vmatprep.subr.bf16.mxu0 0
    %7505 = vmatpush1.bf16.msra.mxu0 0
    %7506 = vmatprep.subr.bf16.mxu0 0
    %7507 = vmatpush1.bf16.msra.mxu0 0
    %7508 = vmatprep.subr.bf16.mxu0 0
    %7509 = vmatpush1.bf16.msra.mxu0 0
    %7510 = vmatprep.subr.bf16.mxu0 0
    %7511 = vmatpush1.bf16.msra.mxu0 0
    %7512 = vmatprep.subr.bf16.mxu0 0
    %7513 = vmatpush1.bf16.msra.mxu0 0
    %7514 = vmatprep.subr.bf16.mxu0 0
    %7515 = vmatpush1.bf16.msra.mxu0 0
    %7516 = vmatprep.subr.bf16.mxu0 0
    %7517 = vmatpush1.bf16.msra.mxu0 0
    %7518 = vmatprep.subr.bf16.mxu0 0
    %7519 = vmatpush1.bf16.msra.mxu0 0
    %7520 = vmatprep.subr.bf16.mxu0 0
    %7521 = vmatpush1.bf16.msra.mxu0 0
    %7522 = vmatprep.mubr.bf16.mxu0 0
    %7523 = vmatmul.mubr.bf16.gmra.mrb[0].mxu0 %v7467
    %v7524 = vpop.f32.mrb[0].mxu0
    %v7525 = vadd.f32 0.0, %v7524
    %v7526 = vpop.f32.mrb[0].mxu0
    %v7527 = vpop.f32.mrb[0].mxu0
    %v7528 = vadd.f32 0.0, %v7527
    %v7529 = vpop.f32.mrb[0].mxu0
    %7530 = vmatprep.mubr.bf16.mxu0 0
    %7531 = vmatmul.mubr.bf16.gmra.mrb[0].mxu0 %v7470
    %v7532 = vpop.f32.mrb[0].mxu0
    %v7533 = vadd.f32 0.0, %v7532
    %v7534 = vpop.f32.mrb[0].mxu0
    %v7535 = vpop.f32.mrb[0].mxu0
    %v7536 = vadd.f32 0.0, %v7535
    %v7537 = vpop.f32.mrb[0].mxu0
    %7538 = vmatprep.mubr.bf16.mxu0 0
    %7539 = vmatmul.mubr.bf16.gmra.mrb[0].mxu0 %v7473
    %v7540 = vpop.f32.mrb[0].mxu0
    %v7541 = vadd.f32 0.0, %v7540
    %v7542 = vpop.f32.mrb[0].mxu0
    %v7543 = vpop.f32.mrb[0].mxu0
    %v7544 = vadd.f32 0.0, %v7543
    %v7545 = vpop.f32.mrb[0].mxu0
    %7546 = vmatprep.mubr.bf16.mxu0 0
    %7547 = vmatmul.mubr.bf16.gmra.mrb[0].mxu0 %v7476
    %v7548 = vpop.f32.mrb[0].mxu0
    %v7549 = vadd.f32 0.0, %v7548
    %v7550 = vpop.f32.mrb[0].mxu0
    %v7551 = vpop.f32.mrb[0].mxu0
    %v7552 = vadd.f32 0.0, %v7551
    %v7553 = vpop.f32.mrb[0].mxu0
    %7554 = vmatprep.mubr.bf16.mxu0 0
    %7555 = vmatmul.mubr.bf16.gmra.mrb[0].mxu0 %v7479
    %v7556 = vpop.f32.mrb[0].mxu0
    %v7557 = vadd.f32 0.0, %v7556
    %v7558 = vpop.f32.mrb[0].mxu0
    %v7559 = vpop.f32.mrb[0].mxu0
    %v7560 = vadd.f32 0.0, %v7559
    %v7561 = vpop.f32.mrb[0].mxu0
    %7562 = vmatprep.mubr.bf16.mxu0 0
    %7563 = vmatmul.mubr.bf16.gmra.mrb[0].mxu0 %v7482
    %v7564 = vpop.f32.mrb[0].mxu0
    %v7565 = vadd.f32 0.0, %v7564
    %v7566 = vpop.f32.mrb[0].mxu0
    %v7567 = vpop.f32.mrb[0].mxu0
    %v7568 = vadd.f32 0.0, %v7567
    %v7569 = vpop.f32.mrb[0].mxu0
    %7570 = vmatprep.mubr.bf16.mxu0 0
    %7571 = vmatmul.mubr.bf16.gmra.mrb[0].mxu0 %v7485
    %v7572 = vpop.f32.mrb[0].mxu0
    %v7573 = vadd.f32 0.0, %v7572
    %v7574 = vpop.f32.mrb[0].mxu0
    %v7575 = vpop.f32.mrb[0].mxu0
    %v7576 = vadd.f32 0.0, %v7575
    %v7577 = vpop.f32.mrb[0].mxu0
    %7578 = vmatprep.mubr.bf16.mxu0 0
    %7579 = vmatmul.mubr.bf16.gmra.mrb[0].mxu0 %v7488
    %v7580 = vpop.f32.mrb[0].mxu0
    %v7581 = vadd.f32 0.0, %v7580
    %v7582 = vpop.f32.mrb[0].mxu0
    %v7583 = vpop.f32.mrb[0].mxu0
    %v7584 = vadd.f32 0.0, %v7583
    %v7585 = vpop.f32.mrb[0].mxu0
    %7586 = vdwg.mxu0
    %v7589 = vunpack.c.l.b16 %v7454
    %v7590 = vunpack.c.l.b16 %v7455
    %v7591 = vpack.c.b16 %v7590, %v7589
    %v7594 = vsel %vm7465, %v7382, 0
    %v7597 = vsel %vm7465, %v7383, 0
    %v7600 = vsel %vm7465, %v7384, 0
    %v7603 = vsel %vm7465, %v7385, 0
    %v7606 = vsel %vm7465, %v7386, 0
    %v7609 = vsel %vm7465, %v7387, 0
    %v7612 = vsel %vm7465, %v7388, 0
    %v7615 = vsel %vm7465, %v7389, 0
    %7617 = vmatprep.subr.bf16.mxu0 0
    %7618 = vmatpush1.bf16.msra.mxu0 %v7591
    %7619 = vmatprep.subr.bf16.mxu0 0
    %7620 = vmatpush1.bf16.msra.mxu0 0
    %7621 = vmatprep.subr.bf16.mxu0 0
    %7622 = vmatpush1.bf16.msra.mxu0 0
    %7623 = vmatprep.subr.bf16.mxu0 0
    %7624 = vmatpush1.bf16.msra.mxu0 0
    %7625 = vmatprep.subr.bf16.mxu0 0
    %7626 = vmatpush1.bf16.msra.mxu0 0
    %7627 = vmatprep.subr.bf16.mxu0 0
    %7628 = vmatpush1.bf16.msra.mxu0 0
    %7629 = vmatprep.subr.bf16.mxu0 0
    %7630 = vmatpush1.bf16.msra.mxu0 0
    %7631 = vmatprep.subr.bf16.mxu0 0
    %7632 = vmatpush1.bf16.msra.mxu0 0
    %7633 = vmatprep.subr.bf16.mxu0 0
    %7634 = vmatpush1.bf16.msra.mxu0 0
    %7635 = vmatprep.subr.bf16.mxu0 0
    %7636 = vmatpush1.bf16.msra.mxu0 0
    %7637 = vmatprep.subr.bf16.mxu0 0
    %7638 = vmatpush1.bf16.msra.mxu0 0
    %7639 = vmatprep.subr.bf16.mxu0 0
    %7640 = vmatpush1.bf16.msra.mxu0 0
    %7641 = vmatprep.subr.bf16.mxu0 0
    %7642 = vmatpush1.bf16.msra.mxu0 0
    %7643 = vmatprep.subr.bf16.mxu0 0
    %7644 = vmatpush1.bf16.msra.mxu0 0
    %7645 = vmatprep.subr.bf16.mxu0 0
    %7646 = vmatpush1.bf16.msra.mxu0 0
    %7647 = vmatprep.subr.bf16.mxu0 0
    %7648 = vmatpush1.bf16.msra.mxu0 0
    %7649 = vmatprep.mubr.bf16.mxu0 0
    %7650 = vmatmul.mubr.bf16.gmra.mrb[0].mxu0 %v7594
    %v7651 = vpop.f32.mrb[0].mxu0
    %v7652 = vadd.f32 %v7525, %v7651
    %v7653 = vpop.f32.mrb[0].mxu0
    %v7654 = vpop.f32.mrb[0].mxu0
    %v7655 = vadd.f32 %v7528, %v7654
    %v7656 = vpop.f32.mrb[0].mxu0
    %7657 = vmatprep.mubr.bf16.mxu0 0
    %7658 = vmatmul.mubr.bf16.gmra.mrb[0].mxu0 %v7597
    %v7659 = vpop.f32.mrb[0].mxu0
    %v7660 = vadd.f32 %v7533, %v7659
    %v7661 = vpop.f32.mrb[0].mxu0
    %v7662 = vpop.f32.mrb[0].mxu0
    %v7663 = vadd.f32 %v7536, %v7662
    %v7664 = vpop.f32.mrb[0].mxu0
    %7665 = vmatprep.mubr.bf16.mxu0 0
    %7666 = vmatmul.mubr.bf16.gmra.mrb[0].mxu0 %v7600
    %v7667 = vpop.f32.mrb[0].mxu0
    %v7668 = vadd.f32 %v7541, %v7667
    %v7669 = vpop.f32.mrb[0].mxu0
    %v7670 = vpop.f32.mrb[0].mxu0
    %v7671 = vadd.f32 %v7544, %v7670
    %v7672 = vpop.f32.mrb[0].mxu0
    %7673 = vmatprep.mubr.bf16.mxu0 0
    %7674 = vmatmul.mubr.bf16.gmra.mrb[0].mxu0 %v7603
    %v7675 = vpop.f32.mrb[0].mxu0
    %v7676 = vadd.f32 %v7549, %v7675
    %v7677 = vpop.f32.mrb[0].mxu0
    %v7678 = vpop.f32.mrb[0].mxu0
    %v7679 = vadd.f32 %v7552, %v7678
    %v7680 = vpop.f32.mrb[0].mxu0
    %7681 = vmatprep.mubr.bf16.mxu0 0
    %7682 = vmatmul.mubr.bf16.gmra.mrb[0].mxu0 %v7606
    %v7683 = vpop.f32.mrb[0].mxu0
    %v7684 = vadd.f32 %v7557, %v7683
    %v7685 = vpop.f32.mrb[0].mxu0
    %v7686 = vpop.f32.mrb[0].mxu0
    %v7687 = vadd.f32 %v7560, %v7686
    %v7688 = vpop.f32.mrb[0].mxu0
    %7689 = vmatprep.mubr.bf16.mxu0 0
    %7690 = vmatmul.mubr.bf16.gmra.mrb[0].mxu0 %v7609
    %v7691 = vpop.f32.mrb[0].mxu0
    %v7692 = vadd.f32 %v7565, %v7691
    %v7693 = vpop.f32.mrb[0].mxu0
    %v7694 = vpop.f32.mrb[0].mxu0
    %v7695 = vadd.f32 %v7568, %v7694
    %v7696 = vpop.f32.mrb[0].mxu0
    %7697 = vmatprep.mubr.bf16.mxu0 0
    %7698 = vmatmul.mubr.bf16.gmra.mrb[0].mxu0 %v7612
    %v7699 = vpop.f32.mrb[0].mxu0
    %v7700 = vadd.f32 %v7573, %v7699
    %v7701 = vpop.f32.mrb[0].mxu0
    %v7702 = vpop.f32.mrb[0].mxu0
    %v7703 = vadd.f32 %v7576, %v7702
    %v7704 = vpop.f32.mrb[0].mxu0
    %7705 = vmatprep.mubr.bf16.mxu0 0
    %7706 = vmatmul.mubr.bf16.gmra.mrb[0].mxu0 %v7615
    %v7707 = vpop.f32.mrb[0].mxu0
    %v7708 = vadd.f32 %v7581, %v7707
    %v7709 = vpop.f32.mrb[0].mxu0
    %v7710 = vpop.f32.mrb[0].mxu0
    %v7711 = vadd.f32 %v7584, %v7710
    %v7712 = vpop.f32.mrb[0].mxu0
    %7713 = vdwg.mxu0
    %s7714 = scalar_lea.vmem %s9, 16
    %v7715 = vld [vmem:[%s7714] sm:$0xf]
    %v7716 = vld [vmem:[%s7714 + $0x4] sm:$0xf]
    %v7719 = vunpack.c.l.b16 %v7715
    %v7720 = vunpack.c.l.b16 %v7716
    %v7721 = vpack.c.b16 %v7720, %v7719
    %v7724 = vsel %vm7465, %v7398, 0
    %v7727 = vsel %vm7465, %v7399, 0
    %v7730 = vsel %vm7465, %v7400, 0
    %v7733 = vsel %vm7465, %v7401, 0
    %v7736 = vsel %vm7465, %v7402, 0
    %v7739 = vsel %vm7465, %v7403, 0
    %v7742 = vsel %vm7465, %v7404, 0
    %v7745 = vsel %vm7465, %v7405, 0
    %7747 = vmatprep.subr.bf16.mxu0 0
    %7748 = vmatpush1.bf16.msra.mxu0 %v7721
    %7749 = vmatprep.subr.bf16.mxu0 0
    %7750 = vmatpush1.bf16.msra.mxu0 0
    %7751 = vmatprep.subr.bf16.mxu0 0
    %7752 = vmatpush1.bf16.msra.mxu0 0
    %7753 = vmatprep.subr.bf16.mxu0 0
    %7754 = vmatpush1.bf16.msra.mxu0 0
    %7755 = vmatprep.subr.bf16.mxu0 0
    %7756 = vmatpush1.bf16.msra.mxu0 0
    %7757 = vmatprep.subr.bf16.mxu0 0
    %7758 = vmatpush1.bf16.msra.mxu0 0
    %7759 = vmatprep.subr.bf16.mxu0 0
    %7760 = vmatpush1.bf16.msra.mxu0 0
    %7761 = vmatprep.subr.bf16.mxu0 0
    %7762 = vmatpush1.bf16.msra.mxu0 0
    %7763 = vmatprep.subr.bf16.mxu0 0
    %7764 = vmatpush1.bf16.msra.mxu0 0
    %7765 = vmatprep.subr.bf16.mxu0 0
    %7766 = vmatpush1.bf16.msra.mxu0 0
    %7767 = vmatprep.subr.bf16.mxu0 0
    %7768 = vmatpush1.bf16.msra.mxu0 0
    %7769 = vmatprep.subr.bf16.mxu0 0
    %7770 = vmatpush1.bf16.msra.mxu0 0
    %7771 = vmatprep.subr.bf16.mxu0 0
    %7772 = vmatpush1.bf16.msra.mxu0 0
    %7773 = vmatprep.subr.bf16.mxu0 0
    %7774 = vmatpush1.bf16.msra.mxu0 0
    %7775 = vmatprep.subr.bf16.mxu0 0
    %7776 = vmatpush1.bf16.msra.mxu0 0
    %7777 = vmatprep.subr.bf16.mxu0 0
    %7778 = vmatpush1.bf16.msra.mxu0 0
    %7779 = vmatprep.mubr.bf16.mxu0 0
    %7780 = vmatmul.mubr.bf16.gmra.mrb[0].mxu0 %v7724
    %v7781 = vpop.f32.mrb[0].mxu0
    %v7782 = vadd.f32 0.0, %v7781
    %v7783 = vpop.f32.mrb[0].mxu0
    %v7784 = vpop.f32.mrb[0].mxu0
    %v7785 = vadd.f32 0.0, %v7784
    %v7786 = vpop.f32.mrb[0].mxu0
    %7787 = vmatprep.mubr.bf16.mxu0 0
    %7788 = vmatmul.mubr.bf16.gmra.mrb[0].mxu0 %v7727
    %v7789 = vpop.f32.mrb[0].mxu0
    %v7790 = vadd.f32 0.0, %v7789
    %v7791 = vpop.f32.mrb[0].mxu0
    %v7792 = vpop.f32.mrb[0].mxu0
    %v7793 = vadd.f32 0.0, %v7792
    %v7794 = vpop.f32.mrb[0].mxu0
    %7795 = vmatprep.mubr.bf16.mxu0 0
    %7796 = vmatmul.mubr.bf16.gmra.mrb[0].mxu0 %v7730
    %v7797 = vpop.f32.mrb[0].mxu0
    %v7798 = vadd.f32 0.0, %v7797
    %v7799 = vpop.f32.mrb[0].mxu0
    %v7800 = vpop.f32.mrb[0].mxu0
    %v7801 = vadd.f32 0.0, %v7800
    %v7802 = vpop.f32.mrb[0].mxu0
    %7803 = vmatprep.mubr.bf16.mxu0 0
    %7804 = vmatmul.mubr.bf16.gmra.mrb[0].mxu0 %v7733
    %v7805 = vpop.f32.mrb[0].mxu0
    %v7806 = vadd.f32 0.0, %v7805
    %v7807 = vpop.f32.mrb[0].mxu0
    %v7808 = vpop.f32.mrb[0].mxu0
    %v7809 = vadd.f32 0.0, %v7808
    %v7810 = vpop.f32.mrb[0].mxu0
    %7811 = vmatprep.mubr.bf16.mxu0 0
    %7812 = vmatmul.mubr.bf16.gmra.mrb[0].mxu0 %v7736
    %v7813 = vpop.f32.mrb[0].mxu0
    %v7814 = vadd.f32 0.0, %v7813
    %v7815 = vpop.f32.mrb[0].mxu0
    %v7816 = vpop.f32.mrb[0].mxu0
    %v7817 = vadd.f32 0.0, %v7816
    %v7818 = vpop.f32.mrb[0].mxu0
    %7819 = vmatprep.mubr.bf16.mxu0 0
    %7820 = vmatmul.mubr.bf16.gmra.mrb[0].mxu0 %v7739
    %v7821 = vpop.f32.mrb[0].mxu0
    %v7822 = vadd.f32 0.0, %v7821
    %v7823 = vpop.f32.mrb[0].mxu0
    %v7824 = vpop.f32.mrb[0].mxu0
    %v7825 = vadd.f32 0.0, %v7824
    %v7826 = vpop.f32.mrb[0].mxu0
    %7827 = vmatprep.mubr.bf16.mxu0 0
    %7828 = vmatmul.mubr.bf16.gmra.mrb[0].mxu0 %v7742
    %v7829 = vpop.f32.mrb[0].mxu0
    %v7830 = vadd.f32 0.0, %v7829
    %v7831 = vpop.f32.mrb[0].mxu0
    %v7832 = vpop.f32.mrb[0].mxu0
    %v7833 = vadd.f32 0.0, %v7832
    %v7834 = vpop.f32.mrb[0].mxu0
    %7835 = vmatprep.mubr.bf16.mxu0 0
    %7836 = vmatmul.mubr.bf16.gmra.mrb[0].mxu0 %v7745
    %v7837 = vpop.f32.mrb[0].mxu0
    %v7838 = vadd.f32 0.0, %v7837
    %v7839 = vpop.f32.mrb[0].mxu0
    %v7840 = vpop.f32.mrb[0].mxu0
    %v7841 = vadd.f32 0.0, %v7840
    %v7842 = vpop.f32.mrb[0].mxu0
    %7843 = vdwg.mxu0
    %v7844 = vadd.f32 %v7652, %v7782
    %v7845 = vadd.f32 %v7655, %v7785
    %v7846 = vadd.f32 %v7660, %v7790
    %v7847 = vadd.f32 %v7663, %v7793
    %v7848 = vadd.f32 %v7668, %v7798
    %v7849 = vadd.f32 %v7671, %v7801
    %v7850 = vadd.f32 %v7676, %v7806
    %v7851 = vadd.f32 %v7679, %v7809
    %v7852 = vadd.f32 %v7684, %v7814
    %v7853 = vadd.f32 %v7687, %v7817
    %v7854 = vadd.f32 %v7692, %v7822
    %v7855 = vadd.f32 %v7695, %v7825
    %v7856 = vadd.f32 %v7700, %v7830
    %v7857 = vadd.f32 %v7703, %v7833
    %v7858 = vadd.f32 %v7708, %v7838
    %v7859 = vadd.f32 %v7711, %v7841
    %s7860 = scalar_lea.vmem %s9, 24
    %v7861 = vld [vmem:[%s7860] sm:$0xf]
    %v7862 = vld [vmem:[%s7860 + $0x4] sm:$0xf]
    %v7865 = vunpack.c.l.b16 %v7861
    %v7866 = vunpack.c.l.b16 %v7862
    %v7867 = vpack.c.b16 %v7866, %v7865
    %v7870 = vsel %vm7465, %v7406, 0
    %v7873 = vsel %vm7465, %v7407, 0
    %v7876 = vsel %vm7465, %v7408, 0
    %v7879 = vsel %vm7465, %v7409, 0
    %v7882 = vsel %vm7465, %v7410, 0
    %v7885 = vsel %vm7465, %v7411, 0
    %v7888 = vsel %vm7465, %v7412, 0
    %v7891 = vsel %vm7465, %v7413, 0
    %7893 = vmatprep.subr.bf16.mxu0 0
    %7894 = vmatpush1.bf16.msra.mxu0 %v7867
    %7895 = vmatprep.subr.bf16.mxu0 0
    %7896 = vmatpush1.bf16.msra.mxu0 0
    %7897 = vmatprep.subr.bf16.mxu0 0
    %7898 = vmatpush1.bf16.msra.mxu0 0
    %7899 = vmatprep.subr.bf16.mxu0 0
    %7900 = vmatpush1.bf16.msra.mxu0 0
    %7901 = vmatprep.subr.bf16.mxu0 0
    %7902 = vmatpush1.bf16.msra.mxu0 0
    %7903 = vmatprep.subr.bf16.mxu0 0
    %7904 = vmatpush1.bf16.msra.mxu0 0
    %7905 = vmatprep.subr.bf16.mxu0 0
    %7906 = vmatpush1.bf16.msra.mxu0 0
    %7907 = vmatprep.subr.bf16.mxu0 0
    %7908 = vmatpush1.bf16.msra.mxu0 0
    %7909 = vmatprep.subr.bf16.mxu0 0
    %7910 = vmatpush1.bf16.msra.mxu0 0
    %7911 = vmatprep.subr.bf16.mxu0 0
    %7912 = vmatpush1.bf16.msra.mxu0 0
    %7913 = vmatprep.subr.bf16.mxu0 0
    %7914 = vmatpush1.bf16.msra.mxu0 0
    %7915 = vmatprep.subr.bf16.mxu0 0
    %7916 = vmatpush1.bf16.msra.mxu0 0
    %7917 = vmatprep.subr.bf16.mxu0 0
    %7918 = vmatpush1.bf16.msra.mxu0 0
    %7919 = vmatprep.subr.bf16.mxu0 0
    %7920 = vmatpush1.bf16.msra.mxu0 0
    %7921 = vmatprep.subr.bf16.mxu0 0
    %7922 = vmatpush1.bf16.msra.mxu0 0
    %7923 = vmatprep.subr.bf16.mxu0 0
    %7924 = vmatpush1.bf16.msra.mxu0 0
    %7925 = vmatprep.mubr.bf16.mxu0 0
    %7926 = vmatmul.mubr.bf16.gmra.mrb[0].mxu0 %v7870
    %v7927 = vpop.f32.mrb[0].mxu0
    %v7928 = vadd.f32 0.0, %v7927
    %v7929 = vpop.f32.mrb[0].mxu0
    %v7930 = vpop.f32.mrb[0].mxu0
    %v7931 = vadd.f32 0.0, %v7930
    %v7932 = vpop.f32.mrb[0].mxu0
    %7933 = vmatprep.mubr.bf16.mxu0 0
    %7934 = vmatmul.mubr.bf16.gmra.mrb[0].mxu0 %v7873
    %v7935 = vpop.f32.mrb[0].mxu0
    %v7936 = vadd.f32 0.0, %v7935
    %v7937 = vpop.f32.mrb[0].mxu0
    %v7938 = vpop.f32.mrb[0].mxu0
    %v7939 = vadd.f32 0.0, %v7938
    %v7940 = vpop.f32.mrb[0].mxu0
    %7941 = vmatprep.mubr.bf16.mxu0 0
    %7942 = vmatmul.mubr.bf16.gmra.mrb[0].mxu0 %v7876
    %v7943 = vpop.f32.mrb[0].mxu0
    %v7944 = vadd.f32 0.0, %v7943
    %v7945 = vpop.f32.mrb[0].mxu0
    %v7946 = vpop.f32.mrb[0].mxu0
    %v7947 = vadd.f32 0.0, %v7946
    %v7948 = vpop.f32.mrb[0].mxu0
    %7949 = vmatprep.mubr.bf16.mxu0 0
    %7950 = vmatmul.mubr.bf16.gmra.mrb[0].mxu0 %v7879
    %v7951 = vpop.f32.mrb[0].mxu0
    %v7952 = vadd.f32 0.0, %v7951
    %v7953 = vpop.f32.mrb[0].mxu0
    %v7954 = vpop.f32.mrb[0].mxu0
    %v7955 = vadd.f32 0.0, %v7954
    %v7956 = vpop.f32.mrb[0].mxu0
    %7957 = vmatprep.mubr.bf16.mxu0 0
    %7958 = vmatmul.mubr.bf16.gmra.mrb[0].mxu0 %v7882
    %v7959 = vpop.f32.mrb[0].mxu0
    %v7960 = vadd.f32 0.0, %v7959
    %v7961 = vpop.f32.mrb[0].mxu0
    %v7962 = vpop.f32.mrb[0].mxu0
    %v7963 = vadd.f32 0.0, %v7962
    %v7964 = vpop.f32.mrb[0].mxu0
    %7965 = vmatprep.mubr.bf16.mxu0 0
    %7966 = vmatmul.mubr.bf16.gmra.mrb[0].mxu0 %v7885
    %v7967 = vpop.f32.mrb[0].mxu0
    %v7968 = vadd.f32 0.0, %v7967
    %v7969 = vpop.f32.mrb[0].mxu0
    %v7970 = vpop.f32.mrb[0].mxu0
    %v7971 = vadd.f32 0.0, %v7970
    %v7972 = vpop.f32.mrb[0].mxu0
    %7973 = vmatprep.mubr.bf16.mxu0 0
    %7974 = vmatmul.mubr.bf16.gmra.mrb[0].mxu0 %v7888
    %v7975 = vpop.f32.mrb[0].mxu0
    %v7976 = vadd.f32 0.0, %v7975
    %v7977 = vpop.f32.mrb[0].mxu0
    %v7978 = vpop.f32.mrb[0].mxu0
    %v7979 = vadd.f32 0.0, %v7978
    %v7980 = vpop.f32.mrb[0].mxu0
    %7981 = vmatprep.mubr.bf16.mxu0 0
    %7982 = vmatmul.mubr.bf16.gmra.mrb[0].mxu0 %v7891
    %v7983 = vpop.f32.mrb[0].mxu0
    %v7984 = vadd.f32 0.0, %v7983
    %v7985 = vpop.f32.mrb[0].mxu0
    %v7986 = vpop.f32.mrb[0].mxu0
    %v7987 = vadd.f32 0.0, %v7986
    %v7988 = vpop.f32.mrb[0].mxu0
    %7989 = vdwg.mxu0
    %v7990 = vadd.f32 %v7844, %v7928
    %v7991 = vadd.f32 %v7845, %v7931
    %v7992 = vadd.f32 %v7846, %v7936
    %v7993 = vadd.f32 %v7847, %v7939
    %v7994 = vadd.f32 %v7848, %v7944
    %v7995 = vadd.f32 %v7849, %v7947
    %v7996 = vadd.f32 %v7850, %v7952
    %v7997 = vadd.f32 %v7851, %v7955
    %v7998 = vadd.f32 %v7852, %v7960
    %v7999 = vadd.f32 %v7853, %v7963
    %v8000 = vadd.f32 %v7854, %v7968
    %v8001 = vadd.f32 %v7855, %v7971
    %v8002 = vadd.f32 %v7856, %v7976
    %v8003 = vadd.f32 %v7857, %v7979
    %v8004 = vadd.f32 %v7858, %v7984
    %v8005 = vadd.f32 %v7859, %v7987
    %s8006 = scalar_lea.vmem %s9, 32
    %v8007 = vld [vmem:[%s8006] sm:$0xf]
    %v8008 = vld [vmem:[%s8006 + $0x4] sm:$0xf]
    %v8011 = vunpack.c.l.b16 %v8007
    %v8012 = vunpack.c.l.b16 %v8008
    %v8013 = vpack.c.b16 %v8012, %v8011
    %v8016 = vsel %vm7465, %v7414, 0
    %v8019 = vsel %vm7465, %v7415, 0
    %v8022 = vsel %vm7465, %v7416, 0
    %v8025 = vsel %vm7465, %v7417, 0
    %v8028 = vsel %vm7465, %v7418, 0
    %v8031 = vsel %vm7465, %v7419, 0
    %v8034 = vsel %vm7465, %v7420, 0
    %v8037 = vsel %vm7465, %v7421, 0
    %8039 = vmatprep.subr.bf16.mxu0 0
    %8040 = vmatpush1.bf16.msra.mxu0 %v8013
    %8041 = vmatprep.subr.bf16.mxu0 0
    %8042 = vmatpush1.bf16.msra.mxu0 0
    %8043 = vmatprep.subr.bf16.mxu0 0
    %8044 = vmatpush1.bf16.msra.mxu0 0
    %8045 = vmatprep.subr.bf16.mxu0 0
    %8046 = vmatpush1.bf16.msra.mxu0 0
    %8047 = vmatprep.subr.bf16.mxu0 0
    %8048 = vmatpush1.bf16.msra.mxu0 0
    %8049 = vmatprep.subr.bf16.mxu0 0
    %8050 = vmatpush1.bf16.msra.mxu0 0
    %8051 = vmatprep.subr.bf16.mxu0 0
    %8052 = vmatpush1.bf16.msra.mxu0 0
    %8053 = vmatprep.subr.bf16.mxu0 0
    %8054 = vmatpush1.bf16.msra.mxu0 0
    %8055 = vmatprep.subr.bf16.mxu0 0
    %8056 = vmatpush1.bf16.msra.mxu0 0
    %8057 = vmatprep.subr.bf16.mxu0 0
    %8058 = vmatpush1.bf16.msra.mxu0 0
    %8059 = vmatprep.subr.bf16.mxu0 0
    %8060 = vmatpush1.bf16.msra.mxu0 0
    %8061 = vmatprep.subr.bf16.mxu0 0
    %8062 = vmatpush1.bf16.msra.mxu0 0
    %8063 = vmatprep.subr.bf16.mxu0 0
    %8064 = vmatpush1.bf16.msra.mxu0 0
    %8065 = vmatprep.subr.bf16.mxu0 0
    %8066 = vmatpush1.bf16.msra.mxu0 0
    %8067 = vmatprep.subr.bf16.mxu0 0
    %8068 = vmatpush1.bf16.msra.mxu0 0
    %8069 = vmatprep.subr.bf16.mxu0 0
    %8070 = vmatpush1.bf16.msra.mxu0 0
    %8071 = vmatprep.mubr.bf16.mxu0 0
    %8072 = vmatmul.mubr.bf16.gmra.mrb[0].mxu0 %v8016
    %v8073 = vpop.f32.mrb[0].mxu0
    %v8074 = vadd.f32 0.0, %v8073
    %v8075 = vpop.f32.mrb[0].mxu0
    %v8076 = vpop.f32.mrb[0].mxu0
    %v8077 = vadd.f32 0.0, %v8076
    %v8078 = vpop.f32.mrb[0].mxu0
    %8079 = vmatprep.mubr.bf16.mxu0 0
    %8080 = vmatmul.mubr.bf16.gmra.mrb[0].mxu0 %v8019
    %v8081 = vpop.f32.mrb[0].mxu0
    %v8082 = vadd.f32 0.0, %v8081
    %v8083 = vpop.f32.mrb[0].mxu0
    %v8084 = vpop.f32.mrb[0].mxu0
    %v8085 = vadd.f32 0.0, %v8084
    %v8086 = vpop.f32.mrb[0].mxu0
    %8087 = vmatprep.mubr.bf16.mxu0 0
    %8088 = vmatmul.mubr.bf16.gmra.mrb[0].mxu0 %v8022
    %v8089 = vpop.f32.mrb[0].mxu0
    %v8090 = vadd.f32 0.0, %v8089
    %v8091 = vpop.f32.mrb[0].mxu0
    %v8092 = vpop.f32.mrb[0].mxu0
    %v8093 = vadd.f32 0.0, %v8092
    %v8094 = vpop.f32.mrb[0].mxu0
    %8095 = vmatprep.mubr.bf16.mxu0 0
    %8096 = vmatmul.mubr.bf16.gmra.mrb[0].mxu0 %v8025
    %v8097 = vpop.f32.mrb[0].mxu0
    %v8098 = vadd.f32 0.0, %v8097
    %v8099 = vpop.f32.mrb[0].mxu0
    %v8100 = vpop.f32.mrb[0].mxu0
    %v8101 = vadd.f32 0.0, %v8100
    %v8102 = vpop.f32.mrb[0].mxu0
    %8103 = vmatprep.mubr.bf16.mxu0 0
    %8104 = vmatmul.mubr.bf16.gmra.mrb[0].mxu0 %v8028
    %v8105 = vpop.f32.mrb[0].mxu0
    %v8106 = vadd.f32 0.0, %v8105
    %v8107 = vpop.f32.mrb[0].mxu0
    %v8108 = vpop.f32.mrb[0].mxu0
    %v8109 = vadd.f32 0.0, %v8108
    %v8110 = vpop.f32.mrb[0].mxu0
    %8111 = vmatprep.mubr.bf16.mxu0 0
    %8112 = vmatmul.mubr.bf16.gmra.mrb[0].mxu0 %v8031
    %v8113 = vpop.f32.mrb[0].mxu0
    %v8114 = vadd.f32 0.0, %v8113
    %v8115 = vpop.f32.mrb[0].mxu0
    %v8116 = vpop.f32.mrb[0].mxu0
    %v8117 = vadd.f32 0.0, %v8116
    %v8118 = vpop.f32.mrb[0].mxu0
    %8119 = vmatprep.mubr.bf16.mxu0 0
    %8120 = vmatmul.mubr.bf16.gmra.mrb[0].mxu0 %v8034
    %v8121 = vpop.f32.mrb[0].mxu0
    %v8122 = vadd.f32 0.0, %v8121
    %v8123 = vpop.f32.mrb[0].mxu0
    %v8124 = vpop.f32.mrb[0].mxu0
    %v8125 = vadd.f32 0.0, %v8124
    %v8126 = vpop.f32.mrb[0].mxu0
    %8127 = vmatprep.mubr.bf16.mxu0 0
    %8128 = vmatmul.mubr.bf16.gmra.mrb[0].mxu0 %v8037
    %v8129 = vpop.f32.mrb[0].mxu0
    %v8130 = vadd.f32 0.0, %v8129
    %v8131 = vpop.f32.mrb[0].mxu0
    %v8132 = vpop.f32.mrb[0].mxu0
    %v8133 = vadd.f32 0.0, %v8132
    %v8134 = vpop.f32.mrb[0].mxu0
    %8135 = vdwg.mxu0
    %v8136 = vadd.f32 %v7990, %v8074
    %v8137 = vadd.f32 %v7991, %v8077
    %v8138 = vadd.f32 %v7992, %v8082
    %v8139 = vadd.f32 %v7993, %v8085
    %v8140 = vadd.f32 %v7994, %v8090
    %v8141 = vadd.f32 %v7995, %v8093
    %v8142 = vadd.f32 %v7996, %v8098
    %v8143 = vadd.f32 %v7997, %v8101
    %v8144 = vadd.f32 %v7998, %v8106
    %v8145 = vadd.f32 %v7999, %v8109
    %v8146 = vadd.f32 %v8000, %v8114
    %v8147 = vadd.f32 %v8001, %v8117
    %v8148 = vadd.f32 %v8002, %v8122
    %v8149 = vadd.f32 %v8003, %v8125
    %v8150 = vadd.f32 %v8004, %v8130
    %v8151 = vadd.f32 %v8005, %v8133
    %s8152 = scalar_lea.vmem %s9, 40
    %v8153 = vld [vmem:[%s8152] sm:$0xf]
    %v8154 = vld [vmem:[%s8152 + $0x4] sm:$0xf]
    %v8157 = vunpack.c.l.b16 %v8153
    %v8158 = vunpack.c.l.b16 %v8154
    %v8159 = vpack.c.b16 %v8158, %v8157
    %v8162 = vsel %vm7465, %v7422, 0
    %v8165 = vsel %vm7465, %v7423, 0
    %v8168 = vsel %vm7465, %v7424, 0
    %v8171 = vsel %vm7465, %v7425, 0
    %v8174 = vsel %vm7465, %v7426, 0
    %v8177 = vsel %vm7465, %v7427, 0
    %v8180 = vsel %vm7465, %v7428, 0
    %v8183 = vsel %vm7465, %v7429, 0
    %8185 = vmatprep.subr.bf16.mxu0 0
    %8186 = vmatpush1.bf16.msra.mxu0 %v8159
    %8187 = vmatprep.subr.bf16.mxu0 0
    %8188 = vmatpush1.bf16.msra.mxu0 0
    %8189 = vmatprep.subr.bf16.mxu0 0
    %8190 = vmatpush1.bf16.msra.mxu0 0
    %8191 = vmatprep.subr.bf16.mxu0 0
    %8192 = vmatpush1.bf16.msra.mxu0 0
    %8193 = vmatprep.subr.bf16.mxu0 0
    %8194 = vmatpush1.bf16.msra.mxu0 0
    %8195 = vmatprep.subr.bf16.mxu0 0
    %8196 = vmatpush1.bf16.msra.mxu0 0
    %8197 = vmatprep.subr.bf16.mxu0 0
    %8198 = vmatpush1.bf16.msra.mxu0 0
    %8199 = vmatprep.subr.bf16.mxu0 0
    %8200 = vmatpush1.bf16.msra.mxu0 0
    %8201 = vmatprep.subr.bf16.mxu0 0
    %8202 = vmatpush1.bf16.msra.mxu0 0
    %8203 = vmatprep.subr.bf16.mxu0 0
    %8204 = vmatpush1.bf16.msra.mxu0 0
    %8205 = vmatprep.subr.bf16.mxu0 0
    %8206 = vmatpush1.bf16.msra.mxu0 0
    %8207 = vmatprep.subr.bf16.mxu0 0
    %8208 = vmatpush1.bf16.msra.mxu0 0
    %8209 = vmatprep.subr.bf16.mxu0 0
    %8210 = vmatpush1.bf16.msra.mxu0 0
    %8211 = vmatprep.subr.bf16.mxu0 0
    %8212 = vmatpush1.bf16.msra.mxu0 0
    %8213 = vmatprep.subr.bf16.mxu0 0
    %8214 = vmatpush1.bf16.msra.mxu0 0
    %8215 = vmatprep.subr.bf16.mxu0 0
    %8216 = vmatpush1.bf16.msra.mxu0 0
    %8217 = vmatprep.mubr.bf16.mxu0 0
    %8218 = vmatmul.mubr.bf16.gmra.mrb[0].mxu0 %v8162
    %v8219 = vpop.f32.mrb[0].mxu0
    %v8220 = vadd.f32 0.0, %v8219
    %v8221 = vpop.f32.mrb[0].mxu0
    %v8222 = vpop.f32.mrb[0].mxu0
    %v8223 = vadd.f32 0.0, %v8222
    %v8224 = vpop.f32.mrb[0].mxu0
    %8225 = vmatprep.mubr.bf16.mxu0 0
    %8226 = vmatmul.mubr.bf16.gmra.mrb[0].mxu0 %v8165
    %v8227 = vpop.f32.mrb[0].mxu0
    %v8228 = vadd.f32 0.0, %v8227
    %v8229 = vpop.f32.mrb[0].mxu0
    %v8230 = vpop.f32.mrb[0].mxu0
    %v8231 = vadd.f32 0.0, %v8230
    %v8232 = vpop.f32.mrb[0].mxu0
    %8233 = vmatprep.mubr.bf16.mxu0 0
    %8234 = vmatmul.mubr.bf16.gmra.mrb[0].mxu0 %v8168
    %v8235 = vpop.f32.mrb[0].mxu0
    %v8236 = vadd.f32 0.0, %v8235
    %v8237 = vpop.f32.mrb[0].mxu0
    %v8238 = vpop.f32.mrb[0].mxu0
    %v8239 = vadd.f32 0.0, %v8238
    %v8240 = vpop.f32.mrb[0].mxu0
    %8241 = vmatprep.mubr.bf16.mxu0 0
    %8242 = vmatmul.mubr.bf16.gmra.mrb[0].mxu0 %v8171
    %v8243 = vpop.f32.mrb[0].mxu0
    %v8244 = vadd.f32 0.0, %v8243
    %v8245 = vpop.f32.mrb[0].mxu0
    %v8246 = vpop.f32.mrb[0].mxu0
    %v8247 = vadd.f32 0.0, %v8246
    %v8248 = vpop.f32.mrb[0].mxu0
    %8249 = vmatprep.mubr.bf16.mxu0 0
    %8250 = vmatmul.mubr.bf16.gmra.mrb[0].mxu0 %v8174
    %v8251 = vpop.f32.mrb[0].mxu0
    %v8252 = vadd.f32 0.0, %v8251
    %v8253 = vpop.f32.mrb[0].mxu0
    %v8254 = vpop.f32.mrb[0].mxu0
    %v8255 = vadd.f32 0.0, %v8254
    %v8256 = vpop.f32.mrb[0].mxu0
    %8257 = vmatprep.mubr.bf16.mxu0 0
    %8258 = vmatmul.mubr.bf16.gmra.mrb[0].mxu0 %v8177
    %v8259 = vpop.f32.mrb[0].mxu0
    %v8260 = vadd.f32 0.0, %v8259
    %v8261 = vpop.f32.mrb[0].mxu0
    %v8262 = vpop.f32.mrb[0].mxu0
    %v8263 = vadd.f32 0.0, %v8262
    %v8264 = vpop.f32.mrb[0].mxu0
    %8265 = vmatprep.mubr.bf16.mxu0 0
    %8266 = vmatmul.mubr.bf16.gmra.mrb[0].mxu0 %v8180
    %v8267 = vpop.f32.mrb[0].mxu0
    %v8268 = vadd.f32 0.0, %v8267
    %v8269 = vpop.f32.mrb[0].mxu0
    %v8270 = vpop.f32.mrb[0].mxu0
    %v8271 = vadd.f32 0.0, %v8270
    %v8272 = vpop.f32.mrb[0].mxu0
    %8273 = vmatprep.mubr.bf16.mxu0 0
    %8274 = vmatmul.mubr.bf16.gmra.mrb[0].mxu0 %v8183
    %v8275 = vpop.f32.mrb[0].mxu0
    %v8276 = vadd.f32 0.0, %v8275
    %v8277 = vpop.f32.mrb[0].mxu0
    %v8278 = vpop.f32.mrb[0].mxu0
    %v8279 = vadd.f32 0.0, %v8278
    %v8280 = vpop.f32.mrb[0].mxu0
    %8281 = vdwg.mxu0
    %v8282 = vadd.f32 %v8136, %v8220
    %v8283 = vadd.f32 %v8137, %v8223
    %v8284 = vadd.f32 %v8138, %v8228
    %v8285 = vadd.f32 %v8139, %v8231
    %v8286 = vadd.f32 %v8140, %v8236
    %v8287 = vadd.f32 %v8141, %v8239
    %v8288 = vadd.f32 %v8142, %v8244
    %v8289 = vadd.f32 %v8143, %v8247
    %v8290 = vadd.f32 %v8144, %v8252
    %v8291 = vadd.f32 %v8145, %v8255
    %v8292 = vadd.f32 %v8146, %v8260
    %v8293 = vadd.f32 %v8147, %v8263
    %v8294 = vadd.f32 %v8148, %v8268
    %v8295 = vadd.f32 %v8149, %v8271
    %v8296 = vadd.f32 %v8150, %v8276
    %v8297 = vadd.f32 %v8151, %v8279
    %s8298 = scalar_lea.vmem %s9, 48
    %v8299 = vld [vmem:[%s8298] sm:$0xf]
    %v8300 = vld [vmem:[%s8298 + $0x4] sm:$0xf]
    %v8303 = vunpack.c.l.b16 %v8299
    %v8304 = vunpack.c.l.b16 %v8300
    %v8305 = vpack.c.b16 %v8304, %v8303
    %v8308 = vsel %vm7465, %v7430, 0
    %v8311 = vsel %vm7465, %v7431, 0
    %v8314 = vsel %vm7465, %v7432, 0
    %v8317 = vsel %vm7465, %v7433, 0
    %v8320 = vsel %vm7465, %v7434, 0
    %v8323 = vsel %vm7465, %v7435, 0
    %v8326 = vsel %vm7465, %v7436, 0
    %v8329 = vsel %vm7465, %v7437, 0
    %8331 = vmatprep.subr.bf16.mxu0 0
    %8332 = vmatpush1.bf16.msra.mxu0 %v8305
    %8333 = vmatprep.subr.bf16.mxu0 0
    %8334 = vmatpush1.bf16.msra.mxu0 0
    %8335 = vmatprep.subr.bf16.mxu0 0
    %8336 = vmatpush1.bf16.msra.mxu0 0
    %8337 = vmatprep.subr.bf16.mxu0 0
    %8338 = vmatpush1.bf16.msra.mxu0 0
    %8339 = vmatprep.subr.bf16.mxu0 0
    %8340 = vmatpush1.bf16.msra.mxu0 0
    %8341 = vmatprep.subr.bf16.mxu0 0
    %8342 = vmatpush1.bf16.msra.mxu0 0
    %8343 = vmatprep.subr.bf16.mxu0 0
    %8344 = vmatpush1.bf16.msra.mxu0 0
    %8345 = vmatprep.subr.bf16.mxu0 0
    %8346 = vmatpush1.bf16.msra.mxu0 0
    %8347 = vmatprep.subr.bf16.mxu0 0
    %8348 = vmatpush1.bf16.msra.mxu0 0
    %8349 = vmatprep.subr.bf16.mxu0 0
    %8350 = vmatpush1.bf16.msra.mxu0 0
    %8351 = vmatprep.subr.bf16.mxu0 0
    %8352 = vmatpush1.bf16.msra.mxu0 0
    %8353 = vmatprep.subr.bf16.mxu0 0
    %8354 = vmatpush1.bf16.msra.mxu0 0
    %8355 = vmatprep.subr.bf16.mxu0 0
    %8356 = vmatpush1.bf16.msra.mxu0 0
    %8357 = vmatprep.subr.bf16.mxu0 0
    %8358 = vmatpush1.bf16.msra.mxu0 0
    %8359 = vmatprep.subr.bf16.mxu0 0
    %8360 = vmatpush1.bf16.msra.mxu0 0
    %8361 = vmatprep.subr.bf16.mxu0 0
    %8362 = vmatpush1.bf16.msra.mxu0 0
    %8363 = vmatprep.mubr.bf16.mxu0 0
    %8364 = vmatmul.mubr.bf16.gmra.mrb[0].mxu0 %v8308
    %v8365 = vpop.f32.mrb[0].mxu0
    %v8366 = vadd.f32 0.0, %v8365
    %v8367 = vpop.f32.mrb[0].mxu0
    %v8368 = vpop.f32.mrb[0].mxu0
    %v8369 = vadd.f32 0.0, %v8368
    %v8370 = vpop.f32.mrb[0].mxu0
    %8371 = vmatprep.mubr.bf16.mxu0 0
    %8372 = vmatmul.mubr.bf16.gmra.mrb[0].mxu0 %v8311
    %v8373 = vpop.f32.mrb[0].mxu0
    %v8374 = vadd.f32 0.0, %v8373
    %v8375 = vpop.f32.mrb[0].mxu0
    %v8376 = vpop.f32.mrb[0].mxu0
    %v8377 = vadd.f32 0.0, %v8376
    %v8378 = vpop.f32.mrb[0].mxu0
    %8379 = vmatprep.mubr.bf16.mxu0 0
    %8380 = vmatmul.mubr.bf16.gmra.mrb[0].mxu0 %v8314
    %v8381 = vpop.f32.mrb[0].mxu0
    %v8382 = vadd.f32 0.0, %v8381
    %v8383 = vpop.f32.mrb[0].mxu0
    %v8384 = vpop.f32.mrb[0].mxu0
    %v8385 = vadd.f32 0.0, %v8384
    %v8386 = vpop.f32.mrb[0].mxu0
    %8387 = vmatprep.mubr.bf16.mxu0 0
    %8388 = vmatmul.mubr.bf16.gmra.mrb[0].mxu0 %v8317
    %v8389 = vpop.f32.mrb[0].mxu0
    %v8390 = vadd.f32 0.0, %v8389
    %v8391 = vpop.f32.mrb[0].mxu0
    %v8392 = vpop.f32.mrb[0].mxu0
    %v8393 = vadd.f32 0.0, %v8392
    %v8394 = vpop.f32.mrb[0].mxu0
    %8395 = vmatprep.mubr.bf16.mxu0 0
    %8396 = vmatmul.mubr.bf16.gmra.mrb[0].mxu0 %v8320
    %v8397 = vpop.f32.mrb[0].mxu0
    %v8398 = vadd.f32 0.0, %v8397
    %v8399 = vpop.f32.mrb[0].mxu0
    %v8400 = vpop.f32.mrb[0].mxu0
    %v8401 = vadd.f32 0.0, %v8400
    %v8402 = vpop.f32.mrb[0].mxu0
    %8403 = vmatprep.mubr.bf16.mxu0 0
    %8404 = vmatmul.mubr.bf16.gmra.mrb[0].mxu0 %v8323
    %v8405 = vpop.f32.mrb[0].mxu0
    %v8406 = vadd.f32 0.0, %v8405
    %v8407 = vpop.f32.mrb[0].mxu0
    %v8408 = vpop.f32.mrb[0].mxu0
    %v8409 = vadd.f32 0.0, %v8408
    %v8410 = vpop.f32.mrb[0].mxu0
    %8411 = vmatprep.mubr.bf16.mxu0 0
    %8412 = vmatmul.mubr.bf16.gmra.mrb[0].mxu0 %v8326
    %v8413 = vpop.f32.mrb[0].mxu0
    %v8414 = vadd.f32 0.0, %v8413
    %v8415 = vpop.f32.mrb[0].mxu0
    %v8416 = vpop.f32.mrb[0].mxu0
    %v8417 = vadd.f32 0.0, %v8416
    %v8418 = vpop.f32.mrb[0].mxu0
    %8419 = vmatprep.mubr.bf16.mxu0 0
    %8420 = vmatmul.mubr.bf16.gmra.mrb[0].mxu0 %v8329
    %v8421 = vpop.f32.mrb[0].mxu0
    %v8422 = vadd.f32 0.0, %v8421
    %v8423 = vpop.f32.mrb[0].mxu0
    %v8424 = vpop.f32.mrb[0].mxu0
    %v8425 = vadd.f32 0.0, %v8424
    %v8426 = vpop.f32.mrb[0].mxu0
    %8427 = vdwg.mxu0
    %v8428 = vadd.f32 %v8282, %v8366
    %v8429 = vadd.f32 %v8283, %v8369
    %v8430 = vadd.f32 %v8284, %v8374
    %v8431 = vadd.f32 %v8285, %v8377
    %v8432 = vadd.f32 %v8286, %v8382
    %v8433 = vadd.f32 %v8287, %v8385
    %v8434 = vadd.f32 %v8288, %v8390
    %v8435 = vadd.f32 %v8289, %v8393
    %v8436 = vadd.f32 %v8290, %v8398
    %v8437 = vadd.f32 %v8291, %v8401
    %v8438 = vadd.f32 %v8292, %v8406
    %v8439 = vadd.f32 %v8293, %v8409
    %v8440 = vadd.f32 %v8294, %v8414
    %v8441 = vadd.f32 %v8295, %v8417
    %v8442 = vadd.f32 %v8296, %v8422
    %v8443 = vadd.f32 %v8297, %v8425
    %s8444 = scalar_lea.vmem %s9, 56
    %v8445 = vld [vmem:[%s8444] sm:$0xf]
    %v8446 = vld [vmem:[%s8444 + $0x4] sm:$0xf]
    %v8449 = vunpack.c.l.b16 %v8445
    %v8450 = vunpack.c.l.b16 %v8446
    %v8451 = vpack.c.b16 %v8450, %v8449
    %v8454 = vsel %vm7465, %v7438, 0
    %v8457 = vsel %vm7465, %v7439, 0
    %v8460 = vsel %vm7465, %v7440, 0
    %v8463 = vsel %vm7465, %v7441, 0
    %v8466 = vsel %vm7465, %v7442, 0
    %v8469 = vsel %vm7465, %v7443, 0
    %v8472 = vsel %vm7465, %v7444, 0
    %v8475 = vsel %vm7465, %v7445, 0
    %8477 = vmatprep.subr.bf16.mxu0 0
    %8478 = vmatpush1.bf16.msra.mxu0 %v8451
    %8479 = vmatprep.subr.bf16.mxu0 0
    %8480 = vmatpush1.bf16.msra.mxu0 0
    %8481 = vmatprep.subr.bf16.mxu0 0
    %8482 = vmatpush1.bf16.msra.mxu0 0
    %8483 = vmatprep.subr.bf16.mxu0 0
    %8484 = vmatpush1.bf16.msra.mxu0 0
    %8485 = vmatprep.subr.bf16.mxu0 0
    %8486 = vmatpush1.bf16.msra.mxu0 0
    %8487 = vmatprep.subr.bf16.mxu0 0
    %8488 = vmatpush1.bf16.msra.mxu0 0
    %8489 = vmatprep.subr.bf16.mxu0 0
    %8490 = vmatpush1.bf16.msra.mxu0 0
    %8491 = vmatprep.subr.bf16.mxu0 0
    %8492 = vmatpush1.bf16.msra.mxu0 0
    %8493 = vmatprep.subr.bf16.mxu0 0
    %8494 = vmatpush1.bf16.msra.mxu0 0
    %8495 = vmatprep.subr.bf16.mxu0 0
    %8496 = vmatpush1.bf16.msra.mxu0 0
    %8497 = vmatprep.subr.bf16.mxu0 0
    %8498 = vmatpush1.bf16.msra.mxu0 0
    %8499 = vmatprep.subr.bf16.mxu0 0
    %8500 = vmatpush1.bf16.msra.mxu0 0
    %8501 = vmatprep.subr.bf16.mxu0 0
    %8502 = vmatpush1.bf16.msra.mxu0 0
    %8503 = vmatprep.subr.bf16.mxu0 0
    %8504 = vmatpush1.bf16.msra.mxu0 0
    %8505 = vmatprep.subr.bf16.mxu0 0
    %8506 = vmatpush1.bf16.msra.mxu0 0
    %8507 = vmatprep.subr.bf16.mxu0 0
    %8508 = vmatpush1.bf16.msra.mxu0 0
    %8509 = vmatprep.mubr.bf16.mxu0 0
    %8510 = vmatmul.mubr.bf16.gmra.mrb[0].mxu0 %v8454
    %v8511 = vpop.f32.mrb[0].mxu0
    %v8512 = vadd.f32 0.0, %v8511
    %v8513 = vpop.f32.mrb[0].mxu0
    %v8514 = vpop.f32.mrb[0].mxu0
    %v8515 = vadd.f32 0.0, %v8514
    %v8516 = vpop.f32.mrb[0].mxu0
    %8517 = vmatprep.mubr.bf16.mxu0 0
    %8518 = vmatmul.mubr.bf16.gmra.mrb[0].mxu0 %v8457
    %v8519 = vpop.f32.mrb[0].mxu0
    %v8520 = vadd.f32 0.0, %v8519
    %v8521 = vpop.f32.mrb[0].mxu0
    %v8522 = vpop.f32.mrb[0].mxu0
    %v8523 = vadd.f32 0.0, %v8522
    %v8524 = vpop.f32.mrb[0].mxu0
    %8525 = vmatprep.mubr.bf16.mxu0 0
    %8526 = vmatmul.mubr.bf16.gmra.mrb[0].mxu0 %v8460
    %v8527 = vpop.f32.mrb[0].mxu0
    %v8528 = vadd.f32 0.0, %v8527
    %v8529 = vpop.f32.mrb[0].mxu0
    %v8530 = vpop.f32.mrb[0].mxu0
    %v8531 = vadd.f32 0.0, %v8530
    %v8532 = vpop.f32.mrb[0].mxu0
    %8533 = vmatprep.mubr.bf16.mxu0 0
    %8534 = vmatmul.mubr.bf16.gmra.mrb[0].mxu0 %v8463
    %v8535 = vpop.f32.mrb[0].mxu0
    %v8536 = vadd.f32 0.0, %v8535
    %v8537 = vpop.f32.mrb[0].mxu0
    %v8538 = vpop.f32.mrb[0].mxu0
    %v8539 = vadd.f32 0.0, %v8538
    %v8540 = vpop.f32.mrb[0].mxu0
    %8541 = vmatprep.mubr.bf16.mxu0 0
    %8542 = vmatmul.mubr.bf16.gmra.mrb[0].mxu0 %v8466
    %v8543 = vpop.f32.mrb[0].mxu0
    %v8544 = vadd.f32 0.0, %v8543
    %v8545 = vpop.f32.mrb[0].mxu0
    %v8546 = vpop.f32.mrb[0].mxu0
    %v8547 = vadd.f32 0.0, %v8546
    %v8548 = vpop.f32.mrb[0].mxu0
    %8549 = vmatprep.mubr.bf16.mxu0 0
    %8550 = vmatmul.mubr.bf16.gmra.mrb[0].mxu0 %v8469
    %v8551 = vpop.f32.mrb[0].mxu0
    %v8552 = vadd.f32 0.0, %v8551
    %v8553 = vpop.f32.mrb[0].mxu0
    %v8554 = vpop.f32.mrb[0].mxu0
    %v8555 = vadd.f32 0.0, %v8554
    %v8556 = vpop.f32.mrb[0].mxu0
    %8557 = vmatprep.mubr.bf16.mxu0 0
    %8558 = vmatmul.mubr.bf16.gmra.mrb[0].mxu0 %v8472
    %v8559 = vpop.f32.mrb[0].mxu0
    %v8560 = vadd.f32 0.0, %v8559
    %v8561 = vpop.f32.mrb[0].mxu0
    %v8562 = vpop.f32.mrb[0].mxu0
    %v8563 = vadd.f32 0.0, %v8562
    %v8564 = vpop.f32.mrb[0].mxu0
    %8565 = vmatprep.mubr.bf16.mxu0 0
    %8566 = vmatmul.mubr.bf16.gmra.mrb[0].mxu0 %v8475
    %v8567 = vpop.f32.mrb[0].mxu0
    %v8568 = vadd.f32 0.0, %v8567
    %v8569 = vpop.f32.mrb[0].mxu0
    %v8570 = vpop.f32.mrb[0].mxu0
    %v8571 = vadd.f32 0.0, %v8570
    %v8572 = vpop.f32.mrb[0].mxu0
    %8573 = vdwg.mxu0
    %v8574 = vadd.f32 %v8428, %v8512
    %v8575 = vadd.f32 %v8429, %v8515
    %v8576 = vadd.f32 %v8430, %v8520
    %v8577 = vadd.f32 %v8431, %v8523
    %v8578 = vadd.f32 %v8432, %v8528
    %v8579 = vadd.f32 %v8433, %v8531
    %v8580 = vadd.f32 %v8434, %v8536
    %v8581 = vadd.f32 %v8435, %v8539
    %v8582 = vadd.f32 %v8436, %v8544
    %v8583 = vadd.f32 %v8437, %v8547
    %v8584 = vadd.f32 %v8438, %v8552
    %v8585 = vadd.f32 %v8439, %v8555
    %v8586 = vadd.f32 %v8440, %v8560
    %v8587 = vadd.f32 %v8441, %v8563
    %v8588 = vadd.f32 %v8442, %v8568
    %v8589 = vadd.f32 %v8443, %v8571
    %s8590 = scalar_lea.vmem %s9, 64
    %v8591 = vld [vmem:[%s8590] sm:$0xf]
    %v8592 = vld [vmem:[%s8590 + $0x4] sm:$0xf]
    %v8595 = vunpack.c.l.b16 %v8591
    %v8596 = vunpack.c.l.b16 %v8592
    %v8597 = vpack.c.b16 %v8596, %v8595
    %v8600 = vsel %vm7465, %v7446, 0
    %v8603 = vsel %vm7465, %v7447, 0
    %v8606 = vsel %vm7465, %v7448, 0
    %v8609 = vsel %vm7465, %v7449, 0
    %v8612 = vsel %vm7465, %v7450, 0
    %v8615 = vsel %vm7465, %v7451, 0
    %v8618 = vsel %vm7465, %v7452, 0
    %v8621 = vsel %vm7465, %v7453, 0
    %8623 = vmatprep.subr.bf16.mxu0 0
    %8624 = vmatpush1.bf16.msra.mxu0 %v8597
    %8625 = vmatprep.subr.bf16.mxu0 0
    %8626 = vmatpush1.bf16.msra.mxu0 0
    %8627 = vmatprep.subr.bf16.mxu0 0
    %8628 = vmatpush1.bf16.msra.mxu0 0
    %8629 = vmatprep.subr.bf16.mxu0 0
    %8630 = vmatpush1.bf16.msra.mxu0 0
    %8631 = vmatprep.subr.bf16.mxu0 0
    %8632 = vmatpush1.bf16.msra.mxu0 0
    %8633 = vmatprep.subr.bf16.mxu0 0
    %8634 = vmatpush1.bf16.msra.mxu0 0
    %8635 = vmatprep.subr.bf16.mxu0 0
    %8636 = vmatpush1.bf16.msra.mxu0 0
    %8637 = vmatprep.subr.bf16.mxu0 0
    %8638 = vmatpush1.bf16.msra.mxu0 0
    %8639 = vmatprep.subr.bf16.mxu0 0
    %8640 = vmatpush1.bf16.msra.mxu0 0
    %8641 = vmatprep.subr.bf16.mxu0 0
    %8642 = vmatpush1.bf16.msra.mxu0 0
    %8643 = vmatprep.subr.bf16.mxu0 0
    %8644 = vmatpush1.bf16.msra.mxu0 0
    %8645 = vmatprep.subr.bf16.mxu0 0
    %8646 = vmatpush1.bf16.msra.mxu0 0
    %8647 = vmatprep.subr.bf16.mxu0 0
    %8648 = vmatpush1.bf16.msra.mxu0 0
    %8649 = vmatprep.subr.bf16.mxu0 0
    %8650 = vmatpush1.bf16.msra.mxu0 0
    %8651 = vmatprep.subr.bf16.mxu0 0
    %8652 = vmatpush1.bf16.msra.mxu0 0
    %8653 = vmatprep.subr.bf16.mxu0 0
    %8654 = vmatpush1.bf16.msra.mxu0 0
    %8655 = vmatprep.mubr.bf16.mxu0 0
    %8656 = vmatmul.mubr.bf16.gmra.mrb[0].mxu0 %v8600
    %v8657 = vpop.f32.mrb[0].mxu0
    %v8658 = vadd.f32 0.0, %v8657
    %v8659 = vpop.f32.mrb[0].mxu0
    %v8660 = vpop.f32.mrb[0].mxu0
    %v8661 = vadd.f32 0.0, %v8660
    %v8662 = vpop.f32.mrb[0].mxu0
    %8663 = vmatprep.mubr.bf16.mxu0 0
    %8664 = vmatmul.mubr.bf16.gmra.mrb[0].mxu0 %v8603
    %v8665 = vpop.f32.mrb[0].mxu0
    %v8666 = vadd.f32 0.0, %v8665
    %v8667 = vpop.f32.mrb[0].mxu0
    %v8668 = vpop.f32.mrb[0].mxu0
    %v8669 = vadd.f32 0.0, %v8668
    %v8670 = vpop.f32.mrb[0].mxu0
    %8671 = vmatprep.mubr.bf16.mxu0 0
    %8672 = vmatmul.mubr.bf16.gmra.mrb[0].mxu0 %v8606
    %v8673 = vpop.f32.mrb[0].mxu0
    %v8674 = vadd.f32 0.0, %v8673
    %v8675 = vpop.f32.mrb[0].mxu0
    %v8676 = vpop.f32.mrb[0].mxu0
    %v8677 = vadd.f32 0.0, %v8676
    %v8678 = vpop.f32.mrb[0].mxu0
    %8679 = vmatprep.mubr.bf16.mxu0 0
    %8680 = vmatmul.mubr.bf16.gmra.mrb[0].mxu0 %v8609
    %v8681 = vpop.f32.mrb[0].mxu0
    %v8682 = vadd.f32 0.0, %v8681
    %v8683 = vpop.f32.mrb[0].mxu0
    %v8684 = vpop.f32.mrb[0].mxu0
    %v8685 = vadd.f32 0.0, %v8684
    %v8686 = vpop.f32.mrb[0].mxu0
    %8687 = vmatprep.mubr.bf16.mxu0 0
    %8688 = vmatmul.mubr.bf16.gmra.mrb[0].mxu0 %v8612
    %v8689 = vpop.f32.mrb[0].mxu0
    %v8690 = vadd.f32 0.0, %v8689
    %v8691 = vpop.f32.mrb[0].mxu0
    %v8692 = vpop.f32.mrb[0].mxu0
    %v8693 = vadd.f32 0.0, %v8692
    %v8694 = vpop.f32.mrb[0].mxu0
    %8695 = vmatprep.mubr.bf16.mxu0 0
    %8696 = vmatmul.mubr.bf16.gmra.mrb[0].mxu0 %v8615
    %v8697 = vpop.f32.mrb[0].mxu0
    %v8698 = vadd.f32 0.0, %v8697
    %v8699 = vpop.f32.mrb[0].mxu0
    %v8700 = vpop.f32.mrb[0].mxu0
    %v8701 = vadd.f32 0.0, %v8700
    %v8702 = vpop.f32.mrb[0].mxu0
    %8703 = vmatprep.mubr.bf16.mxu0 0
    %8704 = vmatmul.mubr.bf16.gmra.mrb[0].mxu0 %v8618
    %v8705 = vpop.f32.mrb[0].mxu0
    %v8706 = vadd.f32 0.0, %v8705
    %v8707 = vpop.f32.mrb[0].mxu0
    %v8708 = vpop.f32.mrb[0].mxu0
    %v8709 = vadd.f32 0.0, %v8708
    %v8710 = vpop.f32.mrb[0].mxu0
    %8711 = vmatprep.mubr.bf16.mxu0 0
    %8712 = vmatmul.mubr.bf16.gmra.mrb[0].mxu0 %v8621
    %v8713 = vpop.f32.mrb[0].mxu0
    %v8714 = vadd.f32 0.0, %v8713
    %v8715 = vpop.f32.mrb[0].mxu0
    %v8716 = vpop.f32.mrb[0].mxu0
    %v8717 = vadd.f32 0.0, %v8716
    %v8718 = vpop.f32.mrb[0].mxu0
    %8719 = vdwg.mxu0
    %v8720 = vadd.f32 %v8574, %v8658
    %v8721 = vadd.f32 %v8575, %v8661
    %v8722 = vadd.f32 %v8576, %v8666
    %v8723 = vadd.f32 %v8577, %v8669
    %v8724 = vadd.f32 %v8578, %v8674
    %v8725 = vadd.f32 %v8579, %v8677
    %v8726 = vadd.f32 %v8580, %v8682
    %v8727 = vadd.f32 %v8581, %v8685
    %v8728 = vadd.f32 %v8582, %v8690
    %v8729 = vadd.f32 %v8583, %v8693
    %v8730 = vadd.f32 %v8584, %v8698
    %v8731 = vadd.f32 %v8585, %v8701
    %v8732 = vadd.f32 %v8586, %v8706
    %v8733 = vadd.f32 %v8587, %v8709
    %v8734 = vadd.f32 %v8588, %v8714
    %v8735 = vadd.f32 %v8589, %v8717
    %v8736 = vld [vmem:[%s10] sm:$0x1]
    %v8737 = vld [vmem:[%s11] sm:$0x1]
    %v8738 = vsel %vm7465, %v8720, 0.0
    %v8739 = vsel %vm7465, %v8721, 0.0
    %v8740 = vadd.f32 %v8738, %v8739
    %v8741 = vsel %vm7465, %v8722, 0.0
    %v8742 = vadd.f32 %v8740, %v8741
    %v8743 = vsel %vm7465, %v8723, 0.0
    %v8744 = vadd.f32 %v8742, %v8743
    %v8745 = vsel %vm7465, %v8724, 0.0
    %v8746 = vadd.f32 %v8744, %v8745
    %v8747 = vsel %vm7465, %v8725, 0.0
    %v8748 = vadd.f32 %v8746, %v8747
    %v8749 = vsel %vm7465, %v8726, 0.0
    %v8750 = vadd.f32 %v8748, %v8749
    %v8751 = vsel %vm7465, %v8727, 0.0
    %v8752 = vadd.f32 %v8750, %v8751
    %v8753 = vsel %vm7465, %v8728, 0.0
    %v8754 = vadd.f32 %v8752, %v8753
    %v8755 = vsel %vm7465, %v8729, 0.0
    %v8756 = vadd.f32 %v8754, %v8755
    %v8757 = vsel %vm7465, %v8730, 0.0
    %v8758 = vadd.f32 %v8756, %v8757
    %v8759 = vsel %vm7465, %v8731, 0.0
    %v8760 = vadd.f32 %v8758, %v8759
    %v8761 = vsel %vm7465, %v8732, 0.0
    %v8762 = vadd.f32 %v8760, %v8761
    %v8763 = vsel %vm7465, %v8733, 0.0
    %v8764 = vadd.f32 %v8762, %v8763
    %v8765 = vsel %vm7465, %v8734, 0.0
    %v8766 = vadd.f32 %v8764, %v8765
    %v8767 = vsel %vm7465, %v8735, 0.0
    %v8768 = vadd.f32 %v8766, %v8767
    %v8769 = vrot.slane %v8768, 4
    %v8770 = vadd.f32 %v8768, %v8769
    %v8771 = vrot.slane %v8770, 2
    %v8772 = vadd.f32 %v8770, %v8771
    %v8773 = vrot.slane %v8772, 1
    %v8774 = vadd.f32 %v8772, %v8773
    %v8775 = vmul.f32 %v8774, %v5681
    %v8776 = vmul.f32 %v8720, %v8720
    %v8777 = vmul.f32 %v8721, %v8721
    %v8778 = vmul.f32 %v8722, %v8722
    %v8779 = vmul.f32 %v8723, %v8723
    %v8780 = vmul.f32 %v8724, %v8724
    %v8781 = vmul.f32 %v8725, %v8725
    %v8782 = vmul.f32 %v8726, %v8726
    %v8783 = vmul.f32 %v8727, %v8727
    %v8784 = vmul.f32 %v8728, %v8728
    %v8785 = vmul.f32 %v8729, %v8729
    %v8786 = vmul.f32 %v8730, %v8730
    %v8787 = vmul.f32 %v8731, %v8731
    %v8788 = vmul.f32 %v8732, %v8732
    %v8789 = vmul.f32 %v8733, %v8733
    %v8790 = vmul.f32 %v8734, %v8734
    %v8791 = vmul.f32 %v8735, %v8735
    %v8792 = vsel %vm7465, %v8776, 0.0
    %v8793 = vsel %vm7465, %v8777, 0.0
    %v8794 = vadd.f32 %v8792, %v8793
    %v8795 = vsel %vm7465, %v8778, 0.0
    %v8796 = vadd.f32 %v8794, %v8795
    %v8797 = vsel %vm7465, %v8779, 0.0
    %v8798 = vadd.f32 %v8796, %v8797
    %v8799 = vsel %vm7465, %v8780, 0.0
    %v8800 = vadd.f32 %v8798, %v8799
    %v8801 = vsel %vm7465, %v8781, 0.0
    %v8802 = vadd.f32 %v8800, %v8801
    %v8803 = vsel %vm7465, %v8782, 0.0
    %v8804 = vadd.f32 %v8802, %v8803
    %v8805 = vsel %vm7465, %v8783, 0.0
    %v8806 = vadd.f32 %v8804, %v8805
    %v8807 = vsel %vm7465, %v8784, 0.0
    %v8808 = vadd.f32 %v8806, %v8807
    %v8809 = vsel %vm7465, %v8785, 0.0
    %v8810 = vadd.f32 %v8808, %v8809
    %v8811 = vsel %vm7465, %v8786, 0.0
    %v8812 = vadd.f32 %v8810, %v8811
    %v8813 = vsel %vm7465, %v8787, 0.0
    %v8814 = vadd.f32 %v8812, %v8813
    %v8815 = vsel %vm7465, %v8788, 0.0
    %v8816 = vadd.f32 %v8814, %v8815
    %v8817 = vsel %vm7465, %v8789, 0.0
    %v8818 = vadd.f32 %v8816, %v8817
    %v8819 = vsel %vm7465, %v8790, 0.0
    %v8820 = vadd.f32 %v8818, %v8819
    %v8821 = vsel %vm7465, %v8791, 0.0
    %v8822 = vadd.f32 %v8820, %v8821
    %v8823 = vrot.slane %v8822, 4
    %v8824 = vadd.f32 %v8822, %v8823
    %v8825 = vrot.slane %v8824, 2
    %v8826 = vadd.f32 %v8824, %v8825
    %v8827 = vrot.slane %v8826, 1
    %v8828 = vadd.f32 %v8826, %v8827
    %v8829 = vmul.f32 %v8828, %v5681
    %v8830 = vmul.f32 %v8775, %v8775
    %v8831 = vsub.f32 %v8829, %v8830
    %v8832 = vmax.f32 %v8831, 0.0
    %v8833 = vsub.f32 %v8720, %v8775
    %v8834 = vsub.f32 %v8721, %v8775
    %v8835 = vsub.f32 %v8722, %v8775
    %v8836 = vsub.f32 %v8723, %v8775
    %v8837 = vsub.f32 %v8724, %v8775
    %v8838 = vsub.f32 %v8725, %v8775
    %v8839 = vsub.f32 %v8726, %v8775
    %v8840 = vsub.f32 %v8727, %v8775
    %v8841 = vsub.f32 %v8728, %v8775
    %v8842 = vsub.f32 %v8729, %v8775
    %v8843 = vsub.f32 %v8730, %v8775
    %v8844 = vsub.f32 %v8731, %v8775
    %v8845 = vsub.f32 %v8732, %v8775
    %v8846 = vsub.f32 %v8733, %v8775
    %v8847 = vsub.f32 %v8734, %v8775
    %v8848 = vsub.f32 %v8735, %v8775
    %v8849 = vadd.f32 %v8832, 1e-05
    %v8850 = vrsqrt.pop %v8849
    %v8851 = vmul.f32 %v8736, %v8850
    %v8853 = vlaneseq
    %v8854 = vshrl.u32 %v8853, 7
    %v8855 = vsub.s32 0, %v8854
    %v8856 = vrot.slane %v8851, %v8855
    %v8858 = vmul.f32 %v8833, %v8856
    %v8859 = vmul.f32 %v8834, %v8856
    %v8860 = vmul.f32 %v8835, %v8856
    %v8861 = vmul.f32 %v8836, %v8856
    %v8862 = vmul.f32 %v8837, %v8856
    %v8863 = vmul.f32 %v8838, %v8856
    %v8864 = vmul.f32 %v8839, %v8856
    %v8865 = vmul.f32 %v8840, %v8856
    %v8866 = vmul.f32 %v8841, %v8856
    %v8867 = vmul.f32 %v8842, %v8856
    %v8868 = vmul.f32 %v8843, %v8856
    %v8869 = vmul.f32 %v8844, %v8856
    %v8870 = vmul.f32 %v8845, %v8856
    %v8871 = vmul.f32 %v8846, %v8856
    %v8872 = vmul.f32 %v8847, %v8856
    %v8873 = vmul.f32 %v8848, %v8856
    %v8875 = vlaneseq
    %v8876 = vshrl.u32 %v8875, 7
    %v8877 = vsub.s32 0, %v8876
    %v8878 = vrot.slane %v8737, %v8877
    %v8880 = vadd.f32 %v8858, %v8878
    %v8881 = vadd.f32 %v8859, %v8878
    %v8882 = vadd.f32 %v8860, %v8878
    %v8883 = vadd.f32 %v8861, %v8878
    %v8884 = vadd.f32 %v8862, %v8878
    %v8885 = vadd.f32 %v8863, %v8878
    %v8886 = vadd.f32 %v8864, %v8878
    %v8887 = vadd.f32 %v8865, %v8878
    %v8888 = vadd.f32 %v8866, %v8878
    %v8889 = vadd.f32 %v8867, %v8878
    %v8890 = vadd.f32 %v8868, %v8878
    %v8891 = vadd.f32 %v8869, %v8878
    %v8892 = vadd.f32 %v8870, %v8878
    %v8893 = vadd.f32 %v8871, %v8878
    %v8894 = vadd.f32 %v8872, %v8878
    %v8895 = vadd.f32 %v8873, %v8878
    %v8896 = vadd.f32 %v8880, %v6095
    %v8897 = vadd.f32 %v8881, %v6100
    %v8898 = vadd.f32 %v8882, %v6105
    %v8899 = vadd.f32 %v8883, %v6110
    %v8900 = vadd.f32 %v8884, %v6115
    %v8901 = vadd.f32 %v8885, %v6120
    %v8902 = vadd.f32 %v8886, %v6125
    %v8903 = vadd.f32 %v8887, %v6130
    %v8904 = vadd.f32 %v8888, %v6135
    %v8905 = vadd.f32 %v8889, %v6140
    %v8906 = vadd.f32 %v8890, %v6145
    %v8907 = vadd.f32 %v8891, %v6150
    %v8908 = vadd.f32 %v8892, %v6155
    %v8909 = vadd.f32 %v8893, %v6160
    %v8910 = vadd.f32 %v8894, %v6165
    %v8911 = vadd.f32 %v8895, %v6170
    %v8912 = vmax.f32 %v8896, 0.0
    %v8913 = vmax.f32 %v8897, 0.0
    %v8914 = vmax.f32 %v8898, 0.0
    %v8915 = vmax.f32 %v8899, 0.0
    %v8916 = vmax.f32 %v8900, 0.0
    %v8917 = vmax.f32 %v8901, 0.0
    %v8918 = vmax.f32 %v8902, 0.0
    %v8919 = vmax.f32 %v8903, 0.0
    %v8920 = vmax.f32 %v8904, 0.0
    %v8921 = vmax.f32 %v8905, 0.0
    %v8922 = vmax.f32 %v8906, 0.0
    %v8923 = vmax.f32 %v8907, 0.0
    %v8924 = vmax.f32 %v8908, 0.0
    %v8925 = vmax.f32 %v8909, 0.0
    %v8926 = vmax.f32 %v8910, 0.0
    %v8927 = vmax.f32 %v8911, 0.0
    %v8928 = vld [vmem:[%s12] sm:$0xf]
    %v8929 = vld [vmem:[%s12 + $0x4] sm:$0xf]
    %v8930 = vld [vmem:[%s12 + $0x8] sm:$0xf]
    %v8931 = vld [vmem:[%s12 + $0xc] sm:$0xf]
    %v8932 = vld [vmem:[%s12 + $0x10] sm:$0xf]
    %v8933 = vld [vmem:[%s12 + $0x14] sm:$0xf]
    %v8934 = vld [vmem:[%s12 + $0x18] sm:$0xf]
    %v8935 = vld [vmem:[%s12 + $0x1c] sm:$0xf]
    %v8936 = vld [vmem:[%s12 + $0x20] sm:$0xf]
    %v8937 = vld [vmem:[%s12 + $0x24] sm:$0xf]
    %v8938 = vld [vmem:[%s12 + $0x28] sm:$0xf]
    %v8939 = vld [vmem:[%s12 + $0x2c] sm:$0xf]
    %v8940 = vld [vmem:[%s12 + $0x30] sm:$0xf]
    %v8941 = vld [vmem:[%s12 + $0x34] sm:$0xf]
    %v8942 = vld [vmem:[%s12 + $0x38] sm:$0xf]
    %v8943 = vld [vmem:[%s12 + $0x3c] sm:$0xf]
    %v8944 = vld [vmem:[%s12 + $0x40] sm:$0xf]
    %v8945 = vld [vmem:[%s12 + $0x44] sm:$0xf]
    %v8946 = vld [vmem:[%s12 + $0x48] sm:$0xf]
    %v8947 = vld [vmem:[%s12 + $0x4c] sm:$0xf]
    %v8948 = vld [vmem:[%s12 + $0x50] sm:$0xf]
    %v8949 = vld [vmem:[%s12 + $0x54] sm:$0xf]
    %v8950 = vld [vmem:[%s12 + $0x58] sm:$0xf]
    %v8951 = vld [vmem:[%s12 + $0x5c] sm:$0xf]
    %v8952 = vld [vmem:[%s12 + $0x60] sm:$0xf]
    %v8953 = vld [vmem:[%s12 + $0x64] sm:$0xf]
    %v8954 = vld [vmem:[%s12 + $0x68] sm:$0xf]
    %v8955 = vld [vmem:[%s12 + $0x6c] sm:$0xf]
    %v8956 = vld [vmem:[%s12 + $0x70] sm:$0xf]
    %v8957 = vld [vmem:[%s12 + $0x74] sm:$0xf]
    %v8958 = vld [vmem:[%s12 + $0x78] sm:$0xf]
    %v8959 = vld [vmem:[%s12 + $0x7c] sm:$0xf]
    %v8960 = vld [vmem:[%s12 + $0x80] sm:$0xf]
    %v8961 = vld [vmem:[%s12 + $0x84] sm:$0xf]
    %v8962 = vld [vmem:[%s12 + $0x88] sm:$0xf]
    %v8963 = vld [vmem:[%s12 + $0x8c] sm:$0xf]
    %v8964 = vpack.c.bf16 %v8913, %v8912
    %v8965 = vpack.c.bf16 %v8915, %v8914
    %v8966 = vpack.c.bf16 %v8917, %v8916
    %v8967 = vpack.c.bf16 %v8919, %v8918
    %v8968 = vpack.c.bf16 %v8921, %v8920
    %v8969 = vpack.c.bf16 %v8923, %v8922
    %v8970 = vpack.c.bf16 %v8925, %v8924
    %v8971 = vpack.c.bf16 %v8927, %v8926
    %v9008 = vunpack.c.l.b16 %v8928
    %v9009 = vunpack.c.l.b16 %v8929
    %v9010 = vunpack.c.l.b16 %v8930
    %v9011 = vunpack.c.l.b16 %v8931
    %v9012 = vunpack.c.l.b16 %v8932
    %v9013 = vunpack.c.l.b16 %v8933
    %v9014 = vunpack.c.l.b16 %v8934
    %v9015 = vunpack.c.l.b16 %v8935
    %v9016 = vunpack.c.l.b16 %v8936
    %v9017 = vunpack.c.l.b16 %v8937
    %v9018 = vunpack.c.l.b16 %v8938
    %v9019 = vunpack.c.l.b16 %v8939
    %v9020 = vunpack.c.l.b16 %v8940
    %v9021 = vunpack.c.l.b16 %v8941
    %v9022 = vunpack.c.l.b16 %v8942
    %v9023 = vunpack.c.l.b16 %v8943
    %v9024 = vunpack.c.l.b16 %v8944
    %v9025 = vunpack.c.l.b16 %v8945
    %v9026 = vunpack.c.l.b16 %v8946
    %v9027 = vunpack.c.l.b16 %v8947
    %v9028 = vunpack.c.l.b16 %v8948
    %v9029 = vunpack.c.l.b16 %v8949
    %v9030 = vunpack.c.l.b16 %v8950
    %v9031 = vunpack.c.l.b16 %v8951
    %v9032 = vunpack.c.l.b16 %v8952
    %v9033 = vunpack.c.l.b16 %v8953
    %v9034 = vunpack.c.l.b16 %v8954
    %v9035 = vunpack.c.l.b16 %v8955
    %v9036 = vunpack.c.l.b16 %v8956
    %v9037 = vunpack.c.l.b16 %v8957
    %v9038 = vunpack.c.l.b16 %v8958
    %v9039 = vunpack.c.l.b16 %v8959
    %v9040 = vunpack.c.l.b16 %v8960
    %v9041 = vunpack.c.l.b16 %v8961
    %v9042 = vunpack.c.l.b16 %v8962
    %v9043 = vunpack.c.l.b16 %v8963
    %v9044 = vpack.c.b16 %v9009, %v9008
    %v9045 = vpack.c.b16 %v9011, %v9010
    %v9046 = vpack.c.b16 %v9013, %v9012
    %v9047 = vpack.c.b16 %v9015, %v9014
    %v9048 = vpack.c.b16 %v9017, %v9016
    %v9049 = vpack.c.b16 %v9019, %v9018
    %v9050 = vpack.c.b16 %v9021, %v9020
    %v9051 = vpack.c.b16 %v9023, %v9022
    %v9052 = vpack.c.b16 %v9025, %v9024
    %v9053 = vpack.c.b16 %v9027, %v9026
    %v9054 = vpack.c.b16 %v9029, %v9028
    %v9055 = vpack.c.b16 %v9031, %v9030
    %v9056 = vpack.c.b16 %v9033, %v9032
    %v9057 = vpack.c.b16 %v9035, %v9034
    %v9058 = vpack.c.b16 %v9037, %v9036
    %v9059 = vpack.c.b16 %v9039, %v9038
    %v9060 = vpack.c.b16 %v9041, %v9040
    %v9061 = vpack.c.b16 %v9043, %v9042
    %9080 = vmatprep.subr.bf16.mxu0 0
    %9081 = vmatpush1.bf16.msra.mxu0 %v8964
    %9082 = vmatprep.subr.bf16.mxu0 0
    %9083 = vmatpush1.bf16.msra.mxu0 %v8965
    %9084 = vmatprep.subr.bf16.mxu0 0
    %9085 = vmatpush1.bf16.msra.mxu0 %v8966
    %9086 = vmatprep.subr.bf16.mxu0 0
    %9087 = vmatpush1.bf16.msra.mxu0 %v8967
    %9088 = vmatprep.subr.bf16.mxu0 0
    %9089 = vmatpush1.bf16.msra.mxu0 %v8968
    %9090 = vmatprep.subr.bf16.mxu0 0
    %9091 = vmatpush1.bf16.msra.mxu0 %v8969
    %9092 = vmatprep.subr.bf16.mxu0 0
    %9093 = vmatpush1.bf16.msra.mxu0 %v8970
    %9094 = vmatprep.subr.bf16.mxu0 0
    %9095 = vmatpush1.bf16.msra.mxu0 %v8971
    %9096 = vmatprep.subr.bf16.mxu0 0
    %9097 = vmatpush1.bf16.msra.mxu0 0
    %9098 = vmatprep.subr.bf16.mxu0 0
    %9099 = vmatpush1.bf16.msra.mxu0 0
    %9100 = vmatprep.subr.bf16.mxu0 0
    %9101 = vmatpush1.bf16.msra.mxu0 0
    %9102 = vmatprep.subr.bf16.mxu0 0
    %9103 = vmatpush1.bf16.msra.mxu0 0
    %9104 = vmatprep.subr.bf16.mxu0 0
    %9105 = vmatpush1.bf16.msra.mxu0 0
    %9106 = vmatprep.subr.bf16.mxu0 0
    %9107 = vmatpush1.bf16.msra.mxu0 0
    %9108 = vmatprep.subr.bf16.mxu0 0
    %9109 = vmatpush1.bf16.msra.mxu0 0
    %9110 = vmatprep.subr.bf16.mxu0 0
    %9111 = vmatpush1.bf16.msra.mxu0 0
    %9112 = vmatprep.mubr.bf16.mxu0 0
    %9113 = vmatmul.mubr.bf16.gmra.mrb[0].mxu0 %v9044
    %v9114 = vpop.f32.mrb[0].mxu0
    %v9115 = vadd.f32 0.0, %v9114
    %v9116 = vpop.f32.mrb[0].mxu0
    %v9117 = vpop.f32.mrb[0].mxu0
    %v9118 = vadd.f32 0.0, %v9117
    %v9119 = vpop.f32.mrb[0].mxu0
    %9120 = vmatprep.mubr.bf16.mxu0 0
    %9121 = vmatmul.mubr.bf16.gmra.mrb[0].mxu0 %v9045
    %v9122 = vpop.f32.mrb[0].mxu0
    %v9123 = vadd.f32 0.0, %v9122
    %v9124 = vpop.f32.mrb[0].mxu0
    %v9125 = vpop.f32.mrb[0].mxu0
    %v9126 = vadd.f32 0.0, %v9125
    %v9127 = vpop.f32.mrb[0].mxu0
    %9128 = vmatprep.mubr.bf16.mxu0 0
    %9129 = vmatmul.mubr.bf16.gmra.mrb[0].mxu0 %v9046
    %v9130 = vpop.f32.mrb[0].mxu0
    %v9131 = vadd.f32 0.0, %v9130
    %v9132 = vpop.f32.mrb[0].mxu0
    %v9133 = vpop.f32.mrb[0].mxu0
    %v9134 = vadd.f32 0.0, %v9133
    %v9135 = vpop.f32.mrb[0].mxu0
    %9136 = vmatprep.mubr.bf16.mxu0 0
    %9137 = vmatmul.mubr.bf16.gmra.mrb[0].mxu0 %v9047
    %v9138 = vpop.f32.mrb[0].mxu0
    %v9139 = vadd.f32 0.0, %v9138
    %v9140 = vpop.f32.mrb[0].mxu0
    %v9141 = vpop.f32.mrb[0].mxu0
    %v9142 = vadd.f32 0.0, %v9141
    %v9143 = vpop.f32.mrb[0].mxu0
    %9144 = vmatprep.mubr.bf16.mxu0 0
    %9145 = vmatmul.mubr.bf16.gmra.mrb[0].mxu0 %v9048
    %v9146 = vpop.f32.mrb[0].mxu0
    %v9147 = vadd.f32 0.0, %v9146
    %v9148 = vpop.f32.mrb[0].mxu0
    %v9149 = vpop.f32.mrb[0].mxu0
    %v9150 = vadd.f32 0.0, %v9149
    %v9151 = vpop.f32.mrb[0].mxu0
    %9152 = vmatprep.mubr.bf16.mxu0 0
    %9153 = vmatmul.mubr.bf16.gmra.mrb[0].mxu0 %v9049
    %v9154 = vpop.f32.mrb[0].mxu0
    %v9155 = vadd.f32 0.0, %v9154
    %v9156 = vpop.f32.mrb[0].mxu0
    %v9157 = vpop.f32.mrb[0].mxu0
    %v9158 = vadd.f32 0.0, %v9157
    %v9159 = vpop.f32.mrb[0].mxu0
    %9160 = vmatprep.mubr.bf16.mxu0 0
    %9161 = vmatmul.mubr.bf16.gmra.mrb[0].mxu0 %v9050
    %v9162 = vpop.f32.mrb[0].mxu0
    %v9163 = vadd.f32 0.0, %v9162
    %v9164 = vpop.f32.mrb[0].mxu0
    %v9165 = vpop.f32.mrb[0].mxu0
    %v9166 = vadd.f32 0.0, %v9165
    %v9167 = vpop.f32.mrb[0].mxu0
    %9168 = vmatprep.mubr.bf16.mxu0 0
    %9169 = vmatmul.mubr.bf16.gmra.mrb[0].mxu0 %v9051
    %v9170 = vpop.f32.mrb[0].mxu0
    %v9171 = vadd.f32 0.0, %v9170
    %v9172 = vpop.f32.mrb[0].mxu0
    %v9173 = vpop.f32.mrb[0].mxu0
    %v9174 = vadd.f32 0.0, %v9173
    %v9175 = vpop.f32.mrb[0].mxu0
    %9176 = vmatprep.mubr.bf16.mxu0 0
    %9177 = vmatmul.mubr.bf16.gmra.mrb[0].mxu0 %v9052
    %v9178 = vpop.f32.mrb[0].mxu0
    %v9179 = vadd.f32 0.0, %v9178
    %v9180 = vpop.f32.mrb[0].mxu0
    %v9181 = vpop.f32.mrb[0].mxu0
    %v9182 = vadd.f32 0.0, %v9181
    %v9183 = vpop.f32.mrb[0].mxu0
    %9184 = vmatprep.mubr.bf16.mxu0 0
    %9185 = vmatmul.mubr.bf16.gmra.mrb[0].mxu0 %v9053
    %v9186 = vpop.f32.mrb[0].mxu0
    %v9187 = vadd.f32 0.0, %v9186
    %v9188 = vpop.f32.mrb[0].mxu0
    %v9189 = vpop.f32.mrb[0].mxu0
    %v9190 = vadd.f32 0.0, %v9189
    %v9191 = vpop.f32.mrb[0].mxu0
    %9192 = vmatprep.mubr.bf16.mxu0 0
    %9193 = vmatmul.mubr.bf16.gmra.mrb[0].mxu0 %v9054
    %v9194 = vpop.f32.mrb[0].mxu0
    %v9195 = vadd.f32 0.0, %v9194
    %v9196 = vpop.f32.mrb[0].mxu0
    %v9197 = vpop.f32.mrb[0].mxu0
    %v9198 = vadd.f32 0.0, %v9197
    %v9199 = vpop.f32.mrb[0].mxu0
    %9200 = vmatprep.mubr.bf16.mxu0 0
    %9201 = vmatmul.mubr.bf16.gmra.mrb[0].mxu0 %v9055
    %v9202 = vpop.f32.mrb[0].mxu0
    %v9203 = vadd.f32 0.0, %v9202
    %v9204 = vpop.f32.mrb[0].mxu0
    %v9205 = vpop.f32.mrb[0].mxu0
    %v9206 = vadd.f32 0.0, %v9205
    %v9207 = vpop.f32.mrb[0].mxu0
    %9208 = vmatprep.mubr.bf16.mxu0 0
    %9209 = vmatmul.mubr.bf16.gmra.mrb[0].mxu0 %v9056
    %v9210 = vpop.f32.mrb[0].mxu0
    %v9211 = vadd.f32 0.0, %v9210
    %v9212 = vpop.f32.mrb[0].mxu0
    %v9213 = vpop.f32.mrb[0].mxu0
    %v9214 = vadd.f32 0.0, %v9213
    %v9215 = vpop.f32.mrb[0].mxu0
    %9216 = vmatprep.mubr.bf16.mxu0 0
    %9217 = vmatmul.mubr.bf16.gmra.mrb[0].mxu0 %v9057
    %v9218 = vpop.f32.mrb[0].mxu0
    %v9219 = vadd.f32 0.0, %v9218
    %v9220 = vpop.f32.mrb[0].mxu0
    %v9221 = vpop.f32.mrb[0].mxu0
    %v9222 = vadd.f32 0.0, %v9221
    %v9223 = vpop.f32.mrb[0].mxu0
    %9224 = vmatprep.mubr.bf16.mxu0 0
    %9225 = vmatmul.mubr.bf16.gmra.mrb[0].mxu0 %v9058
    %v9226 = vpop.f32.mrb[0].mxu0
    %v9227 = vadd.f32 0.0, %v9226
    %v9228 = vpop.f32.mrb[0].mxu0
    %v9229 = vpop.f32.mrb[0].mxu0
    %v9230 = vadd.f32 0.0, %v9229
    %v9231 = vpop.f32.mrb[0].mxu0
    %9232 = vmatprep.mubr.bf16.mxu0 0
    %9233 = vmatmul.mubr.bf16.gmra.mrb[0].mxu0 %v9059
    %v9234 = vpop.f32.mrb[0].mxu0
    %v9235 = vadd.f32 0.0, %v9234
    %v9236 = vpop.f32.mrb[0].mxu0
    %v9237 = vpop.f32.mrb[0].mxu0
    %v9238 = vadd.f32 0.0, %v9237
    %v9239 = vpop.f32.mrb[0].mxu0
    %9240 = vmatprep.mubr.bf16.mxu0 0
    %9241 = vmatmul.mubr.bf16.gmra.mrb[0].mxu0 %v9060
    %v9242 = vpop.f32.mrb[0].mxu0
    %v9243 = vadd.f32 0.0, %v9242
    %v9244 = vpop.f32.mrb[0].mxu0
    %v9245 = vpop.f32.mrb[0].mxu0
    %v9246 = vadd.f32 0.0, %v9245
    %v9247 = vpop.f32.mrb[0].mxu0
    %9248 = vmatprep.mubr.bf16.mxu0 0
    %9249 = vmatmul.mubr.bf16.gmra.mrb[0].mxu0 %v9061
    %v9250 = vpop.f32.mrb[0].mxu0
    %v9251 = vadd.f32 0.0, %v9250
    %v9252 = vpop.f32.mrb[0].mxu0
    %v9253 = vpop.f32.mrb[0].mxu0
    %v9254 = vadd.f32 0.0, %v9253
    %v9255 = vpop.f32.mrb[0].mxu0
    %9256 = vdwg.mxu0
    %v9257 = vpack.c.bf16 %v9118, %v9115
    %v9258 = vpack.c.bf16 %v9126, %v9123
    %v9259 = vpack.c.bf16 %v9134, %v9131
    %v9260 = vpack.c.bf16 %v9142, %v9139
    %v9261 = vpack.c.bf16 %v9150, %v9147
    %v9262 = vpack.c.bf16 %v9158, %v9155
    %v9263 = vpack.c.bf16 %v9166, %v9163
    %v9264 = vpack.c.bf16 %v9174, %v9171
    %v9265 = vpack.c.bf16 %v9182, %v9179
    %v9266 = vpack.c.bf16 %v9190, %v9187
    %v9267 = vpack.c.bf16 %v9198, %v9195
    %v9268 = vpack.c.bf16 %v9206, %v9203
    %v9269 = vpack.c.bf16 %v9214, %v9211
    %v9270 = vpack.c.bf16 %v9222, %v9219
    %v9271 = vpack.c.bf16 %v9230, %v9227
    %v9272 = vpack.c.bf16 %v9238, %v9235
    %v9273 = vpack.c.bf16 %v9246, %v9243
    %v9274 = vpack.c.bf16 %v9254, %v9251
    %v9275 = vld [vmem:[%s13] sm:$0xf]
    %v9276 = vld [vmem:[%s13 + $0x4] sm:$0xf]
    %s9277 = scalar_lea.vmem %s13, 8
    %v9278 = vld [vmem:[%s9277] sm:$0xf]
    %v9279 = vld [vmem:[%s9277 + $0x4] sm:$0xf]
    %v9282 = vunpack.c.l.b16 %v9278
    %v9283 = vunpack.c.l.b16 %v9279
    %v9284 = vpack.c.b16 %v9283, %v9282
    %v9287 = vsel %vm7465, %v9259, 0
    %v9290 = vsel %vm7465, %v9260, 0
    %9292 = vmatprep.subr.bf16.mxu0 0
    %9293 = vmatpush1.bf16.msra.mxu0 %v9284
    %9294 = vmatprep.subr.bf16.mxu0 0
    %9295 = vmatpush1.bf16.msra.mxu0 0
    %9296 = vmatprep.subr.bf16.mxu0 0
    %9297 = vmatpush1.bf16.msra.mxu0 0
    %9298 = vmatprep.subr.bf16.mxu0 0
    %9299 = vmatpush1.bf16.msra.mxu0 0
    %9300 = vmatprep.subr.bf16.mxu0 0
    %9301 = vmatpush1.bf16.msra.mxu0 0
    %9302 = vmatprep.subr.bf16.mxu0 0
    %9303 = vmatpush1.bf16.msra.mxu0 0
    %9304 = vmatprep.subr.bf16.mxu0 0
    %9305 = vmatpush1.bf16.msra.mxu0 0
    %9306 = vmatprep.subr.bf16.mxu0 0
    %9307 = vmatpush1.bf16.msra.mxu0 0
    %9308 = vmatprep.subr.bf16.mxu0 0
    %9309 = vmatpush1.bf16.msra.mxu0 0
    %9310 = vmatprep.subr.bf16.mxu0 0
    %9311 = vmatpush1.bf16.msra.mxu0 0
    %9312 = vmatprep.subr.bf16.mxu0 0
    %9313 = vmatpush1.bf16.msra.mxu0 0
    %9314 = vmatprep.subr.bf16.mxu0 0
    %9315 = vmatpush1.bf16.msra.mxu0 0
    %9316 = vmatprep.subr.bf16.mxu0 0
    %9317 = vmatpush1.bf16.msra.mxu0 0
    %9318 = vmatprep.subr.bf16.mxu0 0
    %9319 = vmatpush1.bf16.msra.mxu0 0
    %9320 = vmatprep.subr.bf16.mxu0 0
    %9321 = vmatpush1.bf16.msra.mxu0 0
    %9322 = vmatprep.subr.bf16.mxu0 0
    %9323 = vmatpush1.bf16.msra.mxu0 0
    %9324 = vmatprep.mubr.bf16.mxu0 0
    %9325 = vmatmul.mubr.bf16.gmra.mrb[0].mxu0 %v9287
    %v9326 = vpop.f32.mrb[0].mxu0
    %v9327 = vadd.f32 0.0, %v9326
    %v9328 = vpop.f32.mrb[0].mxu0
    %v9329 = vpop.f32.mrb[0].mxu0
    %v9330 = vadd.f32 0.0, %v9329
    %v9331 = vpop.f32.mrb[0].mxu0
    %9332 = vmatprep.mubr.bf16.mxu0 0
    %9333 = vmatmul.mubr.bf16.gmra.mrb[0].mxu0 %v9290
    %v9334 = vpop.f32.mrb[0].mxu0
    %v9335 = vadd.f32 0.0, %v9334
    %v9336 = vpop.f32.mrb[0].mxu0
    %v9337 = vpop.f32.mrb[0].mxu0
    %v9338 = vadd.f32 0.0, %v9337
    %v9339 = vpop.f32.mrb[0].mxu0
    %9340 = vdwg.mxu0
    %v9343 = vunpack.c.l.b16 %v9275
    %v9344 = vunpack.c.l.b16 %v9276
    %v9345 = vpack.c.b16 %v9344, %v9343
    %v9348 = vsel %vm7465, %v9257, 0
    %v9351 = vsel %vm7465, %v9258, 0
    %9353 = vmatprep.subr.bf16.mxu0 0
    %9354 = vmatpush1.bf16.msra.mxu0 %v9345
    %9355 = vmatprep.subr.bf16.mxu0 0
    %9356 = vmatpush1.bf16.msra.mxu0 0
    %9357 = vmatprep.subr.bf16.mxu0 0
    %9358 = vmatpush1.bf16.msra.mxu0 0
    %9359 = vmatprep.subr.bf16.mxu0 0
    %9360 = vmatpush1.bf16.msra.mxu0 0
    %9361 = vmatprep.subr.bf16.mxu0 0
    %9362 = vmatpush1.bf16.msra.mxu0 0
    %9363 = vmatprep.subr.bf16.mxu0 0
    %9364 = vmatpush1.bf16.msra.mxu0 0
    %9365 = vmatprep.subr.bf16.mxu0 0
    %9366 = vmatpush1.bf16.msra.mxu0 0
    %9367 = vmatprep.subr.bf16.mxu0 0
    %9368 = vmatpush1.bf16.msra.mxu0 0
    %9369 = vmatprep.subr.bf16.mxu0 0
    %9370 = vmatpush1.bf16.msra.mxu0 0
    %9371 = vmatprep.subr.bf16.mxu0 0
    %9372 = vmatpush1.bf16.msra.mxu0 0
    %9373 = vmatprep.subr.bf16.mxu0 0
    %9374 = vmatpush1.bf16.msra.mxu0 0
    %9375 = vmatprep.subr.bf16.mxu0 0
    %9376 = vmatpush1.bf16.msra.mxu0 0
    %9377 = vmatprep.subr.bf16.mxu0 0
    %9378 = vmatpush1.bf16.msra.mxu0 0
    %9379 = vmatprep.subr.bf16.mxu0 0
    %9380 = vmatpush1.bf16.msra.mxu0 0
    %9381 = vmatprep.subr.bf16.mxu0 0
    %9382 = vmatpush1.bf16.msra.mxu0 0
    %9383 = vmatprep.subr.bf16.mxu0 0
    %9384 = vmatpush1.bf16.msra.mxu0 0
    %9385 = vmatprep.mubr.bf16.mxu0 0
    %9386 = vmatmul.mubr.bf16.gmra.mrb[0].mxu0 %v9348
    %v9387 = vpop.f32.mrb[0].mxu0
    %v9388 = vadd.f32 %v9327, %v9387
    %v9389 = vpop.f32.mrb[0].mxu0
    %v9390 = vpop.f32.mrb[0].mxu0
    %v9391 = vadd.f32 %v9330, %v9390
    %v9392 = vpop.f32.mrb[0].mxu0
    %9393 = vmatprep.mubr.bf16.mxu0 0
    %9394 = vmatmul.mubr.bf16.gmra.mrb[0].mxu0 %v9351
    %v9395 = vpop.f32.mrb[0].mxu0
    %v9396 = vadd.f32 %v9335, %v9395
    %v9397 = vpop.f32.mrb[0].mxu0
    %v9398 = vpop.f32.mrb[0].mxu0
    %v9399 = vadd.f32 %v9338, %v9398
    %v9400 = vpop.f32.mrb[0].mxu0
    %9401 = vdwg.mxu0
    %s9402 = scalar_lea.vmem %s13, 16
    %v9403 = vld [vmem:[%s9402] sm:$0xf]
    %v9404 = vld [vmem:[%s9402 + $0x4] sm:$0xf]
    %v9407 = vunpack.c.l.b16 %v9403
    %v9408 = vunpack.c.l.b16 %v9404
    %v9409 = vpack.c.b16 %v9408, %v9407
    %v9412 = vsel %vm7465, %v9261, 0
    %v9415 = vsel %vm7465, %v9262, 0
    %9417 = vmatprep.subr.bf16.mxu0 0
    %9418 = vmatpush1.bf16.msra.mxu0 %v9409
    %9419 = vmatprep.subr.bf16.mxu0 0
    %9420 = vmatpush1.bf16.msra.mxu0 0
    %9421 = vmatprep.subr.bf16.mxu0 0
    %9422 = vmatpush1.bf16.msra.mxu0 0
    %9423 = vmatprep.subr.bf16.mxu0 0
    %9424 = vmatpush1.bf16.msra.mxu0 0
    %9425 = vmatprep.subr.bf16.mxu0 0
    %9426 = vmatpush1.bf16.msra.mxu0 0
    %9427 = vmatprep.subr.bf16.mxu0 0
    %9428 = vmatpush1.bf16.msra.mxu0 0
    %9429 = vmatprep.subr.bf16.mxu0 0
    %9430 = vmatpush1.bf16.msra.mxu0 0
    %9431 = vmatprep.subr.bf16.mxu0 0
    %9432 = vmatpush1.bf16.msra.mxu0 0
    %9433 = vmatprep.subr.bf16.mxu0 0
    %9434 = vmatpush1.bf16.msra.mxu0 0
    %9435 = vmatprep.subr.bf16.mxu0 0
    %9436 = vmatpush1.bf16.msra.mxu0 0
    %9437 = vmatprep.subr.bf16.mxu0 0
    %9438 = vmatpush1.bf16.msra.mxu0 0
    %9439 = vmatprep.subr.bf16.mxu0 0
    %9440 = vmatpush1.bf16.msra.mxu0 0
    %9441 = vmatprep.subr.bf16.mxu0 0
    %9442 = vmatpush1.bf16.msra.mxu0 0
    %9443 = vmatprep.subr.bf16.mxu0 0
    %9444 = vmatpush1.bf16.msra.mxu0 0
    %9445 = vmatprep.subr.bf16.mxu0 0
    %9446 = vmatpush1.bf16.msra.mxu0 0
    %9447 = vmatprep.subr.bf16.mxu0 0
    %9448 = vmatpush1.bf16.msra.mxu0 0
    %9449 = vmatprep.mubr.bf16.mxu0 0
    %9450 = vmatmul.mubr.bf16.gmra.mrb[0].mxu0 %v9412
    %v9451 = vpop.f32.mrb[0].mxu0
    %v9452 = vadd.f32 0.0, %v9451
    %v9453 = vpop.f32.mrb[0].mxu0
    %v9454 = vpop.f32.mrb[0].mxu0
    %v9455 = vadd.f32 0.0, %v9454
    %v9456 = vpop.f32.mrb[0].mxu0
    %9457 = vmatprep.mubr.bf16.mxu0 0
    %9458 = vmatmul.mubr.bf16.gmra.mrb[0].mxu0 %v9415
    %v9459 = vpop.f32.mrb[0].mxu0
    %v9460 = vadd.f32 0.0, %v9459
    %v9461 = vpop.f32.mrb[0].mxu0
    %v9462 = vpop.f32.mrb[0].mxu0
    %v9463 = vadd.f32 0.0, %v9462
    %v9464 = vpop.f32.mrb[0].mxu0
    %9465 = vdwg.mxu0
    %v9466 = vadd.f32 %v9388, %v9452
    %v9467 = vadd.f32 %v9391, %v9455
    %v9468 = vadd.f32 %v9396, %v9460
    %v9469 = vadd.f32 %v9399, %v9463
    %s9470 = scalar_lea.vmem %s13, 24
    %v9471 = vld [vmem:[%s9470] sm:$0xf]
    %v9472 = vld [vmem:[%s9470 + $0x4] sm:$0xf]
    %v9475 = vunpack.c.l.b16 %v9471
    %v9476 = vunpack.c.l.b16 %v9472
    %v9477 = vpack.c.b16 %v9476, %v9475
    %v9480 = vsel %vm7465, %v9263, 0
    %v9483 = vsel %vm7465, %v9264, 0
    %9485 = vmatprep.subr.bf16.mxu0 0
    %9486 = vmatpush1.bf16.msra.mxu0 %v9477
    %9487 = vmatprep.subr.bf16.mxu0 0
    %9488 = vmatpush1.bf16.msra.mxu0 0
    %9489 = vmatprep.subr.bf16.mxu0 0
    %9490 = vmatpush1.bf16.msra.mxu0 0
    %9491 = vmatprep.subr.bf16.mxu0 0
    %9492 = vmatpush1.bf16.msra.mxu0 0
    %9493 = vmatprep.subr.bf16.mxu0 0
    %9494 = vmatpush1.bf16.msra.mxu0 0
    %9495 = vmatprep.subr.bf16.mxu0 0
    %9496 = vmatpush1.bf16.msra.mxu0 0
    %9497 = vmatprep.subr.bf16.mxu0 0
    %9498 = vmatpush1.bf16.msra.mxu0 0
    %9499 = vmatprep.subr.bf16.mxu0 0
    %9500 = vmatpush1.bf16.msra.mxu0 0
    %9501 = vmatprep.subr.bf16.mxu0 0
    %9502 = vmatpush1.bf16.msra.mxu0 0
    %9503 = vmatprep.subr.bf16.mxu0 0
    %9504 = vmatpush1.bf16.msra.mxu0 0
    %9505 = vmatprep.subr.bf16.mxu0 0
    %9506 = vmatpush1.bf16.msra.mxu0 0
    %9507 = vmatprep.subr.bf16.mxu0 0
    %9508 = vmatpush1.bf16.msra.mxu0 0
    %9509 = vmatprep.subr.bf16.mxu0 0
    %9510 = vmatpush1.bf16.msra.mxu0 0
    %9511 = vmatprep.subr.bf16.mxu0 0
    %9512 = vmatpush1.bf16.msra.mxu0 0
    %9513 = vmatprep.subr.bf16.mxu0 0
    %9514 = vmatpush1.bf16.msra.mxu0 0
    %9515 = vmatprep.subr.bf16.mxu0 0
    %9516 = vmatpush1.bf16.msra.mxu0 0
    %9517 = vmatprep.mubr.bf16.mxu0 0
    %9518 = vmatmul.mubr.bf16.gmra.mrb[0].mxu0 %v9480
    %v9519 = vpop.f32.mrb[0].mxu0
    %v9520 = vadd.f32 0.0, %v9519
    %v9521 = vpop.f32.mrb[0].mxu0
    %v9522 = vpop.f32.mrb[0].mxu0
    %v9523 = vadd.f32 0.0, %v9522
    %v9524 = vpop.f32.mrb[0].mxu0
    %9525 = vmatprep.mubr.bf16.mxu0 0
    %9526 = vmatmul.mubr.bf16.gmra.mrb[0].mxu0 %v9483
    %v9527 = vpop.f32.mrb[0].mxu0
    %v9528 = vadd.f32 0.0, %v9527
    %v9529 = vpop.f32.mrb[0].mxu0
    %v9530 = vpop.f32.mrb[0].mxu0
    %v9531 = vadd.f32 0.0, %v9530
    %v9532 = vpop.f32.mrb[0].mxu0
    %9533 = vdwg.mxu0
    %v9534 = vadd.f32 %v9466, %v9520
    %v9535 = vadd.f32 %v9467, %v9523
    %v9536 = vadd.f32 %v9468, %v9528
    %v9537 = vadd.f32 %v9469, %v9531
    %s9538 = scalar_lea.vmem %s13, 32
    %v9539 = vld [vmem:[%s9538] sm:$0xf]
    %v9540 = vld [vmem:[%s9538 + $0x4] sm:$0xf]
    %v9543 = vunpack.c.l.b16 %v9539
    %v9544 = vunpack.c.l.b16 %v9540
    %v9545 = vpack.c.b16 %v9544, %v9543
    %v9548 = vsel %vm7465, %v9265, 0
    %v9551 = vsel %vm7465, %v9266, 0
    %9553 = vmatprep.subr.bf16.mxu0 0
    %9554 = vmatpush1.bf16.msra.mxu0 %v9545
    %9555 = vmatprep.subr.bf16.mxu0 0
    %9556 = vmatpush1.bf16.msra.mxu0 0
    %9557 = vmatprep.subr.bf16.mxu0 0
    %9558 = vmatpush1.bf16.msra.mxu0 0
    %9559 = vmatprep.subr.bf16.mxu0 0
    %9560 = vmatpush1.bf16.msra.mxu0 0
    %9561 = vmatprep.subr.bf16.mxu0 0
    %9562 = vmatpush1.bf16.msra.mxu0 0
    %9563 = vmatprep.subr.bf16.mxu0 0
    %9564 = vmatpush1.bf16.msra.mxu0 0
    %9565 = vmatprep.subr.bf16.mxu0 0
    %9566 = vmatpush1.bf16.msra.mxu0 0
    %9567 = vmatprep.subr.bf16.mxu0 0
    %9568 = vmatpush1.bf16.msra.mxu0 0
    %9569 = vmatprep.subr.bf16.mxu0 0
    %9570 = vmatpush1.bf16.msra.mxu0 0
    %9571 = vmatprep.subr.bf16.mxu0 0
    %9572 = vmatpush1.bf16.msra.mxu0 0
    %9573 = vmatprep.subr.bf16.mxu0 0
    %9574 = vmatpush1.bf16.msra.mxu0 0
    %9575 = vmatprep.subr.bf16.mxu0 0
    %9576 = vmatpush1.bf16.msra.mxu0 0
    %9577 = vmatprep.subr.bf16.mxu0 0
    %9578 = vmatpush1.bf16.msra.mxu0 0
    %9579 = vmatprep.subr.bf16.mxu0 0
    %9580 = vmatpush1.bf16.msra.mxu0 0
    %9581 = vmatprep.subr.bf16.mxu0 0
    %9582 = vmatpush1.bf16.msra.mxu0 0
    %9583 = vmatprep.subr.bf16.mxu0 0
    %9584 = vmatpush1.bf16.msra.mxu0 0
    %9585 = vmatprep.mubr.bf16.mxu0 0
    %9586 = vmatmul.mubr.bf16.gmra.mrb[0].mxu0 %v9548
    %v9587 = vpop.f32.mrb[0].mxu0
    %v9588 = vadd.f32 0.0, %v9587
    %v9589 = vpop.f32.mrb[0].mxu0
    %v9590 = vpop.f32.mrb[0].mxu0
    %v9591 = vadd.f32 0.0, %v9590
    %v9592 = vpop.f32.mrb[0].mxu0
    %9593 = vmatprep.mubr.bf16.mxu0 0
    %9594 = vmatmul.mubr.bf16.gmra.mrb[0].mxu0 %v9551
    %v9595 = vpop.f32.mrb[0].mxu0
    %v9596 = vadd.f32 0.0, %v9595
    %v9597 = vpop.f32.mrb[0].mxu0
    %v9598 = vpop.f32.mrb[0].mxu0
    %v9599 = vadd.f32 0.0, %v9598
    %v9600 = vpop.f32.mrb[0].mxu0
    %9601 = vdwg.mxu0
    %v9602 = vadd.f32 %v9534, %v9588
    %v9603 = vadd.f32 %v9535, %v9591
    %v9604 = vadd.f32 %v9536, %v9596
    %v9605 = vadd.f32 %v9537, %v9599
    %s9606 = scalar_lea.vmem %s13, 40
    %v9607 = vld [vmem:[%s9606] sm:$0xf]
    %v9608 = vld [vmem:[%s9606 + $0x4] sm:$0xf]
    %v9611 = vunpack.c.l.b16 %v9607
    %v9612 = vunpack.c.l.b16 %v9608
    %v9613 = vpack.c.b16 %v9612, %v9611
    %v9616 = vsel %vm7465, %v9267, 0
    %v9619 = vsel %vm7465, %v9268, 0
    %9621 = vmatprep.subr.bf16.mxu0 0
    %9622 = vmatpush1.bf16.msra.mxu0 %v9613
    %9623 = vmatprep.subr.bf16.mxu0 0
    %9624 = vmatpush1.bf16.msra.mxu0 0
    %9625 = vmatprep.subr.bf16.mxu0 0
    %9626 = vmatpush1.bf16.msra.mxu0 0
    %9627 = vmatprep.subr.bf16.mxu0 0
    %9628 = vmatpush1.bf16.msra.mxu0 0
    %9629 = vmatprep.subr.bf16.mxu0 0
    %9630 = vmatpush1.bf16.msra.mxu0 0
    %9631 = vmatprep.subr.bf16.mxu0 0
    %9632 = vmatpush1.bf16.msra.mxu0 0
    %9633 = vmatprep.subr.bf16.mxu0 0
    %9634 = vmatpush1.bf16.msra.mxu0 0
    %9635 = vmatprep.subr.bf16.mxu0 0
    %9636 = vmatpush1.bf16.msra.mxu0 0
    %9637 = vmatprep.subr.bf16.mxu0 0
    %9638 = vmatpush1.bf16.msra.mxu0 0
    %9639 = vmatprep.subr.bf16.mxu0 0
    %9640 = vmatpush1.bf16.msra.mxu0 0
    %9641 = vmatprep.subr.bf16.mxu0 0
    %9642 = vmatpush1.bf16.msra.mxu0 0
    %9643 = vmatprep.subr.bf16.mxu0 0
    %9644 = vmatpush1.bf16.msra.mxu0 0
    %9645 = vmatprep.subr.bf16.mxu0 0
    %9646 = vmatpush1.bf16.msra.mxu0 0
    %9647 = vmatprep.subr.bf16.mxu0 0
    %9648 = vmatpush1.bf16.msra.mxu0 0
    %9649 = vmatprep.subr.bf16.mxu0 0
    %9650 = vmatpush1.bf16.msra.mxu0 0
    %9651 = vmatprep.subr.bf16.mxu0 0
    %9652 = vmatpush1.bf16.msra.mxu0 0
    %9653 = vmatprep.mubr.bf16.mxu0 0
    %9654 = vmatmul.mubr.bf16.gmra.mrb[0].mxu0 %v9616
    %v9655 = vpop.f32.mrb[0].mxu0
    %v9656 = vadd.f32 0.0, %v9655
    %v9657 = vpop.f32.mrb[0].mxu0
    %v9658 = vpop.f32.mrb[0].mxu0
    %v9659 = vadd.f32 0.0, %v9658
    %v9660 = vpop.f32.mrb[0].mxu0
    %9661 = vmatprep.mubr.bf16.mxu0 0
    %9662 = vmatmul.mubr.bf16.gmra.mrb[0].mxu0 %v9619
    %v9663 = vpop.f32.mrb[0].mxu0
    %v9664 = vadd.f32 0.0, %v9663
    %v9665 = vpop.f32.mrb[0].mxu0
    %v9666 = vpop.f32.mrb[0].mxu0
    %v9667 = vadd.f32 0.0, %v9666
    %v9668 = vpop.f32.mrb[0].mxu0
    %9669 = vdwg.mxu0
    %v9670 = vadd.f32 %v9602, %v9656
    %v9671 = vadd.f32 %v9603, %v9659
    %v9672 = vadd.f32 %v9604, %v9664
    %v9673 = vadd.f32 %v9605, %v9667
    %s9674 = scalar_lea.vmem %s13, 48
    %v9675 = vld [vmem:[%s9674] sm:$0xf]
    %v9676 = vld [vmem:[%s9674 + $0x4] sm:$0xf]
    %v9679 = vunpack.c.l.b16 %v9675
    %v9680 = vunpack.c.l.b16 %v9676
    %v9681 = vpack.c.b16 %v9680, %v9679
    %v9684 = vsel %vm7465, %v9269, 0
    %v9687 = vsel %vm7465, %v9270, 0
    %9689 = vmatprep.subr.bf16.mxu0 0
    %9690 = vmatpush1.bf16.msra.mxu0 %v9681
    %9691 = vmatprep.subr.bf16.mxu0 0
    %9692 = vmatpush1.bf16.msra.mxu0 0
    %9693 = vmatprep.subr.bf16.mxu0 0
    %9694 = vmatpush1.bf16.msra.mxu0 0
    %9695 = vmatprep.subr.bf16.mxu0 0
    %9696 = vmatpush1.bf16.msra.mxu0 0
    %9697 = vmatprep.subr.bf16.mxu0 0
    %9698 = vmatpush1.bf16.msra.mxu0 0
    %9699 = vmatprep.subr.bf16.mxu0 0
    %9700 = vmatpush1.bf16.msra.mxu0 0
    %9701 = vmatprep.subr.bf16.mxu0 0
    %9702 = vmatpush1.bf16.msra.mxu0 0
    %9703 = vmatprep.subr.bf16.mxu0 0
    %9704 = vmatpush1.bf16.msra.mxu0 0
    %9705 = vmatprep.subr.bf16.mxu0 0
    %9706 = vmatpush1.bf16.msra.mxu0 0
    %9707 = vmatprep.subr.bf16.mxu0 0
    %9708 = vmatpush1.bf16.msra.mxu0 0
    %9709 = vmatprep.subr.bf16.mxu0 0
    %9710 = vmatpush1.bf16.msra.mxu0 0
    %9711 = vmatprep.subr.bf16.mxu0 0
    %9712 = vmatpush1.bf16.msra.mxu0 0
    %9713 = vmatprep.subr.bf16.mxu0 0
    %9714 = vmatpush1.bf16.msra.mxu0 0
    %9715 = vmatprep.subr.bf16.mxu0 0
    %9716 = vmatpush1.bf16.msra.mxu0 0
    %9717 = vmatprep.subr.bf16.mxu0 0
    %9718 = vmatpush1.bf16.msra.mxu0 0
    %9719 = vmatprep.subr.bf16.mxu0 0
    %9720 = vmatpush1.bf16.msra.mxu0 0
    %9721 = vmatprep.mubr.bf16.mxu0 0
    %9722 = vmatmul.mubr.bf16.gmra.mrb[0].mxu0 %v9684
    %v9723 = vpop.f32.mrb[0].mxu0
    %v9724 = vadd.f32 0.0, %v9723
    %v9725 = vpop.f32.mrb[0].mxu0
    %v9726 = vpop.f32.mrb[0].mxu0
    %v9727 = vadd.f32 0.0, %v9726
    %v9728 = vpop.f32.mrb[0].mxu0
    %9729 = vmatprep.mubr.bf16.mxu0 0
    %9730 = vmatmul.mubr.bf16.gmra.mrb[0].mxu0 %v9687
    %v9731 = vpop.f32.mrb[0].mxu0
    %v9732 = vadd.f32 0.0, %v9731
    %v9733 = vpop.f32.mrb[0].mxu0
    %v9734 = vpop.f32.mrb[0].mxu0
    %v9735 = vadd.f32 0.0, %v9734
    %v9736 = vpop.f32.mrb[0].mxu0
    %9737 = vdwg.mxu0
    %v9738 = vadd.f32 %v9670, %v9724
    %v9739 = vadd.f32 %v9671, %v9727
    %v9740 = vadd.f32 %v9672, %v9732
    %v9741 = vadd.f32 %v9673, %v9735
    %s9742 = scalar_lea.vmem %s13, 56
    %v9743 = vld [vmem:[%s9742] sm:$0xf]
    %v9744 = vld [vmem:[%s9742 + $0x4] sm:$0xf]
    %v9747 = vunpack.c.l.b16 %v9743
    %v9748 = vunpack.c.l.b16 %v9744
    %v9749 = vpack.c.b16 %v9748, %v9747
    %v9752 = vsel %vm7465, %v9271, 0
    %v9755 = vsel %vm7465, %v9272, 0
    %9757 = vmatprep.subr.bf16.mxu0 0
    %9758 = vmatpush1.bf16.msra.mxu0 %v9749
    %9759 = vmatprep.subr.bf16.mxu0 0
    %9760 = vmatpush1.bf16.msra.mxu0 0
    %9761 = vmatprep.subr.bf16.mxu0 0
    %9762 = vmatpush1.bf16.msra.mxu0 0
    %9763 = vmatprep.subr.bf16.mxu0 0
    %9764 = vmatpush1.bf16.msra.mxu0 0
    %9765 = vmatprep.subr.bf16.mxu0 0
    %9766 = vmatpush1.bf16.msra.mxu0 0
    %9767 = vmatprep.subr.bf16.mxu0 0
    %9768 = vmatpush1.bf16.msra.mxu0 0
    %9769 = vmatprep.subr.bf16.mxu0 0
    %9770 = vmatpush1.bf16.msra.mxu0 0
    %9771 = vmatprep.subr.bf16.mxu0 0
    %9772 = vmatpush1.bf16.msra.mxu0 0
    %9773 = vmatprep.subr.bf16.mxu0 0
    %9774 = vmatpush1.bf16.msra.mxu0 0
    %9775 = vmatprep.subr.bf16.mxu0 0
    %9776 = vmatpush1.bf16.msra.mxu0 0
    %9777 = vmatprep.subr.bf16.mxu0 0
    %9778 = vmatpush1.bf16.msra.mxu0 0
    %9779 = vmatprep.subr.bf16.mxu0 0
    %9780 = vmatpush1.bf16.msra.mxu0 0
    %9781 = vmatprep.subr.bf16.mxu0 0
    %9782 = vmatpush1.bf16.msra.mxu0 0
    %9783 = vmatprep.subr.bf16.mxu0 0
    %9784 = vmatpush1.bf16.msra.mxu0 0
    %9785 = vmatprep.subr.bf16.mxu0 0
    %9786 = vmatpush1.bf16.msra.mxu0 0
    %9787 = vmatprep.subr.bf16.mxu0 0
    %9788 = vmatpush1.bf16.msra.mxu0 0
    %9789 = vmatprep.mubr.bf16.mxu0 0
    %9790 = vmatmul.mubr.bf16.gmra.mrb[0].mxu0 %v9752
    %v9791 = vpop.f32.mrb[0].mxu0
    %v9792 = vadd.f32 0.0, %v9791
    %v9793 = vpop.f32.mrb[0].mxu0
    %v9794 = vpop.f32.mrb[0].mxu0
    %v9795 = vadd.f32 0.0, %v9794
    %v9796 = vpop.f32.mrb[0].mxu0
    %9797 = vmatprep.mubr.bf16.mxu0 0
    %9798 = vmatmul.mubr.bf16.gmra.mrb[0].mxu0 %v9755
    %v9799 = vpop.f32.mrb[0].mxu0
    %v9800 = vadd.f32 0.0, %v9799
    %v9801 = vpop.f32.mrb[0].mxu0
    %v9802 = vpop.f32.mrb[0].mxu0
    %v9803 = vadd.f32 0.0, %v9802
    %v9804 = vpop.f32.mrb[0].mxu0
    %9805 = vdwg.mxu0
    %v9806 = vadd.f32 %v9738, %v9792
    %v9807 = vadd.f32 %v9739, %v9795
    %v9808 = vadd.f32 %v9740, %v9800
    %v9809 = vadd.f32 %v9741, %v9803
    %s9810 = scalar_lea.vmem %s13, 64
    %v9811 = vld [vmem:[%s9810] sm:$0xf]
    %v9812 = vld [vmem:[%s9810 + $0x4] sm:$0xf]
    %v9815 = vunpack.c.l.b16 %v9811
    %v9816 = vunpack.c.l.b16 %v9812
    %v9817 = vpack.c.b16 %v9816, %v9815
    %v9820 = vsel %vm7465, %v9273, 0
    %v9823 = vsel %vm7465, %v9274, 0
    %9825 = vmatprep.subr.bf16.mxu0 0
    %9826 = vmatpush1.bf16.msra.mxu0 %v9817
    %9827 = vmatprep.subr.bf16.mxu0 0
    %9828 = vmatpush1.bf16.msra.mxu0 0
    %9829 = vmatprep.subr.bf16.mxu0 0
    %9830 = vmatpush1.bf16.msra.mxu0 0
    %9831 = vmatprep.subr.bf16.mxu0 0
    %9832 = vmatpush1.bf16.msra.mxu0 0
    %9833 = vmatprep.subr.bf16.mxu0 0
    %9834 = vmatpush1.bf16.msra.mxu0 0
    %9835 = vmatprep.subr.bf16.mxu0 0
    %9836 = vmatpush1.bf16.msra.mxu0 0
    %9837 = vmatprep.subr.bf16.mxu0 0
    %9838 = vmatpush1.bf16.msra.mxu0 0
    %9839 = vmatprep.subr.bf16.mxu0 0
    %9840 = vmatpush1.bf16.msra.mxu0 0
    %9841 = vmatprep.subr.bf16.mxu0 0
    %9842 = vmatpush1.bf16.msra.mxu0 0
    %9843 = vmatprep.subr.bf16.mxu0 0
    %9844 = vmatpush1.bf16.msra.mxu0 0
    %9845 = vmatprep.subr.bf16.mxu0 0
    %9846 = vmatpush1.bf16.msra.mxu0 0
    %9847 = vmatprep.subr.bf16.mxu0 0
    %9848 = vmatpush1.bf16.msra.mxu0 0
    %9849 = vmatprep.subr.bf16.mxu0 0
    %9850 = vmatpush1.bf16.msra.mxu0 0
    %9851 = vmatprep.subr.bf16.mxu0 0
    %9852 = vmatpush1.bf16.msra.mxu0 0
    %9853 = vmatprep.subr.bf16.mxu0 0
    %9854 = vmatpush1.bf16.msra.mxu0 0
    %9855 = vmatprep.subr.bf16.mxu0 0
    %9856 = vmatpush1.bf16.msra.mxu0 0
    %9857 = vmatprep.mubr.bf16.mxu0 0
    %9858 = vmatmul.mubr.bf16.gmra.mrb[0].mxu0 %v9820
    %v9859 = vpop.f32.mrb[0].mxu0
    %v9860 = vadd.f32 0.0, %v9859
    %v9861 = vpop.f32.mrb[0].mxu0
    %v9862 = vpop.f32.mrb[0].mxu0
    %v9863 = vadd.f32 0.0, %v9862
    %v9864 = vpop.f32.mrb[0].mxu0
    %9865 = vmatprep.mubr.bf16.mxu0 0
    %9866 = vmatmul.mubr.bf16.gmra.mrb[0].mxu0 %v9823
    %v9867 = vpop.f32.mrb[0].mxu0
    %v9868 = vadd.f32 0.0, %v9867
    %v9869 = vpop.f32.mrb[0].mxu0
    %v9870 = vpop.f32.mrb[0].mxu0
    %v9871 = vadd.f32 0.0, %v9870
    %v9872 = vpop.f32.mrb[0].mxu0
    %9873 = vdwg.mxu0
    %v9874 = vadd.f32 %v9806, %v9860
    %v9875 = vadd.f32 %v9807, %v9863
    %v9876 = vadd.f32 %v9808, %v9868
    %v9877 = vadd.f32 %v9809, %v9871
    %v9878 = vld [vmem:[%s14] sm:$0x1]
    %v9879 = vld [vmem:[%s15] sm:$0x1]
    %vm9880 = vcmask 523264
    %v9881 = vsel %vm9880, %v9874, 0.0
    %v9882 = vsel %vm9880, %v9875, 0.0
    %v9883 = vadd.f32 %v9881, %v9882
    %v9884 = vsel %vm9880, %v9876, 0.0
    %v9885 = vadd.f32 %v9883, %v9884
    %v9886 = vsel %vm9880, %v9877, 0.0
    %v9887 = vadd.f32 %v9885, %v9886
    %v9888 = vrot.slane %v9887, 4
    %v9889 = vadd.f32 %v9887, %v9888
    %v9890 = vrot.slane %v9889, 2
    %v9891 = vadd.f32 %v9889, %v9890
    %v9892 = vrot.slane %v9891, 1
    %v9893 = vadd.f32 %v9891, %v9892
    %v9894 = vrcp.pop 32.0
    %v9895 = vmul.f32 %v9893, %v9894
    %v9896 = vmul.f32 %v9874, %v9874
    %v9897 = vmul.f32 %v9875, %v9875
    %v9898 = vmul.f32 %v9876, %v9876
    %v9899 = vmul.f32 %v9877, %v9877
    %v9900 = vsel %vm9880, %v9896, 0.0
    %v9901 = vsel %vm9880, %v9897, 0.0
    %v9902 = vadd.f32 %v9900, %v9901
    %v9903 = vsel %vm9880, %v9898, 0.0
    %v9904 = vadd.f32 %v9902, %v9903
    %v9905 = vsel %vm9880, %v9899, 0.0
    %v9906 = vadd.f32 %v9904, %v9905
    %v9907 = vrot.slane %v9906, 4
    %v9908 = vadd.f32 %v9906, %v9907
    %v9909 = vrot.slane %v9908, 2
    %v9910 = vadd.f32 %v9908, %v9909
    %v9911 = vrot.slane %v9910, 1
    %v9912 = vadd.f32 %v9910, %v9911
    %v9913 = vmul.f32 %v9912, %v9894
    %v9914 = vmul.f32 %v9895, %v9895
    %v9915 = vsub.f32 %v9913, %v9914
    %v9916 = vmax.f32 %v9915, 0.0
    %v9917 = vsub.f32 %v9874, %v9895
    %v9918 = vsub.f32 %v9875, %v9895
    %v9919 = vsub.f32 %v9876, %v9895
    %v9920 = vsub.f32 %v9877, %v9895
    %v9921 = vadd.f32 %v9916, 1e-05
    %v9922 = vrsqrt.pop %v9921
    %v9923 = vmul.f32 %v9878, %v9922
    %v9925 = vlaneseq
    %v9926 = vshrl.u32 %v9925, 7
    %v9927 = vsub.s32 0, %v9926
    %v9928 = vrot.slane %v9923, %v9927
    %v9930 = vmul.f32 %v9917, %v9928
    %v9931 = vmul.f32 %v9918, %v9928
    %v9932 = vmul.f32 %v9919, %v9928
    %v9933 = vmul.f32 %v9920, %v9928
    %v9935 = vlaneseq
    %v9936 = vshrl.u32 %v9935, 7
    %v9937 = vsub.s32 0, %v9936
    %v9938 = vrot.slane %v9879, %v9937
    %v9940 = vadd.f32 %v9930, %v9938
    %v9941 = vadd.f32 %v9931, %v9938
    %v9942 = vadd.f32 %v9932, %v9938
    %v9943 = vadd.f32 %v9933, %v9938
    %v9944 = vadd.s32 %v5804, 32
    %v9945 = vadd.s32 %v5804, 40
    %v9946 = vadd.s32 %v5804, 48
    %v9947 = vadd.s32 %v5804, 56
    %vm9948 = vcmp.eq.s32.totalorder %v9944, %v5809
    %vm9949 = vcmp.eq.s32.totalorder %v9945, %v5809
    %vm9950 = vcmp.eq.s32.totalorder %v9946, %v5809
    %vm9951 = vcmp.eq.s32.totalorder %v9947, %v5809
    %v9952 = vsel %vm9948, 1, 0
    %v9953 = vsel %vm9949, 1, 0
    %v9954 = vsel %vm9950, 1, 0
    %v9955 = vsel %vm9951, 1, 0
    %v9956 = vcvt.s32.f32 %v9952
    %v9957 = vcvt.s32.f32 %v9953
    %v9958 = vcvt.s32.f32 %v9954
    %v9959 = vcvt.s32.f32 %v9955
    %v9961 = vsel %vm9880, %v9940, 0
    %v9964 = vsel %vm9880, %v9941, 0
    %v9967 = vsel %vm9880, %v9942, 0
    %v9970 = vsel %vm9880, %v9943, 0
    %9972 = vmatprep.subr.mxu0 0.0
    %9973 = vmatpush1.msra.mxu0 %v5818
    %9974 = vmatprep.subr.mxu0 0.0
    %9975 = vmatpush1.msra.mxu0 %v5819
    %9976 = vmatprep.subr.mxu0 0.0
    %9977 = vmatpush1.msra.mxu0 %v5820
    %9978 = vmatprep.subr.mxu0 0.0
    %9979 = vmatpush1.msra.mxu0 %v5821
    %9980 = vmatprep.subr.mxu0 0.0
    %9981 = vmatpush1.msra.mxu0 %v9956
    %9982 = vmatprep.subr.mxu0 0.0
    %9983 = vmatpush1.msra.mxu0 %v9957
    %9984 = vmatprep.subr.mxu0 0.0
    %9985 = vmatpush1.msra.mxu0 %v9958
    %9986 = vmatprep.subr.mxu0 0.0
    %9987 = vmatpush1.msra.mxu0 %v9959
    %9988 = vmatprep.subr.mxu0 0.0
    %9989 = vmatpush1.msra.mxu0 0.0
    %9990 = vmatprep.subr.mxu0 0.0
    %9991 = vmatpush1.msra.mxu0 0.0
    %9992 = vmatprep.subr.mxu0 0.0
    %9993 = vmatpush1.msra.mxu0 0.0
    %9994 = vmatprep.subr.mxu0 0.0
    %9995 = vmatpush1.msra.mxu0 0.0
    %9996 = vmatprep.subr.mxu0 0.0
    %9997 = vmatpush1.msra.mxu0 0.0
    %9998 = vmatprep.subr.mxu0 0.0
    %9999 = vmatpush1.msra.mxu0 0.0
    %10000 = vmatprep.subr.mxu0 0.0
    %10001 = vmatpush1.msra.mxu0 0.0
    %10002 = vmatprep.subr.mxu0 0.0
    %10003 = vmatpush1.msra.mxu0 0.0
    %10004 = vmatprep.subr.mxu0 0.0
    %10005 = vmatpush1.msra.mxu0 0.0
    %10006 = vmatprep.subr.mxu0 0.0
    %10007 = vmatpush1.msra.mxu0 0.0
    %10008 = vmatprep.subr.mxu0 0.0
    %10009 = vmatpush1.msra.mxu0 0.0
    %10010 = vmatprep.subr.mxu0 0.0
    %10011 = vmatpush1.msra.mxu0 0.0
    %10012 = vmatprep.subr.mxu0 0.0
    %10013 = vmatpush1.msra.mxu0 0.0
    %10014 = vmatprep.subr.mxu0 0.0
    %10015 = vmatpush1.msra.mxu0 0.0
    %10016 = vmatprep.subr.mxu0 0.0
    %10017 = vmatpush1.msra.mxu0 0.0
    %10018 = vmatprep.subr.mxu0 0.0
    %10019 = vmatpush1.msra.mxu0 0.0
    %10020 = vmatprep.subr.mxu0 0.0
    %10021 = vmatpush1.msra.mxu0 0.0
    %10022 = vmatprep.subr.mxu0 0.0
    %10023 = vmatpush1.msra.mxu0 0.0
    %10024 = vmatprep.subr.mxu0 0.0
    %10025 = vmatpush1.msra.mxu0 0.0
    %10026 = vmatprep.subr.mxu0 0.0
    %10027 = vmatpush1.msra.mxu0 0.0
    %10028 = vmatprep.subr.mxu0 0.0
    %10029 = vmatpush1.msra.mxu0 0.0
    %10030 = vmatprep.subr.mxu0 0.0
    %10031 = vmatpush1.msra.mxu0 0.0
    %10032 = vmatprep.subr.mxu0 0.0
    %10033 = vmatpush1.msra.mxu0 0.0
    %10034 = vmatprep.subr.mxu0 0.0
    %10035 = vmatpush1.msra.mxu0 0.0
    %10036 = vmatprep.mubr.f32.mxu0 0.0
    %10037 = vmatmul.mubr.f32.gmra.mrb[0].mxu0 %v9961
    %v10038 = vpop.f32.mrb[0].mxu0
    %v10039 = vadd.f32 0.0, %v10038
    %v10040 = vpop.f32.mrb[0].mxu0
    %10041 = vmatprep.mubr.f32.mxu0 0.0
    %10042 = vmatmul.mubr.f32.gmra.mrb[0].mxu0 %v9964
    %v10043 = vpop.f32.mrb[0].mxu0
    %v10044 = vadd.f32 0.0, %v10043
    %v10045 = vpop.f32.mrb[0].mxu0
    %10046 = vmatprep.mubr.f32.mxu0 0.0
    %10047 = vmatmul.mubr.f32.gmra.mrb[0].mxu0 %v9967
    %v10048 = vpop.f32.mrb[0].mxu0
    %v10049 = vadd.f32 0.0, %v10048
    %v10050 = vpop.f32.mrb[0].mxu0
    %10051 = vmatprep.mubr.f32.mxu0 0.0
    %10052 = vmatmul.mubr.f32.gmra.mrb[0].mxu0 %v9970
    %v10053 = vpop.f32.mrb[0].mxu0
    %v10054 = vadd.f32 0.0, %v10053
    %v10055 = vpop.f32.mrb[0].mxu0
    %10056 = vdwg.mxu0
    %v10057 = vadd.s32 %v5809, 32
    %vm10058 = vcmp.eq.s32.totalorder %v5804, %v10057
    %vm10059 = vcmp.eq.s32.totalorder %v5805, %v10057
    %vm10060 = vcmp.eq.s32.totalorder %v5806, %v10057
    %vm10061 = vcmp.eq.s32.totalorder %v5807, %v10057
    %vm10062 = vcmp.eq.s32.totalorder %v9944, %v10057
    %vm10063 = vcmp.eq.s32.totalorder %v9945, %v10057
    %vm10064 = vcmp.eq.s32.totalorder %v9946, %v10057
    %vm10065 = vcmp.eq.s32.totalorder %v9947, %v10057
    %v10066 = vsel %vm10058, 1, 0
    %v10067 = vsel %vm10059, 1, 0
    %v10068 = vsel %vm10060, 1, 0
    %v10069 = vsel %vm10061, 1, 0
    %v10070 = vsel %vm10062, 1, 0
    %v10071 = vsel %vm10063, 1, 0
    %v10072 = vsel %vm10064, 1, 0
    %v10073 = vsel %vm10065, 1, 0
    %v10074 = vcvt.s32.f32 %v10066
    %v10075 = vcvt.s32.f32 %v10067
    %v10076 = vcvt.s32.f32 %v10068
    %v10077 = vcvt.s32.f32 %v10069
    %v10078 = vcvt.s32.f32 %v10070
    %v10079 = vcvt.s32.f32 %v10071
    %v10080 = vcvt.s32.f32 %v10072
    %v10081 = vcvt.s32.f32 %v10073
    %10082 = vmatprep.subr.mxu0 0.0
    %10083 = vmatpush1.msra.mxu0 %v10074
    %10084 = vmatprep.subr.mxu0 0.0
    %10085 = vmatpush1.msra.mxu0 %v10075
    %10086 = vmatprep.subr.mxu0 0.0
    %10087 = vmatpush1.msra.mxu0 %v10076
    %10088 = vmatprep.subr.mxu0 0.0
    %10089 = vmatpush1.msra.mxu0 %v10077
    %10090 = vmatprep.subr.mxu0 0.0
    %10091 = vmatpush1.msra.mxu0 %v10078
    %10092 = vmatprep.subr.mxu0 0.0
    %10093 = vmatpush1.msra.mxu0 %v10079
    %10094 = vmatprep.subr.mxu0 0.0
    %10095 = vmatpush1.msra.mxu0 %v10080
    %10096 = vmatprep.subr.mxu0 0.0
    %10097 = vmatpush1.msra.mxu0 %v10081
    %10098 = vmatprep.subr.mxu0 0.0
    %10099 = vmatpush1.msra.mxu0 0.0
    %10100 = vmatprep.subr.mxu0 0.0
    %10101 = vmatpush1.msra.mxu0 0.0
    %10102 = vmatprep.subr.mxu0 0.0
    %10103 = vmatpush1.msra.mxu0 0.0
    %10104 = vmatprep.subr.mxu0 0.0
    %10105 = vmatpush1.msra.mxu0 0.0
    %10106 = vmatprep.subr.mxu0 0.0
    %10107 = vmatpush1.msra.mxu0 0.0
    %10108 = vmatprep.subr.mxu0 0.0
    %10109 = vmatpush1.msra.mxu0 0.0
    %10110 = vmatprep.subr.mxu0 0.0
    %10111 = vmatpush1.msra.mxu0 0.0
    %10112 = vmatprep.subr.mxu0 0.0
    %10113 = vmatpush1.msra.mxu0 0.0
    %10114 = vmatprep.subr.mxu0 0.0
    %10115 = vmatpush1.msra.mxu0 0.0
    %10116 = vmatprep.subr.mxu0 0.0
    %10117 = vmatpush1.msra.mxu0 0.0
    %10118 = vmatprep.subr.mxu0 0.0
    %10119 = vmatpush1.msra.mxu0 0.0
    %10120 = vmatprep.subr.mxu0 0.0
    %10121 = vmatpush1.msra.mxu0 0.0
    %10122 = vmatprep.subr.mxu0 0.0
    %10123 = vmatpush1.msra.mxu0 0.0
    %10124 = vmatprep.subr.mxu0 0.0
    %10125 = vmatpush1.msra.mxu0 0.0
    %10126 = vmatprep.subr.mxu0 0.0
    %10127 = vmatpush1.msra.mxu0 0.0
    %10128 = vmatprep.subr.mxu0 0.0
    %10129 = vmatpush1.msra.mxu0 0.0
    %10130 = vmatprep.subr.mxu0 0.0
    %10131 = vmatpush1.msra.mxu0 0.0
    %10132 = vmatprep.subr.mxu0 0.0
    %10133 = vmatpush1.msra.mxu0 0.0
    %10134 = vmatprep.subr.mxu0 0.0
    %10135 = vmatpush1.msra.mxu0 0.0
    %10136 = vmatprep.subr.mxu0 0.0
    %10137 = vmatpush1.msra.mxu0 0.0
    %10138 = vmatprep.subr.mxu0 0.0
    %10139 = vmatpush1.msra.mxu0 0.0
    %10140 = vmatprep.subr.mxu0 0.0
    %10141 = vmatpush1.msra.mxu0 0.0
    %10142 = vmatprep.subr.mxu0 0.0
    %10143 = vmatpush1.msra.mxu0 0.0
    %10144 = vmatprep.subr.mxu0 0.0
    %10145 = vmatpush1.msra.mxu0 0.0
    %10146 = vmatprep.mubr.f32.mxu0 0.0
    %10147 = vmatmul.mubr.f32.gmra.mrb[0].mxu0 %v9961
    %v10148 = vpop.f32.mrb[0].mxu0
    %v10149 = vadd.f32 0.0, %v10148
    %v10150 = vpop.f32.mrb[0].mxu0
    %10151 = vmatprep.mubr.f32.mxu0 0.0
    %10152 = vmatmul.mubr.f32.gmra.mrb[0].mxu0 %v9964
    %v10153 = vpop.f32.mrb[0].mxu0
    %v10154 = vadd.f32 0.0, %v10153
    %v10155 = vpop.f32.mrb[0].mxu0
    %10156 = vmatprep.mubr.f32.mxu0 0.0
    %10157 = vmatmul.mubr.f32.gmra.mrb[0].mxu0 %v9967
    %v10158 = vpop.f32.mrb[0].mxu0
    %v10159 = vadd.f32 0.0, %v10158
    %v10160 = vpop.f32.mrb[0].mxu0
    %10161 = vmatprep.mubr.f32.mxu0 0.0
    %10162 = vmatmul.mubr.f32.gmra.mrb[0].mxu0 %v9970
    %v10163 = vpop.f32.mrb[0].mxu0
    %v10164 = vadd.f32 0.0, %v10163
    %v10165 = vpop.f32.mrb[0].mxu0
    %10166 = vdwg.mxu0
    %v10167 = vmax.f32 %v10039, 0.0
    %v10168 = vmax.f32 %v10044, 0.0
    %v10169 = vmax.f32 %v10049, 0.0
    %v10170 = vmax.f32 %v10054, 0.0
    %v10171 = vld [vmem:[%s16] sm:$0xf]
    %v10172 = vld [vmem:[%s16 + $0x4] sm:$0xf]
    %v10173 = vld [vmem:[%s16 + $0x8] sm:$0xf]
    %v10174 = vld [vmem:[%s16 + $0xc] sm:$0xf]
    %v10175 = vld [vmem:[%s16 + $0x10] sm:$0xf]
    %v10176 = vld [vmem:[%s16 + $0x14] sm:$0xf]
    %v10177 = vld [vmem:[%s16 + $0x18] sm:$0xf]
    %v10178 = vld [vmem:[%s16 + $0x1c] sm:$0xf]
    %v10179 = vld [vmem:[%s16 + $0x20] sm:$0xf]
    %v10180 = vld [vmem:[%s16 + $0x24] sm:$0xf]
    %v10181 = vld [vmem:[%s16 + $0x28] sm:$0xf]
    %v10182 = vld [vmem:[%s16 + $0x2c] sm:$0xf]
    %v10183 = vld [vmem:[%s16 + $0x30] sm:$0xf]
    %v10184 = vld [vmem:[%s16 + $0x34] sm:$0xf]
    %v10185 = vld [vmem:[%s16 + $0x38] sm:$0xf]
    %v10186 = vld [vmem:[%s16 + $0x3c] sm:$0xf]
    %v10187 = vld [vmem:[%s16 + $0x40] sm:$0xf]
    %v10188 = vld [vmem:[%s16 + $0x44] sm:$0xf]
    %v10189 = vld [vmem:[%s16 + $0x48] sm:$0xf]
    %v10190 = vld [vmem:[%s16 + $0x4c] sm:$0xf]
    %v10191 = vld [vmem:[%s16 + $0x50] sm:$0xf]
    %v10192 = vld [vmem:[%s16 + $0x54] sm:$0xf]
    %v10193 = vld [vmem:[%s16 + $0x58] sm:$0xf]
    %v10194 = vld [vmem:[%s16 + $0x5c] sm:$0xf]
    %v10195 = vld [vmem:[%s16 + $0x60] sm:$0xf]
    %v10196 = vld [vmem:[%s16 + $0x64] sm:$0xf]
    %v10197 = vld [vmem:[%s16 + $0x68] sm:$0xf]
    %v10198 = vld [vmem:[%s16 + $0x6c] sm:$0xf]
    %v10199 = vld [vmem:[%s16 + $0x70] sm:$0xf]
    %v10200 = vld [vmem:[%s16 + $0x74] sm:$0xf]
    %v10201 = vld [vmem:[%s16 + $0x78] sm:$0xf]
    %v10202 = vld [vmem:[%s16 + $0x7c] sm:$0xf]
    %v10203 = vld [vmem:[%s16 + $0x80] sm:$0xf]
    %v10204 = vld [vmem:[%s16 + $0x84] sm:$0xf]
    %v10205 = vld [vmem:[%s16 + $0x88] sm:$0xf]
    %v10206 = vld [vmem:[%s16 + $0x8c] sm:$0xf]
    %v10207 = vpack.c.bf16 %v10168, %v10167
    %v10208 = vpack.c.bf16 %v10170, %v10169
    %v10245 = vunpack.c.l.b16 %v10171
    %v10246 = vunpack.c.l.b16 %v10172
    %v10247 = vunpack.c.l.b16 %v10173
    %v10248 = vunpack.c.l.b16 %v10174
    %v10249 = vunpack.c.l.b16 %v10175
    %v10250 = vunpack.c.l.b16 %v10176
    %v10251 = vunpack.c.l.b16 %v10177
    %v10252 = vunpack.c.l.b16 %v10178
    %v10253 = vunpack.c.l.b16 %v10179
    %v10254 = vunpack.c.l.b16 %v10180
    %v10255 = vunpack.c.l.b16 %v10181
    %v10256 = vunpack.c.l.b16 %v10182
    %v10257 = vunpack.c.l.b16 %v10183
    %v10258 = vunpack.c.l.b16 %v10184
    %v10259 = vunpack.c.l.b16 %v10185
    %v10260 = vunpack.c.l.b16 %v10186
    %v10261 = vunpack.c.l.b16 %v10187
    %v10262 = vunpack.c.l.b16 %v10188
    %v10263 = vunpack.c.l.b16 %v10189
    %v10264 = vunpack.c.l.b16 %v10190
    %v10265 = vunpack.c.l.b16 %v10191
    %v10266 = vunpack.c.l.b16 %v10192
    %v10267 = vunpack.c.l.b16 %v10193
    %v10268 = vunpack.c.l.b16 %v10194
    %v10269 = vunpack.c.l.b16 %v10195
    %v10270 = vunpack.c.l.b16 %v10196
    %v10271 = vunpack.c.l.b16 %v10197
    %v10272 = vunpack.c.l.b16 %v10198
    %v10273 = vunpack.c.l.b16 %v10199
    %v10274 = vunpack.c.l.b16 %v10200
    %v10275 = vunpack.c.l.b16 %v10201
    %v10276 = vunpack.c.l.b16 %v10202
    %v10277 = vunpack.c.l.b16 %v10203
    %v10278 = vunpack.c.l.b16 %v10204
    %v10279 = vunpack.c.l.b16 %v10205
    %v10280 = vunpack.c.l.b16 %v10206
    %v10281 = vpack.c.b16 %v10246, %v10245
    %v10282 = vpack.c.b16 %v10248, %v10247
    %v10283 = vpack.c.b16 %v10250, %v10249
    %v10284 = vpack.c.b16 %v10252, %v10251
    %v10285 = vpack.c.b16 %v10254, %v10253
    %v10286 = vpack.c.b16 %v10256, %v10255
    %v10287 = vpack.c.b16 %v10258, %v10257
    %v10288 = vpack.c.b16 %v10260, %v10259
    %v10289 = vpack.c.b16 %v10262, %v10261
    %v10290 = vpack.c.b16 %v10264, %v10263
    %v10291 = vpack.c.b16 %v10266, %v10265
    %v10292 = vpack.c.b16 %v10268, %v10267
    %v10293 = vpack.c.b16 %v10270, %v10269
    %v10294 = vpack.c.b16 %v10272, %v10271
    %v10295 = vpack.c.b16 %v10274, %v10273
    %v10296 = vpack.c.b16 %v10276, %v10275
    %v10297 = vpack.c.b16 %v10278, %v10277
    %v10298 = vpack.c.b16 %v10280, %v10279
    %v10300 = vsel %vm5643, %v10281, 0
    %v10303 = vsel %vm5643, %v10282, 0
    %v10306 = vsel %vm5643, %v10283, 0
    %v10309 = vsel %vm5643, %v10284, 0
    %v10312 = vsel %vm5643, %v10285, 0
    %v10315 = vsel %vm5643, %v10286, 0
    %v10318 = vsel %vm5643, %v10287, 0
    %v10321 = vsel %vm5643, %v10288, 0
    %v10324 = vsel %vm5643, %v10289, 0
    %v10327 = vsel %vm5643, %v10290, 0
    %v10330 = vsel %vm5643, %v10291, 0
    %v10333 = vsel %vm5643, %v10292, 0
    %v10336 = vsel %vm5643, %v10293, 0
    %v10339 = vsel %vm5643, %v10294, 0
    %v10342 = vsel %vm5643, %v10295, 0
    %v10345 = vsel %vm5643, %v10296, 0
    %v10348 = vsel %vm5643, %v10297, 0
    %v10351 = vsel %vm5643, %v10298, 0
    %10353 = vmatprep.subr.bf16.mxu0 0
    %10354 = vmatpush1.bf16.msra.mxu0 %v10207
    %10355 = vmatprep.subr.bf16.mxu0 0
    %10356 = vmatpush1.bf16.msra.mxu0 %v10208
    %10357 = vmatprep.subr.bf16.mxu0 0
    %10358 = vmatpush1.bf16.msra.mxu0 0
    %10359 = vmatprep.subr.bf16.mxu0 0
    %10360 = vmatpush1.bf16.msra.mxu0 0
    %10361 = vmatprep.subr.bf16.mxu0 0
    %10362 = vmatpush1.bf16.msra.mxu0 0
    %10363 = vmatprep.subr.bf16.mxu0 0
    %10364 = vmatpush1.bf16.msra.mxu0 0
    %10365 = vmatprep.subr.bf16.mxu0 0
    %10366 = vmatpush1.bf16.msra.mxu0 0
    %10367 = vmatprep.subr.bf16.mxu0 0
    %10368 = vmatpush1.bf16.msra.mxu0 0
    %10369 = vmatprep.subr.bf16.mxu0 0
    %10370 = vmatpush1.bf16.msra.mxu0 0
    %10371 = vmatprep.subr.bf16.mxu0 0
    %10372 = vmatpush1.bf16.msra.mxu0 0
    %10373 = vmatprep.subr.bf16.mxu0 0
    %10374 = vmatpush1.bf16.msra.mxu0 0
    %10375 = vmatprep.subr.bf16.mxu0 0
    %10376 = vmatpush1.bf16.msra.mxu0 0
    %10377 = vmatprep.subr.bf16.mxu0 0
    %10378 = vmatpush1.bf16.msra.mxu0 0
    %10379 = vmatprep.subr.bf16.mxu0 0
    %10380 = vmatpush1.bf16.msra.mxu0 0
    %10381 = vmatprep.subr.bf16.mxu0 0
    %10382 = vmatpush1.bf16.msra.mxu0 0
    %10383 = vmatprep.subr.bf16.mxu0 0
    %10384 = vmatpush1.bf16.msra.mxu0 0
    %10385 = vmatprep.mubr.bf16.mxu0 0
    %10386 = vmatmul.mubr.bf16.gmra.mrb[0].mxu0 %v10300
    %v10387 = vpop.f32.mrb[0].mxu0
    %v10388 = vadd.f32 0.0, %v10387
    %v10389 = vpop.f32.mrb[0].mxu0
    %v10390 = vpop.f32.mrb[0].mxu0
    %v10391 = vadd.f32 0.0, %v10390
    %v10392 = vpop.f32.mrb[0].mxu0
    %10393 = vmatprep.mubr.bf16.mxu0 0
    %10394 = vmatmul.mubr.bf16.gmra.mrb[0].mxu0 %v10303
    %v10395 = vpop.f32.mrb[0].mxu0
    %v10396 = vadd.f32 0.0, %v10395
    %v10397 = vpop.f32.mrb[0].mxu0
    %v10398 = vpop.f32.mrb[0].mxu0
    %v10399 = vadd.f32 0.0, %v10398
    %v10400 = vpop.f32.mrb[0].mxu0
    %10401 = vmatprep.mubr.bf16.mxu0 0
    %10402 = vmatmul.mubr.bf16.gmra.mrb[0].mxu0 %v10306
    %v10403 = vpop.f32.mrb[0].mxu0
    %v10404 = vadd.f32 0.0, %v10403
    %v10405 = vpop.f32.mrb[0].mxu0
    %v10406 = vpop.f32.mrb[0].mxu0
    %v10407 = vadd.f32 0.0, %v10406
    %v10408 = vpop.f32.mrb[0].mxu0
    %10409 = vmatprep.mubr.bf16.mxu0 0
    %10410 = vmatmul.mubr.bf16.gmra.mrb[0].mxu0 %v10309
    %v10411 = vpop.f32.mrb[0].mxu0
    %v10412 = vadd.f32 0.0, %v10411
    %v10413 = vpop.f32.mrb[0].mxu0
    %v10414 = vpop.f32.mrb[0].mxu0
    %v10415 = vadd.f32 0.0, %v10414
    %v10416 = vpop.f32.mrb[0].mxu0
    %10417 = vmatprep.mubr.bf16.mxu0 0
    %10418 = vmatmul.mubr.bf16.gmra.mrb[0].mxu0 %v10312
    %v10419 = vpop.f32.mrb[0].mxu0
    %v10420 = vadd.f32 0.0, %v10419
    %v10421 = vpop.f32.mrb[0].mxu0
    %v10422 = vpop.f32.mrb[0].mxu0
    %v10423 = vadd.f32 0.0, %v10422
    %v10424 = vpop.f32.mrb[0].mxu0
    %10425 = vmatprep.mubr.bf16.mxu0 0
    %10426 = vmatmul.mubr.bf16.gmra.mrb[0].mxu0 %v10315
    %v10427 = vpop.f32.mrb[0].mxu0
    %v10428 = vadd.f32 0.0, %v10427
    %v10429 = vpop.f32.mrb[0].mxu0
    %v10430 = vpop.f32.mrb[0].mxu0
    %v10431 = vadd.f32 0.0, %v10430
    %v10432 = vpop.f32.mrb[0].mxu0
    %10433 = vmatprep.mubr.bf16.mxu0 0
    %10434 = vmatmul.mubr.bf16.gmra.mrb[0].mxu0 %v10318
    %v10435 = vpop.f32.mrb[0].mxu0
    %v10436 = vadd.f32 0.0, %v10435
    %v10437 = vpop.f32.mrb[0].mxu0
    %v10438 = vpop.f32.mrb[0].mxu0
    %v10439 = vadd.f32 0.0, %v10438
    %v10440 = vpop.f32.mrb[0].mxu0
    %10441 = vmatprep.mubr.bf16.mxu0 0
    %10442 = vmatmul.mubr.bf16.gmra.mrb[0].mxu0 %v10321
    %v10443 = vpop.f32.mrb[0].mxu0
    %v10444 = vadd.f32 0.0, %v10443
    %v10445 = vpop.f32.mrb[0].mxu0
    %v10446 = vpop.f32.mrb[0].mxu0
    %v10447 = vadd.f32 0.0, %v10446
    %v10448 = vpop.f32.mrb[0].mxu0
    %10449 = vmatprep.mubr.bf16.mxu0 0
    %10450 = vmatmul.mubr.bf16.gmra.mrb[0].mxu0 %v10324
    %v10451 = vpop.f32.mrb[0].mxu0
    %v10452 = vadd.f32 0.0, %v10451
    %v10453 = vpop.f32.mrb[0].mxu0
    %v10454 = vpop.f32.mrb[0].mxu0
    %v10455 = vadd.f32 0.0, %v10454
    %v10456 = vpop.f32.mrb[0].mxu0
    %10457 = vmatprep.mubr.bf16.mxu0 0
    %10458 = vmatmul.mubr.bf16.gmra.mrb[0].mxu0 %v10327
    %v10459 = vpop.f32.mrb[0].mxu0
    %v10460 = vadd.f32 0.0, %v10459
    %v10461 = vpop.f32.mrb[0].mxu0
    %v10462 = vpop.f32.mrb[0].mxu0
    %v10463 = vadd.f32 0.0, %v10462
    %v10464 = vpop.f32.mrb[0].mxu0
    %10465 = vmatprep.mubr.bf16.mxu0 0
    %10466 = vmatmul.mubr.bf16.gmra.mrb[0].mxu0 %v10330
    %v10467 = vpop.f32.mrb[0].mxu0
    %v10468 = vadd.f32 0.0, %v10467
    %v10469 = vpop.f32.mrb[0].mxu0
    %v10470 = vpop.f32.mrb[0].mxu0
    %v10471 = vadd.f32 0.0, %v10470
    %v10472 = vpop.f32.mrb[0].mxu0
    %10473 = vmatprep.mubr.bf16.mxu0 0
    %10474 = vmatmul.mubr.bf16.gmra.mrb[0].mxu0 %v10333
    %v10475 = vpop.f32.mrb[0].mxu0
    %v10476 = vadd.f32 0.0, %v10475
    %v10477 = vpop.f32.mrb[0].mxu0
    %v10478 = vpop.f32.mrb[0].mxu0
    %v10479 = vadd.f32 0.0, %v10478
    %v10480 = vpop.f32.mrb[0].mxu0
    %10481 = vmatprep.mubr.bf16.mxu0 0
    %10482 = vmatmul.mubr.bf16.gmra.mrb[0].mxu0 %v10336
    %v10483 = vpop.f32.mrb[0].mxu0
    %v10484 = vadd.f32 0.0, %v10483
    %v10485 = vpop.f32.mrb[0].mxu0
    %v10486 = vpop.f32.mrb[0].mxu0
    %v10487 = vadd.f32 0.0, %v10486
    %v10488 = vpop.f32.mrb[0].mxu0
    %10489 = vmatprep.mubr.bf16.mxu0 0
    %10490 = vmatmul.mubr.bf16.gmra.mrb[0].mxu0 %v10339
    %v10491 = vpop.f32.mrb[0].mxu0
    %v10492 = vadd.f32 0.0, %v10491
    %v10493 = vpop.f32.mrb[0].mxu0
    %v10494 = vpop.f32.mrb[0].mxu0
    %v10495 = vadd.f32 0.0, %v10494
    %v10496 = vpop.f32.mrb[0].mxu0
    %10497 = vmatprep.mubr.bf16.mxu0 0
    %10498 = vmatmul.mubr.bf16.gmra.mrb[0].mxu0 %v10342
    %v10499 = vpop.f32.mrb[0].mxu0
    %v10500 = vadd.f32 0.0, %v10499
    %v10501 = vpop.f32.mrb[0].mxu0
    %v10502 = vpop.f32.mrb[0].mxu0
    %v10503 = vadd.f32 0.0, %v10502
    %v10504 = vpop.f32.mrb[0].mxu0
    %10505 = vmatprep.mubr.bf16.mxu0 0
    %10506 = vmatmul.mubr.bf16.gmra.mrb[0].mxu0 %v10345
    %v10507 = vpop.f32.mrb[0].mxu0
    %v10508 = vadd.f32 0.0, %v10507
    %v10509 = vpop.f32.mrb[0].mxu0
    %v10510 = vpop.f32.mrb[0].mxu0
    %v10511 = vadd.f32 0.0, %v10510
    %v10512 = vpop.f32.mrb[0].mxu0
    %10513 = vmatprep.mubr.bf16.mxu0 0
    %10514 = vmatmul.mubr.bf16.gmra.mrb[0].mxu0 %v10348
    %v10515 = vpop.f32.mrb[0].mxu0
    %v10516 = vadd.f32 0.0, %v10515
    %v10517 = vpop.f32.mrb[0].mxu0
    %v10518 = vpop.f32.mrb[0].mxu0
    %v10519 = vadd.f32 0.0, %v10518
    %v10520 = vpop.f32.mrb[0].mxu0
    %10521 = vmatprep.mubr.bf16.mxu0 0
    %10522 = vmatmul.mubr.bf16.gmra.mrb[0].mxu0 %v10351
    %v10523 = vpop.f32.mrb[0].mxu0
    %v10524 = vadd.f32 0.0, %v10523
    %v10525 = vpop.f32.mrb[0].mxu0
    %v10526 = vpop.f32.mrb[0].mxu0
    %v10527 = vadd.f32 0.0, %v10526
    %v10528 = vpop.f32.mrb[0].mxu0
    %10529 = vdwg.mxu0
    %v10530 = vpack.c.bf16 %v10391, %v10388
    %v10531 = vpack.c.bf16 %v10399, %v10396
    %v10532 = vpack.c.bf16 %v10407, %v10404
    %v10533 = vpack.c.bf16 %v10415, %v10412
    %v10534 = vpack.c.bf16 %v10423, %v10420
    %v10535 = vpack.c.bf16 %v10431, %v10428
    %v10536 = vpack.c.bf16 %v10439, %v10436
    %v10537 = vpack.c.bf16 %v10447, %v10444
    %v10538 = vpack.c.bf16 %v10455, %v10452
    %v10539 = vpack.c.bf16 %v10463, %v10460
    %v10540 = vpack.c.bf16 %v10471, %v10468
    %v10541 = vpack.c.bf16 %v10479, %v10476
    %v10542 = vpack.c.bf16 %v10487, %v10484
    %v10543 = vpack.c.bf16 %v10495, %v10492
    %v10544 = vpack.c.bf16 %v10503, %v10500
    %v10545 = vpack.c.bf16 %v10511, %v10508
    %v10546 = vpack.c.bf16 %v10519, %v10516
    %v10547 = vpack.c.bf16 %v10527, %v10524
    %v10548 = vld [vmem:[%s17] sm:$0xf]
    %v10549 = vld [vmem:[%s17 + $0x4] sm:$0xf]
    %v10550 = vld [vmem:[%s17 + $0x8] sm:$0xf]
    %v10551 = vld [vmem:[%s17 + $0xc] sm:$0xf]
    %s10552 = scalar_lea.vmem %s17, 16
    %v10553 = vld [vmem:[%s10552] sm:$0xf]
    %v10554 = vld [vmem:[%s10552 + $0x4] sm:$0xf]
    %v10555 = vld [vmem:[%s10552 + $0x8] sm:$0xf]
    %v10556 = vld [vmem:[%s10552 + $0xc] sm:$0xf]
    %v10561 = vunpack.c.l.b16 %v10553
    %v10562 = vunpack.c.l.b16 %v10554
    %v10563 = vunpack.c.l.b16 %v10555
    %v10564 = vunpack.c.l.b16 %v10556
    %v10565 = vpack.c.b16 %v10562, %v10561
    %v10566 = vpack.c.b16 %v10564, %v10563
    %v10570 = vsel %vm5643, %v10532, 0
    %v10573 = vsel %vm5643, %v10533, 0
    %10575 = vmatprep.subr.bf16.mxu0 0
    %10576 = vmatpush1.bf16.msra.mxu0 %v10565
    %10577 = vmatprep.subr.bf16.mxu0 0
    %10578 = vmatpush1.bf16.msra.mxu0 %v10566
    %10579 = vmatprep.subr.bf16.mxu0 0
    %10580 = vmatpush1.bf16.msra.mxu0 0
    %10581 = vmatprep.subr.bf16.mxu0 0
    %10582 = vmatpush1.bf16.msra.mxu0 0
    %10583 = vmatprep.subr.bf16.mxu0 0
    %10584 = vmatpush1.bf16.msra.mxu0 0
    %10585 = vmatprep.subr.bf16.mxu0 0
    %10586 = vmatpush1.bf16.msra.mxu0 0
    %10587 = vmatprep.subr.bf16.mxu0 0
    %10588 = vmatpush1.bf16.msra.mxu0 0
    %10589 = vmatprep.subr.bf16.mxu0 0
    %10590 = vmatpush1.bf16.msra.mxu0 0
    %10591 = vmatprep.subr.bf16.mxu0 0
    %10592 = vmatpush1.bf16.msra.mxu0 0
    %10593 = vmatprep.subr.bf16.mxu0 0
    %10594 = vmatpush1.bf16.msra.mxu0 0
    %10595 = vmatprep.subr.bf16.mxu0 0
    %10596 = vmatpush1.bf16.msra.mxu0 0
    %10597 = vmatprep.subr.bf16.mxu0 0
    %10598 = vmatpush1.bf16.msra.mxu0 0
    %10599 = vmatprep.subr.bf16.mxu0 0
    %10600 = vmatpush1.bf16.msra.mxu0 0
    %10601 = vmatprep.subr.bf16.mxu0 0
    %10602 = vmatpush1.bf16.msra.mxu0 0
    %10603 = vmatprep.subr.bf16.mxu0 0
    %10604 = vmatpush1.bf16.msra.mxu0 0
    %10605 = vmatprep.subr.bf16.mxu0 0
    %10606 = vmatpush1.bf16.msra.mxu0 0
    %10607 = vmatprep.mubr.bf16.mxu0 0
    %10608 = vmatmul.mubr.bf16.gmra.mrb[0].mxu0 %v10570
    %v10609 = vpop.f32.mrb[0].mxu0
    %v10610 = vadd.f32 0.0, %v10609
    %v10611 = vpop.f32.mrb[0].mxu0
    %v10612 = vpop.f32.mrb[0].mxu0
    %v10613 = vadd.f32 0.0, %v10612
    %v10614 = vpop.f32.mrb[0].mxu0
    %10615 = vmatprep.mubr.bf16.mxu0 0
    %10616 = vmatmul.mubr.bf16.gmra.mrb[0].mxu0 %v10573
    %v10617 = vpop.f32.mrb[0].mxu0
    %v10618 = vadd.f32 0.0, %v10617
    %v10619 = vpop.f32.mrb[0].mxu0
    %v10620 = vpop.f32.mrb[0].mxu0
    %v10621 = vadd.f32 0.0, %v10620
    %v10622 = vpop.f32.mrb[0].mxu0
    %10623 = vdwg.mxu0
    %v10628 = vunpack.c.l.b16 %v10548
    %v10629 = vunpack.c.l.b16 %v10549
    %v10630 = vunpack.c.l.b16 %v10550
    %v10631 = vunpack.c.l.b16 %v10551
    %v10632 = vpack.c.b16 %v10629, %v10628
    %v10633 = vpack.c.b16 %v10631, %v10630
    %v10637 = vsel %vm5643, %v10530, 0
    %v10640 = vsel %vm5643, %v10531, 0
    %10642 = vmatprep.subr.bf16.mxu0 0
    %10643 = vmatpush1.bf16.msra.mxu0 %v10632
    %10644 = vmatprep.subr.bf16.mxu0 0
    %10645 = vmatpush1.bf16.msra.mxu0 %v10633
    %10646 = vmatprep.subr.bf16.mxu0 0
    %10647 = vmatpush1.bf16.msra.mxu0 0
    %10648 = vmatprep.subr.bf16.mxu0 0
    %10649 = vmatpush1.bf16.msra.mxu0 0
    %10650 = vmatprep.subr.bf16.mxu0 0
    %10651 = vmatpush1.bf16.msra.mxu0 0
    %10652 = vmatprep.subr.bf16.mxu0 0
    %10653 = vmatpush1.bf16.msra.mxu0 0
    %10654 = vmatprep.subr.bf16.mxu0 0
    %10655 = vmatpush1.bf16.msra.mxu0 0
    %10656 = vmatprep.subr.bf16.mxu0 0
    %10657 = vmatpush1.bf16.msra.mxu0 0
    %10658 = vmatprep.subr.bf16.mxu0 0
    %10659 = vmatpush1.bf16.msra.mxu0 0
    %10660 = vmatprep.subr.bf16.mxu0 0
    %10661 = vmatpush1.bf16.msra.mxu0 0
    %10662 = vmatprep.subr.bf16.mxu0 0
    %10663 = vmatpush1.bf16.msra.mxu0 0
    %10664 = vmatprep.subr.bf16.mxu0 0
    %10665 = vmatpush1.bf16.msra.mxu0 0
    %10666 = vmatprep.subr.bf16.mxu0 0
    %10667 = vmatpush1.bf16.msra.mxu0 0
    %10668 = vmatprep.subr.bf16.mxu0 0
    %10669 = vmatpush1.bf16.msra.mxu0 0
    %10670 = vmatprep.subr.bf16.mxu0 0
    %10671 = vmatpush1.bf16.msra.mxu0 0
    %10672 = vmatprep.subr.bf16.mxu0 0
    %10673 = vmatpush1.bf16.msra.mxu0 0
    %10674 = vmatprep.mubr.bf16.mxu0 0
    %10675 = vmatmul.mubr.bf16.gmra.mrb[0].mxu0 %v10637
    %v10676 = vpop.f32.mrb[0].mxu0
    %v10677 = vadd.f32 %v10610, %v10676
    %v10678 = vpop.f32.mrb[0].mxu0
    %v10679 = vpop.f32.mrb[0].mxu0
    %v10680 = vadd.f32 %v10613, %v10679
    %v10681 = vpop.f32.mrb[0].mxu0
    %10682 = vmatprep.mubr.bf16.mxu0 0
    %10683 = vmatmul.mubr.bf16.gmra.mrb[0].mxu0 %v10640
    %v10684 = vpop.f32.mrb[0].mxu0
    %v10685 = vadd.f32 %v10618, %v10684
    %v10686 = vpop.f32.mrb[0].mxu0
    %v10687 = vpop.f32.mrb[0].mxu0
    %v10688 = vadd.f32 %v10621, %v10687
    %v10689 = vpop.f32.mrb[0].mxu0
    %10690 = vdwg.mxu0
    %s10691 = scalar_lea.vmem %s17, 32
    %v10692 = vld [vmem:[%s10691] sm:$0xf]
    %v10693 = vld [vmem:[%s10691 + $0x4] sm:$0xf]
    %v10694 = vld [vmem:[%s10691 + $0x8] sm:$0xf]
    %v10695 = vld [vmem:[%s10691 + $0xc] sm:$0xf]
    %v10700 = vunpack.c.l.b16 %v10692
    %v10701 = vunpack.c.l.b16 %v10693
    %v10702 = vunpack.c.l.b16 %v10694
    %v10703 = vunpack.c.l.b16 %v10695
    %v10704 = vpack.c.b16 %v10701, %v10700
    %v10705 = vpack.c.b16 %v10703, %v10702
    %v10709 = vsel %vm5643, %v10534, 0
    %v10712 = vsel %vm5643, %v10535, 0
    %10714 = vmatprep.subr.bf16.mxu0 0
    %10715 = vmatpush1.bf16.msra.mxu0 %v10704
    %10716 = vmatprep.subr.bf16.mxu0 0
    %10717 = vmatpush1.bf16.msra.mxu0 %v10705
    %10718 = vmatprep.subr.bf16.mxu0 0
    %10719 = vmatpush1.bf16.msra.mxu0 0
    %10720 = vmatprep.subr.bf16.mxu0 0
    %10721 = vmatpush1.bf16.msra.mxu0 0
    %10722 = vmatprep.subr.bf16.mxu0 0
    %10723 = vmatpush1.bf16.msra.mxu0 0
    %10724 = vmatprep.subr.bf16.mxu0 0
    %10725 = vmatpush1.bf16.msra.mxu0 0
    %10726 = vmatprep.subr.bf16.mxu0 0
    %10727 = vmatpush1.bf16.msra.mxu0 0
    %10728 = vmatprep.subr.bf16.mxu0 0
    %10729 = vmatpush1.bf16.msra.mxu0 0
    %10730 = vmatprep.subr.bf16.mxu0 0
    %10731 = vmatpush1.bf16.msra.mxu0 0
    %10732 = vmatprep.subr.bf16.mxu0 0
    %10733 = vmatpush1.bf16.msra.mxu0 0
    %10734 = vmatprep.subr.bf16.mxu0 0
    %10735 = vmatpush1.bf16.msra.mxu0 0
    %10736 = vmatprep.subr.bf16.mxu0 0
    %10737 = vmatpush1.bf16.msra.mxu0 0
    %10738 = vmatprep.subr.bf16.mxu0 0
    %10739 = vmatpush1.bf16.msra.mxu0 0
    %10740 = vmatprep.subr.bf16.mxu0 0
    %10741 = vmatpush1.bf16.msra.mxu0 0
    %10742 = vmatprep.subr.bf16.mxu0 0
    %10743 = vmatpush1.bf16.msra.mxu0 0
    %10744 = vmatprep.subr.bf16.mxu0 0
    %10745 = vmatpush1.bf16.msra.mxu0 0
    %10746 = vmatprep.mubr.bf16.mxu0 0
    %10747 = vmatmul.mubr.bf16.gmra.mrb[0].mxu0 %v10709
    %v10748 = vpop.f32.mrb[0].mxu0
    %v10749 = vadd.f32 0.0, %v10748
    %v10750 = vpop.f32.mrb[0].mxu0
    %v10751 = vpop.f32.mrb[0].mxu0
    %v10752 = vadd.f32 0.0, %v10751
    %v10753 = vpop.f32.mrb[0].mxu0
    %10754 = vmatprep.mubr.bf16.mxu0 0
    %10755 = vmatmul.mubr.bf16.gmra.mrb[0].mxu0 %v10712
    %v10756 = vpop.f32.mrb[0].mxu0
    %v10757 = vadd.f32 0.0, %v10756
    %v10758 = vpop.f32.mrb[0].mxu0
    %v10759 = vpop.f32.mrb[0].mxu0
    %v10760 = vadd.f32 0.0, %v10759
    %v10761 = vpop.f32.mrb[0].mxu0
    %10762 = vdwg.mxu0
    %v10763 = vadd.f32 %v10677, %v10749
    %v10764 = vadd.f32 %v10680, %v10752
    %v10765 = vadd.f32 %v10685, %v10757
    %v10766 = vadd.f32 %v10688, %v10760
    %s10767 = scalar_lea.vmem %s17, 48
    %v10768 = vld [vmem:[%s10767] sm:$0xf]
    %v10769 = vld [vmem:[%s10767 + $0x4] sm:$0xf]
    %v10770 = vld [vmem:[%s10767 + $0x8] sm:$0xf]
    %v10771 = vld [vmem:[%s10767 + $0xc] sm:$0xf]
    %v10776 = vunpack.c.l.b16 %v10768
    %v10777 = vunpack.c.l.b16 %v10769
    %v10778 = vunpack.c.l.b16 %v10770
    %v10779 = vunpack.c.l.b16 %v10771
    %v10780 = vpack.c.b16 %v10777, %v10776
    %v10781 = vpack.c.b16 %v10779, %v10778
    %v10785 = vsel %vm5643, %v10536, 0
    %v10788 = vsel %vm5643, %v10537, 0
    %10790 = vmatprep.subr.bf16.mxu0 0
    %10791 = vmatpush1.bf16.msra.mxu0 %v10780
    %10792 = vmatprep.subr.bf16.mxu0 0
    %10793 = vmatpush1.bf16.msra.mxu0 %v10781
    %10794 = vmatprep.subr.bf16.mxu0 0
    %10795 = vmatpush1.bf16.msra.mxu0 0
    %10796 = vmatprep.subr.bf16.mxu0 0
    %10797 = vmatpush1.bf16.msra.mxu0 0
    %10798 = vmatprep.subr.bf16.mxu0 0
    %10799 = vmatpush1.bf16.msra.mxu0 0
    %10800 = vmatprep.subr.bf16.mxu0 0
    %10801 = vmatpush1.bf16.msra.mxu0 0
    %10802 = vmatprep.subr.bf16.mxu0 0
    %10803 = vmatpush1.bf16.msra.mxu0 0
    %10804 = vmatprep.subr.bf16.mxu0 0
    %10805 = vmatpush1.bf16.msra.mxu0 0
    %10806 = vmatprep.subr.bf16.mxu0 0
    %10807 = vmatpush1.bf16.msra.mxu0 0
    %10808 = vmatprep.subr.bf16.mxu0 0
    %10809 = vmatpush1.bf16.msra.mxu0 0
    %10810 = vmatprep.subr.bf16.mxu0 0
    %10811 = vmatpush1.bf16.msra.mxu0 0
    %10812 = vmatprep.subr.bf16.mxu0 0
    %10813 = vmatpush1.bf16.msra.mxu0 0
    %10814 = vmatprep.subr.bf16.mxu0 0
    %10815 = vmatpush1.bf16.msra.mxu0 0
    %10816 = vmatprep.subr.bf16.mxu0 0
    %10817 = vmatpush1.bf16.msra.mxu0 0
    %10818 = vmatprep.subr.bf16.mxu0 0
    %10819 = vmatpush1.bf16.msra.mxu0 0
    %10820 = vmatprep.subr.bf16.mxu0 0
    %10821 = vmatpush1.bf16.msra.mxu0 0
    %10822 = vmatprep.mubr.bf16.mxu0 0
    %10823 = vmatmul.mubr.bf16.gmra.mrb[0].mxu0 %v10785
    %v10824 = vpop.f32.mrb[0].mxu0
    %v10825 = vadd.f32 0.0, %v10824
    %v10826 = vpop.f32.mrb[0].mxu0
    %v10827 = vpop.f32.mrb[0].mxu0
    %v10828 = vadd.f32 0.0, %v10827
    %v10829 = vpop.f32.mrb[0].mxu0
    %10830 = vmatprep.mubr.bf16.mxu0 0
    %10831 = vmatmul.mubr.bf16.gmra.mrb[0].mxu0 %v10788
    %v10832 = vpop.f32.mrb[0].mxu0
    %v10833 = vadd.f32 0.0, %v10832
    %v10834 = vpop.f32.mrb[0].mxu0
    %v10835 = vpop.f32.mrb[0].mxu0
    %v10836 = vadd.f32 0.0, %v10835
    %v10837 = vpop.f32.mrb[0].mxu0
    %10838 = vdwg.mxu0
    %v10839 = vadd.f32 %v10763, %v10825
    %v10840 = vadd.f32 %v10764, %v10828
    %v10841 = vadd.f32 %v10765, %v10833
    %v10842 = vadd.f32 %v10766, %v10836
    %s10843 = scalar_lea.vmem %s17, 64
    %v10844 = vld [vmem:[%s10843] sm:$0xf]
    %v10845 = vld [vmem:[%s10843 + $0x4] sm:$0xf]
    %v10846 = vld [vmem:[%s10843 + $0x8] sm:$0xf]
    %v10847 = vld [vmem:[%s10843 + $0xc] sm:$0xf]
    %v10852 = vunpack.c.l.b16 %v10844
    %v10853 = vunpack.c.l.b16 %v10845
    %v10854 = vunpack.c.l.b16 %v10846
    %v10855 = vunpack.c.l.b16 %v10847
    %v10856 = vpack.c.b16 %v10853, %v10852
    %v10857 = vpack.c.b16 %v10855, %v10854
    %v10861 = vsel %vm5643, %v10538, 0
    %v10864 = vsel %vm5643, %v10539, 0
    %10866 = vmatprep.subr.bf16.mxu0 0
    %10867 = vmatpush1.bf16.msra.mxu0 %v10856
    %10868 = vmatprep.subr.bf16.mxu0 0
    %10869 = vmatpush1.bf16.msra.mxu0 %v10857
    %10870 = vmatprep.subr.bf16.mxu0 0
    %10871 = vmatpush1.bf16.msra.mxu0 0
    %10872 = vmatprep.subr.bf16.mxu0 0
    %10873 = vmatpush1.bf16.msra.mxu0 0
    %10874 = vmatprep.subr.bf16.mxu0 0
    %10875 = vmatpush1.bf16.msra.mxu0 0
    %10876 = vmatprep.subr.bf16.mxu0 0
    %10877 = vmatpush1.bf16.msra.mxu0 0
    %10878 = vmatprep.subr.bf16.mxu0 0
    %10879 = vmatpush1.bf16.msra.mxu0 0
    %10880 = vmatprep.subr.bf16.mxu0 0
    %10881 = vmatpush1.bf16.msra.mxu0 0
    %10882 = vmatprep.subr.bf16.mxu0 0
    %10883 = vmatpush1.bf16.msra.mxu0 0
    %10884 = vmatprep.subr.bf16.mxu0 0
    %10885 = vmatpush1.bf16.msra.mxu0 0
    %10886 = vmatprep.subr.bf16.mxu0 0
    %10887 = vmatpush1.bf16.msra.mxu0 0
    %10888 = vmatprep.subr.bf16.mxu0 0
    %10889 = vmatpush1.bf16.msra.mxu0 0
    %10890 = vmatprep.subr.bf16.mxu0 0
    %10891 = vmatpush1.bf16.msra.mxu0 0
    %10892 = vmatprep.subr.bf16.mxu0 0
    %10893 = vmatpush1.bf16.msra.mxu0 0
    %10894 = vmatprep.subr.bf16.mxu0 0
    %10895 = vmatpush1.bf16.msra.mxu0 0
    %10896 = vmatprep.subr.bf16.mxu0 0
    %10897 = vmatpush1.bf16.msra.mxu0 0
    %10898 = vmatprep.mubr.bf16.mxu0 0
    %10899 = vmatmul.mubr.bf16.gmra.mrb[0].mxu0 %v10861
    %v10900 = vpop.f32.mrb[0].mxu0
    %v10901 = vadd.f32 0.0, %v10900
    %v10902 = vpop.f32.mrb[0].mxu0
    %v10903 = vpop.f32.mrb[0].mxu0
    %v10904 = vadd.f32 0.0, %v10903
    %v10905 = vpop.f32.mrb[0].mxu0
    %10906 = vmatprep.mubr.bf16.mxu0 0
    %10907 = vmatmul.mubr.bf16.gmra.mrb[0].mxu0 %v10864
    %v10908 = vpop.f32.mrb[0].mxu0
    %v10909 = vadd.f32 0.0, %v10908
    %v10910 = vpop.f32.mrb[0].mxu0
    %v10911 = vpop.f32.mrb[0].mxu0
    %v10912 = vadd.f32 0.0, %v10911
    %v10913 = vpop.f32.mrb[0].mxu0
    %10914 = vdwg.mxu0
    %v10915 = vadd.f32 %v10839, %v10901
    %v10916 = vadd.f32 %v10840, %v10904
    %v10917 = vadd.f32 %v10841, %v10909
    %v10918 = vadd.f32 %v10842, %v10912
    %s10919 = scalar_lea.vmem %s17, 80
    %v10920 = vld [vmem:[%s10919] sm:$0xf]
    %v10921 = vld [vmem:[%s10919 + $0x4] sm:$0xf]
    %v10922 = vld [vmem:[%s10919 + $0x8] sm:$0xf]
    %v10923 = vld [vmem:[%s10919 + $0xc] sm:$0xf]
    %v10928 = vunpack.c.l.b16 %v10920
    %v10929 = vunpack.c.l.b16 %v10921
    %v10930 = vunpack.c.l.b16 %v10922
    %v10931 = vunpack.c.l.b16 %v10923
    %v10932 = vpack.c.b16 %v10929, %v10928
    %v10933 = vpack.c.b16 %v10931, %v10930
    %v10937 = vsel %vm5643, %v10540, 0
    %v10940 = vsel %vm5643, %v10541, 0
    %10942 = vmatprep.subr.bf16.mxu0 0
    %10943 = vmatpush1.bf16.msra.mxu0 %v10932
    %10944 = vmatprep.subr.bf16.mxu0 0
    %10945 = vmatpush1.bf16.msra.mxu0 %v10933
    %10946 = vmatprep.subr.bf16.mxu0 0
    %10947 = vmatpush1.bf16.msra.mxu0 0
    %10948 = vmatprep.subr.bf16.mxu0 0
    %10949 = vmatpush1.bf16.msra.mxu0 0
    %10950 = vmatprep.subr.bf16.mxu0 0
    %10951 = vmatpush1.bf16.msra.mxu0 0
    %10952 = vmatprep.subr.bf16.mxu0 0
    %10953 = vmatpush1.bf16.msra.mxu0 0
    %10954 = vmatprep.subr.bf16.mxu0 0
    %10955 = vmatpush1.bf16.msra.mxu0 0
    %10956 = vmatprep.subr.bf16.mxu0 0
    %10957 = vmatpush1.bf16.msra.mxu0 0
    %10958 = vmatprep.subr.bf16.mxu0 0
    %10959 = vmatpush1.bf16.msra.mxu0 0
    %10960 = vmatprep.subr.bf16.mxu0 0
    %10961 = vmatpush1.bf16.msra.mxu0 0
    %10962 = vmatprep.subr.bf16.mxu0 0
    %10963 = vmatpush1.bf16.msra.mxu0 0
    %10964 = vmatprep.subr.bf16.mxu0 0
    %10965 = vmatpush1.bf16.msra.mxu0 0
    %10966 = vmatprep.subr.bf16.mxu0 0
    %10967 = vmatpush1.bf16.msra.mxu0 0
    %10968 = vmatprep.subr.bf16.mxu0 0
    %10969 = vmatpush1.bf16.msra.mxu0 0
    %10970 = vmatprep.subr.bf16.mxu0 0
    %10971 = vmatpush1.bf16.msra.mxu0 0
    %10972 = vmatprep.subr.bf16.mxu0 0
    %10973 = vmatpush1.bf16.msra.mxu0 0
    %10974 = vmatprep.mubr.bf16.mxu0 0
    %10975 = vmatmul.mubr.bf16.gmra.mrb[0].mxu0 %v10937
    %v10976 = vpop.f32.mrb[0].mxu0
    %v10977 = vadd.f32 0.0, %v10976
    %v10978 = vpop.f32.mrb[0].mxu0
    %v10979 = vpop.f32.mrb[0].mxu0
    %v10980 = vadd.f32 0.0, %v10979
    %v10981 = vpop.f32.mrb[0].mxu0
    %10982 = vmatprep.mubr.bf16.mxu0 0
    %10983 = vmatmul.mubr.bf16.gmra.mrb[0].mxu0 %v10940
    %v10984 = vpop.f32.mrb[0].mxu0
    %v10985 = vadd.f32 0.0, %v10984
    %v10986 = vpop.f32.mrb[0].mxu0
    %v10987 = vpop.f32.mrb[0].mxu0
    %v10988 = vadd.f32 0.0, %v10987
    %v10989 = vpop.f32.mrb[0].mxu0
    %10990 = vdwg.mxu0
    %v10991 = vadd.f32 %v10915, %v10977
    %v10992 = vadd.f32 %v10916, %v10980
    %v10993 = vadd.f32 %v10917, %v10985
    %v10994 = vadd.f32 %v10918, %v10988
    %s10995 = scalar_lea.vmem %s17, 96
    %v10996 = vld [vmem:[%s10995] sm:$0xf]
    %v10997 = vld [vmem:[%s10995 + $0x4] sm:$0xf]
    %v10998 = vld [vmem:[%s10995 + $0x8] sm:$0xf]
    %v10999 = vld [vmem:[%s10995 + $0xc] sm:$0xf]
    %v11004 = vunpack.c.l.b16 %v10996
    %v11005 = vunpack.c.l.b16 %v10997
    %v11006 = vunpack.c.l.b16 %v10998
    %v11007 = vunpack.c.l.b16 %v10999
    %v11008 = vpack.c.b16 %v11005, %v11004
    %v11009 = vpack.c.b16 %v11007, %v11006
    %v11013 = vsel %vm5643, %v10542, 0
    %v11016 = vsel %vm5643, %v10543, 0
    %11018 = vmatprep.subr.bf16.mxu0 0
    %11019 = vmatpush1.bf16.msra.mxu0 %v11008
    %11020 = vmatprep.subr.bf16.mxu0 0
    %11021 = vmatpush1.bf16.msra.mxu0 %v11009
    %11022 = vmatprep.subr.bf16.mxu0 0
    %11023 = vmatpush1.bf16.msra.mxu0 0
    %11024 = vmatprep.subr.bf16.mxu0 0
    %11025 = vmatpush1.bf16.msra.mxu0 0
    %11026 = vmatprep.subr.bf16.mxu0 0
    %11027 = vmatpush1.bf16.msra.mxu0 0
    %11028 = vmatprep.subr.bf16.mxu0 0
    %11029 = vmatpush1.bf16.msra.mxu0 0
    %11030 = vmatprep.subr.bf16.mxu0 0
    %11031 = vmatpush1.bf16.msra.mxu0 0
    %11032 = vmatprep.subr.bf16.mxu0 0
    %11033 = vmatpush1.bf16.msra.mxu0 0
    %11034 = vmatprep.subr.bf16.mxu0 0
    %11035 = vmatpush1.bf16.msra.mxu0 0
    %11036 = vmatprep.subr.bf16.mxu0 0
    %11037 = vmatpush1.bf16.msra.mxu0 0
    %11038 = vmatprep.subr.bf16.mxu0 0
    %11039 = vmatpush1.bf16.msra.mxu0 0
    %11040 = vmatprep.subr.bf16.mxu0 0
    %11041 = vmatpush1.bf16.msra.mxu0 0
    %11042 = vmatprep.subr.bf16.mxu0 0
    %11043 = vmatpush1.bf16.msra.mxu0 0
    %11044 = vmatprep.subr.bf16.mxu0 0
    %11045 = vmatpush1.bf16.msra.mxu0 0
    %11046 = vmatprep.subr.bf16.mxu0 0
    %11047 = vmatpush1.bf16.msra.mxu0 0
    %11048 = vmatprep.subr.bf16.mxu0 0
    %11049 = vmatpush1.bf16.msra.mxu0 0
    %11050 = vmatprep.mubr.bf16.mxu0 0
    %11051 = vmatmul.mubr.bf16.gmra.mrb[0].mxu0 %v11013
    %v11052 = vpop.f32.mrb[0].mxu0
    %v11053 = vadd.f32 0.0, %v11052
    %v11054 = vpop.f32.mrb[0].mxu0
    %v11055 = vpop.f32.mrb[0].mxu0
    %v11056 = vadd.f32 0.0, %v11055
    %v11057 = vpop.f32.mrb[0].mxu0
    %11058 = vmatprep.mubr.bf16.mxu0 0
    %11059 = vmatmul.mubr.bf16.gmra.mrb[0].mxu0 %v11016
    %v11060 = vpop.f32.mrb[0].mxu0
    %v11061 = vadd.f32 0.0, %v11060
    %v11062 = vpop.f32.mrb[0].mxu0
    %v11063 = vpop.f32.mrb[0].mxu0
    %v11064 = vadd.f32 0.0, %v11063
    %v11065 = vpop.f32.mrb[0].mxu0
    %11066 = vdwg.mxu0
    %v11067 = vadd.f32 %v10991, %v11053
    %v11068 = vadd.f32 %v10992, %v11056
    %v11069 = vadd.f32 %v10993, %v11061
    %v11070 = vadd.f32 %v10994, %v11064
    %s11071 = scalar_lea.vmem %s17, 112
    %v11072 = vld [vmem:[%s11071] sm:$0xf]
    %v11073 = vld [vmem:[%s11071 + $0x4] sm:$0xf]
    %v11074 = vld [vmem:[%s11071 + $0x8] sm:$0xf]
    %v11075 = vld [vmem:[%s11071 + $0xc] sm:$0xf]
    %v11080 = vunpack.c.l.b16 %v11072
    %v11081 = vunpack.c.l.b16 %v11073
    %v11082 = vunpack.c.l.b16 %v11074
    %v11083 = vunpack.c.l.b16 %v11075
    %v11084 = vpack.c.b16 %v11081, %v11080
    %v11085 = vpack.c.b16 %v11083, %v11082
    %v11089 = vsel %vm5643, %v10544, 0
    %v11092 = vsel %vm5643, %v10545, 0
    %11094 = vmatprep.subr.bf16.mxu0 0
    %11095 = vmatpush1.bf16.msra.mxu0 %v11084
    %11096 = vmatprep.subr.bf16.mxu0 0
    %11097 = vmatpush1.bf16.msra.mxu0 %v11085
    %11098 = vmatprep.subr.bf16.mxu0 0
    %11099 = vmatpush1.bf16.msra.mxu0 0
    %11100 = vmatprep.subr.bf16.mxu0 0
    %11101 = vmatpush1.bf16.msra.mxu0 0
    %11102 = vmatprep.subr.bf16.mxu0 0
    %11103 = vmatpush1.bf16.msra.mxu0 0
    %11104 = vmatprep.subr.bf16.mxu0 0
    %11105 = vmatpush1.bf16.msra.mxu0 0
    %11106 = vmatprep.subr.bf16.mxu0 0
    %11107 = vmatpush1.bf16.msra.mxu0 0
    %11108 = vmatprep.subr.bf16.mxu0 0
    %11109 = vmatpush1.bf16.msra.mxu0 0
    %11110 = vmatprep.subr.bf16.mxu0 0
    %11111 = vmatpush1.bf16.msra.mxu0 0
    %11112 = vmatprep.subr.bf16.mxu0 0
    %11113 = vmatpush1.bf16.msra.mxu0 0
    %11114 = vmatprep.subr.bf16.mxu0 0
    %11115 = vmatpush1.bf16.msra.mxu0 0
    %11116 = vmatprep.subr.bf16.mxu0 0
    %11117 = vmatpush1.bf16.msra.mxu0 0
    %11118 = vmatprep.subr.bf16.mxu0 0
    %11119 = vmatpush1.bf16.msra.mxu0 0
    %11120 = vmatprep.subr.bf16.mxu0 0
    %11121 = vmatpush1.bf16.msra.mxu0 0
    %11122 = vmatprep.subr.bf16.mxu0 0
    %11123 = vmatpush1.bf16.msra.mxu0 0
    %11124 = vmatprep.subr.bf16.mxu0 0
    %11125 = vmatpush1.bf16.msra.mxu0 0
    %11126 = vmatprep.mubr.bf16.mxu0 0
    %11127 = vmatmul.mubr.bf16.gmra.mrb[0].mxu0 %v11089
    %v11128 = vpop.f32.mrb[0].mxu0
    %v11129 = vadd.f32 0.0, %v11128
    %v11130 = vpop.f32.mrb[0].mxu0
    %v11131 = vpop.f32.mrb[0].mxu0
    %v11132 = vadd.f32 0.0, %v11131
    %v11133 = vpop.f32.mrb[0].mxu0
    %11134 = vmatprep.mubr.bf16.mxu0 0
    %11135 = vmatmul.mubr.bf16.gmra.mrb[0].mxu0 %v11092
    %v11136 = vpop.f32.mrb[0].mxu0
    %v11137 = vadd.f32 0.0, %v11136
    %v11138 = vpop.f32.mrb[0].mxu0
    %v11139 = vpop.f32.mrb[0].mxu0
    %v11140 = vadd.f32 0.0, %v11139
    %v11141 = vpop.f32.mrb[0].mxu0
    %11142 = vdwg.mxu0
    %v11143 = vadd.f32 %v11067, %v11129
    %v11144 = vadd.f32 %v11068, %v11132
    %v11145 = vadd.f32 %v11069, %v11137
    %v11146 = vadd.f32 %v11070, %v11140
    %s11147 = scalar_lea.vmem %s17, 128
    %v11148 = vld [vmem:[%s11147] sm:$0xf]
    %v11149 = vld [vmem:[%s11147 + $0x4] sm:$0xf]
    %v11150 = vld [vmem:[%s11147 + $0x8] sm:$0xf]
    %v11151 = vld [vmem:[%s11147 + $0xc] sm:$0xf]
    %v11156 = vunpack.c.l.b16 %v11148
    %v11157 = vunpack.c.l.b16 %v11149
    %v11158 = vunpack.c.l.b16 %v11150
    %v11159 = vunpack.c.l.b16 %v11151
    %v11160 = vpack.c.b16 %v11157, %v11156
    %v11161 = vpack.c.b16 %v11159, %v11158
    %v11165 = vsel %vm5643, %v10546, 0
    %v11168 = vsel %vm5643, %v10547, 0
    %11170 = vmatprep.subr.bf16.mxu0 0
    %11171 = vmatpush1.bf16.msra.mxu0 %v11160
    %11172 = vmatprep.subr.bf16.mxu0 0
    %11173 = vmatpush1.bf16.msra.mxu0 %v11161
    %11174 = vmatprep.subr.bf16.mxu0 0
    %11175 = vmatpush1.bf16.msra.mxu0 0
    %11176 = vmatprep.subr.bf16.mxu0 0
    %11177 = vmatpush1.bf16.msra.mxu0 0
    %11178 = vmatprep.subr.bf16.mxu0 0
    %11179 = vmatpush1.bf16.msra.mxu0 0
    %11180 = vmatprep.subr.bf16.mxu0 0
    %11181 = vmatpush1.bf16.msra.mxu0 0
    %11182 = vmatprep.subr.bf16.mxu0 0
    %11183 = vmatpush1.bf16.msra.mxu0 0
    %11184 = vmatprep.subr.bf16.mxu0 0
    %11185 = vmatpush1.bf16.msra.mxu0 0
    %11186 = vmatprep.subr.bf16.mxu0 0
    %11187 = vmatpush1.bf16.msra.mxu0 0
    %11188 = vmatprep.subr.bf16.mxu0 0
    %11189 = vmatpush1.bf16.msra.mxu0 0
    %11190 = vmatprep.subr.bf16.mxu0 0
    %11191 = vmatpush1.bf16.msra.mxu0 0
    %11192 = vmatprep.subr.bf16.mxu0 0
    %11193 = vmatpush1.bf16.msra.mxu0 0
    %11194 = vmatprep.subr.bf16.mxu0 0
    %11195 = vmatpush1.bf16.msra.mxu0 0
    %11196 = vmatprep.subr.bf16.mxu0 0
    %11197 = vmatpush1.bf16.msra.mxu0 0
    %11198 = vmatprep.subr.bf16.mxu0 0
    %11199 = vmatpush1.bf16.msra.mxu0 0
    %11200 = vmatprep.subr.bf16.mxu0 0
    %11201 = vmatpush1.bf16.msra.mxu0 0
    %11202 = vmatprep.mubr.bf16.mxu0 0
    %11203 = vmatmul.mubr.bf16.gmra.mrb[0].mxu0 %v11165
    %v11204 = vpop.f32.mrb[0].mxu0
    %v11205 = vadd.f32 0.0, %v11204
    %v11206 = vpop.f32.mrb[0].mxu0
    %v11207 = vpop.f32.mrb[0].mxu0
    %v11208 = vadd.f32 0.0, %v11207
    %v11209 = vpop.f32.mrb[0].mxu0
    %11210 = vmatprep.mubr.bf16.mxu0 0
    %11211 = vmatmul.mubr.bf16.gmra.mrb[0].mxu0 %v11168
    %v11212 = vpop.f32.mrb[0].mxu0
    %v11213 = vadd.f32 0.0, %v11212
    %v11214 = vpop.f32.mrb[0].mxu0
    %v11215 = vpop.f32.mrb[0].mxu0
    %v11216 = vadd.f32 0.0, %v11215
    %v11217 = vpop.f32.mrb[0].mxu0
    %11218 = vdwg.mxu0
    %v11219 = vadd.f32 %v11143, %v11205
    %v11220 = vadd.f32 %v11144, %v11208
    %v11221 = vadd.f32 %v11145, %v11213
    %v11222 = vadd.f32 %v11146, %v11216
    %v11223 = vld [vmem:[%s18] sm:$0x1]
    %v11224 = vld [vmem:[%s19] sm:$0x1]
    %v11225 = vsel %vm5643, %v11219, 0.0
    %v11226 = vsel %vm5643, %v11220, 0.0
    %v11227 = vadd.f32 %v11225, %v11226
    %v11228 = vsel %vm5643, %v11221, 0.0
    %v11229 = vadd.f32 %v11227, %v11228
    %v11230 = vsel %vm5643, %v11222, 0.0
    %v11231 = vadd.f32 %v11229, %v11230
    %v11232 = vrot.slane %v11231, 4
    %v11233 = vadd.f32 %v11231, %v11232
    %v11234 = vrot.slane %v11233, 2
    %v11235 = vadd.f32 %v11233, %v11234
    %v11236 = vrot.slane %v11235, 1
    %v11237 = vadd.f32 %v11235, %v11236
    %v11238 = vmul.f32 %v11237, %v9894
    %v11239 = vmul.f32 %v11219, %v11219
    %v11240 = vmul.f32 %v11220, %v11220
    %v11241 = vmul.f32 %v11221, %v11221
    %v11242 = vmul.f32 %v11222, %v11222
    %v11243 = vsel %vm5643, %v11239, 0.0
    %v11244 = vsel %vm5643, %v11240, 0.0
    %v11245 = vadd.f32 %v11243, %v11244
    %v11246 = vsel %vm5643, %v11241, 0.0
    %v11247 = vadd.f32 %v11245, %v11246
    %v11248 = vsel %vm5643, %v11242, 0.0
    %v11249 = vadd.f32 %v11247, %v11248
    %v11250 = vrot.slane %v11249, 4
    %v11251 = vadd.f32 %v11249, %v11250
    %v11252 = vrot.slane %v11251, 2
    %v11253 = vadd.f32 %v11251, %v11252
    %v11254 = vrot.slane %v11253, 1
    %v11255 = vadd.f32 %v11253, %v11254
    %v11256 = vmul.f32 %v11255, %v9894
    %v11257 = vmul.f32 %v11238, %v11238
    %v11258 = vsub.f32 %v11256, %v11257
    %v11259 = vmax.f32 %v11258, 0.0
    %v11260 = vsub.f32 %v11219, %v11238
    %v11261 = vsub.f32 %v11220, %v11238
    %v11262 = vsub.f32 %v11221, %v11238
    %v11263 = vsub.f32 %v11222, %v11238
    %v11264 = vadd.f32 %v11259, 1e-05
    %v11265 = vrsqrt.pop %v11264
    %v11266 = vmul.f32 %v11223, %v11265
    %v11268 = vlaneseq
    %v11269 = vshrl.u32 %v11268, 7
    %v11270 = vsub.s32 0, %v11269
    %v11271 = vrot.slane %v11266, %v11270
    %v11273 = vmul.f32 %v11260, %v11271
    %v11274 = vmul.f32 %v11261, %v11271
    %v11275 = vmul.f32 %v11262, %v11271
    %v11276 = vmul.f32 %v11263, %v11271
    %v11278 = vlaneseq
    %v11279 = vshrl.u32 %v11278, 7
    %v11280 = vsub.s32 0, %v11279
    %v11281 = vrot.slane %v11224, %v11280
    %v11283 = vadd.f32 %v11273, %v11281
    %v11284 = vadd.f32 %v11274, %v11281
    %v11285 = vadd.f32 %v11275, %v11281
    %v11286 = vadd.f32 %v11276, %v11281
    %v11287 = vadd.f32 %v11283, %v10149
    %v11288 = vadd.f32 %v11284, %v10154
    %v11289 = vadd.f32 %v11285, %v10159
    %v11290 = vadd.f32 %v11286, %v10164
    %v11291 = vmax.f32 %v11287, 0.0
    %v11292 = vmax.f32 %v11288, 0.0
    %v11293 = vmax.f32 %v11289, 0.0
    %v11294 = vmax.f32 %v11290, 0.0
    %v11295 = vld [vmem:[%s20] sm:$0x3]
    %v11297 = vsel %vm5643, %v11295, 0
    %11299 = vmatprep.subr.mxu0 0.0
    %11300 = vmatpush1.msra.mxu0 %v11291
    %11301 = vmatprep.subr.mxu0 0.0
    %11302 = vmatpush1.msra.mxu0 %v11292
    %11303 = vmatprep.subr.mxu0 0.0
    %11304 = vmatpush1.msra.mxu0 %v11293
    %11305 = vmatprep.subr.mxu0 0.0
    %11306 = vmatpush1.msra.mxu0 %v11294
    %11307 = vmatprep.subr.mxu0 0.0
    %11308 = vmatpush1.msra.mxu0 0.0
    %11309 = vmatprep.subr.mxu0 0.0
    %11310 = vmatpush1.msra.mxu0 0.0
    %11311 = vmatprep.subr.mxu0 0.0
    %11312 = vmatpush1.msra.mxu0 0.0
    %11313 = vmatprep.subr.mxu0 0.0
    %11314 = vmatpush1.msra.mxu0 0.0
    %11315 = vmatprep.subr.mxu0 0.0
    %11316 = vmatpush1.msra.mxu0 0.0
    %11317 = vmatprep.subr.mxu0 0.0
    %11318 = vmatpush1.msra.mxu0 0.0
    %11319 = vmatprep.subr.mxu0 0.0
    %11320 = vmatpush1.msra.mxu0 0.0
    %11321 = vmatprep.subr.mxu0 0.0
    %11322 = vmatpush1.msra.mxu0 0.0
    %11323 = vmatprep.subr.mxu0 0.0
    %11324 = vmatpush1.msra.mxu0 0.0
    %11325 = vmatprep.subr.mxu0 0.0
    %11326 = vmatpush1.msra.mxu0 0.0
    %11327 = vmatprep.subr.mxu0 0.0
    %11328 = vmatpush1.msra.mxu0 0.0
    %11329 = vmatprep.subr.mxu0 0.0
    %11330 = vmatpush1.msra.mxu0 0.0
    %11331 = vmatprep.subr.mxu0 0.0
    %11332 = vmatpush1.msra.mxu0 0.0
    %11333 = vmatprep.subr.mxu0 0.0
    %11334 = vmatpush1.msra.mxu0 0.0
    %11335 = vmatprep.subr.mxu0 0.0
    %11336 = vmatpush1.msra.mxu0 0.0
    %11337 = vmatprep.subr.mxu0 0.0
    %11338 = vmatpush1.msra.mxu0 0.0
    %11339 = vmatprep.subr.mxu0 0.0
    %11340 = vmatpush1.msra.mxu0 0.0
    %11341 = vmatprep.subr.mxu0 0.0
    %11342 = vmatpush1.msra.mxu0 0.0
    %11343 = vmatprep.subr.mxu0 0.0
    %11344 = vmatpush1.msra.mxu0 0.0
    %11345 = vmatprep.subr.mxu0 0.0
    %11346 = vmatpush1.msra.mxu0 0.0
    %11347 = vmatprep.subr.mxu0 0.0
    %11348 = vmatpush1.msra.mxu0 0.0
    %11349 = vmatprep.subr.mxu0 0.0
    %11350 = vmatpush1.msra.mxu0 0.0
    %11351 = vmatprep.subr.mxu0 0.0
    %11352 = vmatpush1.msra.mxu0 0.0
    %11353 = vmatprep.subr.mxu0 0.0
    %11354 = vmatpush1.msra.mxu0 0.0
    %11355 = vmatprep.subr.mxu0 0.0
    %11356 = vmatpush1.msra.mxu0 0.0
    %11357 = vmatprep.subr.mxu0 0.0
    %11358 = vmatpush1.msra.mxu0 0.0
    %11359 = vmatprep.subr.mxu0 0.0
    %11360 = vmatpush1.msra.mxu0 0.0
    %11361 = vmatprep.subr.mxu0 0.0
    %11362 = vmatpush1.msra.mxu0 0.0
    %11363 = vmatprep.mubr.f32.mxu0 0.0
    %11364 = vmatmul.mubr.f32.gmra.mrb[0].mxu0 %v11297
    %v11365 = vpop.f32.mrb[0].mxu0
    %v11366 = vadd.f32 0.0, %v11365
    %v11367 = vpop.f32.mrb[0].mxu0
    %11368 = vdwg.mxu0
    %vm11369 = vcmask 254976
    %11370 = vst.msk [vmem:[#allocation4] sm:$0x3] %vm11369, %v11366
    %v11371 = vld [vmem:[%s21] sm:$0xff]
    %v11372 = vld [vmem:[%s21 + $0x8] sm:$0xff]
    %v11373 = vld [vmem:[%s21 + $0x10] sm:$0xff]
    %v11374 = vld [vmem:[%s21 + $0x18] sm:$0xff]
    %v11375 = vld [vmem:[%s22] sm:$0x1]
    %v11377 = vlaneseq
    %v11378 = vshrl.u32 %v11377, 7
    %v11379 = vsub.s32 0, %v11378
    %v11380 = vrot.slane %v11375, %v11379
    %v11383 = vsel %vm5643, %v11366, 0
    %11385 = vmatprep.subr.mxu0 0.0
    %11386 = vmatpush1.msra.mxu0 %v11371
    %11387 = vmatprep.subr.mxu0 0.0
    %11388 = vmatpush1.msra.mxu0 %v11372
    %11389 = vmatprep.subr.mxu0 0.0
    %11390 = vmatpush1.msra.mxu0 %v11373
    %11391 = vmatprep.subr.mxu0 0.0
    %11392 = vmatpush1.msra.mxu0 %v11374
    %11393 = vmatprep.subr.mxu0 0.0
    %11394 = vmatpush1.msra.mxu0 0.0
    %11395 = vmatprep.subr.mxu0 0.0
    %11396 = vmatpush1.msra.mxu0 0.0
    %11397 = vmatprep.subr.mxu0 0.0
    %11398 = vmatpush1.msra.mxu0 0.0
    %11399 = vmatprep.subr.mxu0 0.0
    %11400 = vmatpush1.msra.mxu0 0.0
    %11401 = vmatprep.subr.mxu0 0.0
    %11402 = vmatpush1.msra.mxu0 0.0
    %11403 = vmatprep.subr.mxu0 0.0
    %11404 = vmatpush1.msra.mxu0 0.0
    %11405 = vmatprep.subr.mxu0 0.0
    %11406 = vmatpush1.msra.mxu0 0.0
    %11407 = vmatprep.subr.mxu0 0.0
    %11408 = vmatpush1.msra.mxu0 0.0
    %11409 = vmatprep.subr.mxu0 0.0
    %11410 = vmatpush1.msra.mxu0 0.0
    %11411 = vmatprep.subr.mxu0 0.0
    %11412 = vmatpush1.msra.mxu0 0.0
    %11413 = vmatprep.subr.mxu0 0.0
    %11414 = vmatpush1.msra.mxu0 0.0
    %11415 = vmatprep.subr.mxu0 0.0
    %11416 = vmatpush1.msra.mxu0 0.0
    %11417 = vmatprep.subr.mxu0 0.0
    %11418 = vmatpush1.msra.mxu0 0.0
    %11419 = vmatprep.subr.mxu0 0.0
    %11420 = vmatpush1.msra.mxu0 0.0
    %11421 = vmatprep.subr.mxu0 0.0
    %11422 = vmatpush1.msra.mxu0 0.0
    %11423 = vmatprep.subr.mxu0 0.0
    %11424 = vmatpush1.msra.mxu0 0.0
    %11425 = vmatprep.subr.mxu0 0.0
    %11426 = vmatpush1.msra.mxu0 0.0
    %11427 = vmatprep.subr.mxu0 0.0
    %11428 = vmatpush1.msra.mxu0 0.0
    %11429 = vmatprep.subr.mxu0 0.0
    %11430 = vmatpush1.msra.mxu0 0.0
    %11431 = vmatprep.subr.mxu0 0.0
    %11432 = vmatpush1.msra.mxu0 0.0
    %11433 = vmatprep.subr.mxu0 0.0
    %11434 = vmatpush1.msra.mxu0 0.0
    %11435 = vmatprep.subr.mxu0 0.0
    %11436 = vmatpush1.msra.mxu0 0.0
    %11437 = vmatprep.subr.mxu0 0.0
    %11438 = vmatpush1.msra.mxu0 0.0
    %11439 = vmatprep.subr.mxu0 0.0
    %11440 = vmatpush1.msra.mxu0 0.0
    %11441 = vmatprep.subr.mxu0 0.0
    %11442 = vmatpush1.msra.mxu0 0.0
    %11443 = vmatprep.subr.mxu0 0.0
    %11444 = vmatpush1.msra.mxu0 0.0
    %11445 = vmatprep.subr.mxu0 0.0
    %11446 = vmatpush1.msra.mxu0 0.0
    %11447 = vmatprep.subr.mxu0 0.0
    %11448 = vmatpush1.msra.mxu0 0.0
    %11449 = vmatprep.mubr.f32.mxu0 0.0
    %11450 = vmatmul.mubr.f32.gmra.mrb[0].mxu0 %v11383
    %v11451 = vpop.f32.mrb[0].mxu0
    %v11452 = vadd.f32 %v11380, %v11451
    %v11453 = vpop.f32.mrb[0].mxu0
    %11454 = vdwg.mxu0
    %vm11455 = vcmask 74752
    %11456 = vst.msk [vmem:[#allocation2] sm:$0x3] %vm11455, %v11452
    // Predicated region
    $region94: #{spectral_resnet6_forward.1} parent=1 // pred_check
      _
    $region95: #{spectral_resnet6_forward.1} parent=1 // pred_check_branch
      %11458 = sbr.rel (0) target = $region97
    $region96: #{spectral_resnet6_forward.1} parent=1 // pred_region
      %s11460 = ssub.s32 32, 32
      %11461 = vsyncadd [#allocation3], %s11460
      %s11463 = sshll.u32 [#allocation2], 4
      %s11464 = int_to_ptr.vmem [resolvable:$true] %s11463
      %11466 = dma.vmem_to_hbm [thread:$0]  %s11464, 32, %s23, [#allocation3]
    $region97: #{spectral_resnet6_forward.1} parent=1 // pred_fallthru
      _
    // Predicated region
    $region98: #{spectral_resnet6_forward.1} parent=1 // pred_check
      _
    $region99: #{spectral_resnet6_forward.1} parent=1 // pred_check_branch
      %11468 = sbr.rel (0) target = $region101
    $region100: #{spectral_resnet6_forward.1} parent=1 // pred_region
      %s11470 = ssub.s32 32, 32
      %11471 = vsyncadd [#allocation5], %s11470
      %s11473 = sshll.u32 [#allocation4], 4
      %s11474 = int_to_ptr.vmem [resolvable:$true] %s11473
      %11476 = dma.vmem_to_hbm [thread:$0]  %s11474, 32, %s24, [#allocation5]
    $region101: #{spectral_resnet6_forward.1} parent=1 // pred_fallthru
      _
    // Predicated region
    $region102: #{spectral_resnet6_forward.1} parent=1 // pred_check
      _
    $region103: #{spectral_resnet6_forward.1} parent=1 // pred_check_branch
      %11478 = sbr.rel (0) target = $region105
    $region104: #{spectral_resnet6_forward.1} parent=1 // pred_region
      %11479 = dma.done [#allocation3], 32
    $region105: #{spectral_resnet6_forward.1} parent=1 // pred_fallthru
      _
    // Predicated region
    $region106: #{spectral_resnet6_forward.1} parent=1 // pred_check
      _
    $region107: #{spectral_resnet6_forward.1} parent=1 // pred_check_branch
      %11481 = sbr.rel (0) target = $region109
    $region108: #{spectral_resnet6_forward.1} parent=1 // pred_region
      %11482 = dma.done [#allocation5], 32
    $region109: #{spectral_resnet6_forward.1} parent=1 // pred_fallthru
      _
    %11483 = vsyncpa [#allocation3], 1
    %11484 = vsyncpa [#allocation5], 1

</llo_original>
